<compile_context>
chip_gen: v7x
topology: tpu7x:2x2x1
jax: 0.10.0
libtpu: 0.0.40
codegen_flags: <defaults>
</compile_context>

<pallas_src>
import numpy as np
import jax
import jax.numpy as jnp
from jax.experimental import pallas as pl
from jax.experimental.pallas import tpu as pltpu

EPS = 1e-5  # nn.BatchNorm2d default eps


# ----------------------------- in-kernel helpers ----------------------------------
def _bn(y, gamma, beta=None):
    """Training-mode BatchNorm over rows (= N*H*W pixels), biased variance.

    One-pass statistics (sum, sum of squares) instead of mean + a second
    (y - mean)^2 pass; normalization folded to a single mul + add.
    """
    m = y.shape[0]
    s1 = jnp.sum(y, axis=0, keepdims=True)
    s2 = jnp.sum(y * y, axis=0, keepdims=True)
    mean = s1 * (1.0 / m)
    var = jnp.maximum(s2 * (1.0 / m) - mean * mean, 0.0)
    scale = gamma * jax.lax.rsqrt(var + EPS)
    shift = beta - mean * scale if beta is not None else -mean * scale
    return y * scale + shift


def _conv3x3(a, sel_ref, w_ref, m):
    """3x3 conv on a rows-flattened activation, entirely in VMEM.

    a:       (R, Cin)  f32 activation, rows = (n, h, w) flattened.
    sel_ref: (9*m, R)  bf16 vertical stack of the 9 per-tap 0/1 gather matrices
             (shift + stride + zero-padding + batch separation baked in).
    w_ref:   (9, Cin, Cout) f32 per-tap weights (tap index = kh*3 + kw).
    Returns (m, Cout) f32.
    """
    sel = sel_ref[...].astype(jnp.float32)
    # One wide selection matmul (M = 9*m rows) -> all 9 shifted copies of `a`.
    g = jnp.dot(sel, a, preferred_element_type=jnp.float32)          # (9*m, Cin)
    acc = jnp.dot(g[0:m, :], w_ref[0], preferred_element_type=jnp.float32)
    for t in range(1, 9):
        acc = acc + jnp.dot(g[t * m:(t + 1) * m, :], w_ref[t],
                            preferred_element_type=jnp.float32)
    return acc


# ----------------------------- the fused kernel ------------------------------------
def tiny_resnet_kernel(
        p1_ref, pds_ref, w1a_ref, wdsa_ref, para_ref, s2a_ref, w2a_ref,    # block 1
        s1b_ref, w1b_ref, parb_ref, sdsb_ref, wdsb_ref, s2b_ref, w2b_ref,  # block 2
        pool_ref, fcw_ref, fcb_ref,                                        # head
        out_ref):
    f32 = jnp.float32

    # ----- block 1: x(2,16,16,1) -> out1 rows-flat (128, 64) -----------------------
    pa = para_ref[...]                                  # packed per-channel params
    b1, g1, be1 = pa[0:1], pa[1:2], pa[2:3]
    g2, gds, g3, be3 = pa[3:4], pa[4:5], pa[5:6], pa[6:7]

    h = jnp.dot(p1_ref[...], w1a_ref[...], preferred_element_type=f32) + b1  # cnn1
    h = _bn(jnp.maximum(h, 0.0), g1, be1)                                    # relu -> norm1
    y2 = _conv3x3(h, s2a_ref, w2a_ref, h.shape[0])       # cnn2 (bias cancels in norm2)
    yd = jnp.dot(pds_ref[...], wdsa_ref[...], preferred_element_type=f32)    # 1x1 s2 ds
    # norm2 / ds-BN betas dropped (cancel in the block-level BN below).
    out1 = _bn(_bn(y2, g2) + _bn(yd, gds), g3, be3)                          # (128, 64)

    # ----- block 2: out1(2,8,8,64) -> out2 rows-flat (32, 128) ---------------------
    pb = parb_ref[...]
    b1b, g1b, be1b = pb[0:1], pb[1:2], pb[2:3]
    g2b, gdsb, g3b, be3b = pb[3:4], pb[4:5], pb[5:6], pb[6:7]
    m2 = s1b_ref.shape[0] // 9

    hb = _conv3x3(out1, s1b_ref, w1b_ref, m2) + b1b                          # cnn1 s2
    hb = _bn(jnp.maximum(hb, 0.0), g1b, be1b)
    y2b = _conv3x3(hb, s2b_ref, w2b_ref, m2)                                 # cnn2 s1
    sel_ds = sdsb_ref[...].astype(f32)
    ydb = jnp.dot(jnp.dot(sel_ds, out1, preferred_element_type=f32),
                  wdsb_ref[...], preferred_element_type=f32)                 # 1x1 s2 ds
    out2 = _bn(_bn(y2b, g2b) + _bn(ydb, gdsb), g3b, be3b)                    # (32, 128)

    # ----- head: AdaptiveAvgPool2d((1,1)) as a constant matmul, then FC ------------
    pooled = jnp.dot(pool_ref[...], out2, preferred_element_type=f32)        # (N, C)
    out_ref[...] = jnp.dot(pooled, fcw_ref[...], preferred_element_type=f32) + fcb_ref[...]


def _whole_net_call(out_shape, *args):
    # Everything is tiny -> whole-array VMEM blocks, single grid step.
    in_specs = [pl.BlockSpec(a.shape, lambda i, n=a.ndim: (0,) * n) for a in args]
    out_specs = pl.BlockSpec(out_shape.shape, lambda i, n=len(out_shape.shape): (0,) * n)
    return pl.pallas_call(
        tiny_resnet_kernel,
        grid=(1,),
        in_specs=in_specs,
        out_specs=out_specs,
        out_shape=out_shape,
        compiler_params=pltpu.CompilerParams(dimension_semantics=("arbitrary",)),
    )(*args)


# ----------------------------- host-side constants ---------------------------------
def _conv3x3_selectors(n, h, w, stride):
    """(9*M, R) 0/1 gather matrices for a 3x3 / pad-1 conv on an (n,h,w) grid."""
    ho = (h + 2 - 3) // stride + 1
    wo = (w + 2 - 3) // stride + 1
    m, r = n * ho * wo, n * h * w
    s = np.zeros((9, m, r), np.float32)
    for bi in range(n):
        for oy in range(ho):
            for ox in range(wo):
                row = (bi * ho + oy) * wo + ox
                for kh in range(3):
                    for kw in range(3):
                        iy = oy * stride + kh - 1
                        ix = ox * stride + kw - 1
                        if 0 <= iy < h and 0 <= ix < w:
                            s[kh * 3 + kw, row, (bi * h + iy) * w + ix] = 1.0
    return s.reshape(9 * m, r), (n, ho, wo)


def _downsample_selector(n, h, w):
    """(M, R) 0/1 gather matrix for a 1x1 / stride-2 / pad-0 conv."""
    ho, wo = (h - 1) // 2 + 1, (w - 1) // 2 + 1
    s = np.zeros((n * ho * wo, n * h * w), np.float32)
    for bi in range(n):
        for oy in range(ho):
            for ox in range(wo):
                s[(bi * ho + oy) * wo + ox, (bi * h + 2 * oy) * w + 2 * ox] = 1.0
    return s


def _pool_matrix(n, hw):
    p = np.zeros((n, n * hw), np.float32)
    for bi in range(n):
        p[bi, bi * hw:(bi + 1) * hw] = 1.0 / hw
    return p


def _im2col(x, k, stride, pad):
    """Network-input only: NHWC -> (N*Ho*Wo, k*k*C) with (kh, kw, cin) columns."""
    n, h, w, c = x.shape
    xp = jnp.pad(x, ((0, 0), (pad, pad), (pad, pad), (0, 0)))
    ho = (h + 2 * pad - k) // stride + 1
    wo = (w + 2 * pad - k) // stride + 1
    cols = []
    for kh in range(k):
        for kw in range(k):
            cols.append(xp[:, kh:kh + stride * ho:stride, kw:kw + stride * wo:stride, :])
    return jnp.concatenate(cols, axis=-1).reshape(n * ho * wo, k * k * c), (n, ho, wo)


# ----------------------------- forward --------------------------------------------
@jax.jit
def tiny_resnet_forward(x_nchw, params):
    x = jnp.transpose(x_nchw, (0, 2, 3, 1)).astype(jnp.float32)    # NCHW -> NHWC
    n, h, w, cin = x.shape
    blk1, blk2 = params["blocks"]
    c1 = blk1["w1"].shape[-1]
    c2 = blk2["w1"].shape[-1]

    # Only the *network input* is patch-prepped in XLA (it comes from HBM anyway,
    # and it is tiny).  Every other conv input is built inside the kernel.
    p1, (n, h1, w1) = _im2col(x, 3, 2, 1)                          # (128, 9)
    pds = x[:, ::2, ::2, :].reshape(n * h1 * w1, cin)              # (128, 1)

    # Constant 0/1 gather matrices: exact in bf16 -> half the DMA bytes.
    bf16 = jnp.bfloat16
    s2a, _ = _conv3x3_selectors(n, h1, w1, 1)                      # block-1 cnn2
    s1b, (_, h2, w2) = _conv3x3_selectors(n, h1, w1, 2)            # block-2 cnn1
    s2b, _ = _conv3x3_selectors(n, h2, w2, 1)                      # block-2 cnn2
    sdsb = _downsample_selector(n, h1, w1)                         # block-2 downsample
    pool = _pool_matrix(n, h2 * w2)                                # adaptive avg pool

    def taps(wc):   # (3,3,ci,co) -> (9, ci, co), tap index = kh*3 + kw
        return wc.reshape(9, wc.shape[2], wc.shape[3])

    def packed(blk):   # pack the per-channel vectors into one (8, C) operand
        z = jnp.zeros_like(blk["g1"])
        return jnp.stack([blk["b1"], blk["g1"], blk["be1"], blk["g2"],
                          blk["gds"], blk["g3"], blk["be3"], z], axis=0)

    out_shape = jax.ShapeDtypeStruct((n, params["fc_w"].shape[-1]), jnp.float32)
    return _whole_net_call(
        out_shape,
        p1, pds,
        blk1["w1"].reshape(9 * cin, c1), blk1["wds"].reshape(cin, c1), packed(blk1),
        jnp.asarray(s2a, bf16), taps(blk1["w2"]),
        jnp.asarray(s1b, bf16), taps(blk2["w1"]), packed(blk2),
        jnp.asarray(sdsb, bf16), blk2["wds"].reshape(c1, c2),
        jnp.asarray(s2b, bf16), taps(blk2["w2"]),
        jnp.asarray(pool), params["fc_w"], params["fc_b"].reshape(1, -1))


# ----------------------------- parameters -----------------------------------------
def make_params(channels=(1, 64, 128), num_classes=10, seed=0):
    keys = iter(jax.random.split(jax.random.PRNGKey(seed), 64))
    blocks = []
    for i in range(len(channels) - 1):
        cin, cout = channels[i], channels[i + 1]
        blk = dict(
            w1=jax.random.normal(next(keys), (3, 3, cin, cout), jnp.float32) * (2.0 / (9 * cin)) ** 0.5,
            b1=0.05 * jax.random.normal(next(keys), (cout,), jnp.float32),
            g1=1.0 + 0.1 * jax.random.normal(next(keys), (cout,), jnp.float32),
            be1=0.1 * jax.random.normal(next(keys), (cout,), jnp.float32),
            w2=jax.random.normal(next(keys), (3, 3, cout, cout), jnp.float32) * (2.0 / (9 * cout)) ** 0.5,
            b2=0.05 * jax.random.normal(next(keys), (cout,), jnp.float32),
            g2=1.0 + 0.1 * jax.random.normal(next(keys), (cout,), jnp.float32),
            be2=0.1 * jax.random.normal(next(keys), (cout,), jnp.float32),
            wds=jax.random.normal(next(keys), (1, 1, cin, cout), jnp.float32) * (1.0 / cin) ** 0.5,
            gds=1.0 + 0.1 * jax.random.normal(next(keys), (cout,), jnp.float32),
            beds=0.1 * jax.random.normal(next(keys), (cout,), jnp.float32),
            g3=1.0 + 0.1 * jax.random.normal(next(keys), (cout,), jnp.float32),
            be3=0.1 * jax.random.normal(next(keys), (cout,), jnp.float32),
        )
        blocks.append(blk)
    fc_w = jax.random.normal(next(keys), (channels[-1], num_classes), jnp.float32) * (1.0 / channels[-1]) ** 0.5
    fc_b = 0.05 * jax.random.normal(next(keys), (num_classes,), jnp.float32)
    return {"blocks": blocks, "fc_w": fc_w, "fc_b": fc_b}


# ----------------------------- pure-JAX reference ----------------------------------
# Faithful to the PyTorch module (includes cnn2 bias and all BN betas) -> also
# validates that the dead-term elimination inside the kernel is exact.
def _ref_conv(x, w, stride, pad):
    return jax.lax.conv_general_dilated(
        x, w, (stride, stride), [(pad, pad), (pad, pad)],
        dimension_numbers=("NHWC", "HWIO", "NHWC"),
        precision=jax.lax.Precision.HIGHEST)


def _ref_bn(x, gamma, beta):
    mean = jnp.mean(x, axis=(0, 1, 2), keepdims=True)
    var = jnp.mean((x - mean) ** 2, axis=(0, 1, 2), keepdims=True)
    return (x - mean) * jax.lax.rsqrt(var + EPS) * gamma.reshape(1, 1, 1, -1) + beta.reshape(1, 1, 1, -1)


def reference_forward(x_nchw, params):
    x = jnp.transpose(x_nchw, (0, 2, 3, 1)).astype(jnp.float32)
    for blk in params["blocks"]:
        h = _ref_conv(x, blk["w1"], 2, 1) + blk["b1"].reshape(1, 1, 1, -1)
        h = _ref_bn(jnp.maximum(h, 0.0), blk["g1"], blk["be1"])
        y2 = _ref_conv(h, blk["w2"], 1, 1) + blk["b2"].reshape(1, 1, 1, -1)
        y2 = _ref_bn(y2, blk["g2"], blk["be2"])
        yd = _ref_bn(_ref_conv(x, blk["wds"], 2, 0), blk["gds"], blk["beds"])
        x = _ref_bn(y2 + yd, blk["g3"], blk["be3"])
    pooled = jnp.mean(x, axis=(1, 2))
    return jnp.dot(pooled, params["fc_w"], precision=jax.lax.Precision.HIGHEST) + params["fc_b"]


if __name__ == "__main__":
    params = make_params(channels=(1, 64, 128), num_classes=10, seed=0)
    x = jax.random.normal(jax.random.PRNGKey(0), (2, 1, 16, 16), jnp.float32)  # NCHW, like PyTorch

    logits = jax.block_until_ready(tiny_resnet_forward(x, params))
    assert logits.shape == (2, 10), logits.shape

    ref = jax.block_until_ready(reference_forward(x, params))
    # Tightened from the previous 2e-2.  All non-MXU math is exact f32 and the
    # gather matrices are exact 0/1, so the residual error is bounded by the
    # MXU's f32 pass configuration, which varies by TPU generation; 1e-2 sits
    # safely above that on v5e/v6e/v7x while still catching real regressions.
    assert jnp.allclose(logits, ref, atol=1e-2, rtol=1e-2), (logits, ref)

    print("KERNEL_OK")
</pallas_src>

<mosaic_0001>
module attributes {stable_mosaic.version = 11 : i64} {
  func.func @tiny_resnet_kernel(%arg0: i32, %arg1: memref<128x9xf32, #tpu.memory_space<vmem>>, %arg2: memref<128x1xf32, #tpu.memory_space<vmem>>, %arg3: memref<9x64xf32, #tpu.memory_space<vmem>>, %arg4: memref<1x64xf32, #tpu.memory_space<vmem>>, %arg5: memref<8x64xf32, #tpu.memory_space<vmem>>, %arg6: memref<1152x128xbf16, #tpu.memory_space<vmem>>, %arg7: memref<9x64x64xf32, #tpu.memory_space<vmem>>, %arg8: memref<288x128xbf16, #tpu.memory_space<vmem>>, %arg9: memref<9x64x128xf32, #tpu.memory_space<vmem>>, %arg10: memref<8x128xf32, #tpu.memory_space<vmem>>, %arg11: memref<32x128xbf16, #tpu.memory_space<vmem>>, %arg12: memref<64x128xf32, #tpu.memory_space<vmem>>, %arg13: memref<288x32xbf16, #tpu.memory_space<vmem>>, %arg14: memref<9x128x128xf32, #tpu.memory_space<vmem>>, %arg15: memref<2x32xf32, #tpu.memory_space<vmem>>, %arg16: memref<128x10xf32, #tpu.memory_space<vmem>>, %arg17: memref<1x10xf32, #tpu.memory_space<vmem>>, %arg18: memref<2x10xf32, #tpu.memory_space<vmem>>) attributes {dimension_semantics = [#tpu.dimension_semantics<arbitrary>], iteration_bounds = array<i64: 1>, scalar_prefetch = 0 : i64, scratch_operands = 0 : i64, tpu.core_type = #tpu.core_type<tc>, window_params = [{pipeline_mode = #tpu.pipeline_mode<synchronous>, transform_indices = @transform_0, window_bounds = array<i64: 128, 9>}, {pipeline_mode = #tpu.pipeline_mode<synchronous>, transform_indices = @transform_1, window_bounds = array<i64: 128, 1>}, {pipeline_mode = #tpu.pipeline_mode<synchronous>, transform_indices = @transform_2, window_bounds = array<i64: 9, 64>}, {pipeline_mode = #tpu.pipeline_mode<synchronous>, transform_indices = @transform_3, window_bounds = array<i64: 1, 64>}, {pipeline_mode = #tpu.pipeline_mode<synchronous>, transform_indices = @transform_4, window_bounds = array<i64: 8, 64>}, {pipeline_mode = #tpu.pipeline_mode<synchronous>, transform_indices = @transform_5, window_bounds = array<i64: 1152, 128>}, {pipeline_mode = #tpu.pipeline_mode<synchronous>, transform_indices = @transform_6, window_bounds = array<i64: 9, 64, 64>}, {pipeline_mode = #tpu.pipeline_mode<synchronous>, transform_indices = @transform_7, window_bounds = array<i64: 288, 128>}, {pipeline_mode = #tpu.pipeline_mode<synchronous>, transform_indices = @transform_8, window_bounds = array<i64: 9, 64, 128>}, {pipeline_mode = #tpu.pipeline_mode<synchronous>, transform_indices = @transform_9, window_bounds = array<i64: 8, 128>}, {pipeline_mode = #tpu.pipeline_mode<synchronous>, transform_indices = @transform_10, window_bounds = array<i64: 32, 128>}, {pipeline_mode = #tpu.pipeline_mode<synchronous>, transform_indices = @transform_11, window_bounds = array<i64: 64, 128>}, {pipeline_mode = #tpu.pipeline_mode<synchronous>, transform_indices = @transform_12, window_bounds = array<i64: 288, 32>}, {pipeline_mode = #tpu.pipeline_mode<synchronous>, transform_indices = @transform_13, window_bounds = array<i64: 9, 128, 128>}, {pipeline_mode = #tpu.pipeline_mode<synchronous>, transform_indices = @transform_14, window_bounds = array<i64: 2, 32>}, {pipeline_mode = #tpu.pipeline_mode<synchronous>, transform_indices = @transform_15, window_bounds = array<i64: 128, 10>}, {pipeline_mode = #tpu.pipeline_mode<synchronous>, transform_indices = @transform_16, window_bounds = array<i64: 1, 10>}, {pipeline_mode = #tpu.pipeline_mode<synchronous>, transform_indices = @transform_17, window_bounds = array<i64: 2, 10>}]} {
    %c0 = arith.constant 0 : index
    %c0_0 = arith.constant 0 : index
    %0 = vector.load %arg5[%c0, %c0_0] : memref<8x64xf32, #tpu.memory_space<vmem>>, vector<8x64xf32>
    %1 = vector.extract_strided_slice %0 {offsets = [0, 0], sizes = [1, 64], strides = [1, 1]} : vector<8x64xf32> to vector<1x64xf32>
    %2 = vector.extract_strided_slice %0 {offsets = [1, 0], sizes = [1, 64], strides = [1, 1]} : vector<8x64xf32> to vector<1x64xf32>
    %3 = vector.extract_strided_slice %0 {offsets = [2, 0], sizes = [1, 64], strides = [1, 1]} : vector<8x64xf32> to vector<1x64xf32>
    %4 = vector.extract_strided_slice %0 {offsets = [3, 0], sizes = [1, 64], strides = [1, 1]} : vector<8x64xf32> to vector<1x64xf32>
    %5 = vector.extract_strided_slice %0 {offsets = [4, 0], sizes = [1, 64], strides = [1, 1]} : vector<8x64xf32> to vector<1x64xf32>
    %6 = vector.extract_strided_slice %0 {offsets = [5, 0], sizes = [1, 64], strides = [1, 1]} : vector<8x64xf32> to vector<1x64xf32>
    %7 = vector.extract_strided_slice %0 {offsets = [6, 0], sizes = [1, 64], strides = [1, 1]} : vector<8x64xf32> to vector<1x64xf32>
    %c0_1 = arith.constant 0 : index
    %c0_2 = arith.constant 0 : index
    %8 = vector.load %arg1[%c0_1, %c0_2] : memref<128x9xf32, #tpu.memory_space<vmem>>, vector<128x9xf32>
    %c0_3 = arith.constant 0 : index
    %c0_4 = arith.constant 0 : index
    %9 = vector.load %arg3[%c0_3, %c0_4] : memref<9x64xf32, #tpu.memory_space<vmem>>, vector<9x64xf32>
    %cst = arith.constant dense<0.000000e+00> : vector<128x64xf32>
    %10 = tpu.matmul %8, %9, %cst {dimension_numbers = #tpu.dot_dimension_numbers<[1], [0], [0], [1], [0, 0, 1, 1], [], []>} : vector<128x9xf32>, vector<9x64xf32>, vector<128x64xf32> -> vector<128x64xf32>
    %11 = vector.broadcast %1 : vector<1x64xf32> to vector<128x64xf32>
    %12 = arith.addf %10, %11 : vector<128x64xf32>
    %cst_5 = arith.constant 0.000000e+00 : f32
    %13 = vector.broadcast %cst_5 : f32 to vector<128x64xf32>
    %14 = arith.maximumf %12, %13 : vector<128x64xf32>
    %cst_6 = arith.constant dense<0.000000e+00> : vector<64xf32>
    %15 = vector.multi_reduction <add>, %14, %cst_6 [0] : vector<128x64xf32> to vector<64xf32>
    %16 = vector.shape_cast %15 : vector<64xf32> to vector<1x64xf32>
    %17 = arith.mulf %14, %14 : vector<128x64xf32>
    %cst_7 = arith.constant dense<0.000000e+00> : vector<64xf32>
    %18 = vector.multi_reduction <add>, %17, %cst_7 [0] : vector<128x64xf32> to vector<64xf32>
    %19 = vector.shape_cast %18 : vector<64xf32> to vector<1x64xf32>
    %cst_8 = arith.constant 7.812500e-03 : f32
    %20 = vector.broadcast %cst_8 : f32 to vector<1x64xf32>
    %21 = arith.mulf %16, %20 : vector<1x64xf32>
    %cst_9 = arith.constant 7.812500e-03 : f32
    %22 = vector.broadcast %cst_9 : f32 to vector<1x64xf32>
    %23 = arith.mulf %19, %22 : vector<1x64xf32>
    %24 = arith.mulf %21, %21 : vector<1x64xf32>
    %25 = arith.subf %23, %24 : vector<1x64xf32>
    %cst_10 = arith.constant 0.000000e+00 : f32
    %26 = vector.broadcast %cst_10 : f32 to vector<1x64xf32>
    %27 = arith.maximumf %25, %26 : vector<1x64xf32>
    %cst_11 = arith.constant 9.99999974E-6 : f32
    %28 = vector.broadcast %cst_11 : f32 to vector<1x64xf32>
    %29 = arith.addf %27, %28 : vector<1x64xf32>
    %30 = math.rsqrt %29 : vector<1x64xf32>
    %31 = arith.mulf %2, %30 : vector<1x64xf32>
    %32 = arith.mulf %21, %31 : vector<1x64xf32>
    %33 = arith.subf %3, %32 : vector<1x64xf32>
    %34 = vector.broadcast %31 : vector<1x64xf32> to vector<128x64xf32>
    %35 = arith.mulf %14, %34 : vector<128x64xf32>
    %36 = vector.broadcast %33 : vector<1x64xf32> to vector<128x64xf32>
    %37 = arith.addf %35, %36 : vector<128x64xf32>
    %c0_12 = arith.constant 0 : index
    %c0_13 = arith.constant 0 : index
    %38 = vector.load %arg6[%c0_12, %c0_13] : memref<1152x128xbf16, #tpu.memory_space<vmem>>, vector<1152x128xbf16>
    %39 = arith.extf %38 : vector<1152x128xbf16> to vector<1152x128xf32>
    %cst_14 = arith.constant dense<0.000000e+00> : vector<1152x64xf32>
    %40 = tpu.matmul %39, %37, %cst_14 {dimension_numbers = #tpu.dot_dimension_numbers<[1], [0], [0], [1], [0, 0, 1, 1], [], []>} : vector<1152x128xf32>, vector<128x64xf32>, vector<1152x64xf32> -> vector<1152x64xf32>
    %41 = vector.extract_strided_slice %40 {offsets = [0, 0], sizes = [128, 64], strides = [1, 1]} : vector<1152x64xf32> to vector<128x64xf32>
    %c0_15 = arith.constant 0 : index
    %c0_16 = arith.constant 0 : index
    %c0_17 = arith.constant 0 : index
    %42 = vector.load %arg7[%c0_15, %c0_16, %c0_17] : memref<9x64x64xf32, #tpu.memory_space<vmem>>, vector<1x64x64xf32>
    %43 = vector.shape_cast %42 : vector<1x64x64xf32> to vector<64x64xf32>
    %cst_18 = arith.constant dense<0.000000e+00> : vector<128x64xf32>
    %44 = tpu.matmul %41, %43, %cst_18 {dimension_numbers = #tpu.dot_dimension_numbers<[1], [0], [0], [1], [0, 0, 1, 1], [], []>} : vector<128x64xf32>, vector<64x64xf32>, vector<128x64xf32> -> vector<128x64xf32>
    %45 = vector.extract_strided_slice %40 {offsets = [128, 0], sizes = [128, 64], strides = [1, 1]} : vector<1152x64xf32> to vector<128x64xf32>
    %c1 = arith.constant 1 : index
    %c0_19 = arith.constant 0 : index
    %c0_20 = arith.constant 0 : index
    %46 = vector.load %arg7[%c1, %c0_19, %c0_20] : memref<9x64x64xf32, #tpu.memory_space<vmem>>, vector<1x64x64xf32>
    %47 = vector.shape_cast %46 : vector<1x64x64xf32> to vector<64x64xf32>
    %cst_21 = arith.constant dense<0.000000e+00> : vector<128x64xf32>
    %48 = tpu.matmul %45, %47, %cst_21 {dimension_numbers = #tpu.dot_dimension_numbers<[1], [0], [0], [1], [0, 0, 1, 1], [], []>} : vector<128x64xf32>, vector<64x64xf32>, vector<128x64xf32> -> vector<128x64xf32>
    %49 = arith.addf %44, %48 : vector<128x64xf32>
    %50 = vector.extract_strided_slice %40 {offsets = [256, 0], sizes = [128, 64], strides = [1, 1]} : vector<1152x64xf32> to vector<128x64xf32>
    %c2 = arith.constant 2 : index
    %c0_22 = arith.constant 0 : index
    %c0_23 = arith.constant 0 : index
    %51 = vector.load %arg7[%c2, %c0_22, %c0_23] : memref<9x64x64xf32, #tpu.memory_space<vmem>>, vector<1x64x64xf32>
    %52 = vector.shape_cast %51 : vector<1x64x64xf32> to vector<64x64xf32>
    %cst_24 = arith.constant dense<0.000000e+00> : vector<128x64xf32>
    %53 = tpu.matmul %50, %52, %cst_24 {dimension_numbers = #tpu.dot_dimension_numbers<[1], [0], [0], [1], [0, 0, 1, 1], [], []>} : vector<128x64xf32>, vector<64x64xf32>, vector<128x64xf32> -> vector<128x64xf32>
    %54 = arith.addf %49, %53 : vector<128x64xf32>
    %55 = vector.extract_strided_slice %40 {offsets = [384, 0], sizes = [128, 64], strides = [1, 1]} : vector<1152x64xf32> to vector<128x64xf32>
    %c3 = arith.constant 3 : index
    %c0_25 = arith.constant 0 : index
    %c0_26 = arith.constant 0 : index
    %56 = vector.load %arg7[%c3, %c0_25, %c0_26] : memref<9x64x64xf32, #tpu.memory_space<vmem>>, vector<1x64x64xf32>
    %57 = vector.shape_cast %56 : vector<1x64x64xf32> to vector<64x64xf32>
    %cst_27 = arith.constant dense<0.000000e+00> : vector<128x64xf32>
    %58 = tpu.matmul %55, %57, %cst_27 {dimension_numbers = #tpu.dot_dimension_numbers<[1], [0], [0], [1], [0, 0, 1, 1], [], []>} : vector<128x64xf32>, vector<64x64xf32>, vector<128x64xf32> -> vector<128x64xf32>
    %59 = arith.addf %54, %58 : vector<128x64xf32>
    %60 = vector.extract_strided_slice %40 {offsets = [512, 0], sizes = [128, 64], strides = [1, 1]} : vector<1152x64xf32> to vector<128x64xf32>
    %c4 = arith.constant 4 : index
    %c0_28 = arith.constant 0 : index
    %c0_29 = arith.constant 0 : index
    %61 = vector.load %arg7[%c4, %c0_28, %c0_29] : memref<9x64x64xf32, #tpu.memory_space<vmem>>, vector<1x64x64xf32>
    %62 = vector.shape_cast %61 : vector<1x64x64xf32> to vector<64x64xf32>
    %cst_30 = arith.constant dense<0.000000e+00> : vector<128x64xf32>
    %63 = tpu.matmul %60, %62, %cst_30 {dimension_numbers = #tpu.dot_dimension_numbers<[1], [0], [0], [1], [0, 0, 1, 1], [], []>} : vector<128x64xf32>, vector<64x64xf32>, vector<128x64xf32> -> vector<128x64xf32>
    %64 = arith.addf %59, %63 : vector<128x64xf32>
    %65 = vector.extract_strided_slice %40 {offsets = [640, 0], sizes = [128, 64], strides = [1, 1]} : vector<1152x64xf32> to vector<128x64xf32>
    %c5 = arith.constant 5 : index
    %c0_31 = arith.constant 0 : index
    %c0_32 = arith.constant 0 : index
    %66 = vector.load %arg7[%c5, %c0_31, %c0_32] : memref<9x64x64xf32, #tpu.memory_space<vmem>>, vector<1x64x64xf32>
    %67 = vector.shape_cast %66 : vector<1x64x64xf32> to vector<64x64xf32>
    %cst_33 = arith.constant dense<0.000000e+00> : vector<128x64xf32>
    %68 = tpu.matmul %65, %67, %cst_33 {dimension_numbers = #tpu.dot_dimension_numbers<[1], [0], [0], [1], [0, 0, 1, 1], [], []>} : vector<128x64xf32>, vector<64x64xf32>, vector<128x64xf32> -> vector<128x64xf32>
    %69 = arith.addf %64, %68 : vector<128x64xf32>
    %70 = vector.extract_strided_slice %40 {offsets = [768, 0], sizes = [128, 64], strides = [1, 1]} : vector<1152x64xf32> to vector<128x64xf32>
    %c6 = arith.constant 6 : index
    %c0_34 = arith.constant 0 : index
    %c0_35 = arith.constant 0 : index
    %71 = vector.load %arg7[%c6, %c0_34, %c0_35] : memref<9x64x64xf32, #tpu.memory_space<vmem>>, vector<1x64x64xf32>
    %72 = vector.shape_cast %71 : vector<1x64x64xf32> to vector<64x64xf32>
    %cst_36 = arith.constant dense<0.000000e+00> : vector<128x64xf32>
    %73 = tpu.matmul %70, %72, %cst_36 {dimension_numbers = #tpu.dot_dimension_numbers<[1], [0], [0], [1], [0, 0, 1, 1], [], []>} : vector<128x64xf32>, vector<64x64xf32>, vector<128x64xf32> -> vector<128x64xf32>
    %74 = arith.addf %69, %73 : vector<128x64xf32>
    %75 = vector.extract_strided_slice %40 {offsets = [896, 0], sizes = [128, 64], strides = [1, 1]} : vector<1152x64xf32> to vector<128x64xf32>
    %c7 = arith.constant 7 : index
    %c0_37 = arith.constant 0 : index
    %c0_38 = arith.constant 0 : index
    %76 = vector.load %arg7[%c7, %c0_37, %c0_38] : memref<9x64x64xf32, #tpu.memory_space<vmem>>, vector<1x64x64xf32>
    %77 = vector.shape_cast %76 : vector<1x64x64xf32> to vector<64x64xf32>
    %cst_39 = arith.constant dense<0.000000e+00> : vector<128x64xf32>
    %78 = tpu.matmul %75, %77, %cst_39 {dimension_numbers = #tpu.dot_dimension_numbers<[1], [0], [0], [1], [0, 0, 1, 1], [], []>} : vector<128x64xf32>, vector<64x64xf32>, vector<128x64xf32> -> vector<128x64xf32>
    %79 = arith.addf %74, %78 : vector<128x64xf32>
    %80 = vector.extract_strided_slice %40 {offsets = [1024, 0], sizes = [128, 64], strides = [1, 1]} : vector<1152x64xf32> to vector<128x64xf32>
    %c8 = arith.constant 8 : index
    %c0_40 = arith.constant 0 : index
    %c0_41 = arith.constant 0 : index
    %81 = vector.load %arg7[%c8, %c0_40, %c0_41] : memref<9x64x64xf32, #tpu.memory_space<vmem>>, vector<1x64x64xf32>
    %82 = vector.shape_cast %81 : vector<1x64x64xf32> to vector<64x64xf32>
    %cst_42 = arith.constant dense<0.000000e+00> : vector<128x64xf32>
    %83 = tpu.matmul %80, %82, %cst_42 {dimension_numbers = #tpu.dot_dimension_numbers<[1], [0], [0], [1], [0, 0, 1, 1], [], []>} : vector<128x64xf32>, vector<64x64xf32>, vector<128x64xf32> -> vector<128x64xf32>
    %84 = arith.addf %79, %83 : vector<128x64xf32>
    %c0_43 = arith.constant 0 : index
    %c0_44 = arith.constant 0 : index
    %85 = vector.load %arg2[%c0_43, %c0_44] : memref<128x1xf32, #tpu.memory_space<vmem>>, vector<128x1xf32>
    %c0_45 = arith.constant 0 : index
    %c0_46 = arith.constant 0 : index
    %86 = vector.load %arg4[%c0_45, %c0_46] : memref<1x64xf32, #tpu.memory_space<vmem>>, vector<1x64xf32>
    %cst_47 = arith.constant dense<0.000000e+00> : vector<128x64xf32>
    %87 = tpu.matmul %85, %86, %cst_47 {dimension_numbers = #tpu.dot_dimension_numbers<[1], [0], [0], [1], [0, 0, 1, 1], [], []>} : vector<128x1xf32>, vector<1x64xf32>, vector<128x64xf32> -> vector<128x64xf32>
    %cst_48 = arith.constant dense<0.000000e+00> : vector<64xf32>
    %88 = vector.multi_reduction <add>, %84, %cst_48 [0] : vector<128x64xf32> to vector<64xf32>
    %89 = vector.shape_cast %88 : vector<64xf32> to vector<1x64xf32>
    %90 = arith.mulf %84, %84 : vector<128x64xf32>
    %cst_49 = arith.constant dense<0.000000e+00> : vector<64xf32>
    %91 = vector.multi_reduction <add>, %90, %cst_49 [0] : vector<128x64xf32> to vector<64xf32>
    %92 = vector.shape_cast %91 : vector<64xf32> to vector<1x64xf32>
    %cst_50 = arith.constant 7.812500e-03 : f32
    %93 = vector.broadcast %cst_50 : f32 to vector<1x64xf32>
    %94 = arith.mulf %89, %93 : vector<1x64xf32>
    %cst_51 = arith.constant 7.812500e-03 : f32
    %95 = vector.broadcast %cst_51 : f32 to vector<1x64xf32>
    %96 = arith.mulf %92, %95 : vector<1x64xf32>
    %97 = arith.mulf %94, %94 : vector<1x64xf32>
    %98 = arith.subf %96, %97 : vector<1x64xf32>
    %cst_52 = arith.constant 0.000000e+00 : f32
    %99 = vector.broadcast %cst_52 : f32 to vector<1x64xf32>
    %100 = arith.maximumf %98, %99 : vector<1x64xf32>
    %cst_53 = arith.constant 9.99999974E-6 : f32
    %101 = vector.broadcast %cst_53 : f32 to vector<1x64xf32>
    %102 = arith.addf %100, %101 : vector<1x64xf32>
    %103 = math.rsqrt %102 : vector<1x64xf32>
    %104 = arith.mulf %4, %103 : vector<1x64xf32>
    %cst_54 = arith.constant 0.000000e+00 : f32
    %105 = vector.broadcast %cst_54 : f32 to vector<1x64xf32>
    %106 = arith.subf %105, %94 : vector<1x64xf32>
    %107 = arith.mulf %106, %104 : vector<1x64xf32>
    %108 = vector.broadcast %104 : vector<1x64xf32> to vector<128x64xf32>
    %109 = arith.mulf %84, %108 : vector<128x64xf32>
    %110 = vector.broadcast %107 : vector<1x64xf32> to vector<128x64xf32>
    %111 = arith.addf %109, %110 : vector<128x64xf32>
    %cst_55 = arith.constant dense<0.000000e+00> : vector<64xf32>
    %112 = vector.multi_reduction <add>, %87, %cst_55 [0] : vector<128x64xf32> to vector<64xf32>
    %113 = vector.shape_cast %112 : vector<64xf32> to vector<1x64xf32>
    %114 = arith.mulf %87, %87 : vector<128x64xf32>
    %cst_56 = arith.constant dense<0.000000e+00> : vector<64xf32>
    %115 = vector.multi_reduction <add>, %114, %cst_56 [0] : vector<128x64xf32> to vector<64xf32>
    %116 = vector.shape_cast %115 : vector<64xf32> to vector<1x64xf32>
    %cst_57 = arith.constant 7.812500e-03 : f32
    %117 = vector.broadcast %cst_57 : f32 to vector<1x64xf32>
    %118 = arith.mulf %113, %117 : vector<1x64xf32>
    %cst_58 = arith.constant 7.812500e-03 : f32
    %119 = vector.broadcast %cst_58 : f32 to vector<1x64xf32>
    %120 = arith.mulf %116, %119 : vector<1x64xf32>
    %121 = arith.mulf %118, %118 : vector<1x64xf32>
    %122 = arith.subf %120, %121 : vector<1x64xf32>
    %cst_59 = arith.constant 0.000000e+00 : f32
    %123 = vector.broadcast %cst_59 : f32 to vector<1x64xf32>
    %124 = arith.maximumf %122, %123 : vector<1x64xf32>
    %cst_60 = arith.constant 9.99999974E-6 : f32
    %125 = vector.broadcast %cst_60 : f32 to vector<1x64xf32>
    %126 = arith.addf %124, %125 : vector<1x64xf32>
    %127 = math.rsqrt %126 : vector<1x64xf32>
    %128 = arith.mulf %5, %127 : vector<1x64xf32>
    %cst_61 = arith.constant 0.000000e+00 : f32
    %129 = vector.broadcast %cst_61 : f32 to vector<1x64xf32>
    %130 = arith.subf %129, %118 : vector<1x64xf32>
    %131 = arith.mulf %130, %128 : vector<1x64xf32>
    %132 = vector.broadcast %128 : vector<1x64xf32> to vector<128x64xf32>
    %133 = arith.mulf %87, %132 : vector<128x64xf32>
    %134 = vector.broadcast %131 : vector<1x64xf32> to vector<128x64xf32>
    %135 = arith.addf %133, %134 : vector<128x64xf32>
    %136 = arith.addf %111, %135 : vector<128x64xf32>
    %cst_62 = arith.constant dense<0.000000e+00> : vector<64xf32>
    %137 = vector.multi_reduction <add>, %136, %cst_62 [0] : vector<128x64xf32> to vector<64xf32>
    %138 = vector.shape_cast %137 : vector<64xf32> to vector<1x64xf32>
    %139 = arith.mulf %136, %136 : vector<128x64xf32>
    %cst_63 = arith.constant dense<0.000000e+00> : vector<64xf32>
    %140 = vector.multi_reduction <add>, %139, %cst_63 [0] : vector<128x64xf32> to vector<64xf32>
    %141 = vector.shape_cast %140 : vector<64xf32> to vector<1x64xf32>
    %cst_64 = arith.constant 7.812500e-03 : f32
    %142 = vector.broadcast %cst_64 : f32 to vector<1x64xf32>
    %143 = arith.mulf %138, %142 : vector<1x64xf32>
    %cst_65 = arith.constant 7.812500e-03 : f32
    %144 = vector.broadcast %cst_65 : f32 to vector<1x64xf32>
    %145 = arith.mulf %141, %144 : vector<1x64xf32>
    %146 = arith.mulf %143, %143 : vector<1x64xf32>
    %147 = arith.subf %145, %146 : vector<1x64xf32>
    %cst_66 = arith.constant 0.000000e+00 : f32
    %148 = vector.broadcast %cst_66 : f32 to vector<1x64xf32>
    %149 = arith.maximumf %147, %148 : vector<1x64xf32>
    %cst_67 = arith.constant 9.99999974E-6 : f32
    %150 = vector.broadcast %cst_67 : f32 to vector<1x64xf32>
    %151 = arith.addf %149, %150 : vector<1x64xf32>
    %152 = math.rsqrt %151 : vector<1x64xf32>
    %153 = arith.mulf %6, %152 : vector<1x64xf32>
    %154 = arith.mulf %143, %153 : vector<1x64xf32>
    %155 = arith.subf %7, %154 : vector<1x64xf32>
    %156 = vector.broadcast %153 : vector<1x64xf32> to vector<128x64xf32>
    %157 = arith.mulf %136, %156 : vector<128x64xf32>
    %158 = vector.broadcast %155 : vector<1x64xf32> to vector<128x64xf32>
    %159 = arith.addf %157, %158 : vector<128x64xf32>
    %c0_68 = arith.constant 0 : index
    %c0_69 = arith.constant 0 : index
    %160 = vector.load %arg10[%c0_68, %c0_69] : memref<8x128xf32, #tpu.memory_space<vmem>>, vector<8x128xf32>
    %161 = vector.extract_strided_slice %160 {offsets = [0, 0], sizes = [1, 128], strides = [1, 1]} : vector<8x128xf32> to vector<1x128xf32>
    %162 = vector.extract_strided_slice %160 {offsets = [1, 0], sizes = [1, 128], strides = [1, 1]} : vector<8x128xf32> to vector<1x128xf32>
    %163 = vector.extract_strided_slice %160 {offsets = [2, 0], sizes = [1, 128], strides = [1, 1]} : vector<8x128xf32> to vector<1x128xf32>
    %164 = vector.extract_strided_slice %160 {offsets = [3, 0], sizes = [1, 128], strides = [1, 1]} : vector<8x128xf32> to vector<1x128xf32>
    %165 = vector.extract_strided_slice %160 {offsets = [4, 0], sizes = [1, 128], strides = [1, 1]} : vector<8x128xf32> to vector<1x128xf32>
    %166 = vector.extract_strided_slice %160 {offsets = [5, 0], sizes = [1, 128], strides = [1, 1]} : vector<8x128xf32> to vector<1x128xf32>
    %167 = vector.extract_strided_slice %160 {offsets = [6, 0], sizes = [1, 128], strides = [1, 1]} : vector<8x128xf32> to vector<1x128xf32>
    %c0_70 = arith.constant 0 : index
    %c0_71 = arith.constant 0 : index
    %168 = vector.load %arg8[%c0_70, %c0_71] : memref<288x128xbf16, #tpu.memory_space<vmem>>, vector<288x128xbf16>
    %169 = arith.extf %168 : vector<288x128xbf16> to vector<288x128xf32>
    %cst_72 = arith.constant dense<0.000000e+00> : vector<288x64xf32>
    %170 = tpu.matmul %169, %159, %cst_72 {dimension_numbers = #tpu.dot_dimension_numbers<[1], [0], [0], [1], [0, 0, 1, 1], [], []>} : vector<288x128xf32>, vector<128x64xf32>, vector<288x64xf32> -> vector<288x64xf32>
    %171 = vector.extract_strided_slice %170 {offsets = [0, 0], sizes = [32, 64], strides = [1, 1]} : vector<288x64xf32> to vector<32x64xf32>
    %c0_73 = arith.constant 0 : index
    %c0_74 = arith.constant 0 : index
    %c0_75 = arith.constant 0 : index
    %172 = vector.load %arg9[%c0_73, %c0_74, %c0_75] : memref<9x64x128xf32, #tpu.memory_space<vmem>>, vector<1x64x128xf32>
    %173 = vector.shape_cast %172 : vector<1x64x128xf32> to vector<64x128xf32>
    %cst_76 = arith.constant dense<0.000000e+00> : vector<32x128xf32>
    %174 = tpu.matmul %171, %173, %cst_76 {dimension_numbers = #tpu.dot_dimension_numbers<[1], [0], [0], [1], [0, 0, 1, 1], [], []>} : vector<32x64xf32>, vector<64x128xf32>, vector<32x128xf32> -> vector<32x128xf32>
    %175 = vector.extract_strided_slice %170 {offsets = [32, 0], sizes = [32, 64], strides = [1, 1]} : vector<288x64xf32> to vector<32x64xf32>
    %c1_77 = arith.constant 1 : index
    %c0_78 = arith.constant 0 : index
    %c0_79 = arith.constant 0 : index
    %176 = vector.load %arg9[%c1_77, %c0_78, %c0_79] : memref<9x64x128xf32, #tpu.memory_space<vmem>>, vector<1x64x128xf32>
    %177 = vector.shape_cast %176 : vector<1x64x128xf32> to vector<64x128xf32>
    %cst_80 = arith.constant dense<0.000000e+00> : vector<32x128xf32>
    %178 = tpu.matmul %175, %177, %cst_80 {dimension_numbers = #tpu.dot_dimension_numbers<[1], [0], [0], [1], [0, 0, 1, 1], [], []>} : vector<32x64xf32>, vector<64x128xf32>, vector<32x128xf32> -> vector<32x128xf32>
    %179 = arith.addf %174, %178 : vector<32x128xf32>
    %180 = vector.extract_strided_slice %170 {offsets = [64, 0], sizes = [32, 64], strides = [1, 1]} : vector<288x64xf32> to vector<32x64xf32>
    %c2_81 = arith.constant 2 : index
    %c0_82 = arith.constant 0 : index
    %c0_83 = arith.constant 0 : index
    %181 = vector.load %arg9[%c2_81, %c0_82, %c0_83] : memref<9x64x128xf32, #tpu.memory_space<vmem>>, vector<1x64x128xf32>
    %182 = vector.shape_cast %181 : vector<1x64x128xf32> to vector<64x128xf32>
    %cst_84 = arith.constant dense<0.000000e+00> : vector<32x128xf32>
    %183 = tpu.matmul %180, %182, %cst_84 {dimension_numbers = #tpu.dot_dimension_numbers<[1], [0], [0], [1], [0, 0, 1, 1], [], []>} : vector<32x64xf32>, vector<64x128xf32>, vector<32x128xf32> -> vector<32x128xf32>
    %184 = arith.addf %179, %183 : vector<32x128xf32>
    %185 = vector.extract_strided_slice %170 {offsets = [96, 0], sizes = [32, 64], strides = [1, 1]} : vector<288x64xf32> to vector<32x64xf32>
    %c3_85 = arith.constant 3 : index
    %c0_86 = arith.constant 0 : index
    %c0_87 = arith.constant 0 : index
    %186 = vector.load %arg9[%c3_85, %c0_86, %c0_87] : memref<9x64x128xf32, #tpu.memory_space<vmem>>, vector<1x64x128xf32>
    %187 = vector.shape_cast %186 : vector<1x64x128xf32> to vector<64x128xf32>
    %cst_88 = arith.constant dense<0.000000e+00> : vector<32x128xf32>
    %188 = tpu.matmul %185, %187, %cst_88 {dimension_numbers = #tpu.dot_dimension_numbers<[1], [0], [0], [1], [0, 0, 1, 1], [], []>} : vector<32x64xf32>, vector<64x128xf32>, vector<32x128xf32> -> vector<32x128xf32>
    %189 = arith.addf %184, %188 : vector<32x128xf32>
    %190 = vector.extract_strided_slice %170 {offsets = [128, 0], sizes = [32, 64], strides = [1, 1]} : vector<288x64xf32> to vector<32x64xf32>
    %c4_89 = arith.constant 4 : index
    %c0_90 = arith.constant 0 : index
    %c0_91 = arith.constant 0 : index
    %191 = vector.load %arg9[%c4_89, %c0_90, %c0_91] : memref<9x64x128xf32, #tpu.memory_space<vmem>>, vector<1x64x128xf32>
    %192 = vector.shape_cast %191 : vector<1x64x128xf32> to vector<64x128xf32>
    %cst_92 = arith.constant dense<0.000000e+00> : vector<32x128xf32>
    %193 = tpu.matmul %190, %192, %cst_92 {dimension_numbers = #tpu.dot_dimension_numbers<[1], [0], [0], [1], [0, 0, 1, 1], [], []>} : vector<32x64xf32>, vector<64x128xf32>, vector<32x128xf32> -> vector<32x128xf32>
    %194 = arith.addf %189, %193 : vector<32x128xf32>
    %195 = vector.extract_strided_slice %170 {offsets = [160, 0], sizes = [32, 64], strides = [1, 1]} : vector<288x64xf32> to vector<32x64xf32>
    %c5_93 = arith.constant 5 : index
    %c0_94 = arith.constant 0 : index
    %c0_95 = arith.constant 0 : index
    %196 = vector.load %arg9[%c5_93, %c0_94, %c0_95] : memref<9x64x128xf32, #tpu.memory_space<vmem>>, vector<1x64x128xf32>
    %197 = vector.shape_cast %196 : vector<1x64x128xf32> to vector<64x128xf32>
    %cst_96 = arith.constant dense<0.000000e+00> : vector<32x128xf32>
    %198 = tpu.matmul %195, %197, %cst_96 {dimension_numbers = #tpu.dot_dimension_numbers<[1], [0], [0], [1], [0, 0, 1, 1], [], []>} : vector<32x64xf32>, vector<64x128xf32>, vector<32x128xf32> -> vector<32x128xf32>
    %199 = arith.addf %194, %198 : vector<32x128xf32>
    %200 = vector.extract_strided_slice %170 {offsets = [192, 0], sizes = [32, 64], strides = [1, 1]} : vector<288x64xf32> to vector<32x64xf32>
    %c6_97 = arith.constant 6 : index
    %c0_98 = arith.constant 0 : index
    %c0_99 = arith.constant 0 : index
    %201 = vector.load %arg9[%c6_97, %c0_98, %c0_99] : memref<9x64x128xf32, #tpu.memory_space<vmem>>, vector<1x64x128xf32>
    %202 = vector.shape_cast %201 : vector<1x64x128xf32> to vector<64x128xf32>
    %cst_100 = arith.constant dense<0.000000e+00> : vector<32x128xf32>
    %203 = tpu.matmul %200, %202, %cst_100 {dimension_numbers = #tpu.dot_dimension_numbers<[1], [0], [0], [1], [0, 0, 1, 1], [], []>} : vector<32x64xf32>, vector<64x128xf32>, vector<32x128xf32> -> vector<32x128xf32>
    %204 = arith.addf %199, %203 : vector<32x128xf32>
    %205 = vector.extract_strided_slice %170 {offsets = [224, 0], sizes = [32, 64], strides = [1, 1]} : vector<288x64xf32> to vector<32x64xf32>
    %c7_101 = arith.constant 7 : index
    %c0_102 = arith.constant 0 : index
    %c0_103 = arith.constant 0 : index
    %206 = vector.load %arg9[%c7_101, %c0_102, %c0_103] : memref<9x64x128xf32, #tpu.memory_space<vmem>>, vector<1x64x128xf32>
    %207 = vector.shape_cast %206 : vector<1x64x128xf32> to vector<64x128xf32>
    %cst_104 = arith.constant dense<0.000000e+00> : vector<32x128xf32>
    %208 = tpu.matmul %205, %207, %cst_104 {dimension_numbers = #tpu.dot_dimension_numbers<[1], [0], [0], [1], [0, 0, 1, 1], [], []>} : vector<32x64xf32>, vector<64x128xf32>, vector<32x128xf32> -> vector<32x128xf32>
    %209 = arith.addf %204, %208 : vector<32x128xf32>
    %210 = vector.extract_strided_slice %170 {offsets = [256, 0], sizes = [32, 64], strides = [1, 1]} : vector<288x64xf32> to vector<32x64xf32>
    %c8_105 = arith.constant 8 : index
    %c0_106 = arith.constant 0 : index
    %c0_107 = arith.constant 0 : index
    %211 = vector.load %arg9[%c8_105, %c0_106, %c0_107] : memref<9x64x128xf32, #tpu.memory_space<vmem>>, vector<1x64x128xf32>
    %212 = vector.shape_cast %211 : vector<1x64x128xf32> to vector<64x128xf32>
    %cst_108 = arith.constant dense<0.000000e+00> : vector<32x128xf32>
    %213 = tpu.matmul %210, %212, %cst_108 {dimension_numbers = #tpu.dot_dimension_numbers<[1], [0], [0], [1], [0, 0, 1, 1], [], []>} : vector<32x64xf32>, vector<64x128xf32>, vector<32x128xf32> -> vector<32x128xf32>
    %214 = arith.addf %209, %213 : vector<32x128xf32>
    %215 = vector.broadcast %161 : vector<1x128xf32> to vector<32x128xf32>
    %216 = arith.addf %214, %215 : vector<32x128xf32>
    %cst_109 = arith.constant 0.000000e+00 : f32
    %217 = vector.broadcast %cst_109 : f32 to vector<32x128xf32>
    %218 = arith.maximumf %216, %217 : vector<32x128xf32>
    %cst_110 = arith.constant dense<0.000000e+00> : vector<128xf32>
    %219 = vector.multi_reduction <add>, %218, %cst_110 [0] : vector<32x128xf32> to vector<128xf32>
    %220 = vector.shape_cast %219 : vector<128xf32> to vector<1x128xf32>
    %221 = arith.mulf %218, %218 : vector<32x128xf32>
    %cst_111 = arith.constant dense<0.000000e+00> : vector<128xf32>
    %222 = vector.multi_reduction <add>, %221, %cst_111 [0] : vector<32x128xf32> to vector<128xf32>
    %223 = vector.shape_cast %222 : vector<128xf32> to vector<1x128xf32>
    %cst_112 = arith.constant 3.125000e-02 : f32
    %224 = vector.broadcast %cst_112 : f32 to vector<1x128xf32>
    %225 = arith.mulf %220, %224 : vector<1x128xf32>
    %cst_113 = arith.constant 3.125000e-02 : f32
    %226 = vector.broadcast %cst_113 : f32 to vector<1x128xf32>
    %227 = arith.mulf %223, %226 : vector<1x128xf32>
    %228 = arith.mulf %225, %225 : vector<1x128xf32>
    %229 = arith.subf %227, %228 : vector<1x128xf32>
    %cst_114 = arith.constant 0.000000e+00 : f32
    %230 = vector.broadcast %cst_114 : f32 to vector<1x128xf32>
    %231 = arith.maximumf %229, %230 : vector<1x128xf32>
    %cst_115 = arith.constant 9.99999974E-6 : f32
    %232 = vector.broadcast %cst_115 : f32 to vector<1x128xf32>
    %233 = arith.addf %231, %232 : vector<1x128xf32>
    %234 = math.rsqrt %233 : vector<1x128xf32>
    %235 = arith.mulf %162, %234 : vector<1x128xf32>
    %236 = arith.mulf %225, %235 : vector<1x128xf32>
    %237 = arith.subf %163, %236 : vector<1x128xf32>
    %238 = vector.broadcast %235 : vector<1x128xf32> to vector<32x128xf32>
    %239 = arith.mulf %218, %238 : vector<32x128xf32>
    %240 = vector.broadcast %237 : vector<1x128xf32> to vector<32x128xf32>
    %241 = arith.addf %239, %240 : vector<32x128xf32>
    %c0_116 = arith.constant 0 : index
    %c0_117 = arith.constant 0 : index
    %242 = vector.load %arg13[%c0_116, %c0_117] : memref<288x32xbf16, #tpu.memory_space<vmem>>, vector<288x32xbf16>
    %243 = arith.extf %242 : vector<288x32xbf16> to vector<288x32xf32>
    %cst_118 = arith.constant dense<0.000000e+00> : vector<288x128xf32>
    %244 = tpu.matmul %243, %241, %cst_118 {dimension_numbers = #tpu.dot_dimension_numbers<[1], [0], [0], [1], [0, 0, 1, 1], [], []>} : vector<288x32xf32>, vector<32x128xf32>, vector<288x128xf32> -> vector<288x128xf32>
    %245 = vector.extract_strided_slice %244 {offsets = [0, 0], sizes = [32, 128], strides = [1, 1]} : vector<288x128xf32> to vector<32x128xf32>
    %c0_119 = arith.constant 0 : index
    %c0_120 = arith.constant 0 : index
    %c0_121 = arith.constant 0 : index
    %246 = vector.load %arg14[%c0_119, %c0_120, %c0_121] : memref<9x128x128xf32, #tpu.memory_space<vmem>>, vector<1x128x128xf32>
    %247 = vector.shape_cast %246 : vector<1x128x128xf32> to vector<128x128xf32>
    %cst_122 = arith.constant dense<0.000000e+00> : vector<32x128xf32>
    %248 = tpu.matmul %245, %247, %cst_122 {dimension_numbers = #tpu.dot_dimension_numbers<[1], [0], [0], [1], [0, 0, 1, 1], [], []>} : vector<32x128xf32>, vector<128x128xf32>, vector<32x128xf32> -> vector<32x128xf32>
    %249 = vector.extract_strided_slice %244 {offsets = [32, 0], sizes = [32, 128], strides = [1, 1]} : vector<288x128xf32> to vector<32x128xf32>
    %c1_123 = arith.constant 1 : index
    %c0_124 = arith.constant 0 : index
    %c0_125 = arith.constant 0 : index
    %250 = vector.load %arg14[%c1_123, %c0_124, %c0_125] : memref<9x128x128xf32, #tpu.memory_space<vmem>>, vector<1x128x128xf32>
    %251 = vector.shape_cast %250 : vector<1x128x128xf32> to vector<128x128xf32>
    %cst_126 = arith.constant dense<0.000000e+00> : vector<32x128xf32>
    %252 = tpu.matmul %249, %251, %cst_126 {dimension_numbers = #tpu.dot_dimension_numbers<[1], [0], [0], [1], [0, 0, 1, 1], [], []>} : vector<32x128xf32>, vector<128x128xf32>, vector<32x128xf32> -> vector<32x128xf32>
    %253 = arith.addf %248, %252 : vector<32x128xf32>
    %254 = vector.extract_strided_slice %244 {offsets = [64, 0], sizes = [32, 128], strides = [1, 1]} : vector<288x128xf32> to vector<32x128xf32>
    %c2_127 = arith.constant 2 : index
    %c0_128 = arith.constant 0 : index
    %c0_129 = arith.constant 0 : index
    %255 = vector.load %arg14[%c2_127, %c0_128, %c0_129] : memref<9x128x128xf32, #tpu.memory_space<vmem>>, vector<1x128x128xf32>
    %256 = vector.shape_cast %255 : vector<1x128x128xf32> to vector<128x128xf32>
    %cst_130 = arith.constant dense<0.000000e+00> : vector<32x128xf32>
    %257 = tpu.matmul %254, %256, %cst_130 {dimension_numbers = #tpu.dot_dimension_numbers<[1], [0], [0], [1], [0, 0, 1, 1], [], []>} : vector<32x128xf32>, vector<128x128xf32>, vector<32x128xf32> -> vector<32x128xf32>
    %258 = arith.addf %253, %257 : vector<32x128xf32>
    %259 = vector.extract_strided_slice %244 {offsets = [96, 0], sizes = [32, 128], strides = [1, 1]} : vector<288x128xf32> to vector<32x128xf32>
    %c3_131 = arith.constant 3 : index
    %c0_132 = arith.constant 0 : index
    %c0_133 = arith.constant 0 : index
    %260 = vector.load %arg14[%c3_131, %c0_132, %c0_133] : memref<9x128x128xf32, #tpu.memory_space<vmem>>, vector<1x128x128xf32>
    %261 = vector.shape_cast %260 : vector<1x128x128xf32> to vector<128x128xf32>
    %cst_134 = arith.constant dense<0.000000e+00> : vector<32x128xf32>
    %262 = tpu.matmul %259, %261, %cst_134 {dimension_numbers = #tpu.dot_dimension_numbers<[1], [0], [0], [1], [0, 0, 1, 1], [], []>} : vector<32x128xf32>, vector<128x128xf32>, vector<32x128xf32> -> vector<32x128xf32>
    %263 = arith.addf %258, %262 : vector<32x128xf32>
    %264 = vector.extract_strided_slice %244 {offsets = [128, 0], sizes = [32, 128], strides = [1, 1]} : vector<288x128xf32> to vector<32x128xf32>
    %c4_135 = arith.constant 4 : index
    %c0_136 = arith.constant 0 : index
    %c0_137 = arith.constant 0 : index
    %265 = vector.load %arg14[%c4_135, %c0_136, %c0_137] : memref<9x128x128xf32, #tpu.memory_space<vmem>>, vector<1x128x128xf32>
    %266 = vector.shape_cast %265 : vector<1x128x128xf32> to vector<128x128xf32>
    %cst_138 = arith.constant dense<0.000000e+00> : vector<32x128xf32>
    %267 = tpu.matmul %264, %266, %cst_138 {dimension_numbers = #tpu.dot_dimension_numbers<[1], [0], [0], [1], [0, 0, 1, 1], [], []>} : vector<32x128xf32>, vector<128x128xf32>, vector<32x128xf32> -> vector<32x128xf32>
    %268 = arith.addf %263, %267 : vector<32x128xf32>
    %269 = vector.extract_strided_slice %244 {offsets = [160, 0], sizes = [32, 128], strides = [1, 1]} : vector<288x128xf32> to vector<32x128xf32>
    %c5_139 = arith.constant 5 : index
    %c0_140 = arith.constant 0 : index
    %c0_141 = arith.constant 0 : index
    %270 = vector.load %arg14[%c5_139, %c0_140, %c0_141] : memref<9x128x128xf32, #tpu.memory_space<vmem>>, vector<1x128x128xf32>
    %271 = vector.shape_cast %270 : vector<1x128x128xf32> to vector<128x128xf32>
    %cst_142 = arith.constant dense<0.000000e+00> : vector<32x128xf32>
    %272 = tpu.matmul %269, %271, %cst_142 {dimension_numbers = #tpu.dot_dimension_numbers<[1], [0], [0], [1], [0, 0, 1, 1], [], []>} : vector<32x128xf32>, vector<128x128xf32>, vector<32x128xf32> -> vector<32x128xf32>
    %273 = arith.addf %268, %272 : vector<32x128xf32>
    %274 = vector.extract_strided_slice %244 {offsets = [192, 0], sizes = [32, 128], strides = [1, 1]} : vector<288x128xf32> to vector<32x128xf32>
    %c6_143 = arith.constant 6 : index
    %c0_144 = arith.constant 0 : index
    %c0_145 = arith.constant 0 : index
    %275 = vector.load %arg14[%c6_143, %c0_144, %c0_145] : memref<9x128x128xf32, #tpu.memory_space<vmem>>, vector<1x128x128xf32>
    %276 = vector.shape_cast %275 : vector<1x128x128xf32> to vector<128x128xf32>
    %cst_146 = arith.constant dense<0.000000e+00> : vector<32x128xf32>
    %277 = tpu.matmul %274, %276, %cst_146 {dimension_numbers = #tpu.dot_dimension_numbers<[1], [0], [0], [1], [0, 0, 1, 1], [], []>} : vector<32x128xf32>, vector<128x128xf32>, vector<32x128xf32> -> vector<32x128xf32>
    %278 = arith.addf %273, %277 : vector<32x128xf32>
    %279 = vector.extract_strided_slice %244 {offsets = [224, 0], sizes = [32, 128], strides = [1, 1]} : vector<288x128xf32> to vector<32x128xf32>
    %c7_147 = arith.constant 7 : index
    %c0_148 = arith.constant 0 : index
    %c0_149 = arith.constant 0 : index
    %280 = vector.load %arg14[%c7_147, %c0_148, %c0_149] : memref<9x128x128xf32, #tpu.memory_space<vmem>>, vector<1x128x128xf32>
    %281 = vector.shape_cast %280 : vector<1x128x128xf32> to vector<128x128xf32>
    %cst_150 = arith.constant dense<0.000000e+00> : vector<32x128xf32>
    %282 = tpu.matmul %279, %281, %cst_150 {dimension_numbers = #tpu.dot_dimension_numbers<[1], [0], [0], [1], [0, 0, 1, 1], [], []>} : vector<32x128xf32>, vector<128x128xf32>, vector<32x128xf32> -> vector<32x128xf32>
    %283 = arith.addf %278, %282 : vector<32x128xf32>
    %284 = vector.extract_strided_slice %244 {offsets = [256, 0], sizes = [32, 128], strides = [1, 1]} : vector<288x128xf32> to vector<32x128xf32>
    %c8_151 = arith.constant 8 : index
    %c0_152 = arith.constant 0 : index
    %c0_153 = arith.constant 0 : index
    %285 = vector.load %arg14[%c8_151, %c0_152, %c0_153] : memref<9x128x128xf32, #tpu.memory_space<vmem>>, vector<1x128x128xf32>
    %286 = vector.shape_cast %285 : vector<1x128x128xf32> to vector<128x128xf32>
    %cst_154 = arith.constant dense<0.000000e+00> : vector<32x128xf32>
    %287 = tpu.matmul %284, %286, %cst_154 {dimension_numbers = #tpu.dot_dimension_numbers<[1], [0], [0], [1], [0, 0, 1, 1], [], []>} : vector<32x128xf32>, vector<128x128xf32>, vector<32x128xf32> -> vector<32x128xf32>
    %288 = arith.addf %283, %287 : vector<32x128xf32>
    %c0_155 = arith.constant 0 : index
    %c0_156 = arith.constant 0 : index
    %289 = vector.load %arg11[%c0_155, %c0_156] : memref<32x128xbf16, #tpu.memory_space<vmem>>, vector<32x128xbf16>
    %290 = arith.extf %289 : vector<32x128xbf16> to vector<32x128xf32>
    %cst_157 = arith.constant dense<0.000000e+00> : vector<32x64xf32>
    %291 = tpu.matmul %290, %159, %cst_157 {dimension_numbers = #tpu.dot_dimension_numbers<[1], [0], [0], [1], [0, 0, 1, 1], [], []>} : vector<32x128xf32>, vector<128x64xf32>, vector<32x64xf32> -> vector<32x64xf32>
    %c0_158 = arith.constant 0 : index
    %c0_159 = arith.constant 0 : index
    %292 = vector.load %arg12[%c0_158, %c0_159] : memref<64x128xf32, #tpu.memory_space<vmem>>, vector<64x128xf32>
    %cst_160 = arith.constant dense<0.000000e+00> : vector<32x128xf32>
    %293 = tpu.matmul %291, %292, %cst_160 {dimension_numbers = #tpu.dot_dimension_numbers<[1], [0], [0], [1], [0, 0, 1, 1], [], []>} : vector<32x64xf32>, vector<64x128xf32>, vector<32x128xf32> -> vector<32x128xf32>
    %cst_161 = arith.constant dense<0.000000e+00> : vector<128xf32>
    %294 = vector.multi_reduction <add>, %288, %cst_161 [0] : vector<32x128xf32> to vector<128xf32>
    %295 = vector.shape_cast %294 : vector<128xf32> to vector<1x128xf32>
    %296 = arith.mulf %288, %288 : vector<32x128xf32>
    %cst_162 = arith.constant dense<0.000000e+00> : vector<128xf32>
    %297 = vector.multi_reduction <add>, %296, %cst_162 [0] : vector<32x128xf32> to vector<128xf32>
    %298 = vector.shape_cast %297 : vector<128xf32> to vector<1x128xf32>
    %cst_163 = arith.constant 3.125000e-02 : f32
    %299 = vector.broadcast %cst_163 : f32 to vector<1x128xf32>
    %300 = arith.mulf %295, %299 : vector<1x128xf32>
    %cst_164 = arith.constant 3.125000e-02 : f32
    %301 = vector.broadcast %cst_164 : f32 to vector<1x128xf32>
    %302 = arith.mulf %298, %301 : vector<1x128xf32>
    %303 = arith.mulf %300, %300 : vector<1x128xf32>
    %304 = arith.subf %302, %303 : vector<1x128xf32>
    %cst_165 = arith.constant 0.000000e+00 : f32
    %305 = vector.broadcast %cst_165 : f32 to vector<1x128xf32>
    %306 = arith.maximumf %304, %305 : vector<1x128xf32>
    %cst_166 = arith.constant 9.99999974E-6 : f32
    %307 = vector.broadcast %cst_166 : f32 to vector<1x128xf32>
    %308 = arith.addf %306, %307 : vector<1x128xf32>
    %309 = math.rsqrt %308 : vector<1x128xf32>
    %310 = arith.mulf %164, %309 : vector<1x128xf32>
    %cst_167 = arith.constant 0.000000e+00 : f32
    %311 = vector.broadcast %cst_167 : f32 to vector<1x128xf32>
    %312 = arith.subf %311, %300 : vector<1x128xf32>
    %313 = arith.mulf %312, %310 : vector<1x128xf32>
    %314 = vector.broadcast %310 : vector<1x128xf32> to vector<32x128xf32>
    %315 = arith.mulf %288, %314 : vector<32x128xf32>
    %316 = vector.broadcast %313 : vector<1x128xf32> to vector<32x128xf32>
    %317 = arith.addf %315, %316 : vector<32x128xf32>
    %cst_168 = arith.constant dense<0.000000e+00> : vector<128xf32>
    %318 = vector.multi_reduction <add>, %293, %cst_168 [0] : vector<32x128xf32> to vector<128xf32>
    %319 = vector.shape_cast %318 : vector<128xf32> to vector<1x128xf32>
    %320 = arith.mulf %293, %293 : vector<32x128xf32>
    %cst_169 = arith.constant dense<0.000000e+00> : vector<128xf32>
    %321 = vector.multi_reduction <add>, %320, %cst_169 [0] : vector<32x128xf32> to vector<128xf32>
    %322 = vector.shape_cast %321 : vector<128xf32> to vector<1x128xf32>
    %cst_170 = arith.constant 3.125000e-02 : f32
    %323 = vector.broadcast %cst_170 : f32 to vector<1x128xf32>
    %324 = arith.mulf %319, %323 : vector<1x128xf32>
    %cst_171 = arith.constant 3.125000e-02 : f32
    %325 = vector.broadcast %cst_171 : f32 to vector<1x128xf32>
    %326 = arith.mulf %322, %325 : vector<1x128xf32>
    %327 = arith.mulf %324, %324 : vector<1x128xf32>
    %328 = arith.subf %326, %327 : vector<1x128xf32>
    %cst_172 = arith.constant 0.000000e+00 : f32
    %329 = vector.broadcast %cst_172 : f32 to vector<1x128xf32>
    %330 = arith.maximumf %328, %329 : vector<1x128xf32>
    %cst_173 = arith.constant 9.99999974E-6 : f32
    %331 = vector.broadcast %cst_173 : f32 to vector<1x128xf32>
    %332 = arith.addf %330, %331 : vector<1x128xf32>
    %333 = math.rsqrt %332 : vector<1x128xf32>
    %334 = arith.mulf %165, %333 : vector<1x128xf32>
    %cst_174 = arith.constant 0.000000e+00 : f32
    %335 = vector.broadcast %cst_174 : f32 to vector<1x128xf32>
    %336 = arith.subf %335, %324 : vector<1x128xf32>
    %337 = arith.mulf %336, %334 : vector<1x128xf32>
    %338 = vector.broadcast %334 : vector<1x128xf32> to vector<32x128xf32>
    %339 = arith.mulf %293, %338 : vector<32x128xf32>
    %340 = vector.broadcast %337 : vector<1x128xf32> to vector<32x128xf32>
    %341 = arith.addf %339, %340 : vector<32x128xf32>
    %342 = arith.addf %317, %341 : vector<32x128xf32>
    %cst_175 = arith.constant dense<0.000000e+00> : vector<128xf32>
    %343 = vector.multi_reduction <add>, %342, %cst_175 [0] : vector<32x128xf32> to vector<128xf32>
    %344 = vector.shape_cast %343 : vector<128xf32> to vector<1x128xf32>
    %345 = arith.mulf %342, %342 : vector<32x128xf32>
    %cst_176 = arith.constant dense<0.000000e+00> : vector<128xf32>
    %346 = vector.multi_reduction <add>, %345, %cst_176 [0] : vector<32x128xf32> to vector<128xf32>
    %347 = vector.shape_cast %346 : vector<128xf32> to vector<1x128xf32>
    %cst_177 = arith.constant 3.125000e-02 : f32
    %348 = vector.broadcast %cst_177 : f32 to vector<1x128xf32>
    %349 = arith.mulf %344, %348 : vector<1x128xf32>
    %cst_178 = arith.constant 3.125000e-02 : f32
    %350 = vector.broadcast %cst_178 : f32 to vector<1x128xf32>
    %351 = arith.mulf %347, %350 : vector<1x128xf32>
    %352 = arith.mulf %349, %349 : vector<1x128xf32>
    %353 = arith.subf %351, %352 : vector<1x128xf32>
    %cst_179 = arith.constant 0.000000e+00 : f32
    %354 = vector.broadcast %cst_179 : f32 to vector<1x128xf32>
    %355 = arith.maximumf %353, %354 : vector<1x128xf32>
    %cst_180 = arith.constant 9.99999974E-6 : f32
    %356 = vector.broadcast %cst_180 : f32 to vector<1x128xf32>
    %357 = arith.addf %355, %356 : vector<1x128xf32>
    %358 = math.rsqrt %357 : vector<1x128xf32>
    %359 = arith.mulf %166, %358 : vector<1x128xf32>
    %360 = arith.mulf %349, %359 : vector<1x128xf32>
    %361 = arith.subf %167, %360 : vector<1x128xf32>
    %362 = vector.broadcast %359 : vector<1x128xf32> to vector<32x128xf32>
    %363 = arith.mulf %342, %362 : vector<32x128xf32>
    %364 = vector.broadcast %361 : vector<1x128xf32> to vector<32x128xf32>
    %365 = arith.addf %363, %364 : vector<32x128xf32>
    %c0_181 = arith.constant 0 : index
    %c0_182 = arith.constant 0 : index
    %366 = vector.load %arg15[%c0_181, %c0_182] : memref<2x32xf32, #tpu.memory_space<vmem>>, vector<2x32xf32>
    %cst_183 = arith.constant dense<0.000000e+00> : vector<2x128xf32>
    %367 = tpu.matmul %366, %365, %cst_183 {dimension_numbers = #tpu.dot_dimension_numbers<[1], [0], [0], [1], [0, 0, 1, 1], [], []>} : vector<2x32xf32>, vector<32x128xf32>, vector<2x128xf32> -> vector<2x128xf32>
    %c0_184 = arith.constant 0 : index
    %c0_185 = arith.constant 0 : index
    %368 = vector.load %arg16[%c0_184, %c0_185] : memref<128x10xf32, #tpu.memory_space<vmem>>, vector<128x10xf32>
    %cst_186 = arith.constant dense<0.000000e+00> : vector<2x10xf32>
    %369 = tpu.matmul %367, %368, %cst_186 {dimension_numbers = #tpu.dot_dimension_numbers<[1], [0], [0], [1], [0, 0, 1, 1], [], []>} : vector<2x128xf32>, vector<128x10xf32>, vector<2x10xf32> -> vector<2x10xf32>
    %c0_187 = arith.constant 0 : index
    %c0_188 = arith.constant 0 : index
    %370 = vector.load %arg17[%c0_187, %c0_188] : memref<1x10xf32, #tpu.memory_space<vmem>>, vector<1x10xf32>
    %371 = vector.broadcast %370 : vector<1x10xf32> to vector<2x10xf32>
    %372 = arith.addf %369, %371 : vector<2x10xf32>
    %c0_189 = arith.constant 0 : index
    %c0_190 = arith.constant 0 : index
    %373 = vector.load %arg18[%c0_189, %c0_190] : memref<2x10xf32, #tpu.memory_space<vmem>>, vector<2x10xf32>
    tpu.vector_store %arg18[%c0_189, %c0_190], %372 {strides = array<i32>} : memref<2x10xf32, #tpu.memory_space<vmem>>, vector<2x10xf32>,
    return
  }
  func.func @transform_0(%arg0: i32) -> (i32, i32) {
    %c0_i32 = arith.constant 0 : i32
    %c0_i32_0 = arith.constant 0 : i32
    %c0_i32_1 = arith.constant 0 : i32
    return %c0_i32, %c0_i32_0 : i32, i32
  }
  func.func @transform_1(%arg0: i32) -> (i32, i32) {
    %c0_i32 = arith.constant 0 : i32
    %c0_i32_0 = arith.constant 0 : i32
    %c0_i32_1 = arith.constant 0 : i32
    return %c0_i32, %c0_i32_0 : i32, i32
  }
  func.func @transform_2(%arg0: i32) -> (i32, i32) {
    %c0_i32 = arith.constant 0 : i32
    %c0_i32_0 = arith.constant 0 : i32
    %c0_i32_1 = arith.constant 0 : i32
    return %c0_i32, %c0_i32_0 : i32, i32
  }
  func.func @transform_3(%arg0: i32) -> (i32, i32) {
    %c0_i32 = arith.constant 0 : i32
    %c0_i32_0 = arith.constant 0 : i32
    %c0_i32_1 = arith.constant 0 : i32
    return %c0_i32, %c0_i32_0 : i32, i32
  }
  func.func @transform_4(%arg0: i32) -> (i32, i32) {
    %c0_i32 = arith.constant 0 : i32
    %c0_i32_0 = arith.constant 0 : i32
    %c0_i32_1 = arith.constant 0 : i32
    return %c0_i32, %c0_i32_0 : i32, i32
  }
  func.func @transform_5(%arg0: i32) -> (i32, i32) {
    %c0_i32 = arith.constant 0 : i32
    %c0_i32_0 = arith.constant 0 : i32
    %c0_i32_1 = arith.constant 0 : i32
    return %c0_i32, %c0_i32_0 : i32, i32
  }
  func.func @transform_6(%arg0: i32) -> (i32, i32, i32) {
    %c0_i32 = arith.constant 0 : i32
    %c0_i32_0 = arith.constant 0 : i32
    %c0_i32_1 = arith.constant 0 : i32
    %c0_i32_2 = arith.constant 0 : i32
    return %c0_i32, %c0_i32_0, %c0_i32_1 : i32, i32, i32
  }
  func.func @transform_7(%arg0: i32) -> (i32, i32) {
    %c0_i32 = arith.constant 0 : i32
    %c0_i32_0 = arith.constant 0 : i32
    %c0_i32_1 = arith.constant 0 : i32
    return %c0_i32, %c0_i32_0 : i32, i32
  }
  func.func @transform_8(%arg0: i32) -> (i32, i32, i32) {
    %c0_i32 = arith.constant 0 : i32
    %c0_i32_0 = arith.constant 0 : i32
    %c0_i32_1 = arith.constant 0 : i32
    %c0_i32_2 = arith.constant 0 : i32
    return %c0_i32, %c0_i32_0, %c0_i32_1 : i32, i32, i32
  }
  func.func @transform_9(%arg0: i32) -> (i32, i32) {
    %c0_i32 = arith.constant 0 : i32
    %c0_i32_0 = arith.constant 0 : i32
    %c0_i32_1 = arith.constant 0 : i32
    return %c0_i32, %c0_i32_0 : i32, i32
  }
  func.func @transform_10(%arg0: i32) -> (i32, i32) {
    %c0_i32 = arith.constant 0 : i32
    %c0_i32_0 = arith.constant 0 : i32
    %c0_i32_1 = arith.constant 0 : i32
    return %c0_i32, %c0_i32_0 : i32, i32
  }
  func.func @transform_11(%arg0: i32) -> (i32, i32) {
    %c0_i32 = arith.constant 0 : i32
    %c0_i32_0 = arith.constant 0 : i32
    %c0_i32_1 = arith.constant 0 : i32
    return %c0_i32, %c0_i32_0 : i32, i32
  }
  func.func @transform_12(%arg0: i32) -> (i32, i32) {
    %c0_i32 = arith.constant 0 : i32
    %c0_i32_0 = arith.constant 0 : i32
    %c0_i32_1 = arith.constant 0 : i32
    return %c0_i32, %c0_i32_0 : i32, i32
  }
  func.func @transform_13(%arg0: i32) -> (i32, i32, i32) {
    %c0_i32 = arith.constant 0 : i32
    %c0_i32_0 = arith.constant 0 : i32
    %c0_i32_1 = arith.constant 0 : i32
    %c0_i32_2 = arith.constant 0 : i32
    return %c0_i32, %c0_i32_0, %c0_i32_1 : i32, i32, i32
  }
  func.func @transform_14(%arg0: i32) -> (i32, i32) {
    %c0_i32 = arith.constant 0 : i32
    %c0_i32_0 = arith.constant 0 : i32
    %c0_i32_1 = arith.constant 0 : i32
    return %c0_i32, %c0_i32_0 : i32, i32
  }
  func.func @transform_15(%arg0: i32) -> (i32, i32) {
    %c0_i32 = arith.constant 0 : i32
    %c0_i32_0 = arith.constant 0 : i32
    %c0_i32_1 = arith.constant 0 : i32
    return %c0_i32, %c0_i32_0 : i32, i32
  }
  func.func @transform_16(%arg0: i32) -> (i32, i32) {
    %c0_i32 = arith.constant 0 : i32
    %c0_i32_0 = arith.constant 0 : i32
    %c0_i32_1 = arith.constant 0 : i32
    return %c0_i32, %c0_i32_0 : i32, i32
  }
  func.func @transform_17(%arg0: i32) -> (i32, i32) {
    %c0_i32 = arith.constant 0 : i32
    %c0_i32_0 = arith.constant 0 : i32
    %c0_i32_1 = arith.constant 0 : i32
    return %c0_i32, %c0_i32_0 : i32, i32
  }
}

</mosaic_0001>

<llo_original>
// kernel: tiny_resnet_forward.1
$region0: #{tiny_resnet_forward.1}
  #allocation0 [shape = 'u32[]', space=smem, size = 0x4, offset = 0x4, fixed_abs, tag = 'smem constant byte address 0x4 - core index']
  #allocation1 [shape = 'u32[144,128]{1,0:T(1,128)}', space=vmem, size = 0x12000, scoped, tag = 'internal scratch']
  %s0 = inlined_call_operand.vmem [shape: f32[128,9], index: 0, kind: input, shape index: {}]
  %s1 = inlined_call_operand.vmem [shape: f32[128,1], index: 1, kind: input, shape index: {}]
  %s2 = inlined_call_operand.vmem [shape: f32[9,64], index: 2, kind: input, shape index: {}]
  %s3 = inlined_call_operand.hbm [shape: f32[1,64], index: 3, kind: input, shape index: {}]
  %s4 = inlined_call_operand.vmem [shape: f32[8,64], index: 4, kind: input, shape index: {}]
  %s5 = inlined_call_operand.hbm [shape: bf16[1152,128], index: 5, kind: input, shape index: {}]
  %s6 = inlined_call_operand.hbm [shape: f32[9,64,64], index: 6, kind: input, shape index: {}]
  %s7 = inlined_call_operand.vmem [shape: bf16[288,128], index: 7, kind: input, shape index: {}]
  %s8 = inlined_call_operand.hbm [shape: f32[9,64,128], index: 8, kind: input, shape index: {}]
  %s9 = inlined_call_operand.vmem [shape: f32[8,128], index: 9, kind: input, shape index: {}]
  %s10 = inlined_call_operand.vmem [shape: bf16[32,128], index: 10, kind: input, shape index: {}]
  %s11 = inlined_call_operand.hbm [shape: f32[64,128], index: 11, kind: input, shape index: {}]
  %s12 = inlined_call_operand.vmem [shape: bf16[288,32], index: 12, kind: input, shape index: {}]
  %s13 = inlined_call_operand.vmem [shape: f32[9,128,128], index: 13, kind: input, shape index: {}]
  %s14 = inlined_call_operand.vmem [shape: f32[2,32], index: 14, kind: input, shape index: {}]
  %s15 = inlined_call_operand.vmem [shape: f32[128,10], index: 15, kind: input, shape index: {}]
  %s16 = inlined_call_operand.hbm [shape: f32[1,10], index: 16, kind: input, shape index: {}]
  %s17 = inlined_call_operand.hbm [shape: f32[2,10], index: 17, kind: output, shape index: {}]
  %s18 = sld [smem:[#allocation0]]
  $region102: #{tiny_resnet_forward.1} parent=0
    _
  %s20 = ssub.s32 1, %s18
  %s21 = scalar_select 0, %s20, %s18
  $region1: #{tiny_resnet_forward.1} parent=0
    #allocation2 [shape = 'u8[512]{0}', space=vmem, size = 0x400, scoped, tag = 'input window, operand 3, single buffered']
    #allocation3 [shape = 's32[1]{0}', space=sflag, size = 0x4, scoped, tag = 'scoped memory for tiny_resnet_forward.1']
    #allocation4 [shape = 's32[1]{0}', space=sflag, size = 0x4, scoped, tag = 'scoped memory for tiny_resnet_forward.1']
    #allocation5 [shape = 'u8[294912]{0}', space=vmem, size = 0x48000, scoped, tag = 'input window, operand 5, single buffered']
    #allocation6 [shape = 's32[1]{0}', space=sflag, size = 0x4, scoped, tag = 'scoped memory for tiny_resnet_forward.1']
    #allocation7 [shape = 'u8[294912]{0}', space=vmem, size = 0x48000, scoped, tag = 'input window, operand 6, single buffered']
    #allocation8 [shape = 'u8[294912]{0}', space=vmem, size = 0x48000, scoped, tag = 'input window, operand 8, single buffered']
    #allocation9 [shape = 's32[1]{0}', space=sflag, size = 0x4, scoped, tag = 'scoped memory for tiny_resnet_forward.1']
    #allocation10 [shape = 'u8[32768]{0}', space=vmem, size = 0x8000, scoped, tag = 'input window, operand 11, single buffered']
    #allocation11 [shape = 'u8[512]{0}', space=vmem, size = 0x400, scoped, tag = 'input window, operand 16, single buffered']
    #allocation12 [shape = 's32[1]{0}', space=sflag, size = 0x4, scoped, tag = 'scoped memory for tiny_resnet_forward.1']
    #allocation13 [shape = 'u8[1024]{0}', space=vmem, size = 0x400, scoped, tag = 'output window, operand 0, single buffered']
    %22 = vsyncpa [#allocation3], 0
    %23 = vsyncpa [#allocation6], 0
    %24 = vsyncpa [#allocation9], 0
    %25 = vsyncpa [#allocation12], 0
    %26 = vsyncpa [#allocation4], 0
    // Predicated region
    $region2: #{tiny_resnet_forward.1} parent=1 // pred_check
      _
    $region3: #{tiny_resnet_forward.1} parent=1 // pred_check_branch
      %28 = sbr.rel (0) target = $region5
    $region4: #{tiny_resnet_forward.1} parent=1 // pred_region
      _
    $region5: #{tiny_resnet_forward.1} parent=1 // pred_fallthru
      _
    // Predicated region
    $region6: #{tiny_resnet_forward.1} parent=1 // pred_check
      _
    $region7: #{tiny_resnet_forward.1} parent=1 // pred_check_branch
      %30 = sbr.rel (0) target = $region9
    $region8: #{tiny_resnet_forward.1} parent=1 // pred_region
      _
    $region9: #{tiny_resnet_forward.1} parent=1 // pred_fallthru
      _
    // Predicated region
    $region10: #{tiny_resnet_forward.1} parent=1 // pred_check
      _
    $region11: #{tiny_resnet_forward.1} parent=1 // pred_check_branch
      %32 = sbr.rel (0) target = $region13
    $region12: #{tiny_resnet_forward.1} parent=1 // pred_region
      _
    $region13: #{tiny_resnet_forward.1} parent=1 // pred_fallthru
      _
    // Predicated region
    $region14: #{tiny_resnet_forward.1} parent=1 // pred_check
      _
    $region15: #{tiny_resnet_forward.1} parent=1 // pred_check_branch
      %34 = sbr.rel (0) target = $region17
    $region16: #{tiny_resnet_forward.1} parent=1 // pred_region
      %s36 = ssub.s32 16, 16
      %37 = vsyncadd [#allocation3], %s36
      %s39 = sshll.u32 [#allocation2], 4
      %s40 = int_to_ptr.vmem [resolvable:$true] %s39
      %42 = dma.hbm_to_vmem [thread:$0]  %s3, 16, %s40, [#allocation3]
    $region17: #{tiny_resnet_forward.1} parent=1 // pred_fallthru
      _
    // Predicated region
    $region18: #{tiny_resnet_forward.1} parent=1 // pred_check
      _
    $region19: #{tiny_resnet_forward.1} parent=1 // pred_check_branch
      %44 = sbr.rel (0) target = $region21
    $region20: #{tiny_resnet_forward.1} parent=1 // pred_region
      _
    $region21: #{tiny_resnet_forward.1} parent=1 // pred_fallthru
      _
    // Predicated region
    $region22: #{tiny_resnet_forward.1} parent=1 // pred_check
      _
    $region23: #{tiny_resnet_forward.1} parent=1 // pred_check_branch
      %46 = sbr.rel (0) target = $region25
    $region24: #{tiny_resnet_forward.1} parent=1 // pred_region
      %s48 = ssub.s32 9216, 9216
      %49 = vsyncadd [#allocation6], %s48
      %s50 = sshll.u32 [#allocation5], 4
      %s51 = int_to_ptr.vmem [resolvable:$true] %s50
      %56 = dma.hbm_to_vmem [thread:$0]  %s5, 9216, %s51, [#allocation6], 64, 64, 4
    $region25: #{tiny_resnet_forward.1} parent=1 // pred_fallthru
      _
    // Predicated region
    $region26: #{tiny_resnet_forward.1} parent=1 // pred_check
      _
    $region27: #{tiny_resnet_forward.1} parent=1 // pred_check_branch
      %58 = sbr.rel (0) target = $region29
    $region28: #{tiny_resnet_forward.1} parent=1 // pred_region
      %s60 = ssub.s32 9216, 9216
      %61 = vsyncadd [#allocation6], %s60
      %s62 = sshll.u32 [#allocation7], 4
      %s63 = int_to_ptr.vmem [resolvable:$true] %s62
      %68 = dma.hbm_to_vmem [thread:$0]  %s6, 9216, %s63, [#allocation6], 128, 128, 8
    $region29: #{tiny_resnet_forward.1} parent=1 // pred_fallthru
      _
    // Predicated region
    $region30: #{tiny_resnet_forward.1} parent=1 // pred_check
      _
    $region31: #{tiny_resnet_forward.1} parent=1 // pred_check_branch
      %70 = sbr.rel (0) target = $region33
    $region32: #{tiny_resnet_forward.1} parent=1 // pred_region
      _
    $region33: #{tiny_resnet_forward.1} parent=1 // pred_fallthru
      _
    // Predicated region
    $region34: #{tiny_resnet_forward.1} parent=1 // pred_check
      _
    $region35: #{tiny_resnet_forward.1} parent=1 // pred_check_branch
      %72 = sbr.rel (0) target = $region37
    $region36: #{tiny_resnet_forward.1} parent=1 // pred_region
      %s74 = ssub.s32 9216, 9216
      %75 = vsyncadd [#allocation9], %s74
      %s76 = sshll.u32 [#allocation8], 4
      %s77 = int_to_ptr.vmem [resolvable:$true] %s76
      %82 = dma.hbm_to_vmem [thread:$0]  %s8, 9216, %s77, [#allocation9], 128, 128, 8
    $region37: #{tiny_resnet_forward.1} parent=1 // pred_fallthru
      _
    // Predicated region
    $region38: #{tiny_resnet_forward.1} parent=1 // pred_check
      _
    $region39: #{tiny_resnet_forward.1} parent=1 // pred_check_branch
      %84 = sbr.rel (0) target = $region41
    $region40: #{tiny_resnet_forward.1} parent=1 // pred_region
      _
    $region41: #{tiny_resnet_forward.1} parent=1 // pred_fallthru
      _
    // Predicated region
    $region42: #{tiny_resnet_forward.1} parent=1 // pred_check
      _
    $region43: #{tiny_resnet_forward.1} parent=1 // pred_check_branch
      %86 = sbr.rel (0) target = $region45
    $region44: #{tiny_resnet_forward.1} parent=1 // pred_region
      _
    $region45: #{tiny_resnet_forward.1} parent=1 // pred_fallthru
      _
    // Predicated region
    $region46: #{tiny_resnet_forward.1} parent=1 // pred_check
      _
    $region47: #{tiny_resnet_forward.1} parent=1 // pred_check_branch
      %88 = sbr.rel (0) target = $region49
    $region48: #{tiny_resnet_forward.1} parent=1 // pred_region
      %s90 = ssub.s32 1024, 1024
      %91 = vsyncadd [#allocation9], %s90
      %s92 = sshll.u32 [#allocation10], 4
      %s93 = int_to_ptr.vmem [resolvable:$true] %s92
      %98 = dma.hbm_to_vmem [thread:$0]  %s11, 1024, %s93, [#allocation9], 128, 128, 8
    $region49: #{tiny_resnet_forward.1} parent=1 // pred_fallthru
      _
    // Predicated region
    $region50: #{tiny_resnet_forward.1} parent=1 // pred_check
      _
    $region51: #{tiny_resnet_forward.1} parent=1 // pred_check_branch
      %100 = sbr.rel (0) target = $region53
    $region52: #{tiny_resnet_forward.1} parent=1 // pred_region
      _
    $region53: #{tiny_resnet_forward.1} parent=1 // pred_fallthru
      _
    // Predicated region
    $region54: #{tiny_resnet_forward.1} parent=1 // pred_check
      _
    $region55: #{tiny_resnet_forward.1} parent=1 // pred_check_branch
      %102 = sbr.rel (0) target = $region57
    $region56: #{tiny_resnet_forward.1} parent=1 // pred_region
      _
    $region57: #{tiny_resnet_forward.1} parent=1 // pred_fallthru
      _
    // Predicated region
    $region58: #{tiny_resnet_forward.1} parent=1 // pred_check
      _
    $region59: #{tiny_resnet_forward.1} parent=1 // pred_check_branch
      %104 = sbr.rel (0) target = $region61
    $region60: #{tiny_resnet_forward.1} parent=1 // pred_region
      _
    $region61: #{tiny_resnet_forward.1} parent=1 // pred_fallthru
      _
    // Predicated region
    $region62: #{tiny_resnet_forward.1} parent=1 // pred_check
      _
    $region63: #{tiny_resnet_forward.1} parent=1 // pred_check_branch
      %106 = sbr.rel (0) target = $region65
    $region64: #{tiny_resnet_forward.1} parent=1 // pred_region
      _
    $region65: #{tiny_resnet_forward.1} parent=1 // pred_fallthru
      _
    // Predicated region
    $region66: #{tiny_resnet_forward.1} parent=1 // pred_check
      _
    $region67: #{tiny_resnet_forward.1} parent=1 // pred_check_branch
      %108 = sbr.rel (0) target = $region69
    $region68: #{tiny_resnet_forward.1} parent=1 // pred_region
      %s110 = ssub.s32 16, 16
      %111 = vsyncadd [#allocation12], %s110
      %s113 = sshll.u32 [#allocation11], 4
      %s114 = int_to_ptr.vmem [resolvable:$true] %s113
      %116 = dma.hbm_to_vmem [thread:$0]  %s16, 16, %s114, [#allocation12]
    $region69: #{tiny_resnet_forward.1} parent=1 // pred_fallthru
      _
    // Predicated region
    $region70: #{tiny_resnet_forward.1} parent=1 // pred_check
      _
    $region71: #{tiny_resnet_forward.1} parent=1 // pred_check_branch
      %118 = sbr.rel (0) target = $region73
    $region72: #{tiny_resnet_forward.1} parent=1 // pred_region
      %119 = dma.done [#allocation3], 16
    $region73: #{tiny_resnet_forward.1} parent=1 // pred_fallthru
      _
    // Predicated region
    $region74: #{tiny_resnet_forward.1} parent=1 // pred_check
      _
    $region75: #{tiny_resnet_forward.1} parent=1 // pred_check_branch
      %121 = sbr.rel (0) target = $region77
    $region76: #{tiny_resnet_forward.1} parent=1 // pred_region
      %122 = dma.done [#allocation6], 9216
    $region77: #{tiny_resnet_forward.1} parent=1 // pred_fallthru
      _
    // Predicated region
    $region78: #{tiny_resnet_forward.1} parent=1 // pred_check
      _
    $region79: #{tiny_resnet_forward.1} parent=1 // pred_check_branch
      %124 = sbr.rel (0) target = $region81
    $region80: #{tiny_resnet_forward.1} parent=1 // pred_region
      %125 = dma.done [#allocation6], 9216
    $region81: #{tiny_resnet_forward.1} parent=1 // pred_fallthru
      _
    // Predicated region
    $region82: #{tiny_resnet_forward.1} parent=1 // pred_check
      _
    $region83: #{tiny_resnet_forward.1} parent=1 // pred_check_branch
      %127 = sbr.rel (0) target = $region85
    $region84: #{tiny_resnet_forward.1} parent=1 // pred_region
      %128 = dma.done [#allocation9], 9216
    $region85: #{tiny_resnet_forward.1} parent=1 // pred_fallthru
      _
    // Predicated region
    $region86: #{tiny_resnet_forward.1} parent=1 // pred_check
      _
    $region87: #{tiny_resnet_forward.1} parent=1 // pred_check_branch
      %130 = sbr.rel (0) target = $region89
    $region88: #{tiny_resnet_forward.1} parent=1 // pred_region
      %131 = dma.done [#allocation9], 1024
    $region89: #{tiny_resnet_forward.1} parent=1 // pred_fallthru
      _
    // Predicated region
    $region90: #{tiny_resnet_forward.1} parent=1 // pred_check
      _
    $region91: #{tiny_resnet_forward.1} parent=1 // pred_check_branch
      %133 = sbr.rel (0) target = $region93
    $region92: #{tiny_resnet_forward.1} parent=1 // pred_region
      %134 = dma.done [#allocation12], 16
    $region93: #{tiny_resnet_forward.1} parent=1 // pred_fallthru
      _
    %v135 = vld [vmem:[%s4] sm:$0xff]
    %v136 = vld [vmem:[%s0] sm:$0xff]
    %v137 = vld [vmem:[%s0 + $0x8] sm:$0xff]
    %v138 = vld [vmem:[%s0 + $0x10] sm:$0xff]
    %v139 = vld [vmem:[%s0 + $0x18] sm:$0xff]
    %v140 = vld [vmem:[%s0 + $0x20] sm:$0xff]
    %v141 = vld [vmem:[%s0 + $0x28] sm:$0xff]
    %v142 = vld [vmem:[%s0 + $0x30] sm:$0xff]
    %v143 = vld [vmem:[%s0 + $0x38] sm:$0xff]
    %v144 = vld [vmem:[%s0 + $0x40] sm:$0xff]
    %v145 = vld [vmem:[%s0 + $0x48] sm:$0xff]
    %v146 = vld [vmem:[%s0 + $0x50] sm:$0xff]
    %v147 = vld [vmem:[%s0 + $0x58] sm:$0xff]
    %v148 = vld [vmem:[%s0 + $0x60] sm:$0xff]
    %v149 = vld [vmem:[%s0 + $0x68] sm:$0xff]
    %v150 = vld [vmem:[%s0 + $0x70] sm:$0xff]
    %v151 = vld [vmem:[%s0 + $0x78] sm:$0xff]
    %v152 = vld [vmem:[%s2] sm:$0xff]
    %v153 = vld [vmem:[%s2 + $0x8] sm:$0x1]
    %v154 = vlaneseq
    %v155 = vshrl.u32 %v154, 7
    %v156 = vsub.s32 0, %v155
    %v157 = vrot.slane %v135, %v156
    %vm158 = vcmask 72704
    %v160 = vsel %vm158, %v136, 0
    %v163 = vsel %vm158, %v137, 0
    %v166 = vsel %vm158, %v138, 0
    %v169 = vsel %vm158, %v139, 0
    %v172 = vsel %vm158, %v140, 0
    %v175 = vsel %vm158, %v141, 0
    %v178 = vsel %vm158, %v142, 0
    %v181 = vsel %vm158, %v143, 0
    %v184 = vsel %vm158, %v144, 0
    %v187 = vsel %vm158, %v145, 0
    %v190 = vsel %vm158, %v146, 0
    %v193 = vsel %vm158, %v147, 0
    %v196 = vsel %vm158, %v148, 0
    %v199 = vsel %vm158, %v149, 0
    %v202 = vsel %vm158, %v150, 0
    %v205 = vsel %vm158, %v151, 0
    %vm207 = vcmask 1040384
    %v209 = vsel %vm207, %v153, 0
    %211 = vmatprep.subr.mxu0 0.0
    %212 = vmatpush1.msra.mxu0 %v152
    %213 = vmatprep.subr.mxu0 0.0
    %214 = vmatpush1.msra.mxu0 %v209
    %215 = vmatprep.subr.mxu0 0.0
    %216 = vmatpush1.msra.mxu0 0.0
    %217 = vmatprep.subr.mxu0 0.0
    %218 = vmatpush1.msra.mxu0 0.0
    %219 = vmatprep.subr.mxu0 0.0
    %220 = vmatpush1.msra.mxu0 0.0
    %221 = vmatprep.subr.mxu0 0.0
    %222 = vmatpush1.msra.mxu0 0.0
    %223 = vmatprep.subr.mxu0 0.0
    %224 = vmatpush1.msra.mxu0 0.0
    %225 = vmatprep.subr.mxu0 0.0
    %226 = vmatpush1.msra.mxu0 0.0
    %227 = vmatprep.subr.mxu0 0.0
    %228 = vmatpush1.msra.mxu0 0.0
    %229 = vmatprep.subr.mxu0 0.0
    %230 = vmatpush1.msra.mxu0 0.0
    %231 = vmatprep.subr.mxu0 0.0
    %232 = vmatpush1.msra.mxu0 0.0
    %233 = vmatprep.subr.mxu0 0.0
    %234 = vmatpush1.msra.mxu0 0.0
    %235 = vmatprep.subr.mxu0 0.0
    %236 = vmatpush1.msra.mxu0 0.0
    %237 = vmatprep.subr.mxu0 0.0
    %238 = vmatpush1.msra.mxu0 0.0
    %239 = vmatprep.subr.mxu0 0.0
    %240 = vmatpush1.msra.mxu0 0.0
    %241 = vmatprep.subr.mxu0 0.0
    %242 = vmatpush1.msra.mxu0 0.0
    %243 = vmatprep.subr.mxu0 0.0
    %244 = vmatpush1.msra.mxu0 0.0
    %245 = vmatprep.subr.mxu0 0.0
    %246 = vmatpush1.msra.mxu0 0.0
    %247 = vmatprep.subr.mxu0 0.0
    %248 = vmatpush1.msra.mxu0 0.0
    %249 = vmatprep.subr.mxu0 0.0
    %250 = vmatpush1.msra.mxu0 0.0
    %251 = vmatprep.subr.mxu0 0.0
    %252 = vmatpush1.msra.mxu0 0.0
    %253 = vmatprep.subr.mxu0 0.0
    %254 = vmatpush1.msra.mxu0 0.0
    %255 = vmatprep.subr.mxu0 0.0
    %256 = vmatpush1.msra.mxu0 0.0
    %257 = vmatprep.subr.mxu0 0.0
    %258 = vmatpush1.msra.mxu0 0.0
    %259 = vmatprep.subr.mxu0 0.0
    %260 = vmatpush1.msra.mxu0 0.0
    %261 = vmatprep.subr.mxu0 0.0
    %262 = vmatpush1.msra.mxu0 0.0
    %263 = vmatprep.subr.mxu0 0.0
    %264 = vmatpush1.msra.mxu0 0.0
    %265 = vmatprep.subr.mxu0 0.0
    %266 = vmatpush1.msra.mxu0 0.0
    %267 = vmatprep.subr.mxu0 0.0
    %268 = vmatpush1.msra.mxu0 0.0
    %269 = vmatprep.subr.mxu0 0.0
    %270 = vmatpush1.msra.mxu0 0.0
    %271 = vmatprep.subr.mxu0 0.0
    %272 = vmatpush1.msra.mxu0 0.0
    %273 = vmatprep.subr.mxu0 0.0
    %274 = vmatpush1.msra.mxu0 0.0
    %275 = vmatprep.mubr.f32.mxu0 0.0
    %276 = vmatmul.mubr.f32.gmra.mrb[0].mxu0 %v160
    %v277 = vpop.f32.mrb[0].mxu0
    %v278 = vadd.f32 %v157, %v277
    %v279 = vpop.f32.mrb[0].mxu0
    %280 = vmatprep.mubr.f32.mxu0 0.0
    %281 = vmatmul.mubr.f32.gmra.mrb[0].mxu0 %v163
    %v282 = vpop.f32.mrb[0].mxu0
    %v283 = vadd.f32 %v157, %v282
    %v284 = vpop.f32.mrb[0].mxu0
    %285 = vmatprep.mubr.f32.mxu0 0.0
    %286 = vmatmul.mubr.f32.gmra.mrb[0].mxu0 %v166
    %v287 = vpop.f32.mrb[0].mxu0
    %v288 = vadd.f32 %v157, %v287
    %v289 = vpop.f32.mrb[0].mxu0
    %290 = vmatprep.mubr.f32.mxu0 0.0
    %291 = vmatmul.mubr.f32.gmra.mrb[0].mxu0 %v169
    %v292 = vpop.f32.mrb[0].mxu0
    %v293 = vadd.f32 %v157, %v292
    %v294 = vpop.f32.mrb[0].mxu0
    %295 = vmatprep.mubr.f32.mxu0 0.0
    %296 = vmatmul.mubr.f32.gmra.mrb[0].mxu0 %v172
    %v297 = vpop.f32.mrb[0].mxu0
    %v298 = vadd.f32 %v157, %v297
    %v299 = vpop.f32.mrb[0].mxu0
    %300 = vmatprep.mubr.f32.mxu0 0.0
    %301 = vmatmul.mubr.f32.gmra.mrb[0].mxu0 %v175
    %v302 = vpop.f32.mrb[0].mxu0
    %v303 = vadd.f32 %v157, %v302
    %v304 = vpop.f32.mrb[0].mxu0
    %305 = vmatprep.mubr.f32.mxu0 0.0
    %306 = vmatmul.mubr.f32.gmra.mrb[0].mxu0 %v178
    %v307 = vpop.f32.mrb[0].mxu0
    %v308 = vadd.f32 %v157, %v307
    %v309 = vpop.f32.mrb[0].mxu0
    %310 = vmatprep.mubr.f32.mxu0 0.0
    %311 = vmatmul.mubr.f32.gmra.mrb[0].mxu0 %v181
    %v312 = vpop.f32.mrb[0].mxu0
    %v313 = vadd.f32 %v157, %v312
    %v314 = vpop.f32.mrb[0].mxu0
    %315 = vmatprep.mubr.f32.mxu0 0.0
    %316 = vmatmul.mubr.f32.gmra.mrb[0].mxu0 %v184
    %v317 = vpop.f32.mrb[0].mxu0
    %v318 = vadd.f32 %v157, %v317
    %v319 = vpop.f32.mrb[0].mxu0
    %320 = vmatprep.mubr.f32.mxu0 0.0
    %321 = vmatmul.mubr.f32.gmra.mrb[0].mxu0 %v187
    %v322 = vpop.f32.mrb[0].mxu0
    %v323 = vadd.f32 %v157, %v322
    %v324 = vpop.f32.mrb[0].mxu0
    %325 = vmatprep.mubr.f32.mxu0 0.0
    %326 = vmatmul.mubr.f32.gmra.mrb[0].mxu0 %v190
    %v327 = vpop.f32.mrb[0].mxu0
    %v328 = vadd.f32 %v157, %v327
    %v329 = vpop.f32.mrb[0].mxu0
    %330 = vmatprep.mubr.f32.mxu0 0.0
    %331 = vmatmul.mubr.f32.gmra.mrb[0].mxu0 %v193
    %v332 = vpop.f32.mrb[0].mxu0
    %v333 = vadd.f32 %v157, %v332
    %v334 = vpop.f32.mrb[0].mxu0
    %335 = vmatprep.mubr.f32.mxu0 0.0
    %336 = vmatmul.mubr.f32.gmra.mrb[0].mxu0 %v196
    %v337 = vpop.f32.mrb[0].mxu0
    %v338 = vadd.f32 %v157, %v337
    %v339 = vpop.f32.mrb[0].mxu0
    %340 = vmatprep.mubr.f32.mxu0 0.0
    %341 = vmatmul.mubr.f32.gmra.mrb[0].mxu0 %v199
    %v342 = vpop.f32.mrb[0].mxu0
    %v343 = vadd.f32 %v157, %v342
    %v344 = vpop.f32.mrb[0].mxu0
    %345 = vmatprep.mubr.f32.mxu0 0.0
    %346 = vmatmul.mubr.f32.gmra.mrb[0].mxu0 %v202
    %v347 = vpop.f32.mrb[0].mxu0
    %v348 = vadd.f32 %v157, %v347
    %v349 = vpop.f32.mrb[0].mxu0
    %350 = vmatprep.mubr.f32.mxu0 0.0
    %351 = vmatmul.mubr.f32.gmra.mrb[0].mxu0 %v205
    %v352 = vpop.f32.mrb[0].mxu0
    %v353 = vadd.f32 %v157, %v352
    %v354 = vpop.f32.mrb[0].mxu0
    %355 = vdwg.mxu0
    %v356 = vmax.f32 %v278, 0.0
    %v357 = vmax.f32 %v283, 0.0
    %v358 = vmax.f32 %v288, 0.0
    %v359 = vmax.f32 %v293, 0.0
    %v360 = vmax.f32 %v298, 0.0
    %v361 = vmax.f32 %v303, 0.0
    %v362 = vmax.f32 %v308, 0.0
    %v363 = vmax.f32 %v313, 0.0
    %v364 = vmax.f32 %v318, 0.0
    %v365 = vmax.f32 %v323, 0.0
    %v366 = vmax.f32 %v328, 0.0
    %v367 = vmax.f32 %v333, 0.0
    %v368 = vmax.f32 %v338, 0.0
    %v369 = vmax.f32 %v343, 0.0
    %v370 = vmax.f32 %v348, 0.0
    %v371 = vmax.f32 %v353, 0.0
    %vm372 = vcmask 523264
    %v373 = vsel %vm372, %v356, 0.0
    %v374 = vsel %vm372, %v357, 0.0
    %v375 = vadd.f32 %v373, %v374
    %v376 = vsel %vm372, %v358, 0.0
    %v377 = vadd.f32 %v375, %v376
    %v378 = vsel %vm372, %v359, 0.0
    %v379 = vadd.f32 %v377, %v378
    %v380 = vsel %vm372, %v360, 0.0
    %v381 = vadd.f32 %v379, %v380
    %v382 = vsel %vm372, %v361, 0.0
    %v383 = vadd.f32 %v381, %v382
    %v384 = vsel %vm372, %v362, 0.0
    %v385 = vadd.f32 %v383, %v384
    %v386 = vsel %vm372, %v363, 0.0
    %v387 = vadd.f32 %v385, %v386
    %v388 = vsel %vm372, %v364, 0.0
    %v389 = vadd.f32 %v387, %v388
    %v390 = vsel %vm372, %v365, 0.0
    %v391 = vadd.f32 %v389, %v390
    %v392 = vsel %vm372, %v366, 0.0
    %v393 = vadd.f32 %v391, %v392
    %v394 = vsel %vm372, %v367, 0.0
    %v395 = vadd.f32 %v393, %v394
    %v396 = vsel %vm372, %v368, 0.0
    %v397 = vadd.f32 %v395, %v396
    %v398 = vsel %vm372, %v369, 0.0
    %v399 = vadd.f32 %v397, %v398
    %v400 = vsel %vm372, %v370, 0.0
    %v401 = vadd.f32 %v399, %v400
    %v402 = vsel %vm372, %v371, 0.0
    %v403 = vadd.f32 %v401, %v402
    %v404 = vrot.slane %v403, 4
    %v405 = vadd.f32 %v403, %v404
    %v406 = vrot.slane %v405, 2
    %v407 = vadd.f32 %v405, %v406
    %v408 = vrot.slane %v407, 1
    %v409 = vadd.f32 %v407, %v408
    %v410 = vmul.f32 %v356, %v356
    %v411 = vmul.f32 %v357, %v357
    %v412 = vmul.f32 %v358, %v358
    %v413 = vmul.f32 %v359, %v359
    %v414 = vmul.f32 %v360, %v360
    %v415 = vmul.f32 %v361, %v361
    %v416 = vmul.f32 %v362, %v362
    %v417 = vmul.f32 %v363, %v363
    %v418 = vmul.f32 %v364, %v364
    %v419 = vmul.f32 %v365, %v365
    %v420 = vmul.f32 %v366, %v366
    %v421 = vmul.f32 %v367, %v367
    %v422 = vmul.f32 %v368, %v368
    %v423 = vmul.f32 %v369, %v369
    %v424 = vmul.f32 %v370, %v370
    %v425 = vmul.f32 %v371, %v371
    %v426 = vsel %vm372, %v410, 0.0
    %v427 = vsel %vm372, %v411, 0.0
    %v428 = vadd.f32 %v426, %v427
    %v429 = vsel %vm372, %v412, 0.0
    %v430 = vadd.f32 %v428, %v429
    %v431 = vsel %vm372, %v413, 0.0
    %v432 = vadd.f32 %v430, %v431
    %v433 = vsel %vm372, %v414, 0.0
    %v434 = vadd.f32 %v432, %v433
    %v435 = vsel %vm372, %v415, 0.0
    %v436 = vadd.f32 %v434, %v435
    %v437 = vsel %vm372, %v416, 0.0
    %v438 = vadd.f32 %v436, %v437
    %v439 = vsel %vm372, %v417, 0.0
    %v440 = vadd.f32 %v438, %v439
    %v441 = vsel %vm372, %v418, 0.0
    %v442 = vadd.f32 %v440, %v441
    %v443 = vsel %vm372, %v419, 0.0
    %v444 = vadd.f32 %v442, %v443
    %v445 = vsel %vm372, %v420, 0.0
    %v446 = vadd.f32 %v444, %v445
    %v447 = vsel %vm372, %v421, 0.0
    %v448 = vadd.f32 %v446, %v447
    %v449 = vsel %vm372, %v422, 0.0
    %v450 = vadd.f32 %v448, %v449
    %v451 = vsel %vm372, %v423, 0.0
    %v452 = vadd.f32 %v450, %v451
    %v453 = vsel %vm372, %v424, 0.0
    %v454 = vadd.f32 %v452, %v453
    %v455 = vsel %vm372, %v425, 0.0
    %v456 = vadd.f32 %v454, %v455
    %v457 = vrot.slane %v456, 4
    %v458 = vadd.f32 %v456, %v457
    %v459 = vrot.slane %v458, 2
    %v460 = vadd.f32 %v458, %v459
    %v461 = vrot.slane %v460, 1
    %v462 = vadd.f32 %v460, %v461
    %v463 = vmul.f32 %v409, 0.0078125
    %v464 = vmul.f32 %v462, 0.0078125
    %v465 = vmul.f32 %v463, %v463
    %v466 = vsub.f32 %v464, %v465
    %v467 = vmax.f32 %v466, 0.0
    %v468 = vadd.f32 %v467, 1e-05
    %v469 = vrsqrt.pop %v468
    %v470 = vmul.f32 %v135, %v469
    %v471 = vmul.f32 %v463, %v470
    %v473 = vrot.slane %v471, 7
    %v475 = vsub.f32 %v135, %v473
    %v476 = vlaneseq
    %v477 = vshrl.u32 %v476, 7
    %v478 = vsub.s32 1, %v477
    %v479 = vrot.slane %v470, %v478
    %v480 = vmul.f32 %v356, %v479
    %v481 = vmul.f32 %v357, %v479
    %v482 = vmul.f32 %v358, %v479
    %v483 = vmul.f32 %v359, %v479
    %v484 = vmul.f32 %v360, %v479
    %v485 = vmul.f32 %v361, %v479
    %v486 = vmul.f32 %v362, %v479
    %v487 = vmul.f32 %v363, %v479
    %v488 = vmul.f32 %v364, %v479
    %v489 = vmul.f32 %v365, %v479
    %v490 = vmul.f32 %v366, %v479
    %v491 = vmul.f32 %v367, %v479
    %v492 = vmul.f32 %v368, %v479
    %v493 = vmul.f32 %v369, %v479
    %v494 = vmul.f32 %v370, %v479
    %v495 = vmul.f32 %v371, %v479
    %v496 = vlaneseq
    %v497 = vshrl.u32 %v496, 7
    %v498 = vsub.s32 2, %v497
    %v499 = vrot.slane %v475, %v498
    %v500 = vadd.f32 %v480, %v499
    %v501 = vadd.f32 %v481, %v499
    %v502 = vadd.f32 %v482, %v499
    %v503 = vadd.f32 %v483, %v499
    %v504 = vadd.f32 %v484, %v499
    %v505 = vadd.f32 %v485, %v499
    %v506 = vadd.f32 %v486, %v499
    %v507 = vadd.f32 %v487, %v499
    %v508 = vadd.f32 %v488, %v499
    %v509 = vadd.f32 %v489, %v499
    %v510 = vadd.f32 %v490, %v499
    %v511 = vadd.f32 %v491, %v499
    %v512 = vadd.f32 %v492, %v499
    %v513 = vadd.f32 %v493, %v499
    %v514 = vadd.f32 %v494, %v499
    %v515 = vadd.f32 %v495, %v499
    %v516 = vld [vmem:[#allocation5] sm:$0xf]
    %v517 = vld [vmem:[#allocation5 + $0x4] sm:$0xf]
    %v518 = vld [vmem:[#allocation5 + $0x8] sm:$0xf]
    %v519 = vld [vmem:[#allocation5 + $0xc] sm:$0xf]
    %v520 = vld [vmem:[#allocation5 + $0x10] sm:$0xf]
    %v521 = vld [vmem:[#allocation5 + $0x14] sm:$0xf]
    %v522 = vld [vmem:[#allocation5 + $0x18] sm:$0xf]
    %v523 = vld [vmem:[#allocation5 + $0x1c] sm:$0xf]
    %v524 = vld [vmem:[#allocation5 + $0x20] sm:$0xf]
    %v525 = vld [vmem:[#allocation5 + $0x24] sm:$0xf]
    %v526 = vld [vmem:[#allocation5 + $0x28] sm:$0xf]
    %v527 = vld [vmem:[#allocation5 + $0x2c] sm:$0xf]
    %v528 = vld [vmem:[#allocation5 + $0x30] sm:$0xf]
    %v529 = vld [vmem:[#allocation5 + $0x34] sm:$0xf]
    %v530 = vld [vmem:[#allocation5 + $0x38] sm:$0xf]
    %v531 = vld [vmem:[#allocation5 + $0x3c] sm:$0xf]
    %v532 = vld [vmem:[#allocation5 + $0x40] sm:$0xf]
    %v533 = vld [vmem:[#allocation5 + $0x44] sm:$0xf]
    %v534 = vld [vmem:[#allocation5 + $0x48] sm:$0xf]
    %v535 = vld [vmem:[#allocation5 + $0x4c] sm:$0xf]
    %v536 = vld [vmem:[#allocation5 + $0x50] sm:$0xf]
    %v537 = vld [vmem:[#allocation5 + $0x54] sm:$0xf]
    %v538 = vld [vmem:[#allocation5 + $0x58] sm:$0xf]
    %v539 = vld [vmem:[#allocation5 + $0x5c] sm:$0xf]
    %v540 = vld [vmem:[#allocation5 + $0x60] sm:$0xf]
    %v541 = vld [vmem:[#allocation5 + $0x64] sm:$0xf]
    %v542 = vld [vmem:[#allocation5 + $0x68] sm:$0xf]
    %v543 = vld [vmem:[#allocation5 + $0x6c] sm:$0xf]
    %v544 = vld [vmem:[#allocation5 + $0x70] sm:$0xf]
    %v545 = vld [vmem:[#allocation5 + $0x74] sm:$0xf]
    %v546 = vld [vmem:[#allocation5 + $0x78] sm:$0xf]
    %v547 = vld [vmem:[#allocation5 + $0x7c] sm:$0xf]
    %v548 = vld [vmem:[#allocation5 + $0x80] sm:$0xf]
    %v549 = vld [vmem:[#allocation5 + $0x84] sm:$0xf]
    %v550 = vld [vmem:[#allocation5 + $0x88] sm:$0xf]
    %v551 = vld [vmem:[#allocation5 + $0x8c] sm:$0xf]
    %v552 = vld [vmem:[#allocation5 + $0x90] sm:$0xf]
    %v553 = vld [vmem:[#allocation5 + $0x94] sm:$0xf]
    %v554 = vld [vmem:[#allocation5 + $0x98] sm:$0xf]
    %v555 = vld [vmem:[#allocation5 + $0x9c] sm:$0xf]
    %v556 = vld [vmem:[#allocation5 + $0xa0] sm:$0xf]
    %v557 = vld [vmem:[#allocation5 + $0xa4] sm:$0xf]
    %v558 = vld [vmem:[#allocation5 + $0xa8] sm:$0xf]
    %v559 = vld [vmem:[#allocation5 + $0xac] sm:$0xf]
    %v560 = vld [vmem:[#allocation5 + $0xb0] sm:$0xf]
    %v561 = vld [vmem:[#allocation5 + $0xb4] sm:$0xf]
    %v562 = vld [vmem:[#allocation5 + $0xb8] sm:$0xf]
    %v563 = vld [vmem:[#allocation5 + $0xbc] sm:$0xf]
    %v564 = vld [vmem:[#allocation5 + $0xc0] sm:$0xf]
    %v565 = vld [vmem:[#allocation5 + $0xc4] sm:$0xf]
    %v566 = vld [vmem:[#allocation5 + $0xc8] sm:$0xf]
    %v567 = vld [vmem:[#allocation5 + $0xcc] sm:$0xf]
    %v568 = vld [vmem:[#allocation5 + $0xd0] sm:$0xf]
    %v569 = vld [vmem:[#allocation5 + $0xd4] sm:$0xf]
    %v570 = vld [vmem:[#allocation5 + $0xd8] sm:$0xf]
    %v571 = vld [vmem:[#allocation5 + $0xdc] sm:$0xf]
    %v572 = vld [vmem:[#allocation5 + $0xe0] sm:$0xf]
    %v573 = vld [vmem:[#allocation5 + $0xe4] sm:$0xf]
    %v574 = vld [vmem:[#allocation5 + $0xe8] sm:$0xf]
    %v575 = vld [vmem:[#allocation5 + $0xec] sm:$0xf]
    %v576 = vld [vmem:[#allocation5 + $0xf0] sm:$0xf]
    %v577 = vld [vmem:[#allocation5 + $0xf4] sm:$0xf]
    %v578 = vld [vmem:[#allocation5 + $0xf8] sm:$0xf]
    %v579 = vld [vmem:[#allocation5 + $0xfc] sm:$0xf]
    %v580 = vld [vmem:[#allocation5 + $0x100] sm:$0xf]
    %v581 = vld [vmem:[#allocation5 + $0x104] sm:$0xf]
    %v582 = vld [vmem:[#allocation5 + $0x108] sm:$0xf]
    %v583 = vld [vmem:[#allocation5 + $0x10c] sm:$0xf]
    %v584 = vld [vmem:[#allocation5 + $0x110] sm:$0xf]
    %v585 = vld [vmem:[#allocation5 + $0x114] sm:$0xf]
    %v586 = vld [vmem:[#allocation5 + $0x118] sm:$0xf]
    %v587 = vld [vmem:[#allocation5 + $0x11c] sm:$0xf]
    %v588 = vld [vmem:[#allocation5 + $0x120] sm:$0xf]
    %v589 = vld [vmem:[#allocation5 + $0x124] sm:$0xf]
    %v590 = vld [vmem:[#allocation5 + $0x128] sm:$0xf]
    %v591 = vld [vmem:[#allocation5 + $0x12c] sm:$0xf]
    %v592 = vld [vmem:[#allocation5 + $0x130] sm:$0xf]
    %v593 = vld [vmem:[#allocation5 + $0x134] sm:$0xf]
    %v594 = vld [vmem:[#allocation5 + $0x138] sm:$0xf]
    %v595 = vld [vmem:[#allocation5 + $0x13c] sm:$0xf]
    %v596 = vld [vmem:[#allocation5 + $0x140] sm:$0xf]
    %v597 = vld [vmem:[#allocation5 + $0x144] sm:$0xf]
    %v598 = vld [vmem:[#allocation5 + $0x148] sm:$0xf]
    %v599 = vld [vmem:[#allocation5 + $0x14c] sm:$0xf]
    %v600 = vld [vmem:[#allocation5 + $0x150] sm:$0xf]
    %v601 = vld [vmem:[#allocation5 + $0x154] sm:$0xf]
    %v602 = vld [vmem:[#allocation5 + $0x158] sm:$0xf]
    %v603 = vld [vmem:[#allocation5 + $0x15c] sm:$0xf]
    %v604 = vld [vmem:[#allocation5 + $0x160] sm:$0xf]
    %v605 = vld [vmem:[#allocation5 + $0x164] sm:$0xf]
    %v606 = vld [vmem:[#allocation5 + $0x168] sm:$0xf]
    %v607 = vld [vmem:[#allocation5 + $0x16c] sm:$0xf]
    %v608 = vld [vmem:[#allocation5 + $0x170] sm:$0xf]
    %v609 = vld [vmem:[#allocation5 + $0x174] sm:$0xf]
    %v610 = vld [vmem:[#allocation5 + $0x178] sm:$0xf]
    %v611 = vld [vmem:[#allocation5 + $0x17c] sm:$0xf]
    %v612 = vld [vmem:[#allocation5 + $0x180] sm:$0xf]
    %v613 = vld [vmem:[#allocation5 + $0x184] sm:$0xf]
    %v614 = vld [vmem:[#allocation5 + $0x188] sm:$0xf]
    %v615 = vld [vmem:[#allocation5 + $0x18c] sm:$0xf]
    %v616 = vld [vmem:[#allocation5 + $0x190] sm:$0xf]
    %v617 = vld [vmem:[#allocation5 + $0x194] sm:$0xf]
    %v618 = vld [vmem:[#allocation5 + $0x198] sm:$0xf]
    %v619 = vld [vmem:[#allocation5 + $0x19c] sm:$0xf]
    %v620 = vld [vmem:[#allocation5 + $0x1a0] sm:$0xf]
    %v621 = vld [vmem:[#allocation5 + $0x1a4] sm:$0xf]
    %v622 = vld [vmem:[#allocation5 + $0x1a8] sm:$0xf]
    %v623 = vld [vmem:[#allocation5 + $0x1ac] sm:$0xf]
    %v624 = vld [vmem:[#allocation5 + $0x1b0] sm:$0xf]
    %v625 = vld [vmem:[#allocation5 + $0x1b4] sm:$0xf]
    %v626 = vld [vmem:[#allocation5 + $0x1b8] sm:$0xf]
    %v627 = vld [vmem:[#allocation5 + $0x1bc] sm:$0xf]
    %v628 = vld [vmem:[#allocation5 + $0x1c0] sm:$0xf]
    %v629 = vld [vmem:[#allocation5 + $0x1c4] sm:$0xf]
    %v630 = vld [vmem:[#allocation5 + $0x1c8] sm:$0xf]
    %v631 = vld [vmem:[#allocation5 + $0x1cc] sm:$0xf]
    %v632 = vld [vmem:[#allocation5 + $0x1d0] sm:$0xf]
    %v633 = vld [vmem:[#allocation5 + $0x1d4] sm:$0xf]
    %v634 = vld [vmem:[#allocation5 + $0x1d8] sm:$0xf]
    %v635 = vld [vmem:[#allocation5 + $0x1dc] sm:$0xf]
    %v636 = vld [vmem:[#allocation5 + $0x1e0] sm:$0xf]
    %v637 = vld [vmem:[#allocation5 + $0x1e4] sm:$0xf]
    %v638 = vld [vmem:[#allocation5 + $0x1e8] sm:$0xf]
    %v639 = vld [vmem:[#allocation5 + $0x1ec] sm:$0xf]
    %v640 = vld [vmem:[#allocation5 + $0x1f0] sm:$0xf]
    %v641 = vld [vmem:[#allocation5 + $0x1f4] sm:$0xf]
    %v642 = vld [vmem:[#allocation5 + $0x1f8] sm:$0xf]
    %v643 = vld [vmem:[#allocation5 + $0x1fc] sm:$0xf]
    %v644 = vld [vmem:[#allocation5 + $0x200] sm:$0xf]
    %v645 = vld [vmem:[#allocation5 + $0x204] sm:$0xf]
    %v646 = vld [vmem:[#allocation5 + $0x208] sm:$0xf]
    %v647 = vld [vmem:[#allocation5 + $0x20c] sm:$0xf]
    %v648 = vld [vmem:[#allocation5 + $0x210] sm:$0xf]
    %v649 = vld [vmem:[#allocation5 + $0x214] sm:$0xf]
    %v650 = vld [vmem:[#allocation5 + $0x218] sm:$0xf]
    %v651 = vld [vmem:[#allocation5 + $0x21c] sm:$0xf]
    %v652 = vld [vmem:[#allocation5 + $0x220] sm:$0xf]
    %v653 = vld [vmem:[#allocation5 + $0x224] sm:$0xf]
    %v654 = vld [vmem:[#allocation5 + $0x228] sm:$0xf]
    %v655 = vld [vmem:[#allocation5 + $0x22c] sm:$0xf]
    %v656 = vld [vmem:[#allocation5 + $0x230] sm:$0xf]
    %v657 = vld [vmem:[#allocation5 + $0x234] sm:$0xf]
    %v658 = vld [vmem:[#allocation5 + $0x238] sm:$0xf]
    %v659 = vld [vmem:[#allocation5 + $0x23c] sm:$0xf]
    %v660 = vunpack.c.l.bf16 %v516
    %v661 = vunpack.c.l.bf16 %v517
    %v662 = vunpack.c.l.bf16 %v518
    %v663 = vunpack.c.l.bf16 %v519
    %v664 = vunpack.c.l.bf16 %v520
    %v665 = vunpack.c.l.bf16 %v521
    %v666 = vunpack.c.l.bf16 %v522
    %v667 = vunpack.c.l.bf16 %v523
    %v668 = vunpack.c.l.bf16 %v524
    %v669 = vunpack.c.l.bf16 %v525
    %v670 = vunpack.c.l.bf16 %v526
    %v671 = vunpack.c.l.bf16 %v527
    %v672 = vunpack.c.l.bf16 %v528
    %v673 = vunpack.c.l.bf16 %v529
    %v674 = vunpack.c.l.bf16 %v530
    %v675 = vunpack.c.l.bf16 %v531
    %v676 = vunpack.c.l.bf16 %v532
    %v677 = vunpack.c.l.bf16 %v533
    %v678 = vunpack.c.l.bf16 %v534
    %v679 = vunpack.c.l.bf16 %v535
    %v680 = vunpack.c.l.bf16 %v536
    %v681 = vunpack.c.l.bf16 %v537
    %v682 = vunpack.c.l.bf16 %v538
    %v683 = vunpack.c.l.bf16 %v539
    %v684 = vunpack.c.l.bf16 %v540
    %v685 = vunpack.c.l.bf16 %v541
    %v686 = vunpack.c.l.bf16 %v542
    %v687 = vunpack.c.l.bf16 %v543
    %v688 = vunpack.c.l.bf16 %v544
    %v689 = vunpack.c.l.bf16 %v545
    %v690 = vunpack.c.l.bf16 %v546
    %v691 = vunpack.c.l.bf16 %v547
    %v692 = vunpack.c.l.bf16 %v548
    %v693 = vunpack.c.l.bf16 %v549
    %v694 = vunpack.c.l.bf16 %v550
    %v695 = vunpack.c.l.bf16 %v551
    %v696 = vunpack.c.l.bf16 %v552
    %v697 = vunpack.c.l.bf16 %v553
    %v698 = vunpack.c.l.bf16 %v554
    %v699 = vunpack.c.l.bf16 %v555
    %v700 = vunpack.c.l.bf16 %v556
    %v701 = vunpack.c.l.bf16 %v557
    %v702 = vunpack.c.l.bf16 %v558
    %v703 = vunpack.c.l.bf16 %v559
    %v704 = vunpack.c.l.bf16 %v560
    %v705 = vunpack.c.l.bf16 %v561
    %v706 = vunpack.c.l.bf16 %v562
    %v707 = vunpack.c.l.bf16 %v563
    %v708 = vunpack.c.l.bf16 %v564
    %v709 = vunpack.c.l.bf16 %v565
    %v710 = vunpack.c.l.bf16 %v566
    %v711 = vunpack.c.l.bf16 %v567
    %v712 = vunpack.c.l.bf16 %v568
    %v713 = vunpack.c.l.bf16 %v569
    %v714 = vunpack.c.l.bf16 %v570
    %v715 = vunpack.c.l.bf16 %v571
    %v716 = vunpack.c.l.bf16 %v572
    %v717 = vunpack.c.l.bf16 %v573
    %v718 = vunpack.c.l.bf16 %v574
    %v719 = vunpack.c.l.bf16 %v575
    %v720 = vunpack.c.l.bf16 %v576
    %v721 = vunpack.c.l.bf16 %v577
    %v722 = vunpack.c.l.bf16 %v578
    %v723 = vunpack.c.l.bf16 %v579
    %v724 = vunpack.c.l.bf16 %v580
    %v725 = vunpack.c.l.bf16 %v581
    %v726 = vunpack.c.l.bf16 %v582
    %v727 = vunpack.c.l.bf16 %v583
    %v728 = vunpack.c.l.bf16 %v584
    %v729 = vunpack.c.l.bf16 %v585
    %v730 = vunpack.c.l.bf16 %v586
    %v731 = vunpack.c.l.bf16 %v587
    %v732 = vunpack.c.l.bf16 %v588
    %v733 = vunpack.c.l.bf16 %v589
    %v734 = vunpack.c.l.bf16 %v590
    %v735 = vunpack.c.l.bf16 %v591
    %v736 = vunpack.c.l.bf16 %v592
    %v737 = vunpack.c.l.bf16 %v593
    %v738 = vunpack.c.l.bf16 %v594
    %v739 = vunpack.c.l.bf16 %v595
    %v740 = vunpack.c.l.bf16 %v596
    %v741 = vunpack.c.l.bf16 %v597
    %v742 = vunpack.c.l.bf16 %v598
    %v743 = vunpack.c.l.bf16 %v599
    %v744 = vunpack.c.l.bf16 %v600
    %v745 = vunpack.c.l.bf16 %v601
    %v746 = vunpack.c.l.bf16 %v602
    %v747 = vunpack.c.l.bf16 %v603
    %v748 = vunpack.c.l.bf16 %v604
    %v749 = vunpack.c.l.bf16 %v605
    %v750 = vunpack.c.l.bf16 %v606
    %v751 = vunpack.c.l.bf16 %v607
    %v752 = vunpack.c.l.bf16 %v608
    %v753 = vunpack.c.l.bf16 %v609
    %v754 = vunpack.c.l.bf16 %v610
    %v755 = vunpack.c.l.bf16 %v611
    %v756 = vunpack.c.l.bf16 %v612
    %v757 = vunpack.c.l.bf16 %v613
    %v758 = vunpack.c.l.bf16 %v614
    %v759 = vunpack.c.l.bf16 %v615
    %v760 = vunpack.c.l.bf16 %v616
    %v761 = vunpack.c.l.bf16 %v617
    %v762 = vunpack.c.l.bf16 %v618
    %v763 = vunpack.c.l.bf16 %v619
    %v764 = vunpack.c.l.bf16 %v620
    %v765 = vunpack.c.l.bf16 %v621
    %v766 = vunpack.c.l.bf16 %v622
    %v767 = vunpack.c.l.bf16 %v623
    %v768 = vunpack.c.l.bf16 %v624
    %v769 = vunpack.c.l.bf16 %v625
    %v770 = vunpack.c.l.bf16 %v626
    %v771 = vunpack.c.l.bf16 %v627
    %v772 = vunpack.c.l.bf16 %v628
    %v773 = vunpack.c.l.bf16 %v629
    %v774 = vunpack.c.l.bf16 %v630
    %v775 = vunpack.c.l.bf16 %v631
    %v776 = vunpack.c.l.bf16 %v632
    %v777 = vunpack.c.l.bf16 %v633
    %v778 = vunpack.c.l.bf16 %v634
    %v779 = vunpack.c.l.bf16 %v635
    %v780 = vunpack.c.l.bf16 %v636
    %v781 = vunpack.c.l.bf16 %v637
    %v782 = vunpack.c.l.bf16 %v638
    %v783 = vunpack.c.l.bf16 %v639
    %v784 = vunpack.c.l.bf16 %v640
    %v785 = vunpack.c.l.bf16 %v641
    %v786 = vunpack.c.l.bf16 %v642
    %v787 = vunpack.c.l.bf16 %v643
    %v788 = vunpack.c.l.bf16 %v644
    %v789 = vunpack.c.l.bf16 %v645
    %v790 = vunpack.c.l.bf16 %v646
    %v791 = vunpack.c.l.bf16 %v647
    %v792 = vunpack.c.l.bf16 %v648
    %v793 = vunpack.c.l.bf16 %v649
    %v794 = vunpack.c.l.bf16 %v650
    %v795 = vunpack.c.l.bf16 %v651
    %v796 = vunpack.c.l.bf16 %v652
    %v797 = vunpack.c.l.bf16 %v653
    %v798 = vunpack.c.l.bf16 %v654
    %v799 = vunpack.c.l.bf16 %v655
    %v800 = vunpack.c.l.bf16 %v656
    %v801 = vunpack.c.l.bf16 %v657
    %v802 = vunpack.c.l.bf16 %v658
    %v803 = vunpack.c.l.bf16 %v659
    %804 = vmatprep.subr.mxu0 0.0
    %805 = vmatpush1.msra.mxu0 %v500
    %806 = vmatprep.subr.mxu0 0.0
    %807 = vmatpush1.msra.mxu0 %v501
    %808 = vmatprep.subr.mxu0 0.0
    %809 = vmatpush1.msra.mxu0 %v502
    %810 = vmatprep.subr.mxu0 0.0
    %811 = vmatpush1.msra.mxu0 %v503
    %812 = vmatprep.subr.mxu0 0.0
    %813 = vmatpush1.msra.mxu0 %v504
    %814 = vmatprep.subr.mxu0 0.0
    %815 = vmatpush1.msra.mxu0 %v505
    %816 = vmatprep.subr.mxu0 0.0
    %817 = vmatpush1.msra.mxu0 %v506
    %818 = vmatprep.subr.mxu0 0.0
    %819 = vmatpush1.msra.mxu0 %v507
    %820 = vmatprep.subr.mxu0 0.0
    %821 = vmatpush1.msra.mxu0 %v508
    %822 = vmatprep.subr.mxu0 0.0
    %823 = vmatpush1.msra.mxu0 %v509
    %824 = vmatprep.subr.mxu0 0.0
    %825 = vmatpush1.msra.mxu0 %v510
    %826 = vmatprep.subr.mxu0 0.0
    %827 = vmatpush1.msra.mxu0 %v511
    %828 = vmatprep.subr.mxu0 0.0
    %829 = vmatpush1.msra.mxu0 %v512
    %830 = vmatprep.subr.mxu0 0.0
    %831 = vmatpush1.msra.mxu0 %v513
    %832 = vmatprep.subr.mxu0 0.0
    %833 = vmatpush1.msra.mxu0 %v514
    %834 = vmatprep.subr.mxu0 0.0
    %835 = vmatpush1.msra.mxu0 %v515
    %836 = vmatprep.subr.mxu0 0.0
    %837 = vmatpush1.msra.mxu0 0.0
    %838 = vmatprep.subr.mxu0 0.0
    %839 = vmatpush1.msra.mxu0 0.0
    %840 = vmatprep.subr.mxu0 0.0
    %841 = vmatpush1.msra.mxu0 0.0
    %842 = vmatprep.subr.mxu0 0.0
    %843 = vmatpush1.msra.mxu0 0.0
    %844 = vmatprep.subr.mxu0 0.0
    %845 = vmatpush1.msra.mxu0 0.0
    %846 = vmatprep.subr.mxu0 0.0
    %847 = vmatpush1.msra.mxu0 0.0
    %848 = vmatprep.subr.mxu0 0.0
    %849 = vmatpush1.msra.mxu0 0.0
    %850 = vmatprep.subr.mxu0 0.0
    %851 = vmatpush1.msra.mxu0 0.0
    %852 = vmatprep.subr.mxu0 0.0
    %853 = vmatpush1.msra.mxu0 0.0
    %854 = vmatprep.subr.mxu0 0.0
    %855 = vmatpush1.msra.mxu0 0.0
    %856 = vmatprep.subr.mxu0 0.0
    %857 = vmatpush1.msra.mxu0 0.0
    %858 = vmatprep.subr.mxu0 0.0
    %859 = vmatpush1.msra.mxu0 0.0
    %860 = vmatprep.subr.mxu0 0.0
    %861 = vmatpush1.msra.mxu0 0.0
    %862 = vmatprep.subr.mxu0 0.0
    %863 = vmatpush1.msra.mxu0 0.0
    %864 = vmatprep.subr.mxu0 0.0
    %865 = vmatpush1.msra.mxu0 0.0
    %866 = vmatprep.subr.mxu0 0.0
    %867 = vmatpush1.msra.mxu0 0.0
    %868 = vmatprep.mubr.f32.mxu0 0.0
    %869 = vmatmul.mubr.f32.gmra.mrb[0].mxu0 %v660
    %v870 = vpop.f32.mrb[0].mxu0
    %v871 = vadd.f32 0.0, %v870
    %v872 = vpop.f32.mrb[0].mxu0
    %873 = vmatprep.mubr.f32.mxu0 0.0
    %874 = vmatmul.mubr.f32.gmra.mrb[0].mxu0 %v661
    %v875 = vpop.f32.mrb[0].mxu0
    %v876 = vadd.f32 0.0, %v875
    %v877 = vpop.f32.mrb[0].mxu0
    %878 = vmatprep.mubr.f32.mxu0 0.0
    %879 = vmatmul.mubr.f32.gmra.mrb[0].mxu0 %v662
    %v880 = vpop.f32.mrb[0].mxu0
    %v881 = vadd.f32 0.0, %v880
    %v882 = vpop.f32.mrb[0].mxu0
    %883 = vmatprep.mubr.f32.mxu0 0.0
    %884 = vmatmul.mubr.f32.gmra.mrb[0].mxu0 %v663
    %v885 = vpop.f32.mrb[0].mxu0
    %v886 = vadd.f32 0.0, %v885
    %v887 = vpop.f32.mrb[0].mxu0
    %888 = vmatprep.mubr.f32.mxu0 0.0
    %889 = vmatmul.mubr.f32.gmra.mrb[0].mxu0 %v664
    %v890 = vpop.f32.mrb[0].mxu0
    %v891 = vadd.f32 0.0, %v890
    %v892 = vpop.f32.mrb[0].mxu0
    %893 = vmatprep.mubr.f32.mxu0 0.0
    %894 = vmatmul.mubr.f32.gmra.mrb[0].mxu0 %v665
    %v895 = vpop.f32.mrb[0].mxu0
    %v896 = vadd.f32 0.0, %v895
    %v897 = vpop.f32.mrb[0].mxu0
    %898 = vmatprep.mubr.f32.mxu0 0.0
    %899 = vmatmul.mubr.f32.gmra.mrb[0].mxu0 %v666
    %v900 = vpop.f32.mrb[0].mxu0
    %v901 = vadd.f32 0.0, %v900
    %v902 = vpop.f32.mrb[0].mxu0
    %903 = vmatprep.mubr.f32.mxu0 0.0
    %904 = vmatmul.mubr.f32.gmra.mrb[0].mxu0 %v667
    %v905 = vpop.f32.mrb[0].mxu0
    %v906 = vadd.f32 0.0, %v905
    %v907 = vpop.f32.mrb[0].mxu0
    %908 = vmatprep.mubr.f32.mxu0 0.0
    %909 = vmatmul.mubr.f32.gmra.mrb[0].mxu0 %v668
    %v910 = vpop.f32.mrb[0].mxu0
    %v911 = vadd.f32 0.0, %v910
    %v912 = vpop.f32.mrb[0].mxu0
    %913 = vmatprep.mubr.f32.mxu0 0.0
    %914 = vmatmul.mubr.f32.gmra.mrb[0].mxu0 %v669
    %v915 = vpop.f32.mrb[0].mxu0
    %v916 = vadd.f32 0.0, %v915
    %v917 = vpop.f32.mrb[0].mxu0
    %918 = vmatprep.mubr.f32.mxu0 0.0
    %919 = vmatmul.mubr.f32.gmra.mrb[0].mxu0 %v670
    %v920 = vpop.f32.mrb[0].mxu0
    %v921 = vadd.f32 0.0, %v920
    %v922 = vpop.f32.mrb[0].mxu0
    %923 = vmatprep.mubr.f32.mxu0 0.0
    %924 = vmatmul.mubr.f32.gmra.mrb[0].mxu0 %v671
    %v925 = vpop.f32.mrb[0].mxu0
    %v926 = vadd.f32 0.0, %v925
    %v927 = vpop.f32.mrb[0].mxu0
    %928 = vmatprep.mubr.f32.mxu0 0.0
    %929 = vmatmul.mubr.f32.gmra.mrb[0].mxu0 %v672
    %v930 = vpop.f32.mrb[0].mxu0
    %v931 = vadd.f32 0.0, %v930
    %v932 = vpop.f32.mrb[0].mxu0
    %933 = vmatprep.mubr.f32.mxu0 0.0
    %934 = vmatmul.mubr.f32.gmra.mrb[0].mxu0 %v673
    %v935 = vpop.f32.mrb[0].mxu0
    %v936 = vadd.f32 0.0, %v935
    %v937 = vpop.f32.mrb[0].mxu0
    %938 = vmatprep.mubr.f32.mxu0 0.0
    %939 = vmatmul.mubr.f32.gmra.mrb[0].mxu0 %v674
    %v940 = vpop.f32.mrb[0].mxu0
    %v941 = vadd.f32 0.0, %v940
    %v942 = vpop.f32.mrb[0].mxu0
    %943 = vmatprep.mubr.f32.mxu0 0.0
    %944 = vmatmul.mubr.f32.gmra.mrb[0].mxu0 %v675
    %v945 = vpop.f32.mrb[0].mxu0
    %v946 = vadd.f32 0.0, %v945
    %v947 = vpop.f32.mrb[0].mxu0
    %948 = vmatprep.mubr.f32.mxu0 0.0
    %949 = vmatmul.mubr.f32.gmra.mrb[0].mxu0 %v676
    %v950 = vpop.f32.mrb[0].mxu0
    %v951 = vadd.f32 0.0, %v950
    %v952 = vpop.f32.mrb[0].mxu0
    %953 = vmatprep.mubr.f32.mxu0 0.0
    %954 = vmatmul.mubr.f32.gmra.mrb[0].mxu0 %v677
    %v955 = vpop.f32.mrb[0].mxu0
    %v956 = vadd.f32 0.0, %v955
    %v957 = vpop.f32.mrb[0].mxu0
    %958 = vmatprep.mubr.f32.mxu0 0.0
    %959 = vmatmul.mubr.f32.gmra.mrb[0].mxu0 %v678
    %v960 = vpop.f32.mrb[0].mxu0
    %v961 = vadd.f32 0.0, %v960
    %v962 = vpop.f32.mrb[0].mxu0
    %963 = vmatprep.mubr.f32.mxu0 0.0
    %964 = vmatmul.mubr.f32.gmra.mrb[0].mxu0 %v679
    %v965 = vpop.f32.mrb[0].mxu0
    %v966 = vadd.f32 0.0, %v965
    %v967 = vpop.f32.mrb[0].mxu0
    %968 = vmatprep.mubr.f32.mxu0 0.0
    %969 = vmatmul.mubr.f32.gmra.mrb[0].mxu0 %v680
    %v970 = vpop.f32.mrb[0].mxu0
    %v971 = vadd.f32 0.0, %v970
    %v972 = vpop.f32.mrb[0].mxu0
    %973 = vmatprep.mubr.f32.mxu0 0.0
    %974 = vmatmul.mubr.f32.gmra.mrb[0].mxu0 %v681
    %v975 = vpop.f32.mrb[0].mxu0
    %v976 = vadd.f32 0.0, %v975
    %v977 = vpop.f32.mrb[0].mxu0
    %978 = vmatprep.mubr.f32.mxu0 0.0
    %979 = vmatmul.mubr.f32.gmra.mrb[0].mxu0 %v682
    %v980 = vpop.f32.mrb[0].mxu0
    %v981 = vadd.f32 0.0, %v980
    %v982 = vpop.f32.mrb[0].mxu0
    %983 = vmatprep.mubr.f32.mxu0 0.0
    %984 = vmatmul.mubr.f32.gmra.mrb[0].mxu0 %v683
    %v985 = vpop.f32.mrb[0].mxu0
    %v986 = vadd.f32 0.0, %v985
    %v987 = vpop.f32.mrb[0].mxu0
    %988 = vmatprep.mubr.f32.mxu0 0.0
    %989 = vmatmul.mubr.f32.gmra.mrb[0].mxu0 %v684
    %v990 = vpop.f32.mrb[0].mxu0
    %v991 = vadd.f32 0.0, %v990
    %v992 = vpop.f32.mrb[0].mxu0
    %993 = vmatprep.mubr.f32.mxu0 0.0
    %994 = vmatmul.mubr.f32.gmra.mrb[0].mxu0 %v685
    %v995 = vpop.f32.mrb[0].mxu0
    %v996 = vadd.f32 0.0, %v995
    %v997 = vpop.f32.mrb[0].mxu0
    %998 = vmatprep.mubr.f32.mxu0 0.0
    %999 = vmatmul.mubr.f32.gmra.mrb[0].mxu0 %v686
    %v1000 = vpop.f32.mrb[0].mxu0
    %v1001 = vadd.f32 0.0, %v1000
    %v1002 = vpop.f32.mrb[0].mxu0
    %1003 = vmatprep.mubr.f32.mxu0 0.0
    %1004 = vmatmul.mubr.f32.gmra.mrb[0].mxu0 %v687
    %v1005 = vpop.f32.mrb[0].mxu0
    %v1006 = vadd.f32 0.0, %v1005
    %v1007 = vpop.f32.mrb[0].mxu0
    %1008 = vmatprep.mubr.f32.mxu0 0.0
    %1009 = vmatmul.mubr.f32.gmra.mrb[0].mxu0 %v688
    %v1010 = vpop.f32.mrb[0].mxu0
    %v1011 = vadd.f32 0.0, %v1010
    %v1012 = vpop.f32.mrb[0].mxu0
    %1013 = vmatprep.mubr.f32.mxu0 0.0
    %1014 = vmatmul.mubr.f32.gmra.mrb[0].mxu0 %v689
    %v1015 = vpop.f32.mrb[0].mxu0
    %v1016 = vadd.f32 0.0, %v1015
    %v1017 = vpop.f32.mrb[0].mxu0
    %1018 = vmatprep.mubr.f32.mxu0 0.0
    %1019 = vmatmul.mubr.f32.gmra.mrb[0].mxu0 %v690
    %v1020 = vpop.f32.mrb[0].mxu0
    %v1021 = vadd.f32 0.0, %v1020
    %v1022 = vpop.f32.mrb[0].mxu0
    %1023 = vmatprep.mubr.f32.mxu0 0.0
    %1024 = vmatmul.mubr.f32.gmra.mrb[0].mxu0 %v691
    %v1025 = vpop.f32.mrb[0].mxu0
    %v1026 = vadd.f32 0.0, %v1025
    %v1027 = vpop.f32.mrb[0].mxu0
    %1028 = vmatprep.mubr.f32.mxu0 0.0
    %1029 = vmatmul.mubr.f32.gmra.mrb[0].mxu0 %v692
    %v1030 = vpop.f32.mrb[0].mxu0
    %v1031 = vadd.f32 0.0, %v1030
    %v1032 = vpop.f32.mrb[0].mxu0
    %1033 = vmatprep.mubr.f32.mxu0 0.0
    %1034 = vmatmul.mubr.f32.gmra.mrb[0].mxu0 %v693
    %v1035 = vpop.f32.mrb[0].mxu0
    %v1036 = vadd.f32 0.0, %v1035
    %v1037 = vpop.f32.mrb[0].mxu0
    %1038 = vmatprep.mubr.f32.mxu0 0.0
    %1039 = vmatmul.mubr.f32.gmra.mrb[0].mxu0 %v694
    %v1040 = vpop.f32.mrb[0].mxu0
    %v1041 = vadd.f32 0.0, %v1040
    %v1042 = vpop.f32.mrb[0].mxu0
    %1043 = vmatprep.mubr.f32.mxu0 0.0
    %1044 = vmatmul.mubr.f32.gmra.mrb[0].mxu0 %v695
    %v1045 = vpop.f32.mrb[0].mxu0
    %v1046 = vadd.f32 0.0, %v1045
    %v1047 = vpop.f32.mrb[0].mxu0
    %1048 = vmatprep.mubr.f32.mxu0 0.0
    %1049 = vmatmul.mubr.f32.gmra.mrb[0].mxu0 %v696
    %v1050 = vpop.f32.mrb[0].mxu0
    %v1051 = vadd.f32 0.0, %v1050
    %v1052 = vpop.f32.mrb[0].mxu0
    %1053 = vmatprep.mubr.f32.mxu0 0.0
    %1054 = vmatmul.mubr.f32.gmra.mrb[0].mxu0 %v697
    %v1055 = vpop.f32.mrb[0].mxu0
    %v1056 = vadd.f32 0.0, %v1055
    %v1057 = vpop.f32.mrb[0].mxu0
    %1058 = vmatprep.mubr.f32.mxu0 0.0
    %1059 = vmatmul.mubr.f32.gmra.mrb[0].mxu0 %v698
    %v1060 = vpop.f32.mrb[0].mxu0
    %v1061 = vadd.f32 0.0, %v1060
    %v1062 = vpop.f32.mrb[0].mxu0
    %1063 = vmatprep.mubr.f32.mxu0 0.0
    %1064 = vmatmul.mubr.f32.gmra.mrb[0].mxu0 %v699
    %v1065 = vpop.f32.mrb[0].mxu0
    %v1066 = vadd.f32 0.0, %v1065
    %v1067 = vpop.f32.mrb[0].mxu0
    %1068 = vmatprep.mubr.f32.mxu0 0.0
    %1069 = vmatmul.mubr.f32.gmra.mrb[0].mxu0 %v700
    %v1070 = vpop.f32.mrb[0].mxu0
    %v1071 = vadd.f32 0.0, %v1070
    %v1072 = vpop.f32.mrb[0].mxu0
    %1073 = vmatprep.mubr.f32.mxu0 0.0
    %1074 = vmatmul.mubr.f32.gmra.mrb[0].mxu0 %v701
    %v1075 = vpop.f32.mrb[0].mxu0
    %v1076 = vadd.f32 0.0, %v1075
    %v1077 = vpop.f32.mrb[0].mxu0
    %1078 = vmatprep.mubr.f32.mxu0 0.0
    %1079 = vmatmul.mubr.f32.gmra.mrb[0].mxu0 %v702
    %v1080 = vpop.f32.mrb[0].mxu0
    %v1081 = vadd.f32 0.0, %v1080
    %v1082 = vpop.f32.mrb[0].mxu0
    %1083 = vmatprep.mubr.f32.mxu0 0.0
    %1084 = vmatmul.mubr.f32.gmra.mrb[0].mxu0 %v703
    %v1085 = vpop.f32.mrb[0].mxu0
    %v1086 = vadd.f32 0.0, %v1085
    %v1087 = vpop.f32.mrb[0].mxu0
    %1088 = vmatprep.mubr.f32.mxu0 0.0
    %1089 = vmatmul.mubr.f32.gmra.mrb[0].mxu0 %v704
    %v1090 = vpop.f32.mrb[0].mxu0
    %v1091 = vadd.f32 0.0, %v1090
    %v1092 = vpop.f32.mrb[0].mxu0
    %1093 = vmatprep.mubr.f32.mxu0 0.0
    %1094 = vmatmul.mubr.f32.gmra.mrb[0].mxu0 %v705
    %v1095 = vpop.f32.mrb[0].mxu0
    %v1096 = vadd.f32 0.0, %v1095
    %v1097 = vpop.f32.mrb[0].mxu0
    %1098 = vmatprep.mubr.f32.mxu0 0.0
    %1099 = vmatmul.mubr.f32.gmra.mrb[0].mxu0 %v706
    %v1100 = vpop.f32.mrb[0].mxu0
    %v1101 = vadd.f32 0.0, %v1100
    %v1102 = vpop.f32.mrb[0].mxu0
    %1103 = vmatprep.mubr.f32.mxu0 0.0
    %1104 = vmatmul.mubr.f32.gmra.mrb[0].mxu0 %v707
    %v1105 = vpop.f32.mrb[0].mxu0
    %v1106 = vadd.f32 0.0, %v1105
    %v1107 = vpop.f32.mrb[0].mxu0
    %1108 = vmatprep.mubr.f32.mxu0 0.0
    %1109 = vmatmul.mubr.f32.gmra.mrb[0].mxu0 %v708
    %v1110 = vpop.f32.mrb[0].mxu0
    %v1111 = vadd.f32 0.0, %v1110
    %v1112 = vpop.f32.mrb[0].mxu0
    %1113 = vmatprep.mubr.f32.mxu0 0.0
    %1114 = vmatmul.mubr.f32.gmra.mrb[0].mxu0 %v709
    %v1115 = vpop.f32.mrb[0].mxu0
    %v1116 = vadd.f32 0.0, %v1115
    %v1117 = vpop.f32.mrb[0].mxu0
    %1118 = vmatprep.mubr.f32.mxu0 0.0
    %1119 = vmatmul.mubr.f32.gmra.mrb[0].mxu0 %v710
    %v1120 = vpop.f32.mrb[0].mxu0
    %v1121 = vadd.f32 0.0, %v1120
    %v1122 = vpop.f32.mrb[0].mxu0
    %1123 = vmatprep.mubr.f32.mxu0 0.0
    %1124 = vmatmul.mubr.f32.gmra.mrb[0].mxu0 %v711
    %v1125 = vpop.f32.mrb[0].mxu0
    %v1126 = vadd.f32 0.0, %v1125
    %v1127 = vpop.f32.mrb[0].mxu0
    %1128 = vmatprep.mubr.f32.mxu0 0.0
    %1129 = vmatmul.mubr.f32.gmra.mrb[0].mxu0 %v712
    %v1130 = vpop.f32.mrb[0].mxu0
    %v1131 = vadd.f32 0.0, %v1130
    %v1132 = vpop.f32.mrb[0].mxu0
    %1133 = vmatprep.mubr.f32.mxu0 0.0
    %1134 = vmatmul.mubr.f32.gmra.mrb[0].mxu0 %v713
    %v1135 = vpop.f32.mrb[0].mxu0
    %v1136 = vadd.f32 0.0, %v1135
    %v1137 = vpop.f32.mrb[0].mxu0
    %1138 = vmatprep.mubr.f32.mxu0 0.0
    %1139 = vmatmul.mubr.f32.gmra.mrb[0].mxu0 %v714
    %v1140 = vpop.f32.mrb[0].mxu0
    %v1141 = vadd.f32 0.0, %v1140
    %v1142 = vpop.f32.mrb[0].mxu0
    %1143 = vmatprep.mubr.f32.mxu0 0.0
    %1144 = vmatmul.mubr.f32.gmra.mrb[0].mxu0 %v715
    %v1145 = vpop.f32.mrb[0].mxu0
    %v1146 = vadd.f32 0.0, %v1145
    %v1147 = vpop.f32.mrb[0].mxu0
    %1148 = vmatprep.mubr.f32.mxu0 0.0
    %1149 = vmatmul.mubr.f32.gmra.mrb[0].mxu0 %v716
    %v1150 = vpop.f32.mrb[0].mxu0
    %v1151 = vadd.f32 0.0, %v1150
    %v1152 = vpop.f32.mrb[0].mxu0
    %1153 = vmatprep.mubr.f32.mxu0 0.0
    %1154 = vmatmul.mubr.f32.gmra.mrb[0].mxu0 %v717
    %v1155 = vpop.f32.mrb[0].mxu0
    %v1156 = vadd.f32 0.0, %v1155
    %v1157 = vpop.f32.mrb[0].mxu0
    %1158 = vmatprep.mubr.f32.mxu0 0.0
    %1159 = vmatmul.mubr.f32.gmra.mrb[0].mxu0 %v718
    %v1160 = vpop.f32.mrb[0].mxu0
    %v1161 = vadd.f32 0.0, %v1160
    %v1162 = vpop.f32.mrb[0].mxu0
    %1163 = vmatprep.mubr.f32.mxu0 0.0
    %1164 = vmatmul.mubr.f32.gmra.mrb[0].mxu0 %v719
    %v1165 = vpop.f32.mrb[0].mxu0
    %v1166 = vadd.f32 0.0, %v1165
    %v1167 = vpop.f32.mrb[0].mxu0
    %1168 = vmatprep.mubr.f32.mxu0 0.0
    %1169 = vmatmul.mubr.f32.gmra.mrb[0].mxu0 %v720
    %v1170 = vpop.f32.mrb[0].mxu0
    %v1171 = vadd.f32 0.0, %v1170
    %v1172 = vpop.f32.mrb[0].mxu0
    %1173 = vmatprep.mubr.f32.mxu0 0.0
    %1174 = vmatmul.mubr.f32.gmra.mrb[0].mxu0 %v721
    %v1175 = vpop.f32.mrb[0].mxu0
    %v1176 = vadd.f32 0.0, %v1175
    %v1177 = vpop.f32.mrb[0].mxu0
    %1178 = vmatprep.mubr.f32.mxu0 0.0
    %1179 = vmatmul.mubr.f32.gmra.mrb[0].mxu0 %v722
    %v1180 = vpop.f32.mrb[0].mxu0
    %v1181 = vadd.f32 0.0, %v1180
    %v1182 = vpop.f32.mrb[0].mxu0
    %1183 = vmatprep.mubr.f32.mxu0 0.0
    %1184 = vmatmul.mubr.f32.gmra.mrb[0].mxu0 %v723
    %v1185 = vpop.f32.mrb[0].mxu0
    %v1186 = vadd.f32 0.0, %v1185
    %v1187 = vpop.f32.mrb[0].mxu0
    %1188 = vmatprep.mubr.f32.mxu0 0.0
    %1189 = vmatmul.mubr.f32.gmra.mrb[0].mxu0 %v724
    %v1190 = vpop.f32.mrb[0].mxu0
    %v1191 = vadd.f32 0.0, %v1190
    %v1192 = vpop.f32.mrb[0].mxu0
    %1193 = vmatprep.mubr.f32.mxu0 0.0
    %1194 = vmatmul.mubr.f32.gmra.mrb[0].mxu0 %v725
    %v1195 = vpop.f32.mrb[0].mxu0
    %v1196 = vadd.f32 0.0, %v1195
    %v1197 = vpop.f32.mrb[0].mxu0
    %1198 = vmatprep.mubr.f32.mxu0 0.0
    %1199 = vmatmul.mubr.f32.gmra.mrb[0].mxu0 %v726
    %v1200 = vpop.f32.mrb[0].mxu0
    %v1201 = vadd.f32 0.0, %v1200
    %v1202 = vpop.f32.mrb[0].mxu0
    %1203 = vmatprep.mubr.f32.mxu0 0.0
    %1204 = vmatmul.mubr.f32.gmra.mrb[0].mxu0 %v727
    %v1205 = vpop.f32.mrb[0].mxu0
    %v1206 = vadd.f32 0.0, %v1205
    %v1207 = vpop.f32.mrb[0].mxu0
    %1208 = vmatprep.mubr.f32.mxu0 0.0
    %1209 = vmatmul.mubr.f32.gmra.mrb[0].mxu0 %v728
    %v1210 = vpop.f32.mrb[0].mxu0
    %v1211 = vadd.f32 0.0, %v1210
    %v1212 = vpop.f32.mrb[0].mxu0
    %1213 = vmatprep.mubr.f32.mxu0 0.0
    %1214 = vmatmul.mubr.f32.gmra.mrb[0].mxu0 %v729
    %v1215 = vpop.f32.mrb[0].mxu0
    %v1216 = vadd.f32 0.0, %v1215
    %v1217 = vpop.f32.mrb[0].mxu0
    %1218 = vmatprep.mubr.f32.mxu0 0.0
    %1219 = vmatmul.mubr.f32.gmra.mrb[0].mxu0 %v730
    %v1220 = vpop.f32.mrb[0].mxu0
    %v1221 = vadd.f32 0.0, %v1220
    %v1222 = vpop.f32.mrb[0].mxu0
    %1223 = vmatprep.mubr.f32.mxu0 0.0
    %1224 = vmatmul.mubr.f32.gmra.mrb[0].mxu0 %v731
    %v1225 = vpop.f32.mrb[0].mxu0
    %v1226 = vadd.f32 0.0, %v1225
    %v1227 = vpop.f32.mrb[0].mxu0
    %1228 = vmatprep.mubr.f32.mxu0 0.0
    %1229 = vmatmul.mubr.f32.gmra.mrb[0].mxu0 %v732
    %v1230 = vpop.f32.mrb[0].mxu0
    %v1231 = vadd.f32 0.0, %v1230
    %v1232 = vpop.f32.mrb[0].mxu0
    %1233 = vmatprep.mubr.f32.mxu0 0.0
    %1234 = vmatmul.mubr.f32.gmra.mrb[0].mxu0 %v733
    %v1235 = vpop.f32.mrb[0].mxu0
    %v1236 = vadd.f32 0.0, %v1235
    %v1237 = vpop.f32.mrb[0].mxu0
    %1238 = vmatprep.mubr.f32.mxu0 0.0
    %1239 = vmatmul.mubr.f32.gmra.mrb[0].mxu0 %v734
    %v1240 = vpop.f32.mrb[0].mxu0
    %v1241 = vadd.f32 0.0, %v1240
    %v1242 = vpop.f32.mrb[0].mxu0
    %1243 = vmatprep.mubr.f32.mxu0 0.0
    %1244 = vmatmul.mubr.f32.gmra.mrb[0].mxu0 %v735
    %v1245 = vpop.f32.mrb[0].mxu0
    %v1246 = vadd.f32 0.0, %v1245
    %v1247 = vpop.f32.mrb[0].mxu0
    %1248 = vmatprep.mubr.f32.mxu0 0.0
    %1249 = vmatmul.mubr.f32.gmra.mrb[0].mxu0 %v736
    %v1250 = vpop.f32.mrb[0].mxu0
    %v1251 = vadd.f32 0.0, %v1250
    %v1252 = vpop.f32.mrb[0].mxu0
    %1253 = vmatprep.mubr.f32.mxu0 0.0
    %1254 = vmatmul.mubr.f32.gmra.mrb[0].mxu0 %v737
    %v1255 = vpop.f32.mrb[0].mxu0
    %v1256 = vadd.f32 0.0, %v1255
    %v1257 = vpop.f32.mrb[0].mxu0
    %1258 = vmatprep.mubr.f32.mxu0 0.0
    %1259 = vmatmul.mubr.f32.gmra.mrb[0].mxu0 %v738
    %v1260 = vpop.f32.mrb[0].mxu0
    %v1261 = vadd.f32 0.0, %v1260
    %v1262 = vpop.f32.mrb[0].mxu0
    %1263 = vmatprep.mubr.f32.mxu0 0.0
    %1264 = vmatmul.mubr.f32.gmra.mrb[0].mxu0 %v739
    %v1265 = vpop.f32.mrb[0].mxu0
    %v1266 = vadd.f32 0.0, %v1265
    %v1267 = vpop.f32.mrb[0].mxu0
    %1268 = vmatprep.mubr.f32.mxu0 0.0
    %1269 = vmatmul.mubr.f32.gmra.mrb[0].mxu0 %v740
    %v1270 = vpop.f32.mrb[0].mxu0
    %v1271 = vadd.f32 0.0, %v1270
    %v1272 = vpop.f32.mrb[0].mxu0
    %1273 = vmatprep.mubr.f32.mxu0 0.0
    %1274 = vmatmul.mubr.f32.gmra.mrb[0].mxu0 %v741
    %v1275 = vpop.f32.mrb[0].mxu0
    %v1276 = vadd.f32 0.0, %v1275
    %v1277 = vpop.f32.mrb[0].mxu0
    %1278 = vmatprep.mubr.f32.mxu0 0.0
    %1279 = vmatmul.mubr.f32.gmra.mrb[0].mxu0 %v742
    %v1280 = vpop.f32.mrb[0].mxu0
    %v1281 = vadd.f32 0.0, %v1280
    %v1282 = vpop.f32.mrb[0].mxu0
    %1283 = vmatprep.mubr.f32.mxu0 0.0
    %1284 = vmatmul.mubr.f32.gmra.mrb[0].mxu0 %v743
    %v1285 = vpop.f32.mrb[0].mxu0
    %v1286 = vadd.f32 0.0, %v1285
    %v1287 = vpop.f32.mrb[0].mxu0
    %1288 = vmatprep.mubr.f32.mxu0 0.0
    %1289 = vmatmul.mubr.f32.gmra.mrb[0].mxu0 %v744
    %v1290 = vpop.f32.mrb[0].mxu0
    %v1291 = vadd.f32 0.0, %v1290
    %v1292 = vpop.f32.mrb[0].mxu0
    %1293 = vmatprep.mubr.f32.mxu0 0.0
    %1294 = vmatmul.mubr.f32.gmra.mrb[0].mxu0 %v745
    %v1295 = vpop.f32.mrb[0].mxu0
    %v1296 = vadd.f32 0.0, %v1295
    %v1297 = vpop.f32.mrb[0].mxu0
    %1298 = vmatprep.mubr.f32.mxu0 0.0
    %1299 = vmatmul.mubr.f32.gmra.mrb[0].mxu0 %v746
    %v1300 = vpop.f32.mrb[0].mxu0
    %v1301 = vadd.f32 0.0, %v1300
    %v1302 = vpop.f32.mrb[0].mxu0
    %1303 = vmatprep.mubr.f32.mxu0 0.0
    %1304 = vmatmul.mubr.f32.gmra.mrb[0].mxu0 %v747
    %v1305 = vpop.f32.mrb[0].mxu0
    %v1306 = vadd.f32 0.0, %v1305
    %v1307 = vpop.f32.mrb[0].mxu0
    %1308 = vmatprep.mubr.f32.mxu0 0.0
    %1309 = vmatmul.mubr.f32.gmra.mrb[0].mxu0 %v748
    %v1310 = vpop.f32.mrb[0].mxu0
    %v1311 = vadd.f32 0.0, %v1310
    %v1312 = vpop.f32.mrb[0].mxu0
    %1313 = vmatprep.mubr.f32.mxu0 0.0
    %1314 = vmatmul.mubr.f32.gmra.mrb[0].mxu0 %v749
    %v1315 = vpop.f32.mrb[0].mxu0
    %v1316 = vadd.f32 0.0, %v1315
    %v1317 = vpop.f32.mrb[0].mxu0
    %1318 = vmatprep.mubr.f32.mxu0 0.0
    %1319 = vmatmul.mubr.f32.gmra.mrb[0].mxu0 %v750
    %v1320 = vpop.f32.mrb[0].mxu0
    %v1321 = vadd.f32 0.0, %v1320
    %v1322 = vpop.f32.mrb[0].mxu0
    %1323 = vmatprep.mubr.f32.mxu0 0.0
    %1324 = vmatmul.mubr.f32.gmra.mrb[0].mxu0 %v751
    %v1325 = vpop.f32.mrb[0].mxu0
    %v1326 = vadd.f32 0.0, %v1325
    %v1327 = vpop.f32.mrb[0].mxu0
    %1328 = vmatprep.mubr.f32.mxu0 0.0
    %1329 = vmatmul.mubr.f32.gmra.mrb[0].mxu0 %v752
    %v1330 = vpop.f32.mrb[0].mxu0
    %v1331 = vadd.f32 0.0, %v1330
    %v1332 = vpop.f32.mrb[0].mxu0
    %1333 = vmatprep.mubr.f32.mxu0 0.0
    %1334 = vmatmul.mubr.f32.gmra.mrb[0].mxu0 %v753
    %v1335 = vpop.f32.mrb[0].mxu0
    %v1336 = vadd.f32 0.0, %v1335
    %v1337 = vpop.f32.mrb[0].mxu0
    %1338 = vmatprep.mubr.f32.mxu0 0.0
    %1339 = vmatmul.mubr.f32.gmra.mrb[0].mxu0 %v754
    %v1340 = vpop.f32.mrb[0].mxu0
    %v1341 = vadd.f32 0.0, %v1340
    %v1342 = vpop.f32.mrb[0].mxu0
    %1343 = vmatprep.mubr.f32.mxu0 0.0
    %1344 = vmatmul.mubr.f32.gmra.mrb[0].mxu0 %v755
    %v1345 = vpop.f32.mrb[0].mxu0
    %v1346 = vadd.f32 0.0, %v1345
    %v1347 = vpop.f32.mrb[0].mxu0
    %1348 = vmatprep.mubr.f32.mxu0 0.0
    %1349 = vmatmul.mubr.f32.gmra.mrb[0].mxu0 %v756
    %v1350 = vpop.f32.mrb[0].mxu0
    %v1351 = vadd.f32 0.0, %v1350
    %v1352 = vpop.f32.mrb[0].mxu0
    %1353 = vmatprep.mubr.f32.mxu0 0.0
    %1354 = vmatmul.mubr.f32.gmra.mrb[0].mxu0 %v757
    %v1355 = vpop.f32.mrb[0].mxu0
    %v1356 = vadd.f32 0.0, %v1355
    %v1357 = vpop.f32.mrb[0].mxu0
    %1358 = vmatprep.mubr.f32.mxu0 0.0
    %1359 = vmatmul.mubr.f32.gmra.mrb[0].mxu0 %v758
    %v1360 = vpop.f32.mrb[0].mxu0
    %v1361 = vadd.f32 0.0, %v1360
    %v1362 = vpop.f32.mrb[0].mxu0
    %1363 = vmatprep.mubr.f32.mxu0 0.0
    %1364 = vmatmul.mubr.f32.gmra.mrb[0].mxu0 %v759
    %v1365 = vpop.f32.mrb[0].mxu0
    %v1366 = vadd.f32 0.0, %v1365
    %v1367 = vpop.f32.mrb[0].mxu0
    %1368 = vmatprep.mubr.f32.mxu0 0.0
    %1369 = vmatmul.mubr.f32.gmra.mrb[0].mxu0 %v760
    %v1370 = vpop.f32.mrb[0].mxu0
    %v1371 = vadd.f32 0.0, %v1370
    %v1372 = vpop.f32.mrb[0].mxu0
    %1373 = vmatprep.mubr.f32.mxu0 0.0
    %1374 = vmatmul.mubr.f32.gmra.mrb[0].mxu0 %v761
    %v1375 = vpop.f32.mrb[0].mxu0
    %v1376 = vadd.f32 0.0, %v1375
    %v1377 = vpop.f32.mrb[0].mxu0
    %1378 = vmatprep.mubr.f32.mxu0 0.0
    %1379 = vmatmul.mubr.f32.gmra.mrb[0].mxu0 %v762
    %v1380 = vpop.f32.mrb[0].mxu0
    %v1381 = vadd.f32 0.0, %v1380
    %v1382 = vpop.f32.mrb[0].mxu0
    %1383 = vmatprep.mubr.f32.mxu0 0.0
    %1384 = vmatmul.mubr.f32.gmra.mrb[0].mxu0 %v763
    %v1385 = vpop.f32.mrb[0].mxu0
    %v1386 = vadd.f32 0.0, %v1385
    %v1387 = vpop.f32.mrb[0].mxu0
    %1388 = vmatprep.mubr.f32.mxu0 0.0
    %1389 = vmatmul.mubr.f32.gmra.mrb[0].mxu0 %v764
    %v1390 = vpop.f32.mrb[0].mxu0
    %v1391 = vadd.f32 0.0, %v1390
    %v1392 = vpop.f32.mrb[0].mxu0
    %1393 = vmatprep.mubr.f32.mxu0 0.0
    %1394 = vmatmul.mubr.f32.gmra.mrb[0].mxu0 %v765
    %v1395 = vpop.f32.mrb[0].mxu0
    %v1396 = vadd.f32 0.0, %v1395
    %v1397 = vpop.f32.mrb[0].mxu0
    %1398 = vmatprep.mubr.f32.mxu0 0.0
    %1399 = vmatmul.mubr.f32.gmra.mrb[0].mxu0 %v766
    %v1400 = vpop.f32.mrb[0].mxu0
    %v1401 = vadd.f32 0.0, %v1400
    %v1402 = vpop.f32.mrb[0].mxu0
    %1403 = vmatprep.mubr.f32.mxu0 0.0
    %1404 = vmatmul.mubr.f32.gmra.mrb[0].mxu0 %v767
    %v1405 = vpop.f32.mrb[0].mxu0
    %v1406 = vadd.f32 0.0, %v1405
    %v1407 = vpop.f32.mrb[0].mxu0
    %1408 = vmatprep.mubr.f32.mxu0 0.0
    %1409 = vmatmul.mubr.f32.gmra.mrb[0].mxu0 %v768
    %v1410 = vpop.f32.mrb[0].mxu0
    %v1411 = vadd.f32 0.0, %v1410
    %v1412 = vpop.f32.mrb[0].mxu0
    %1413 = vmatprep.mubr.f32.mxu0 0.0
    %1414 = vmatmul.mubr.f32.gmra.mrb[0].mxu0 %v769
    %v1415 = vpop.f32.mrb[0].mxu0
    %v1416 = vadd.f32 0.0, %v1415
    %v1417 = vpop.f32.mrb[0].mxu0
    %1418 = vmatprep.mubr.f32.mxu0 0.0
    %1419 = vmatmul.mubr.f32.gmra.mrb[0].mxu0 %v770
    %v1420 = vpop.f32.mrb[0].mxu0
    %v1421 = vadd.f32 0.0, %v1420
    %v1422 = vpop.f32.mrb[0].mxu0
    %1423 = vmatprep.mubr.f32.mxu0 0.0
    %1424 = vmatmul.mubr.f32.gmra.mrb[0].mxu0 %v771
    %v1425 = vpop.f32.mrb[0].mxu0
    %v1426 = vadd.f32 0.0, %v1425
    %v1427 = vpop.f32.mrb[0].mxu0
    %1428 = vmatprep.mubr.f32.mxu0 0.0
    %1429 = vmatmul.mubr.f32.gmra.mrb[0].mxu0 %v772
    %v1430 = vpop.f32.mrb[0].mxu0
    %v1431 = vadd.f32 0.0, %v1430
    %v1432 = vpop.f32.mrb[0].mxu0
    %1433 = vmatprep.mubr.f32.mxu0 0.0
    %1434 = vmatmul.mubr.f32.gmra.mrb[0].mxu0 %v773
    %v1435 = vpop.f32.mrb[0].mxu0
    %v1436 = vadd.f32 0.0, %v1435
    %v1437 = vpop.f32.mrb[0].mxu0
    %1438 = vmatprep.mubr.f32.mxu0 0.0
    %1439 = vmatmul.mubr.f32.gmra.mrb[0].mxu0 %v774
    %v1440 = vpop.f32.mrb[0].mxu0
    %v1441 = vadd.f32 0.0, %v1440
    %v1442 = vpop.f32.mrb[0].mxu0
    %1443 = vmatprep.mubr.f32.mxu0 0.0
    %1444 = vmatmul.mubr.f32.gmra.mrb[0].mxu0 %v775
    %v1445 = vpop.f32.mrb[0].mxu0
    %v1446 = vadd.f32 0.0, %v1445
    %v1447 = vpop.f32.mrb[0].mxu0
    %1448 = vmatprep.mubr.f32.mxu0 0.0
    %1449 = vmatmul.mubr.f32.gmra.mrb[0].mxu0 %v776
    %v1450 = vpop.f32.mrb[0].mxu0
    %v1451 = vadd.f32 0.0, %v1450
    %v1452 = vpop.f32.mrb[0].mxu0
    %1453 = vmatprep.mubr.f32.mxu0 0.0
    %1454 = vmatmul.mubr.f32.gmra.mrb[0].mxu0 %v777
    %v1455 = vpop.f32.mrb[0].mxu0
    %v1456 = vadd.f32 0.0, %v1455
    %v1457 = vpop.f32.mrb[0].mxu0
    %1458 = vmatprep.mubr.f32.mxu0 0.0
    %1459 = vmatmul.mubr.f32.gmra.mrb[0].mxu0 %v778
    %v1460 = vpop.f32.mrb[0].mxu0
    %v1461 = vadd.f32 0.0, %v1460
    %v1462 = vpop.f32.mrb[0].mxu0
    %1463 = vmatprep.mubr.f32.mxu0 0.0
    %1464 = vmatmul.mubr.f32.gmra.mrb[0].mxu0 %v779
    %v1465 = vpop.f32.mrb[0].mxu0
    %v1466 = vadd.f32 0.0, %v1465
    %v1467 = vpop.f32.mrb[0].mxu0
    %1468 = vmatprep.mubr.f32.mxu0 0.0
    %1469 = vmatmul.mubr.f32.gmra.mrb[0].mxu0 %v780
    %v1470 = vpop.f32.mrb[0].mxu0
    %v1471 = vadd.f32 0.0, %v1470
    %v1472 = vpop.f32.mrb[0].mxu0
    %1473 = vmatprep.mubr.f32.mxu0 0.0
    %1474 = vmatmul.mubr.f32.gmra.mrb[0].mxu0 %v781
    %v1475 = vpop.f32.mrb[0].mxu0
    %v1476 = vadd.f32 0.0, %v1475
    %v1477 = vpop.f32.mrb[0].mxu0
    %1478 = vmatprep.mubr.f32.mxu0 0.0
    %1479 = vmatmul.mubr.f32.gmra.mrb[0].mxu0 %v782
    %v1480 = vpop.f32.mrb[0].mxu0
    %v1481 = vadd.f32 0.0, %v1480
    %v1482 = vpop.f32.mrb[0].mxu0
    %1483 = vmatprep.mubr.f32.mxu0 0.0
    %1484 = vmatmul.mubr.f32.gmra.mrb[0].mxu0 %v783
    %v1485 = vpop.f32.mrb[0].mxu0
    %v1486 = vadd.f32 0.0, %v1485
    %v1487 = vpop.f32.mrb[0].mxu0
    %1488 = vmatprep.mubr.f32.mxu0 0.0
    %1489 = vmatmul.mubr.f32.gmra.mrb[0].mxu0 %v784
    %v1490 = vpop.f32.mrb[0].mxu0
    %v1491 = vadd.f32 0.0, %v1490
    %v1492 = vpop.f32.mrb[0].mxu0
    %1493 = vmatprep.mubr.f32.mxu0 0.0
    %1494 = vmatmul.mubr.f32.gmra.mrb[0].mxu0 %v785
    %v1495 = vpop.f32.mrb[0].mxu0
    %v1496 = vadd.f32 0.0, %v1495
    %v1497 = vpop.f32.mrb[0].mxu0
    %1498 = vmatprep.mubr.f32.mxu0 0.0
    %1499 = vmatmul.mubr.f32.gmra.mrb[0].mxu0 %v786
    %v1500 = vpop.f32.mrb[0].mxu0
    %v1501 = vadd.f32 0.0, %v1500
    %v1502 = vpop.f32.mrb[0].mxu0
    %1503 = vmatprep.mubr.f32.mxu0 0.0
    %1504 = vmatmul.mubr.f32.gmra.mrb[0].mxu0 %v787
    %v1505 = vpop.f32.mrb[0].mxu0
    %v1506 = vadd.f32 0.0, %v1505
    %v1507 = vpop.f32.mrb[0].mxu0
    %1508 = vmatprep.mubr.f32.mxu0 0.0
    %1509 = vmatmul.mubr.f32.gmra.mrb[0].mxu0 %v788
    %v1510 = vpop.f32.mrb[0].mxu0
    %v1511 = vadd.f32 0.0, %v1510
    %v1512 = vpop.f32.mrb[0].mxu0
    %1513 = vmatprep.mubr.f32.mxu0 0.0
    %1514 = vmatmul.mubr.f32.gmra.mrb[0].mxu0 %v789
    %v1515 = vpop.f32.mrb[0].mxu0
    %v1516 = vadd.f32 0.0, %v1515
    %v1517 = vpop.f32.mrb[0].mxu0
    %1518 = vmatprep.mubr.f32.mxu0 0.0
    %1519 = vmatmul.mubr.f32.gmra.mrb[0].mxu0 %v790
    %v1520 = vpop.f32.mrb[0].mxu0
    %v1521 = vadd.f32 0.0, %v1520
    %v1522 = vpop.f32.mrb[0].mxu0
    %1523 = vmatprep.mubr.f32.mxu0 0.0
    %1524 = vmatmul.mubr.f32.gmra.mrb[0].mxu0 %v791
    %v1525 = vpop.f32.mrb[0].mxu0
    %v1526 = vadd.f32 0.0, %v1525
    %v1527 = vpop.f32.mrb[0].mxu0
    %1528 = vmatprep.mubr.f32.mxu0 0.0
    %1529 = vmatmul.mubr.f32.gmra.mrb[0].mxu0 %v792
    %v1530 = vpop.f32.mrb[0].mxu0
    %v1531 = vadd.f32 0.0, %v1530
    %v1532 = vpop.f32.mrb[0].mxu0
    %1533 = vmatprep.mubr.f32.mxu0 0.0
    %1534 = vmatmul.mubr.f32.gmra.mrb[0].mxu0 %v793
    %v1535 = vpop.f32.mrb[0].mxu0
    %v1536 = vadd.f32 0.0, %v1535
    %v1537 = vpop.f32.mrb[0].mxu0
    %1538 = vmatprep.mubr.f32.mxu0 0.0
    %1539 = vmatmul.mubr.f32.gmra.mrb[0].mxu0 %v794
    %v1540 = vpop.f32.mrb[0].mxu0
    %v1541 = vadd.f32 0.0, %v1540
    %v1542 = vpop.f32.mrb[0].mxu0
    %1543 = vmatprep.mubr.f32.mxu0 0.0
    %1544 = vmatmul.mubr.f32.gmra.mrb[0].mxu0 %v795
    %v1545 = vpop.f32.mrb[0].mxu0
    %v1546 = vadd.f32 0.0, %v1545
    %v1547 = vpop.f32.mrb[0].mxu0
    %1548 = vmatprep.mubr.f32.mxu0 0.0
    %1549 = vmatmul.mubr.f32.gmra.mrb[0].mxu0 %v796
    %v1550 = vpop.f32.mrb[0].mxu0
    %v1551 = vadd.f32 0.0, %v1550
    %v1552 = vpop.f32.mrb[0].mxu0
    %1553 = vmatprep.mubr.f32.mxu0 0.0
    %1554 = vmatmul.mubr.f32.gmra.mrb[0].mxu0 %v797
    %v1555 = vpop.f32.mrb[0].mxu0
    %v1556 = vadd.f32 0.0, %v1555
    %v1557 = vpop.f32.mrb[0].mxu0
    %1558 = vmatprep.mubr.f32.mxu0 0.0
    %1559 = vmatmul.mubr.f32.gmra.mrb[0].mxu0 %v798
    %v1560 = vpop.f32.mrb[0].mxu0
    %v1561 = vadd.f32 0.0, %v1560
    %v1562 = vpop.f32.mrb[0].mxu0
    %1563 = vmatprep.mubr.f32.mxu0 0.0
    %1564 = vmatmul.mubr.f32.gmra.mrb[0].mxu0 %v799
    %v1565 = vpop.f32.mrb[0].mxu0
    %v1566 = vadd.f32 0.0, %v1565
    %v1567 = vpop.f32.mrb[0].mxu0
    %1568 = vmatprep.mubr.f32.mxu0 0.0
    %1569 = vmatmul.mubr.f32.gmra.mrb[0].mxu0 %v800
    %v1570 = vpop.f32.mrb[0].mxu0
    %v1571 = vadd.f32 0.0, %v1570
    %v1572 = vpop.f32.mrb[0].mxu0
    %1573 = vmatprep.mubr.f32.mxu0 0.0
    %1574 = vmatmul.mubr.f32.gmra.mrb[0].mxu0 %v801
    %v1575 = vpop.f32.mrb[0].mxu0
    %v1576 = vadd.f32 0.0, %v1575
    %v1577 = vpop.f32.mrb[0].mxu0
    %1578 = vmatprep.mubr.f32.mxu0 0.0
    %1579 = vmatmul.mubr.f32.gmra.mrb[0].mxu0 %v802
    %v1580 = vpop.f32.mrb[0].mxu0
    %v1581 = vadd.f32 0.0, %v1580
    %v1582 = vpop.f32.mrb[0].mxu0
    %1583 = vmatprep.mubr.f32.mxu0 0.0
    %1584 = vmatmul.mubr.f32.gmra.mrb[0].mxu0 %v803
    %v1585 = vpop.f32.mrb[0].mxu0
    %v1586 = vadd.f32 0.0, %v1585
    %v1587 = vpop.f32.mrb[0].mxu0
    %1588 = vdwg.mxu0
    %v1589 = vld [vmem:[#allocation7] sm:$0xff]
    %v1590 = vld [vmem:[#allocation7 + $0x8] sm:$0xff]
    %v1591 = vld [vmem:[#allocation7 + $0x10] sm:$0xff]
    %v1592 = vld [vmem:[#allocation7 + $0x18] sm:$0xff]
    %v1593 = vld [vmem:[#allocation7 + $0x20] sm:$0xff]
    %v1594 = vld [vmem:[#allocation7 + $0x28] sm:$0xff]
    %v1595 = vld [vmem:[#allocation7 + $0x30] sm:$0xff]
    %v1596 = vld [vmem:[#allocation7 + $0x38] sm:$0xff]
    %s1597 = scalar_lea.vmem [#allocation7], 64
    %v1598 = vld [vmem:[%s1597] sm:$0xff]
    %v1599 = vld [vmem:[%s1597 + $0x8] sm:$0xff]
    %v1600 = vld [vmem:[%s1597 + $0x10] sm:$0xff]
    %v1601 = vld [vmem:[%s1597 + $0x18] sm:$0xff]
    %v1602 = vld [vmem:[%s1597 + $0x20] sm:$0xff]
    %v1603 = vld [vmem:[%s1597 + $0x28] sm:$0xff]
    %v1604 = vld [vmem:[%s1597 + $0x30] sm:$0xff]
    %v1605 = vld [vmem:[%s1597 + $0x38] sm:$0xff]
    %v1607 = vsel %vm372, %v951, 0
    %v1610 = vsel %vm372, %v956, 0
    %v1613 = vsel %vm372, %v961, 0
    %v1616 = vsel %vm372, %v966, 0
    %v1619 = vsel %vm372, %v971, 0
    %v1622 = vsel %vm372, %v976, 0
    %v1625 = vsel %vm372, %v981, 0
    %v1628 = vsel %vm372, %v986, 0
    %v1631 = vsel %vm372, %v991, 0
    %v1634 = vsel %vm372, %v996, 0
    %v1637 = vsel %vm372, %v1001, 0
    %v1640 = vsel %vm372, %v1006, 0
    %v1643 = vsel %vm372, %v1011, 0
    %v1646 = vsel %vm372, %v1016, 0
    %v1649 = vsel %vm372, %v1021, 0
    %v1652 = vsel %vm372, %v1026, 0
    %1654 = vmatprep.subr.mxu0 0.0
    %1655 = vmatpush1.msra.mxu0 %v1598
    %1656 = vmatprep.subr.mxu0 0.0
    %1657 = vmatpush1.msra.mxu0 %v1599
    %1658 = vmatprep.subr.mxu0 0.0
    %1659 = vmatpush1.msra.mxu0 %v1600
    %1660 = vmatprep.subr.mxu0 0.0
    %1661 = vmatpush1.msra.mxu0 %v1601
    %1662 = vmatprep.subr.mxu0 0.0
    %1663 = vmatpush1.msra.mxu0 %v1602
    %1664 = vmatprep.subr.mxu0 0.0
    %1665 = vmatpush1.msra.mxu0 %v1603
    %1666 = vmatprep.subr.mxu0 0.0
    %1667 = vmatpush1.msra.mxu0 %v1604
    %1668 = vmatprep.subr.mxu0 0.0
    %1669 = vmatpush1.msra.mxu0 %v1605
    %1670 = vmatprep.subr.mxu0 0.0
    %1671 = vmatpush1.msra.mxu0 0.0
    %1672 = vmatprep.subr.mxu0 0.0
    %1673 = vmatpush1.msra.mxu0 0.0
    %1674 = vmatprep.subr.mxu0 0.0
    %1675 = vmatpush1.msra.mxu0 0.0
    %1676 = vmatprep.subr.mxu0 0.0
    %1677 = vmatpush1.msra.mxu0 0.0
    %1678 = vmatprep.subr.mxu0 0.0
    %1679 = vmatpush1.msra.mxu0 0.0
    %1680 = vmatprep.subr.mxu0 0.0
    %1681 = vmatpush1.msra.mxu0 0.0
    %1682 = vmatprep.subr.mxu0 0.0
    %1683 = vmatpush1.msra.mxu0 0.0
    %1684 = vmatprep.subr.mxu0 0.0
    %1685 = vmatpush1.msra.mxu0 0.0
    %1686 = vmatprep.subr.mxu0 0.0
    %1687 = vmatpush1.msra.mxu0 0.0
    %1688 = vmatprep.subr.mxu0 0.0
    %1689 = vmatpush1.msra.mxu0 0.0
    %1690 = vmatprep.subr.mxu0 0.0
    %1691 = vmatpush1.msra.mxu0 0.0
    %1692 = vmatprep.subr.mxu0 0.0
    %1693 = vmatpush1.msra.mxu0 0.0
    %1694 = vmatprep.subr.mxu0 0.0
    %1695 = vmatpush1.msra.mxu0 0.0
    %1696 = vmatprep.subr.mxu0 0.0
    %1697 = vmatpush1.msra.mxu0 0.0
    %1698 = vmatprep.subr.mxu0 0.0
    %1699 = vmatpush1.msra.mxu0 0.0
    %1700 = vmatprep.subr.mxu0 0.0
    %1701 = vmatpush1.msra.mxu0 0.0
    %1702 = vmatprep.subr.mxu0 0.0
    %1703 = vmatpush1.msra.mxu0 0.0
    %1704 = vmatprep.subr.mxu0 0.0
    %1705 = vmatpush1.msra.mxu0 0.0
    %1706 = vmatprep.subr.mxu0 0.0
    %1707 = vmatpush1.msra.mxu0 0.0
    %1708 = vmatprep.subr.mxu0 0.0
    %1709 = vmatpush1.msra.mxu0 0.0
    %1710 = vmatprep.subr.mxu0 0.0
    %1711 = vmatpush1.msra.mxu0 0.0
    %1712 = vmatprep.subr.mxu0 0.0
    %1713 = vmatpush1.msra.mxu0 0.0
    %1714 = vmatprep.subr.mxu0 0.0
    %1715 = vmatpush1.msra.mxu0 0.0
    %1716 = vmatprep.subr.mxu0 0.0
    %1717 = vmatpush1.msra.mxu0 0.0
    %1718 = vmatprep.mubr.f32.mxu0 0.0
    %1719 = vmatmul.mubr.f32.gmra.mrb[0].mxu0 %v1607
    %v1720 = vpop.f32.mrb[0].mxu0
    %v1721 = vadd.f32 0.0, %v1720
    %v1722 = vpop.f32.mrb[0].mxu0
    %1723 = vmatprep.mubr.f32.mxu0 0.0
    %1724 = vmatmul.mubr.f32.gmra.mrb[0].mxu0 %v1610
    %v1725 = vpop.f32.mrb[0].mxu0
    %v1726 = vadd.f32 0.0, %v1725
    %v1727 = vpop.f32.mrb[0].mxu0
    %1728 = vmatprep.mubr.f32.mxu0 0.0
    %1729 = vmatmul.mubr.f32.gmra.mrb[0].mxu0 %v1613
    %v1730 = vpop.f32.mrb[0].mxu0
    %v1731 = vadd.f32 0.0, %v1730
    %v1732 = vpop.f32.mrb[0].mxu0
    %1733 = vmatprep.mubr.f32.mxu0 0.0
    %1734 = vmatmul.mubr.f32.gmra.mrb[0].mxu0 %v1616
    %v1735 = vpop.f32.mrb[0].mxu0
    %v1736 = vadd.f32 0.0, %v1735
    %v1737 = vpop.f32.mrb[0].mxu0
    %1738 = vmatprep.mubr.f32.mxu0 0.0
    %1739 = vmatmul.mubr.f32.gmra.mrb[0].mxu0 %v1619
    %v1740 = vpop.f32.mrb[0].mxu0
    %v1741 = vadd.f32 0.0, %v1740
    %v1742 = vpop.f32.mrb[0].mxu0
    %1743 = vmatprep.mubr.f32.mxu0 0.0
    %1744 = vmatmul.mubr.f32.gmra.mrb[0].mxu0 %v1622
    %v1745 = vpop.f32.mrb[0].mxu0
    %v1746 = vadd.f32 0.0, %v1745
    %v1747 = vpop.f32.mrb[0].mxu0
    %1748 = vmatprep.mubr.f32.mxu0 0.0
    %1749 = vmatmul.mubr.f32.gmra.mrb[0].mxu0 %v1625
    %v1750 = vpop.f32.mrb[0].mxu0
    %v1751 = vadd.f32 0.0, %v1750
    %v1752 = vpop.f32.mrb[0].mxu0
    %1753 = vmatprep.mubr.f32.mxu0 0.0
    %1754 = vmatmul.mubr.f32.gmra.mrb[0].mxu0 %v1628
    %v1755 = vpop.f32.mrb[0].mxu0
    %v1756 = vadd.f32 0.0, %v1755
    %v1757 = vpop.f32.mrb[0].mxu0
    %1758 = vmatprep.mubr.f32.mxu0 0.0
    %1759 = vmatmul.mubr.f32.gmra.mrb[0].mxu0 %v1631
    %v1760 = vpop.f32.mrb[0].mxu0
    %v1761 = vadd.f32 0.0, %v1760
    %v1762 = vpop.f32.mrb[0].mxu0
    %1763 = vmatprep.mubr.f32.mxu0 0.0
    %1764 = vmatmul.mubr.f32.gmra.mrb[0].mxu0 %v1634
    %v1765 = vpop.f32.mrb[0].mxu0
    %v1766 = vadd.f32 0.0, %v1765
    %v1767 = vpop.f32.mrb[0].mxu0
    %1768 = vmatprep.mubr.f32.mxu0 0.0
    %1769 = vmatmul.mubr.f32.gmra.mrb[0].mxu0 %v1637
    %v1770 = vpop.f32.mrb[0].mxu0
    %v1771 = vadd.f32 0.0, %v1770
    %v1772 = vpop.f32.mrb[0].mxu0
    %1773 = vmatprep.mubr.f32.mxu0 0.0
    %1774 = vmatmul.mubr.f32.gmra.mrb[0].mxu0 %v1640
    %v1775 = vpop.f32.mrb[0].mxu0
    %v1776 = vadd.f32 0.0, %v1775
    %v1777 = vpop.f32.mrb[0].mxu0
    %1778 = vmatprep.mubr.f32.mxu0 0.0
    %1779 = vmatmul.mubr.f32.gmra.mrb[0].mxu0 %v1643
    %v1780 = vpop.f32.mrb[0].mxu0
    %v1781 = vadd.f32 0.0, %v1780
    %v1782 = vpop.f32.mrb[0].mxu0
    %1783 = vmatprep.mubr.f32.mxu0 0.0
    %1784 = vmatmul.mubr.f32.gmra.mrb[0].mxu0 %v1646
    %v1785 = vpop.f32.mrb[0].mxu0
    %v1786 = vadd.f32 0.0, %v1785
    %v1787 = vpop.f32.mrb[0].mxu0
    %1788 = vmatprep.mubr.f32.mxu0 0.0
    %1789 = vmatmul.mubr.f32.gmra.mrb[0].mxu0 %v1649
    %v1790 = vpop.f32.mrb[0].mxu0
    %v1791 = vadd.f32 0.0, %v1790
    %v1792 = vpop.f32.mrb[0].mxu0
    %1793 = vmatprep.mubr.f32.mxu0 0.0
    %1794 = vmatmul.mubr.f32.gmra.mrb[0].mxu0 %v1652
    %v1795 = vpop.f32.mrb[0].mxu0
    %v1796 = vadd.f32 0.0, %v1795
    %v1797 = vpop.f32.mrb[0].mxu0
    %1798 = vdwg.mxu0
    %v1800 = vsel %vm372, %v871, 0
    %v1803 = vsel %vm372, %v876, 0
    %v1806 = vsel %vm372, %v881, 0
    %v1809 = vsel %vm372, %v886, 0
    %v1812 = vsel %vm372, %v891, 0
    %v1815 = vsel %vm372, %v896, 0
    %v1818 = vsel %vm372, %v901, 0
    %v1821 = vsel %vm372, %v906, 0
    %v1824 = vsel %vm372, %v911, 0
    %v1827 = vsel %vm372, %v916, 0
    %v1830 = vsel %vm372, %v921, 0
    %v1833 = vsel %vm372, %v926, 0
    %v1836 = vsel %vm372, %v931, 0
    %v1839 = vsel %vm372, %v936, 0
    %v1842 = vsel %vm372, %v941, 0
    %v1845 = vsel %vm372, %v946, 0
    %1847 = vmatprep.subr.mxu0 0.0
    %1848 = vmatpush1.msra.mxu0 %v1589
    %1849 = vmatprep.subr.mxu0 0.0
    %1850 = vmatpush1.msra.mxu0 %v1590
    %1851 = vmatprep.subr.mxu0 0.0
    %1852 = vmatpush1.msra.mxu0 %v1591
    %1853 = vmatprep.subr.mxu0 0.0
    %1854 = vmatpush1.msra.mxu0 %v1592
    %1855 = vmatprep.subr.mxu0 0.0
    %1856 = vmatpush1.msra.mxu0 %v1593
    %1857 = vmatprep.subr.mxu0 0.0
    %1858 = vmatpush1.msra.mxu0 %v1594
    %1859 = vmatprep.subr.mxu0 0.0
    %1860 = vmatpush1.msra.mxu0 %v1595
    %1861 = vmatprep.subr.mxu0 0.0
    %1862 = vmatpush1.msra.mxu0 %v1596
    %1863 = vmatprep.subr.mxu0 0.0
    %1864 = vmatpush1.msra.mxu0 0.0
    %1865 = vmatprep.subr.mxu0 0.0
    %1866 = vmatpush1.msra.mxu0 0.0
    %1867 = vmatprep.subr.mxu0 0.0
    %1868 = vmatpush1.msra.mxu0 0.0
    %1869 = vmatprep.subr.mxu0 0.0
    %1870 = vmatpush1.msra.mxu0 0.0
    %1871 = vmatprep.subr.mxu0 0.0
    %1872 = vmatpush1.msra.mxu0 0.0
    %1873 = vmatprep.subr.mxu0 0.0
    %1874 = vmatpush1.msra.mxu0 0.0
    %1875 = vmatprep.subr.mxu0 0.0
    %1876 = vmatpush1.msra.mxu0 0.0
    %1877 = vmatprep.subr.mxu0 0.0
    %1878 = vmatpush1.msra.mxu0 0.0
    %1879 = vmatprep.subr.mxu0 0.0
    %1880 = vmatpush1.msra.mxu0 0.0
    %1881 = vmatprep.subr.mxu0 0.0
    %1882 = vmatpush1.msra.mxu0 0.0
    %1883 = vmatprep.subr.mxu0 0.0
    %1884 = vmatpush1.msra.mxu0 0.0
    %1885 = vmatprep.subr.mxu0 0.0
    %1886 = vmatpush1.msra.mxu0 0.0
    %1887 = vmatprep.subr.mxu0 0.0
    %1888 = vmatpush1.msra.mxu0 0.0
    %1889 = vmatprep.subr.mxu0 0.0
    %1890 = vmatpush1.msra.mxu0 0.0
    %1891 = vmatprep.subr.mxu0 0.0
    %1892 = vmatpush1.msra.mxu0 0.0
    %1893 = vmatprep.subr.mxu0 0.0
    %1894 = vmatpush1.msra.mxu0 0.0
    %1895 = vmatprep.subr.mxu0 0.0
    %1896 = vmatpush1.msra.mxu0 0.0
    %1897 = vmatprep.subr.mxu0 0.0
    %1898 = vmatpush1.msra.mxu0 0.0
    %1899 = vmatprep.subr.mxu0 0.0
    %1900 = vmatpush1.msra.mxu0 0.0
    %1901 = vmatprep.subr.mxu0 0.0
    %1902 = vmatpush1.msra.mxu0 0.0
    %1903 = vmatprep.subr.mxu0 0.0
    %1904 = vmatpush1.msra.mxu0 0.0
    %1905 = vmatprep.subr.mxu0 0.0
    %1906 = vmatpush1.msra.mxu0 0.0
    %1907 = vmatprep.subr.mxu0 0.0
    %1908 = vmatpush1.msra.mxu0 0.0
    %1909 = vmatprep.subr.mxu0 0.0
    %1910 = vmatpush1.msra.mxu0 0.0
    %1911 = vmatprep.mubr.f32.mxu0 0.0
    %1912 = vmatmul.mubr.f32.gmra.mrb[0].mxu0 %v1800
    %v1913 = vpop.f32.mrb[0].mxu0
    %v1914 = vadd.f32 %v1721, %v1913
    %v1915 = vpop.f32.mrb[0].mxu0
    %1916 = vmatprep.mubr.f32.mxu0 0.0
    %1917 = vmatmul.mubr.f32.gmra.mrb[0].mxu0 %v1803
    %v1918 = vpop.f32.mrb[0].mxu0
    %v1919 = vadd.f32 %v1726, %v1918
    %v1920 = vpop.f32.mrb[0].mxu0
    %1921 = vmatprep.mubr.f32.mxu0 0.0
    %1922 = vmatmul.mubr.f32.gmra.mrb[0].mxu0 %v1806
    %v1923 = vpop.f32.mrb[0].mxu0
    %v1924 = vadd.f32 %v1731, %v1923
    %v1925 = vpop.f32.mrb[0].mxu0
    %1926 = vmatprep.mubr.f32.mxu0 0.0
    %1927 = vmatmul.mubr.f32.gmra.mrb[0].mxu0 %v1809
    %v1928 = vpop.f32.mrb[0].mxu0
    %v1929 = vadd.f32 %v1736, %v1928
    %v1930 = vpop.f32.mrb[0].mxu0
    %1931 = vmatprep.mubr.f32.mxu0 0.0
    %1932 = vmatmul.mubr.f32.gmra.mrb[0].mxu0 %v1812
    %v1933 = vpop.f32.mrb[0].mxu0
    %v1934 = vadd.f32 %v1741, %v1933
    %v1935 = vpop.f32.mrb[0].mxu0
    %1936 = vmatprep.mubr.f32.mxu0 0.0
    %1937 = vmatmul.mubr.f32.gmra.mrb[0].mxu0 %v1815
    %v1938 = vpop.f32.mrb[0].mxu0
    %v1939 = vadd.f32 %v1746, %v1938
    %v1940 = vpop.f32.mrb[0].mxu0
    %1941 = vmatprep.mubr.f32.mxu0 0.0
    %1942 = vmatmul.mubr.f32.gmra.mrb[0].mxu0 %v1818
    %v1943 = vpop.f32.mrb[0].mxu0
    %v1944 = vadd.f32 %v1751, %v1943
    %v1945 = vpop.f32.mrb[0].mxu0
    %1946 = vmatprep.mubr.f32.mxu0 0.0
    %1947 = vmatmul.mubr.f32.gmra.mrb[0].mxu0 %v1821
    %v1948 = vpop.f32.mrb[0].mxu0
    %v1949 = vadd.f32 %v1756, %v1948
    %v1950 = vpop.f32.mrb[0].mxu0
    %1951 = vmatprep.mubr.f32.mxu0 0.0
    %1952 = vmatmul.mubr.f32.gmra.mrb[0].mxu0 %v1824
    %v1953 = vpop.f32.mrb[0].mxu0
    %v1954 = vadd.f32 %v1761, %v1953
    %v1955 = vpop.f32.mrb[0].mxu0
    %1956 = vmatprep.mubr.f32.mxu0 0.0
    %1957 = vmatmul.mubr.f32.gmra.mrb[0].mxu0 %v1827
    %v1958 = vpop.f32.mrb[0].mxu0
    %v1959 = vadd.f32 %v1766, %v1958
    %v1960 = vpop.f32.mrb[0].mxu0
    %1961 = vmatprep.mubr.f32.mxu0 0.0
    %1962 = vmatmul.mubr.f32.gmra.mrb[0].mxu0 %v1830
    %v1963 = vpop.f32.mrb[0].mxu0
    %v1964 = vadd.f32 %v1771, %v1963
    %v1965 = vpop.f32.mrb[0].mxu0
    %1966 = vmatprep.mubr.f32.mxu0 0.0
    %1967 = vmatmul.mubr.f32.gmra.mrb[0].mxu0 %v1833
    %v1968 = vpop.f32.mrb[0].mxu0
    %v1969 = vadd.f32 %v1776, %v1968
    %v1970 = vpop.f32.mrb[0].mxu0
    %1971 = vmatprep.mubr.f32.mxu0 0.0
    %1972 = vmatmul.mubr.f32.gmra.mrb[0].mxu0 %v1836
    %v1973 = vpop.f32.mrb[0].mxu0
    %v1974 = vadd.f32 %v1781, %v1973
    %v1975 = vpop.f32.mrb[0].mxu0
    %1976 = vmatprep.mubr.f32.mxu0 0.0
    %1977 = vmatmul.mubr.f32.gmra.mrb[0].mxu0 %v1839
    %v1978 = vpop.f32.mrb[0].mxu0
    %v1979 = vadd.f32 %v1786, %v1978
    %v1980 = vpop.f32.mrb[0].mxu0
    %1981 = vmatprep.mubr.f32.mxu0 0.0
    %1982 = vmatmul.mubr.f32.gmra.mrb[0].mxu0 %v1842
    %v1983 = vpop.f32.mrb[0].mxu0
    %v1984 = vadd.f32 %v1791, %v1983
    %v1985 = vpop.f32.mrb[0].mxu0
    %1986 = vmatprep.mubr.f32.mxu0 0.0
    %1987 = vmatmul.mubr.f32.gmra.mrb[0].mxu0 %v1845
    %v1988 = vpop.f32.mrb[0].mxu0
    %v1989 = vadd.f32 %v1796, %v1988
    %v1990 = vpop.f32.mrb[0].mxu0
    %1991 = vdwg.mxu0
    %s1992 = scalar_lea.vmem [#allocation7], 128
    %v1993 = vld [vmem:[%s1992] sm:$0xff]
    %v1994 = vld [vmem:[%s1992 + $0x8] sm:$0xff]
    %v1995 = vld [vmem:[%s1992 + $0x10] sm:$0xff]
    %v1996 = vld [vmem:[%s1992 + $0x18] sm:$0xff]
    %v1997 = vld [vmem:[%s1992 + $0x20] sm:$0xff]
    %v1998 = vld [vmem:[%s1992 + $0x28] sm:$0xff]
    %v1999 = vld [vmem:[%s1992 + $0x30] sm:$0xff]
    %v2000 = vld [vmem:[%s1992 + $0x38] sm:$0xff]
    %v2002 = vsel %vm372, %v1031, 0
    %v2005 = vsel %vm372, %v1036, 0
    %v2008 = vsel %vm372, %v1041, 0
    %v2011 = vsel %vm372, %v1046, 0
    %v2014 = vsel %vm372, %v1051, 0
    %v2017 = vsel %vm372, %v1056, 0
    %v2020 = vsel %vm372, %v1061, 0
    %v2023 = vsel %vm372, %v1066, 0
    %v2026 = vsel %vm372, %v1071, 0
    %v2029 = vsel %vm372, %v1076, 0
    %v2032 = vsel %vm372, %v1081, 0
    %v2035 = vsel %vm372, %v1086, 0
    %v2038 = vsel %vm372, %v1091, 0
    %v2041 = vsel %vm372, %v1096, 0
    %v2044 = vsel %vm372, %v1101, 0
    %v2047 = vsel %vm372, %v1106, 0
    %2049 = vmatprep.subr.mxu0 0.0
    %2050 = vmatpush1.msra.mxu0 %v1993
    %2051 = vmatprep.subr.mxu0 0.0
    %2052 = vmatpush1.msra.mxu0 %v1994
    %2053 = vmatprep.subr.mxu0 0.0
    %2054 = vmatpush1.msra.mxu0 %v1995
    %2055 = vmatprep.subr.mxu0 0.0
    %2056 = vmatpush1.msra.mxu0 %v1996
    %2057 = vmatprep.subr.mxu0 0.0
    %2058 = vmatpush1.msra.mxu0 %v1997
    %2059 = vmatprep.subr.mxu0 0.0
    %2060 = vmatpush1.msra.mxu0 %v1998
    %2061 = vmatprep.subr.mxu0 0.0
    %2062 = vmatpush1.msra.mxu0 %v1999
    %2063 = vmatprep.subr.mxu0 0.0
    %2064 = vmatpush1.msra.mxu0 %v2000
    %2065 = vmatprep.subr.mxu0 0.0
    %2066 = vmatpush1.msra.mxu0 0.0
    %2067 = vmatprep.subr.mxu0 0.0
    %2068 = vmatpush1.msra.mxu0 0.0
    %2069 = vmatprep.subr.mxu0 0.0
    %2070 = vmatpush1.msra.mxu0 0.0
    %2071 = vmatprep.subr.mxu0 0.0
    %2072 = vmatpush1.msra.mxu0 0.0
    %2073 = vmatprep.subr.mxu0 0.0
    %2074 = vmatpush1.msra.mxu0 0.0
    %2075 = vmatprep.subr.mxu0 0.0
    %2076 = vmatpush1.msra.mxu0 0.0
    %2077 = vmatprep.subr.mxu0 0.0
    %2078 = vmatpush1.msra.mxu0 0.0
    %2079 = vmatprep.subr.mxu0 0.0
    %2080 = vmatpush1.msra.mxu0 0.0
    %2081 = vmatprep.subr.mxu0 0.0
    %2082 = vmatpush1.msra.mxu0 0.0
    %2083 = vmatprep.subr.mxu0 0.0
    %2084 = vmatpush1.msra.mxu0 0.0
    %2085 = vmatprep.subr.mxu0 0.0
    %2086 = vmatpush1.msra.mxu0 0.0
    %2087 = vmatprep.subr.mxu0 0.0
    %2088 = vmatpush1.msra.mxu0 0.0
    %2089 = vmatprep.subr.mxu0 0.0
    %2090 = vmatpush1.msra.mxu0 0.0
    %2091 = vmatprep.subr.mxu0 0.0
    %2092 = vmatpush1.msra.mxu0 0.0
    %2093 = vmatprep.subr.mxu0 0.0
    %2094 = vmatpush1.msra.mxu0 0.0
    %2095 = vmatprep.subr.mxu0 0.0
    %2096 = vmatpush1.msra.mxu0 0.0
    %2097 = vmatprep.subr.mxu0 0.0
    %2098 = vmatpush1.msra.mxu0 0.0
    %2099 = vmatprep.subr.mxu0 0.0
    %2100 = vmatpush1.msra.mxu0 0.0
    %2101 = vmatprep.subr.mxu0 0.0
    %2102 = vmatpush1.msra.mxu0 0.0
    %2103 = vmatprep.subr.mxu0 0.0
    %2104 = vmatpush1.msra.mxu0 0.0
    %2105 = vmatprep.subr.mxu0 0.0
    %2106 = vmatpush1.msra.mxu0 0.0
    %2107 = vmatprep.subr.mxu0 0.0
    %2108 = vmatpush1.msra.mxu0 0.0
    %2109 = vmatprep.subr.mxu0 0.0
    %2110 = vmatpush1.msra.mxu0 0.0
    %2111 = vmatprep.subr.mxu0 0.0
    %2112 = vmatpush1.msra.mxu0 0.0
    %2113 = vmatprep.mubr.f32.mxu0 0.0
    %2114 = vmatmul.mubr.f32.gmra.mrb[0].mxu0 %v2002
    %v2115 = vpop.f32.mrb[0].mxu0
    %v2116 = vadd.f32 0.0, %v2115
    %v2117 = vpop.f32.mrb[0].mxu0
    %2118 = vmatprep.mubr.f32.mxu0 0.0
    %2119 = vmatmul.mubr.f32.gmra.mrb[0].mxu0 %v2005
    %v2120 = vpop.f32.mrb[0].mxu0
    %v2121 = vadd.f32 0.0, %v2120
    %v2122 = vpop.f32.mrb[0].mxu0
    %2123 = vmatprep.mubr.f32.mxu0 0.0
    %2124 = vmatmul.mubr.f32.gmra.mrb[0].mxu0 %v2008
    %v2125 = vpop.f32.mrb[0].mxu0
    %v2126 = vadd.f32 0.0, %v2125
    %v2127 = vpop.f32.mrb[0].mxu0
    %2128 = vmatprep.mubr.f32.mxu0 0.0
    %2129 = vmatmul.mubr.f32.gmra.mrb[0].mxu0 %v2011
    %v2130 = vpop.f32.mrb[0].mxu0
    %v2131 = vadd.f32 0.0, %v2130
    %v2132 = vpop.f32.mrb[0].mxu0
    %2133 = vmatprep.mubr.f32.mxu0 0.0
    %2134 = vmatmul.mubr.f32.gmra.mrb[0].mxu0 %v2014
    %v2135 = vpop.f32.mrb[0].mxu0
    %v2136 = vadd.f32 0.0, %v2135
    %v2137 = vpop.f32.mrb[0].mxu0
    %2138 = vmatprep.mubr.f32.mxu0 0.0
    %2139 = vmatmul.mubr.f32.gmra.mrb[0].mxu0 %v2017
    %v2140 = vpop.f32.mrb[0].mxu0
    %v2141 = vadd.f32 0.0, %v2140
    %v2142 = vpop.f32.mrb[0].mxu0
    %2143 = vmatprep.mubr.f32.mxu0 0.0
    %2144 = vmatmul.mubr.f32.gmra.mrb[0].mxu0 %v2020
    %v2145 = vpop.f32.mrb[0].mxu0
    %v2146 = vadd.f32 0.0, %v2145
    %v2147 = vpop.f32.mrb[0].mxu0
    %2148 = vmatprep.mubr.f32.mxu0 0.0
    %2149 = vmatmul.mubr.f32.gmra.mrb[0].mxu0 %v2023
    %v2150 = vpop.f32.mrb[0].mxu0
    %v2151 = vadd.f32 0.0, %v2150
    %v2152 = vpop.f32.mrb[0].mxu0
    %2153 = vmatprep.mubr.f32.mxu0 0.0
    %2154 = vmatmul.mubr.f32.gmra.mrb[0].mxu0 %v2026
    %v2155 = vpop.f32.mrb[0].mxu0
    %v2156 = vadd.f32 0.0, %v2155
    %v2157 = vpop.f32.mrb[0].mxu0
    %2158 = vmatprep.mubr.f32.mxu0 0.0
    %2159 = vmatmul.mubr.f32.gmra.mrb[0].mxu0 %v2029
    %v2160 = vpop.f32.mrb[0].mxu0
    %v2161 = vadd.f32 0.0, %v2160
    %v2162 = vpop.f32.mrb[0].mxu0
    %2163 = vmatprep.mubr.f32.mxu0 0.0
    %2164 = vmatmul.mubr.f32.gmra.mrb[0].mxu0 %v2032
    %v2165 = vpop.f32.mrb[0].mxu0
    %v2166 = vadd.f32 0.0, %v2165
    %v2167 = vpop.f32.mrb[0].mxu0
    %2168 = vmatprep.mubr.f32.mxu0 0.0
    %2169 = vmatmul.mubr.f32.gmra.mrb[0].mxu0 %v2035
    %v2170 = vpop.f32.mrb[0].mxu0
    %v2171 = vadd.f32 0.0, %v2170
    %v2172 = vpop.f32.mrb[0].mxu0
    %2173 = vmatprep.mubr.f32.mxu0 0.0
    %2174 = vmatmul.mubr.f32.gmra.mrb[0].mxu0 %v2038
    %v2175 = vpop.f32.mrb[0].mxu0
    %v2176 = vadd.f32 0.0, %v2175
    %v2177 = vpop.f32.mrb[0].mxu0
    %2178 = vmatprep.mubr.f32.mxu0 0.0
    %2179 = vmatmul.mubr.f32.gmra.mrb[0].mxu0 %v2041
    %v2180 = vpop.f32.mrb[0].mxu0
    %v2181 = vadd.f32 0.0, %v2180
    %v2182 = vpop.f32.mrb[0].mxu0
    %2183 = vmatprep.mubr.f32.mxu0 0.0
    %2184 = vmatmul.mubr.f32.gmra.mrb[0].mxu0 %v2044
    %v2185 = vpop.f32.mrb[0].mxu0
    %v2186 = vadd.f32 0.0, %v2185
    %v2187 = vpop.f32.mrb[0].mxu0
    %2188 = vmatprep.mubr.f32.mxu0 0.0
    %2189 = vmatmul.mubr.f32.gmra.mrb[0].mxu0 %v2047
    %v2190 = vpop.f32.mrb[0].mxu0
    %v2191 = vadd.f32 0.0, %v2190
    %v2192 = vpop.f32.mrb[0].mxu0
    %2193 = vdwg.mxu0
    %v2194 = vadd.f32 %v1914, %v2116
    %v2195 = vadd.f32 %v1919, %v2121
    %v2196 = vadd.f32 %v1924, %v2126
    %v2197 = vadd.f32 %v1929, %v2131
    %v2198 = vadd.f32 %v1934, %v2136
    %v2199 = vadd.f32 %v1939, %v2141
    %v2200 = vadd.f32 %v1944, %v2146
    %v2201 = vadd.f32 %v1949, %v2151
    %v2202 = vadd.f32 %v1954, %v2156
    %v2203 = vadd.f32 %v1959, %v2161
    %v2204 = vadd.f32 %v1964, %v2166
    %v2205 = vadd.f32 %v1969, %v2171
    %v2206 = vadd.f32 %v1974, %v2176
    %v2207 = vadd.f32 %v1979, %v2181
    %v2208 = vadd.f32 %v1984, %v2186
    %v2209 = vadd.f32 %v1989, %v2191
    %s2210 = scalar_lea.vmem [#allocation7], 192
    %v2211 = vld [vmem:[%s2210] sm:$0xff]
    %v2212 = vld [vmem:[%s2210 + $0x8] sm:$0xff]
    %v2213 = vld [vmem:[%s2210 + $0x10] sm:$0xff]
    %v2214 = vld [vmem:[%s2210 + $0x18] sm:$0xff]
    %v2215 = vld [vmem:[%s2210 + $0x20] sm:$0xff]
    %v2216 = vld [vmem:[%s2210 + $0x28] sm:$0xff]
    %v2217 = vld [vmem:[%s2210 + $0x30] sm:$0xff]
    %v2218 = vld [vmem:[%s2210 + $0x38] sm:$0xff]
    %v2220 = vsel %vm372, %v1111, 0
    %v2223 = vsel %vm372, %v1116, 0
    %v2226 = vsel %vm372, %v1121, 0
    %v2229 = vsel %vm372, %v1126, 0
    %v2232 = vsel %vm372, %v1131, 0
    %v2235 = vsel %vm372, %v1136, 0
    %v2238 = vsel %vm372, %v1141, 0
    %v2241 = vsel %vm372, %v1146, 0
    %v2244 = vsel %vm372, %v1151, 0
    %v2247 = vsel %vm372, %v1156, 0
    %v2250 = vsel %vm372, %v1161, 0
    %v2253 = vsel %vm372, %v1166, 0
    %v2256 = vsel %vm372, %v1171, 0
    %v2259 = vsel %vm372, %v1176, 0
    %v2262 = vsel %vm372, %v1181, 0
    %v2265 = vsel %vm372, %v1186, 0
    %2267 = vmatprep.subr.mxu0 0.0
    %2268 = vmatpush1.msra.mxu0 %v2211
    %2269 = vmatprep.subr.mxu0 0.0
    %2270 = vmatpush1.msra.mxu0 %v2212
    %2271 = vmatprep.subr.mxu0 0.0
    %2272 = vmatpush1.msra.mxu0 %v2213
    %2273 = vmatprep.subr.mxu0 0.0
    %2274 = vmatpush1.msra.mxu0 %v2214
    %2275 = vmatprep.subr.mxu0 0.0
    %2276 = vmatpush1.msra.mxu0 %v2215
    %2277 = vmatprep.subr.mxu0 0.0
    %2278 = vmatpush1.msra.mxu0 %v2216
    %2279 = vmatprep.subr.mxu0 0.0
    %2280 = vmatpush1.msra.mxu0 %v2217
    %2281 = vmatprep.subr.mxu0 0.0
    %2282 = vmatpush1.msra.mxu0 %v2218
    %2283 = vmatprep.subr.mxu0 0.0
    %2284 = vmatpush1.msra.mxu0 0.0
    %2285 = vmatprep.subr.mxu0 0.0
    %2286 = vmatpush1.msra.mxu0 0.0
    %2287 = vmatprep.subr.mxu0 0.0
    %2288 = vmatpush1.msra.mxu0 0.0
    %2289 = vmatprep.subr.mxu0 0.0
    %2290 = vmatpush1.msra.mxu0 0.0
    %2291 = vmatprep.subr.mxu0 0.0
    %2292 = vmatpush1.msra.mxu0 0.0
    %2293 = vmatprep.subr.mxu0 0.0
    %2294 = vmatpush1.msra.mxu0 0.0
    %2295 = vmatprep.subr.mxu0 0.0
    %2296 = vmatpush1.msra.mxu0 0.0
    %2297 = vmatprep.subr.mxu0 0.0
    %2298 = vmatpush1.msra.mxu0 0.0
    %2299 = vmatprep.subr.mxu0 0.0
    %2300 = vmatpush1.msra.mxu0 0.0
    %2301 = vmatprep.subr.mxu0 0.0
    %2302 = vmatpush1.msra.mxu0 0.0
    %2303 = vmatprep.subr.mxu0 0.0
    %2304 = vmatpush1.msra.mxu0 0.0
    %2305 = vmatprep.subr.mxu0 0.0
    %2306 = vmatpush1.msra.mxu0 0.0
    %2307 = vmatprep.subr.mxu0 0.0
    %2308 = vmatpush1.msra.mxu0 0.0
    %2309 = vmatprep.subr.mxu0 0.0
    %2310 = vmatpush1.msra.mxu0 0.0
    %2311 = vmatprep.subr.mxu0 0.0
    %2312 = vmatpush1.msra.mxu0 0.0
    %2313 = vmatprep.subr.mxu0 0.0
    %2314 = vmatpush1.msra.mxu0 0.0
    %2315 = vmatprep.subr.mxu0 0.0
    %2316 = vmatpush1.msra.mxu0 0.0
    %2317 = vmatprep.subr.mxu0 0.0
    %2318 = vmatpush1.msra.mxu0 0.0
    %2319 = vmatprep.subr.mxu0 0.0
    %2320 = vmatpush1.msra.mxu0 0.0
    %2321 = vmatprep.subr.mxu0 0.0
    %2322 = vmatpush1.msra.mxu0 0.0
    %2323 = vmatprep.subr.mxu0 0.0
    %2324 = vmatpush1.msra.mxu0 0.0
    %2325 = vmatprep.subr.mxu0 0.0
    %2326 = vmatpush1.msra.mxu0 0.0
    %2327 = vmatprep.subr.mxu0 0.0
    %2328 = vmatpush1.msra.mxu0 0.0
    %2329 = vmatprep.subr.mxu0 0.0
    %2330 = vmatpush1.msra.mxu0 0.0
    %2331 = vmatprep.mubr.f32.mxu0 0.0
    %2332 = vmatmul.mubr.f32.gmra.mrb[0].mxu0 %v2220
    %v2333 = vpop.f32.mrb[0].mxu0
    %v2334 = vadd.f32 0.0, %v2333
    %v2335 = vpop.f32.mrb[0].mxu0
    %2336 = vmatprep.mubr.f32.mxu0 0.0
    %2337 = vmatmul.mubr.f32.gmra.mrb[0].mxu0 %v2223
    %v2338 = vpop.f32.mrb[0].mxu0
    %v2339 = vadd.f32 0.0, %v2338
    %v2340 = vpop.f32.mrb[0].mxu0
    %2341 = vmatprep.mubr.f32.mxu0 0.0
    %2342 = vmatmul.mubr.f32.gmra.mrb[0].mxu0 %v2226
    %v2343 = vpop.f32.mrb[0].mxu0
    %v2344 = vadd.f32 0.0, %v2343
    %v2345 = vpop.f32.mrb[0].mxu0
    %2346 = vmatprep.mubr.f32.mxu0 0.0
    %2347 = vmatmul.mubr.f32.gmra.mrb[0].mxu0 %v2229
    %v2348 = vpop.f32.mrb[0].mxu0
    %v2349 = vadd.f32 0.0, %v2348
    %v2350 = vpop.f32.mrb[0].mxu0
    %2351 = vmatprep.mubr.f32.mxu0 0.0
    %2352 = vmatmul.mubr.f32.gmra.mrb[0].mxu0 %v2232
    %v2353 = vpop.f32.mrb[0].mxu0
    %v2354 = vadd.f32 0.0, %v2353
    %v2355 = vpop.f32.mrb[0].mxu0
    %2356 = vmatprep.mubr.f32.mxu0 0.0
    %2357 = vmatmul.mubr.f32.gmra.mrb[0].mxu0 %v2235
    %v2358 = vpop.f32.mrb[0].mxu0
    %v2359 = vadd.f32 0.0, %v2358
    %v2360 = vpop.f32.mrb[0].mxu0
    %2361 = vmatprep.mubr.f32.mxu0 0.0
    %2362 = vmatmul.mubr.f32.gmra.mrb[0].mxu0 %v2238
    %v2363 = vpop.f32.mrb[0].mxu0
    %v2364 = vadd.f32 0.0, %v2363
    %v2365 = vpop.f32.mrb[0].mxu0
    %2366 = vmatprep.mubr.f32.mxu0 0.0
    %2367 = vmatmul.mubr.f32.gmra.mrb[0].mxu0 %v2241
    %v2368 = vpop.f32.mrb[0].mxu0
    %v2369 = vadd.f32 0.0, %v2368
    %v2370 = vpop.f32.mrb[0].mxu0
    %2371 = vmatprep.mubr.f32.mxu0 0.0
    %2372 = vmatmul.mubr.f32.gmra.mrb[0].mxu0 %v2244
    %v2373 = vpop.f32.mrb[0].mxu0
    %v2374 = vadd.f32 0.0, %v2373
    %v2375 = vpop.f32.mrb[0].mxu0
    %2376 = vmatprep.mubr.f32.mxu0 0.0
    %2377 = vmatmul.mubr.f32.gmra.mrb[0].mxu0 %v2247
    %v2378 = vpop.f32.mrb[0].mxu0
    %v2379 = vadd.f32 0.0, %v2378
    %v2380 = vpop.f32.mrb[0].mxu0
    %2381 = vmatprep.mubr.f32.mxu0 0.0
    %2382 = vmatmul.mubr.f32.gmra.mrb[0].mxu0 %v2250
    %v2383 = vpop.f32.mrb[0].mxu0
    %v2384 = vadd.f32 0.0, %v2383
    %v2385 = vpop.f32.mrb[0].mxu0
    %2386 = vmatprep.mubr.f32.mxu0 0.0
    %2387 = vmatmul.mubr.f32.gmra.mrb[0].mxu0 %v2253
    %v2388 = vpop.f32.mrb[0].mxu0
    %v2389 = vadd.f32 0.0, %v2388
    %v2390 = vpop.f32.mrb[0].mxu0
    %2391 = vmatprep.mubr.f32.mxu0 0.0
    %2392 = vmatmul.mubr.f32.gmra.mrb[0].mxu0 %v2256
    %v2393 = vpop.f32.mrb[0].mxu0
    %v2394 = vadd.f32 0.0, %v2393
    %v2395 = vpop.f32.mrb[0].mxu0
    %2396 = vmatprep.mubr.f32.mxu0 0.0
    %2397 = vmatmul.mubr.f32.gmra.mrb[0].mxu0 %v2259
    %v2398 = vpop.f32.mrb[0].mxu0
    %v2399 = vadd.f32 0.0, %v2398
    %v2400 = vpop.f32.mrb[0].mxu0
    %2401 = vmatprep.mubr.f32.mxu0 0.0
    %2402 = vmatmul.mubr.f32.gmra.mrb[0].mxu0 %v2262
    %v2403 = vpop.f32.mrb[0].mxu0
    %v2404 = vadd.f32 0.0, %v2403
    %v2405 = vpop.f32.mrb[0].mxu0
    %2406 = vmatprep.mubr.f32.mxu0 0.0
    %2407 = vmatmul.mubr.f32.gmra.mrb[0].mxu0 %v2265
    %v2408 = vpop.f32.mrb[0].mxu0
    %v2409 = vadd.f32 0.0, %v2408
    %v2410 = vpop.f32.mrb[0].mxu0
    %2411 = vdwg.mxu0
    %v2412 = vadd.f32 %v2194, %v2334
    %v2413 = vadd.f32 %v2195, %v2339
    %v2414 = vadd.f32 %v2196, %v2344
    %v2415 = vadd.f32 %v2197, %v2349
    %v2416 = vadd.f32 %v2198, %v2354
    %v2417 = vadd.f32 %v2199, %v2359
    %v2418 = vadd.f32 %v2200, %v2364
    %v2419 = vadd.f32 %v2201, %v2369
    %v2420 = vadd.f32 %v2202, %v2374
    %v2421 = vadd.f32 %v2203, %v2379
    %v2422 = vadd.f32 %v2204, %v2384
    %v2423 = vadd.f32 %v2205, %v2389
    %v2424 = vadd.f32 %v2206, %v2394
    %v2425 = vadd.f32 %v2207, %v2399
    %v2426 = vadd.f32 %v2208, %v2404
    %v2427 = vadd.f32 %v2209, %v2409
    %s2428 = scalar_lea.vmem [#allocation7], 256
    %v2429 = vld [vmem:[%s2428] sm:$0xff]
    %v2430 = vld [vmem:[%s2428 + $0x8] sm:$0xff]
    %v2431 = vld [vmem:[%s2428 + $0x10] sm:$0xff]
    %v2432 = vld [vmem:[%s2428 + $0x18] sm:$0xff]
    %v2433 = vld [vmem:[%s2428 + $0x20] sm:$0xff]
    %v2434 = vld [vmem:[%s2428 + $0x28] sm:$0xff]
    %v2435 = vld [vmem:[%s2428 + $0x30] sm:$0xff]
    %v2436 = vld [vmem:[%s2428 + $0x38] sm:$0xff]
    %v2438 = vsel %vm372, %v1191, 0
    %v2441 = vsel %vm372, %v1196, 0
    %v2444 = vsel %vm372, %v1201, 0
    %v2447 = vsel %vm372, %v1206, 0
    %v2450 = vsel %vm372, %v1211, 0
    %v2453 = vsel %vm372, %v1216, 0
    %v2456 = vsel %vm372, %v1221, 0
    %v2459 = vsel %vm372, %v1226, 0
    %v2462 = vsel %vm372, %v1231, 0
    %v2465 = vsel %vm372, %v1236, 0
    %v2468 = vsel %vm372, %v1241, 0
    %v2471 = vsel %vm372, %v1246, 0
    %v2474 = vsel %vm372, %v1251, 0
    %v2477 = vsel %vm372, %v1256, 0
    %v2480 = vsel %vm372, %v1261, 0
    %v2483 = vsel %vm372, %v1266, 0
    %2485 = vmatprep.subr.mxu0 0.0
    %2486 = vmatpush1.msra.mxu0 %v2429
    %2487 = vmatprep.subr.mxu0 0.0
    %2488 = vmatpush1.msra.mxu0 %v2430
    %2489 = vmatprep.subr.mxu0 0.0
    %2490 = vmatpush1.msra.mxu0 %v2431
    %2491 = vmatprep.subr.mxu0 0.0
    %2492 = vmatpush1.msra.mxu0 %v2432
    %2493 = vmatprep.subr.mxu0 0.0
    %2494 = vmatpush1.msra.mxu0 %v2433
    %2495 = vmatprep.subr.mxu0 0.0
    %2496 = vmatpush1.msra.mxu0 %v2434
    %2497 = vmatprep.subr.mxu0 0.0
    %2498 = vmatpush1.msra.mxu0 %v2435
    %2499 = vmatprep.subr.mxu0 0.0
    %2500 = vmatpush1.msra.mxu0 %v2436
    %2501 = vmatprep.subr.mxu0 0.0
    %2502 = vmatpush1.msra.mxu0 0.0
    %2503 = vmatprep.subr.mxu0 0.0
    %2504 = vmatpush1.msra.mxu0 0.0
    %2505 = vmatprep.subr.mxu0 0.0
    %2506 = vmatpush1.msra.mxu0 0.0
    %2507 = vmatprep.subr.mxu0 0.0
    %2508 = vmatpush1.msra.mxu0 0.0
    %2509 = vmatprep.subr.mxu0 0.0
    %2510 = vmatpush1.msra.mxu0 0.0
    %2511 = vmatprep.subr.mxu0 0.0
    %2512 = vmatpush1.msra.mxu0 0.0
    %2513 = vmatprep.subr.mxu0 0.0
    %2514 = vmatpush1.msra.mxu0 0.0
    %2515 = vmatprep.subr.mxu0 0.0
    %2516 = vmatpush1.msra.mxu0 0.0
    %2517 = vmatprep.subr.mxu0 0.0
    %2518 = vmatpush1.msra.mxu0 0.0
    %2519 = vmatprep.subr.mxu0 0.0
    %2520 = vmatpush1.msra.mxu0 0.0
    %2521 = vmatprep.subr.mxu0 0.0
    %2522 = vmatpush1.msra.mxu0 0.0
    %2523 = vmatprep.subr.mxu0 0.0
    %2524 = vmatpush1.msra.mxu0 0.0
    %2525 = vmatprep.subr.mxu0 0.0
    %2526 = vmatpush1.msra.mxu0 0.0
    %2527 = vmatprep.subr.mxu0 0.0
    %2528 = vmatpush1.msra.mxu0 0.0
    %2529 = vmatprep.subr.mxu0 0.0
    %2530 = vmatpush1.msra.mxu0 0.0
    %2531 = vmatprep.subr.mxu0 0.0
    %2532 = vmatpush1.msra.mxu0 0.0
    %2533 = vmatprep.subr.mxu0 0.0
    %2534 = vmatpush1.msra.mxu0 0.0
    %2535 = vmatprep.subr.mxu0 0.0
    %2536 = vmatpush1.msra.mxu0 0.0
    %2537 = vmatprep.subr.mxu0 0.0
    %2538 = vmatpush1.msra.mxu0 0.0
    %2539 = vmatprep.subr.mxu0 0.0
    %2540 = vmatpush1.msra.mxu0 0.0
    %2541 = vmatprep.subr.mxu0 0.0
    %2542 = vmatpush1.msra.mxu0 0.0
    %2543 = vmatprep.subr.mxu0 0.0
    %2544 = vmatpush1.msra.mxu0 0.0
    %2545 = vmatprep.subr.mxu0 0.0
    %2546 = vmatpush1.msra.mxu0 0.0
    %2547 = vmatprep.subr.mxu0 0.0
    %2548 = vmatpush1.msra.mxu0 0.0
    %2549 = vmatprep.mubr.f32.mxu0 0.0
    %2550 = vmatmul.mubr.f32.gmra.mrb[0].mxu0 %v2438
    %v2551 = vpop.f32.mrb[0].mxu0
    %v2552 = vadd.f32 0.0, %v2551
    %v2553 = vpop.f32.mrb[0].mxu0
    %2554 = vmatprep.mubr.f32.mxu0 0.0
    %2555 = vmatmul.mubr.f32.gmra.mrb[0].mxu0 %v2441
    %v2556 = vpop.f32.mrb[0].mxu0
    %v2557 = vadd.f32 0.0, %v2556
    %v2558 = vpop.f32.mrb[0].mxu0
    %2559 = vmatprep.mubr.f32.mxu0 0.0
    %2560 = vmatmul.mubr.f32.gmra.mrb[0].mxu0 %v2444
    %v2561 = vpop.f32.mrb[0].mxu0
    %v2562 = vadd.f32 0.0, %v2561
    %v2563 = vpop.f32.mrb[0].mxu0
    %2564 = vmatprep.mubr.f32.mxu0 0.0
    %2565 = vmatmul.mubr.f32.gmra.mrb[0].mxu0 %v2447
    %v2566 = vpop.f32.mrb[0].mxu0
    %v2567 = vadd.f32 0.0, %v2566
    %v2568 = vpop.f32.mrb[0].mxu0
    %2569 = vmatprep.mubr.f32.mxu0 0.0
    %2570 = vmatmul.mubr.f32.gmra.mrb[0].mxu0 %v2450
    %v2571 = vpop.f32.mrb[0].mxu0
    %v2572 = vadd.f32 0.0, %v2571
    %v2573 = vpop.f32.mrb[0].mxu0
    %2574 = vmatprep.mubr.f32.mxu0 0.0
    %2575 = vmatmul.mubr.f32.gmra.mrb[0].mxu0 %v2453
    %v2576 = vpop.f32.mrb[0].mxu0
    %v2577 = vadd.f32 0.0, %v2576
    %v2578 = vpop.f32.mrb[0].mxu0
    %2579 = vmatprep.mubr.f32.mxu0 0.0
    %2580 = vmatmul.mubr.f32.gmra.mrb[0].mxu0 %v2456
    %v2581 = vpop.f32.mrb[0].mxu0
    %v2582 = vadd.f32 0.0, %v2581
    %v2583 = vpop.f32.mrb[0].mxu0
    %2584 = vmatprep.mubr.f32.mxu0 0.0
    %2585 = vmatmul.mubr.f32.gmra.mrb[0].mxu0 %v2459
    %v2586 = vpop.f32.mrb[0].mxu0
    %v2587 = vadd.f32 0.0, %v2586
    %v2588 = vpop.f32.mrb[0].mxu0
    %2589 = vmatprep.mubr.f32.mxu0 0.0
    %2590 = vmatmul.mubr.f32.gmra.mrb[0].mxu0 %v2462
    %v2591 = vpop.f32.mrb[0].mxu0
    %v2592 = vadd.f32 0.0, %v2591
    %v2593 = vpop.f32.mrb[0].mxu0
    %2594 = vmatprep.mubr.f32.mxu0 0.0
    %2595 = vmatmul.mubr.f32.gmra.mrb[0].mxu0 %v2465
    %v2596 = vpop.f32.mrb[0].mxu0
    %v2597 = vadd.f32 0.0, %v2596
    %v2598 = vpop.f32.mrb[0].mxu0
    %2599 = vmatprep.mubr.f32.mxu0 0.0
    %2600 = vmatmul.mubr.f32.gmra.mrb[0].mxu0 %v2468
    %v2601 = vpop.f32.mrb[0].mxu0
    %v2602 = vadd.f32 0.0, %v2601
    %v2603 = vpop.f32.mrb[0].mxu0
    %2604 = vmatprep.mubr.f32.mxu0 0.0
    %2605 = vmatmul.mubr.f32.gmra.mrb[0].mxu0 %v2471
    %v2606 = vpop.f32.mrb[0].mxu0
    %v2607 = vadd.f32 0.0, %v2606
    %v2608 = vpop.f32.mrb[0].mxu0
    %2609 = vmatprep.mubr.f32.mxu0 0.0
    %2610 = vmatmul.mubr.f32.gmra.mrb[0].mxu0 %v2474
    %v2611 = vpop.f32.mrb[0].mxu0
    %v2612 = vadd.f32 0.0, %v2611
    %v2613 = vpop.f32.mrb[0].mxu0
    %2614 = vmatprep.mubr.f32.mxu0 0.0
    %2615 = vmatmul.mubr.f32.gmra.mrb[0].mxu0 %v2477
    %v2616 = vpop.f32.mrb[0].mxu0
    %v2617 = vadd.f32 0.0, %v2616
    %v2618 = vpop.f32.mrb[0].mxu0
    %2619 = vmatprep.mubr.f32.mxu0 0.0
    %2620 = vmatmul.mubr.f32.gmra.mrb[0].mxu0 %v2480
    %v2621 = vpop.f32.mrb[0].mxu0
    %v2622 = vadd.f32 0.0, %v2621
    %v2623 = vpop.f32.mrb[0].mxu0
    %2624 = vmatprep.mubr.f32.mxu0 0.0
    %2625 = vmatmul.mubr.f32.gmra.mrb[0].mxu0 %v2483
    %v2626 = vpop.f32.mrb[0].mxu0
    %v2627 = vadd.f32 0.0, %v2626
    %v2628 = vpop.f32.mrb[0].mxu0
    %2629 = vdwg.mxu0
    %v2630 = vadd.f32 %v2412, %v2552
    %v2631 = vadd.f32 %v2413, %v2557
    %v2632 = vadd.f32 %v2414, %v2562
    %v2633 = vadd.f32 %v2415, %v2567
    %v2634 = vadd.f32 %v2416, %v2572
    %v2635 = vadd.f32 %v2417, %v2577
    %v2636 = vadd.f32 %v2418, %v2582
    %v2637 = vadd.f32 %v2419, %v2587
    %v2638 = vadd.f32 %v2420, %v2592
    %v2639 = vadd.f32 %v2421, %v2597
    %v2640 = vadd.f32 %v2422, %v2602
    %v2641 = vadd.f32 %v2423, %v2607
    %v2642 = vadd.f32 %v2424, %v2612
    %v2643 = vadd.f32 %v2425, %v2617
    %v2644 = vadd.f32 %v2426, %v2622
    %v2645 = vadd.f32 %v2427, %v2627
    %s2646 = scalar_lea.vmem [#allocation7], 320
    %v2647 = vld [vmem:[%s2646] sm:$0xff]
    %v2648 = vld [vmem:[%s2646 + $0x8] sm:$0xff]
    %v2649 = vld [vmem:[%s2646 + $0x10] sm:$0xff]
    %v2650 = vld [vmem:[%s2646 + $0x18] sm:$0xff]
    %v2651 = vld [vmem:[%s2646 + $0x20] sm:$0xff]
    %v2652 = vld [vmem:[%s2646 + $0x28] sm:$0xff]
    %v2653 = vld [vmem:[%s2646 + $0x30] sm:$0xff]
    %v2654 = vld [vmem:[%s2646 + $0x38] sm:$0xff]
    %v2656 = vsel %vm372, %v1271, 0
    %v2659 = vsel %vm372, %v1276, 0
    %v2662 = vsel %vm372, %v1281, 0
    %v2665 = vsel %vm372, %v1286, 0
    %v2668 = vsel %vm372, %v1291, 0
    %v2671 = vsel %vm372, %v1296, 0
    %v2674 = vsel %vm372, %v1301, 0
    %v2677 = vsel %vm372, %v1306, 0
    %v2680 = vsel %vm372, %v1311, 0
    %v2683 = vsel %vm372, %v1316, 0
    %v2686 = vsel %vm372, %v1321, 0
    %v2689 = vsel %vm372, %v1326, 0
    %v2692 = vsel %vm372, %v1331, 0
    %v2695 = vsel %vm372, %v1336, 0
    %v2698 = vsel %vm372, %v1341, 0
    %v2701 = vsel %vm372, %v1346, 0
    %2703 = vmatprep.subr.mxu0 0.0
    %2704 = vmatpush1.msra.mxu0 %v2647
    %2705 = vmatprep.subr.mxu0 0.0
    %2706 = vmatpush1.msra.mxu0 %v2648
    %2707 = vmatprep.subr.mxu0 0.0
    %2708 = vmatpush1.msra.mxu0 %v2649
    %2709 = vmatprep.subr.mxu0 0.0
    %2710 = vmatpush1.msra.mxu0 %v2650
    %2711 = vmatprep.subr.mxu0 0.0
    %2712 = vmatpush1.msra.mxu0 %v2651
    %2713 = vmatprep.subr.mxu0 0.0
    %2714 = vmatpush1.msra.mxu0 %v2652
    %2715 = vmatprep.subr.mxu0 0.0
    %2716 = vmatpush1.msra.mxu0 %v2653
    %2717 = vmatprep.subr.mxu0 0.0
    %2718 = vmatpush1.msra.mxu0 %v2654
    %2719 = vmatprep.subr.mxu0 0.0
    %2720 = vmatpush1.msra.mxu0 0.0
    %2721 = vmatprep.subr.mxu0 0.0
    %2722 = vmatpush1.msra.mxu0 0.0
    %2723 = vmatprep.subr.mxu0 0.0
    %2724 = vmatpush1.msra.mxu0 0.0
    %2725 = vmatprep.subr.mxu0 0.0
    %2726 = vmatpush1.msra.mxu0 0.0
    %2727 = vmatprep.subr.mxu0 0.0
    %2728 = vmatpush1.msra.mxu0 0.0
    %2729 = vmatprep.subr.mxu0 0.0
    %2730 = vmatpush1.msra.mxu0 0.0
    %2731 = vmatprep.subr.mxu0 0.0
    %2732 = vmatpush1.msra.mxu0 0.0
    %2733 = vmatprep.subr.mxu0 0.0
    %2734 = vmatpush1.msra.mxu0 0.0
    %2735 = vmatprep.subr.mxu0 0.0
    %2736 = vmatpush1.msra.mxu0 0.0
    %2737 = vmatprep.subr.mxu0 0.0
    %2738 = vmatpush1.msra.mxu0 0.0
    %2739 = vmatprep.subr.mxu0 0.0
    %2740 = vmatpush1.msra.mxu0 0.0
    %2741 = vmatprep.subr.mxu0 0.0
    %2742 = vmatpush1.msra.mxu0 0.0
    %2743 = vmatprep.subr.mxu0 0.0
    %2744 = vmatpush1.msra.mxu0 0.0
    %2745 = vmatprep.subr.mxu0 0.0
    %2746 = vmatpush1.msra.mxu0 0.0
    %2747 = vmatprep.subr.mxu0 0.0
    %2748 = vmatpush1.msra.mxu0 0.0
    %2749 = vmatprep.subr.mxu0 0.0
    %2750 = vmatpush1.msra.mxu0 0.0
    %2751 = vmatprep.subr.mxu0 0.0
    %2752 = vmatpush1.msra.mxu0 0.0
    %2753 = vmatprep.subr.mxu0 0.0
    %2754 = vmatpush1.msra.mxu0 0.0
    %2755 = vmatprep.subr.mxu0 0.0
    %2756 = vmatpush1.msra.mxu0 0.0
    %2757 = vmatprep.subr.mxu0 0.0
    %2758 = vmatpush1.msra.mxu0 0.0
    %2759 = vmatprep.subr.mxu0 0.0
    %2760 = vmatpush1.msra.mxu0 0.0
    %2761 = vmatprep.subr.mxu0 0.0
    %2762 = vmatpush1.msra.mxu0 0.0
    %2763 = vmatprep.subr.mxu0 0.0
    %2764 = vmatpush1.msra.mxu0 0.0
    %2765 = vmatprep.subr.mxu0 0.0
    %2766 = vmatpush1.msra.mxu0 0.0
    %2767 = vmatprep.mubr.f32.mxu0 0.0
    %2768 = vmatmul.mubr.f32.gmra.mrb[0].mxu0 %v2656
    %v2769 = vpop.f32.mrb[0].mxu0
    %v2770 = vadd.f32 0.0, %v2769
    %v2771 = vpop.f32.mrb[0].mxu0
    %2772 = vmatprep.mubr.f32.mxu0 0.0
    %2773 = vmatmul.mubr.f32.gmra.mrb[0].mxu0 %v2659
    %v2774 = vpop.f32.mrb[0].mxu0
    %v2775 = vadd.f32 0.0, %v2774
    %v2776 = vpop.f32.mrb[0].mxu0
    %2777 = vmatprep.mubr.f32.mxu0 0.0
    %2778 = vmatmul.mubr.f32.gmra.mrb[0].mxu0 %v2662
    %v2779 = vpop.f32.mrb[0].mxu0
    %v2780 = vadd.f32 0.0, %v2779
    %v2781 = vpop.f32.mrb[0].mxu0
    %2782 = vmatprep.mubr.f32.mxu0 0.0
    %2783 = vmatmul.mubr.f32.gmra.mrb[0].mxu0 %v2665
    %v2784 = vpop.f32.mrb[0].mxu0
    %v2785 = vadd.f32 0.0, %v2784
    %v2786 = vpop.f32.mrb[0].mxu0
    %2787 = vmatprep.mubr.f32.mxu0 0.0
    %2788 = vmatmul.mubr.f32.gmra.mrb[0].mxu0 %v2668
    %v2789 = vpop.f32.mrb[0].mxu0
    %v2790 = vadd.f32 0.0, %v2789
    %v2791 = vpop.f32.mrb[0].mxu0
    %2792 = vmatprep.mubr.f32.mxu0 0.0
    %2793 = vmatmul.mubr.f32.gmra.mrb[0].mxu0 %v2671
    %v2794 = vpop.f32.mrb[0].mxu0
    %v2795 = vadd.f32 0.0, %v2794
    %v2796 = vpop.f32.mrb[0].mxu0
    %2797 = vmatprep.mubr.f32.mxu0 0.0
    %2798 = vmatmul.mubr.f32.gmra.mrb[0].mxu0 %v2674
    %v2799 = vpop.f32.mrb[0].mxu0
    %v2800 = vadd.f32 0.0, %v2799
    %v2801 = vpop.f32.mrb[0].mxu0
    %2802 = vmatprep.mubr.f32.mxu0 0.0
    %2803 = vmatmul.mubr.f32.gmra.mrb[0].mxu0 %v2677
    %v2804 = vpop.f32.mrb[0].mxu0
    %v2805 = vadd.f32 0.0, %v2804
    %v2806 = vpop.f32.mrb[0].mxu0
    %2807 = vmatprep.mubr.f32.mxu0 0.0
    %2808 = vmatmul.mubr.f32.gmra.mrb[0].mxu0 %v2680
    %v2809 = vpop.f32.mrb[0].mxu0
    %v2810 = vadd.f32 0.0, %v2809
    %v2811 = vpop.f32.mrb[0].mxu0
    %2812 = vmatprep.mubr.f32.mxu0 0.0
    %2813 = vmatmul.mubr.f32.gmra.mrb[0].mxu0 %v2683
    %v2814 = vpop.f32.mrb[0].mxu0
    %v2815 = vadd.f32 0.0, %v2814
    %v2816 = vpop.f32.mrb[0].mxu0
    %2817 = vmatprep.mubr.f32.mxu0 0.0
    %2818 = vmatmul.mubr.f32.gmra.mrb[0].mxu0 %v2686
    %v2819 = vpop.f32.mrb[0].mxu0
    %v2820 = vadd.f32 0.0, %v2819
    %v2821 = vpop.f32.mrb[0].mxu0
    %2822 = vmatprep.mubr.f32.mxu0 0.0
    %2823 = vmatmul.mubr.f32.gmra.mrb[0].mxu0 %v2689
    %v2824 = vpop.f32.mrb[0].mxu0
    %v2825 = vadd.f32 0.0, %v2824
    %v2826 = vpop.f32.mrb[0].mxu0
    %2827 = vmatprep.mubr.f32.mxu0 0.0
    %2828 = vmatmul.mubr.f32.gmra.mrb[0].mxu0 %v2692
    %v2829 = vpop.f32.mrb[0].mxu0
    %v2830 = vadd.f32 0.0, %v2829
    %v2831 = vpop.f32.mrb[0].mxu0
    %2832 = vmatprep.mubr.f32.mxu0 0.0
    %2833 = vmatmul.mubr.f32.gmra.mrb[0].mxu0 %v2695
    %v2834 = vpop.f32.mrb[0].mxu0
    %v2835 = vadd.f32 0.0, %v2834
    %v2836 = vpop.f32.mrb[0].mxu0
    %2837 = vmatprep.mubr.f32.mxu0 0.0
    %2838 = vmatmul.mubr.f32.gmra.mrb[0].mxu0 %v2698
    %v2839 = vpop.f32.mrb[0].mxu0
    %v2840 = vadd.f32 0.0, %v2839
    %v2841 = vpop.f32.mrb[0].mxu0
    %2842 = vmatprep.mubr.f32.mxu0 0.0
    %2843 = vmatmul.mubr.f32.gmra.mrb[0].mxu0 %v2701
    %v2844 = vpop.f32.mrb[0].mxu0
    %v2845 = vadd.f32 0.0, %v2844
    %v2846 = vpop.f32.mrb[0].mxu0
    %2847 = vdwg.mxu0
    %v2848 = vadd.f32 %v2630, %v2770
    %v2849 = vadd.f32 %v2631, %v2775
    %v2850 = vadd.f32 %v2632, %v2780
    %v2851 = vadd.f32 %v2633, %v2785
    %v2852 = vadd.f32 %v2634, %v2790
    %v2853 = vadd.f32 %v2635, %v2795
    %v2854 = vadd.f32 %v2636, %v2800
    %v2855 = vadd.f32 %v2637, %v2805
    %v2856 = vadd.f32 %v2638, %v2810
    %v2857 = vadd.f32 %v2639, %v2815
    %v2858 = vadd.f32 %v2640, %v2820
    %v2859 = vadd.f32 %v2641, %v2825
    %v2860 = vadd.f32 %v2642, %v2830
    %v2861 = vadd.f32 %v2643, %v2835
    %v2862 = vadd.f32 %v2644, %v2840
    %v2863 = vadd.f32 %v2645, %v2845
    %s2864 = scalar_lea.vmem [#allocation7], 384
    %v2865 = vld [vmem:[%s2864] sm:$0xff]
    %v2866 = vld [vmem:[%s2864 + $0x8] sm:$0xff]
    %v2867 = vld [vmem:[%s2864 + $0x10] sm:$0xff]
    %v2868 = vld [vmem:[%s2864 + $0x18] sm:$0xff]
    %v2869 = vld [vmem:[%s2864 + $0x20] sm:$0xff]
    %v2870 = vld [vmem:[%s2864 + $0x28] sm:$0xff]
    %v2871 = vld [vmem:[%s2864 + $0x30] sm:$0xff]
    %v2872 = vld [vmem:[%s2864 + $0x38] sm:$0xff]
    %v2874 = vsel %vm372, %v1351, 0
    %v2877 = vsel %vm372, %v1356, 0
    %v2880 = vsel %vm372, %v1361, 0
    %v2883 = vsel %vm372, %v1366, 0
    %v2886 = vsel %vm372, %v1371, 0
    %v2889 = vsel %vm372, %v1376, 0
    %v2892 = vsel %vm372, %v1381, 0
    %v2895 = vsel %vm372, %v1386, 0
    %v2898 = vsel %vm372, %v1391, 0
    %v2901 = vsel %vm372, %v1396, 0
    %v2904 = vsel %vm372, %v1401, 0
    %v2907 = vsel %vm372, %v1406, 0
    %v2910 = vsel %vm372, %v1411, 0
    %v2913 = vsel %vm372, %v1416, 0
    %v2916 = vsel %vm372, %v1421, 0
    %v2919 = vsel %vm372, %v1426, 0
    %2921 = vmatprep.subr.mxu0 0.0
    %2922 = vmatpush1.msra.mxu0 %v2865
    %2923 = vmatprep.subr.mxu0 0.0
    %2924 = vmatpush1.msra.mxu0 %v2866
    %2925 = vmatprep.subr.mxu0 0.0
    %2926 = vmatpush1.msra.mxu0 %v2867
    %2927 = vmatprep.subr.mxu0 0.0
    %2928 = vmatpush1.msra.mxu0 %v2868
    %2929 = vmatprep.subr.mxu0 0.0
    %2930 = vmatpush1.msra.mxu0 %v2869
    %2931 = vmatprep.subr.mxu0 0.0
    %2932 = vmatpush1.msra.mxu0 %v2870
    %2933 = vmatprep.subr.mxu0 0.0
    %2934 = vmatpush1.msra.mxu0 %v2871
    %2935 = vmatprep.subr.mxu0 0.0
    %2936 = vmatpush1.msra.mxu0 %v2872
    %2937 = vmatprep.subr.mxu0 0.0
    %2938 = vmatpush1.msra.mxu0 0.0
    %2939 = vmatprep.subr.mxu0 0.0
    %2940 = vmatpush1.msra.mxu0 0.0
    %2941 = vmatprep.subr.mxu0 0.0
    %2942 = vmatpush1.msra.mxu0 0.0
    %2943 = vmatprep.subr.mxu0 0.0
    %2944 = vmatpush1.msra.mxu0 0.0
    %2945 = vmatprep.subr.mxu0 0.0
    %2946 = vmatpush1.msra.mxu0 0.0
    %2947 = vmatprep.subr.mxu0 0.0
    %2948 = vmatpush1.msra.mxu0 0.0
    %2949 = vmatprep.subr.mxu0 0.0
    %2950 = vmatpush1.msra.mxu0 0.0
    %2951 = vmatprep.subr.mxu0 0.0
    %2952 = vmatpush1.msra.mxu0 0.0
    %2953 = vmatprep.subr.mxu0 0.0
    %2954 = vmatpush1.msra.mxu0 0.0
    %2955 = vmatprep.subr.mxu0 0.0
    %2956 = vmatpush1.msra.mxu0 0.0
    %2957 = vmatprep.subr.mxu0 0.0
    %2958 = vmatpush1.msra.mxu0 0.0
    %2959 = vmatprep.subr.mxu0 0.0
    %2960 = vmatpush1.msra.mxu0 0.0
    %2961 = vmatprep.subr.mxu0 0.0
    %2962 = vmatpush1.msra.mxu0 0.0
    %2963 = vmatprep.subr.mxu0 0.0
    %2964 = vmatpush1.msra.mxu0 0.0
    %2965 = vmatprep.subr.mxu0 0.0
    %2966 = vmatpush1.msra.mxu0 0.0
    %2967 = vmatprep.subr.mxu0 0.0
    %2968 = vmatpush1.msra.mxu0 0.0
    %2969 = vmatprep.subr.mxu0 0.0
    %2970 = vmatpush1.msra.mxu0 0.0
    %2971 = vmatprep.subr.mxu0 0.0
    %2972 = vmatpush1.msra.mxu0 0.0
    %2973 = vmatprep.subr.mxu0 0.0
    %2974 = vmatpush1.msra.mxu0 0.0
    %2975 = vmatprep.subr.mxu0 0.0
    %2976 = vmatpush1.msra.mxu0 0.0
    %2977 = vmatprep.subr.mxu0 0.0
    %2978 = vmatpush1.msra.mxu0 0.0
    %2979 = vmatprep.subr.mxu0 0.0
    %2980 = vmatpush1.msra.mxu0 0.0
    %2981 = vmatprep.subr.mxu0 0.0
    %2982 = vmatpush1.msra.mxu0 0.0
    %2983 = vmatprep.subr.mxu0 0.0
    %2984 = vmatpush1.msra.mxu0 0.0
    %2985 = vmatprep.mubr.f32.mxu0 0.0
    %2986 = vmatmul.mubr.f32.gmra.mrb[0].mxu0 %v2874
    %v2987 = vpop.f32.mrb[0].mxu0
    %v2988 = vadd.f32 0.0, %v2987
    %v2989 = vpop.f32.mrb[0].mxu0
    %2990 = vmatprep.mubr.f32.mxu0 0.0
    %2991 = vmatmul.mubr.f32.gmra.mrb[0].mxu0 %v2877
    %v2992 = vpop.f32.mrb[0].mxu0
    %v2993 = vadd.f32 0.0, %v2992
    %v2994 = vpop.f32.mrb[0].mxu0
    %2995 = vmatprep.mubr.f32.mxu0 0.0
    %2996 = vmatmul.mubr.f32.gmra.mrb[0].mxu0 %v2880
    %v2997 = vpop.f32.mrb[0].mxu0
    %v2998 = vadd.f32 0.0, %v2997
    %v2999 = vpop.f32.mrb[0].mxu0
    %3000 = vmatprep.mubr.f32.mxu0 0.0
    %3001 = vmatmul.mubr.f32.gmra.mrb[0].mxu0 %v2883
    %v3002 = vpop.f32.mrb[0].mxu0
    %v3003 = vadd.f32 0.0, %v3002
    %v3004 = vpop.f32.mrb[0].mxu0
    %3005 = vmatprep.mubr.f32.mxu0 0.0
    %3006 = vmatmul.mubr.f32.gmra.mrb[0].mxu0 %v2886
    %v3007 = vpop.f32.mrb[0].mxu0
    %v3008 = vadd.f32 0.0, %v3007
    %v3009 = vpop.f32.mrb[0].mxu0
    %3010 = vmatprep.mubr.f32.mxu0 0.0
    %3011 = vmatmul.mubr.f32.gmra.mrb[0].mxu0 %v2889
    %v3012 = vpop.f32.mrb[0].mxu0
    %v3013 = vadd.f32 0.0, %v3012
    %v3014 = vpop.f32.mrb[0].mxu0
    %3015 = vmatprep.mubr.f32.mxu0 0.0
    %3016 = vmatmul.mubr.f32.gmra.mrb[0].mxu0 %v2892
    %v3017 = vpop.f32.mrb[0].mxu0
    %v3018 = vadd.f32 0.0, %v3017
    %v3019 = vpop.f32.mrb[0].mxu0
    %3020 = vmatprep.mubr.f32.mxu0 0.0
    %3021 = vmatmul.mubr.f32.gmra.mrb[0].mxu0 %v2895
    %v3022 = vpop.f32.mrb[0].mxu0
    %v3023 = vadd.f32 0.0, %v3022
    %v3024 = vpop.f32.mrb[0].mxu0
    %3025 = vmatprep.mubr.f32.mxu0 0.0
    %3026 = vmatmul.mubr.f32.gmra.mrb[0].mxu0 %v2898
    %v3027 = vpop.f32.mrb[0].mxu0
    %v3028 = vadd.f32 0.0, %v3027
    %v3029 = vpop.f32.mrb[0].mxu0
    %3030 = vmatprep.mubr.f32.mxu0 0.0
    %3031 = vmatmul.mubr.f32.gmra.mrb[0].mxu0 %v2901
    %v3032 = vpop.f32.mrb[0].mxu0
    %v3033 = vadd.f32 0.0, %v3032
    %v3034 = vpop.f32.mrb[0].mxu0
    %3035 = vmatprep.mubr.f32.mxu0 0.0
    %3036 = vmatmul.mubr.f32.gmra.mrb[0].mxu0 %v2904
    %v3037 = vpop.f32.mrb[0].mxu0
    %v3038 = vadd.f32 0.0, %v3037
    %v3039 = vpop.f32.mrb[0].mxu0
    %3040 = vmatprep.mubr.f32.mxu0 0.0
    %3041 = vmatmul.mubr.f32.gmra.mrb[0].mxu0 %v2907
    %v3042 = vpop.f32.mrb[0].mxu0
    %v3043 = vadd.f32 0.0, %v3042
    %v3044 = vpop.f32.mrb[0].mxu0
    %3045 = vmatprep.mubr.f32.mxu0 0.0
    %3046 = vmatmul.mubr.f32.gmra.mrb[0].mxu0 %v2910
    %v3047 = vpop.f32.mrb[0].mxu0
    %v3048 = vadd.f32 0.0, %v3047
    %v3049 = vpop.f32.mrb[0].mxu0
    %3050 = vmatprep.mubr.f32.mxu0 0.0
    %3051 = vmatmul.mubr.f32.gmra.mrb[0].mxu0 %v2913
    %v3052 = vpop.f32.mrb[0].mxu0
    %v3053 = vadd.f32 0.0, %v3052
    %v3054 = vpop.f32.mrb[0].mxu0
    %3055 = vmatprep.mubr.f32.mxu0 0.0
    %3056 = vmatmul.mubr.f32.gmra.mrb[0].mxu0 %v2916
    %v3057 = vpop.f32.mrb[0].mxu0
    %v3058 = vadd.f32 0.0, %v3057
    %v3059 = vpop.f32.mrb[0].mxu0
    %3060 = vmatprep.mubr.f32.mxu0 0.0
    %3061 = vmatmul.mubr.f32.gmra.mrb[0].mxu0 %v2919
    %v3062 = vpop.f32.mrb[0].mxu0
    %v3063 = vadd.f32 0.0, %v3062
    %v3064 = vpop.f32.mrb[0].mxu0
    %3065 = vdwg.mxu0
    %v3066 = vadd.f32 %v2848, %v2988
    %v3067 = vadd.f32 %v2849, %v2993
    %v3068 = vadd.f32 %v2850, %v2998
    %v3069 = vadd.f32 %v2851, %v3003
    %v3070 = vadd.f32 %v2852, %v3008
    %v3071 = vadd.f32 %v2853, %v3013
    %v3072 = vadd.f32 %v2854, %v3018
    %v3073 = vadd.f32 %v2855, %v3023
    %v3074 = vadd.f32 %v2856, %v3028
    %v3075 = vadd.f32 %v2857, %v3033
    %v3076 = vadd.f32 %v2858, %v3038
    %v3077 = vadd.f32 %v2859, %v3043
    %v3078 = vadd.f32 %v2860, %v3048
    %v3079 = vadd.f32 %v2861, %v3053
    %v3080 = vadd.f32 %v2862, %v3058
    %v3081 = vadd.f32 %v2863, %v3063
    %s3082 = scalar_lea.vmem [#allocation7], 448
    %v3083 = vld [vmem:[%s3082] sm:$0xff]
    %v3084 = vld [vmem:[%s3082 + $0x8] sm:$0xff]
    %v3085 = vld [vmem:[%s3082 + $0x10] sm:$0xff]
    %v3086 = vld [vmem:[%s3082 + $0x18] sm:$0xff]
    %v3087 = vld [vmem:[%s3082 + $0x20] sm:$0xff]
    %v3088 = vld [vmem:[%s3082 + $0x28] sm:$0xff]
    %v3089 = vld [vmem:[%s3082 + $0x30] sm:$0xff]
    %v3090 = vld [vmem:[%s3082 + $0x38] sm:$0xff]
    %v3092 = vsel %vm372, %v1431, 0
    %v3095 = vsel %vm372, %v1436, 0
    %v3098 = vsel %vm372, %v1441, 0
    %v3101 = vsel %vm372, %v1446, 0
    %v3104 = vsel %vm372, %v1451, 0
    %v3107 = vsel %vm372, %v1456, 0
    %v3110 = vsel %vm372, %v1461, 0
    %v3113 = vsel %vm372, %v1466, 0
    %v3116 = vsel %vm372, %v1471, 0
    %v3119 = vsel %vm372, %v1476, 0
    %v3122 = vsel %vm372, %v1481, 0
    %v3125 = vsel %vm372, %v1486, 0
    %v3128 = vsel %vm372, %v1491, 0
    %v3131 = vsel %vm372, %v1496, 0
    %v3134 = vsel %vm372, %v1501, 0
    %v3137 = vsel %vm372, %v1506, 0
    %3139 = vmatprep.subr.mxu0 0.0
    %3140 = vmatpush1.msra.mxu0 %v3083
    %3141 = vmatprep.subr.mxu0 0.0
    %3142 = vmatpush1.msra.mxu0 %v3084
    %3143 = vmatprep.subr.mxu0 0.0
    %3144 = vmatpush1.msra.mxu0 %v3085
    %3145 = vmatprep.subr.mxu0 0.0
    %3146 = vmatpush1.msra.mxu0 %v3086
    %3147 = vmatprep.subr.mxu0 0.0
    %3148 = vmatpush1.msra.mxu0 %v3087
    %3149 = vmatprep.subr.mxu0 0.0
    %3150 = vmatpush1.msra.mxu0 %v3088
    %3151 = vmatprep.subr.mxu0 0.0
    %3152 = vmatpush1.msra.mxu0 %v3089
    %3153 = vmatprep.subr.mxu0 0.0
    %3154 = vmatpush1.msra.mxu0 %v3090
    %3155 = vmatprep.subr.mxu0 0.0
    %3156 = vmatpush1.msra.mxu0 0.0
    %3157 = vmatprep.subr.mxu0 0.0
    %3158 = vmatpush1.msra.mxu0 0.0
    %3159 = vmatprep.subr.mxu0 0.0
    %3160 = vmatpush1.msra.mxu0 0.0
    %3161 = vmatprep.subr.mxu0 0.0
    %3162 = vmatpush1.msra.mxu0 0.0
    %3163 = vmatprep.subr.mxu0 0.0
    %3164 = vmatpush1.msra.mxu0 0.0
    %3165 = vmatprep.subr.mxu0 0.0
    %3166 = vmatpush1.msra.mxu0 0.0
    %3167 = vmatprep.subr.mxu0 0.0
    %3168 = vmatpush1.msra.mxu0 0.0
    %3169 = vmatprep.subr.mxu0 0.0
    %3170 = vmatpush1.msra.mxu0 0.0
    %3171 = vmatprep.subr.mxu0 0.0
    %3172 = vmatpush1.msra.mxu0 0.0
    %3173 = vmatprep.subr.mxu0 0.0
    %3174 = vmatpush1.msra.mxu0 0.0
    %3175 = vmatprep.subr.mxu0 0.0
    %3176 = vmatpush1.msra.mxu0 0.0
    %3177 = vmatprep.subr.mxu0 0.0
    %3178 = vmatpush1.msra.mxu0 0.0
    %3179 = vmatprep.subr.mxu0 0.0
    %3180 = vmatpush1.msra.mxu0 0.0
    %3181 = vmatprep.subr.mxu0 0.0
    %3182 = vmatpush1.msra.mxu0 0.0
    %3183 = vmatprep.subr.mxu0 0.0
    %3184 = vmatpush1.msra.mxu0 0.0
    %3185 = vmatprep.subr.mxu0 0.0
    %3186 = vmatpush1.msra.mxu0 0.0
    %3187 = vmatprep.subr.mxu0 0.0
    %3188 = vmatpush1.msra.mxu0 0.0
    %3189 = vmatprep.subr.mxu0 0.0
    %3190 = vmatpush1.msra.mxu0 0.0
    %3191 = vmatprep.subr.mxu0 0.0
    %3192 = vmatpush1.msra.mxu0 0.0
    %3193 = vmatprep.subr.mxu0 0.0
    %3194 = vmatpush1.msra.mxu0 0.0
    %3195 = vmatprep.subr.mxu0 0.0
    %3196 = vmatpush1.msra.mxu0 0.0
    %3197 = vmatprep.subr.mxu0 0.0
    %3198 = vmatpush1.msra.mxu0 0.0
    %3199 = vmatprep.subr.mxu0 0.0
    %3200 = vmatpush1.msra.mxu0 0.0
    %3201 = vmatprep.subr.mxu0 0.0
    %3202 = vmatpush1.msra.mxu0 0.0
    %3203 = vmatprep.mubr.f32.mxu0 0.0
    %3204 = vmatmul.mubr.f32.gmra.mrb[0].mxu0 %v3092
    %v3205 = vpop.f32.mrb[0].mxu0
    %v3206 = vadd.f32 0.0, %v3205
    %v3207 = vpop.f32.mrb[0].mxu0
    %3208 = vmatprep.mubr.f32.mxu0 0.0
    %3209 = vmatmul.mubr.f32.gmra.mrb[0].mxu0 %v3095
    %v3210 = vpop.f32.mrb[0].mxu0
    %v3211 = vadd.f32 0.0, %v3210
    %v3212 = vpop.f32.mrb[0].mxu0
    %3213 = vmatprep.mubr.f32.mxu0 0.0
    %3214 = vmatmul.mubr.f32.gmra.mrb[0].mxu0 %v3098
    %v3215 = vpop.f32.mrb[0].mxu0
    %v3216 = vadd.f32 0.0, %v3215
    %v3217 = vpop.f32.mrb[0].mxu0
    %3218 = vmatprep.mubr.f32.mxu0 0.0
    %3219 = vmatmul.mubr.f32.gmra.mrb[0].mxu0 %v3101
    %v3220 = vpop.f32.mrb[0].mxu0
    %v3221 = vadd.f32 0.0, %v3220
    %v3222 = vpop.f32.mrb[0].mxu0
    %3223 = vmatprep.mubr.f32.mxu0 0.0
    %3224 = vmatmul.mubr.f32.gmra.mrb[0].mxu0 %v3104
    %v3225 = vpop.f32.mrb[0].mxu0
    %v3226 = vadd.f32 0.0, %v3225
    %v3227 = vpop.f32.mrb[0].mxu0
    %3228 = vmatprep.mubr.f32.mxu0 0.0
    %3229 = vmatmul.mubr.f32.gmra.mrb[0].mxu0 %v3107
    %v3230 = vpop.f32.mrb[0].mxu0
    %v3231 = vadd.f32 0.0, %v3230
    %v3232 = vpop.f32.mrb[0].mxu0
    %3233 = vmatprep.mubr.f32.mxu0 0.0
    %3234 = vmatmul.mubr.f32.gmra.mrb[0].mxu0 %v3110
    %v3235 = vpop.f32.mrb[0].mxu0
    %v3236 = vadd.f32 0.0, %v3235
    %v3237 = vpop.f32.mrb[0].mxu0
    %3238 = vmatprep.mubr.f32.mxu0 0.0
    %3239 = vmatmul.mubr.f32.gmra.mrb[0].mxu0 %v3113
    %v3240 = vpop.f32.mrb[0].mxu0
    %v3241 = vadd.f32 0.0, %v3240
    %v3242 = vpop.f32.mrb[0].mxu0
    %3243 = vmatprep.mubr.f32.mxu0 0.0
    %3244 = vmatmul.mubr.f32.gmra.mrb[0].mxu0 %v3116
    %v3245 = vpop.f32.mrb[0].mxu0
    %v3246 = vadd.f32 0.0, %v3245
    %v3247 = vpop.f32.mrb[0].mxu0
    %3248 = vmatprep.mubr.f32.mxu0 0.0
    %3249 = vmatmul.mubr.f32.gmra.mrb[0].mxu0 %v3119
    %v3250 = vpop.f32.mrb[0].mxu0
    %v3251 = vadd.f32 0.0, %v3250
    %v3252 = vpop.f32.mrb[0].mxu0
    %3253 = vmatprep.mubr.f32.mxu0 0.0
    %3254 = vmatmul.mubr.f32.gmra.mrb[0].mxu0 %v3122
    %v3255 = vpop.f32.mrb[0].mxu0
    %v3256 = vadd.f32 0.0, %v3255
    %v3257 = vpop.f32.mrb[0].mxu0
    %3258 = vmatprep.mubr.f32.mxu0 0.0
    %3259 = vmatmul.mubr.f32.gmra.mrb[0].mxu0 %v3125
    %v3260 = vpop.f32.mrb[0].mxu0
    %v3261 = vadd.f32 0.0, %v3260
    %v3262 = vpop.f32.mrb[0].mxu0
    %3263 = vmatprep.mubr.f32.mxu0 0.0
    %3264 = vmatmul.mubr.f32.gmra.mrb[0].mxu0 %v3128
    %v3265 = vpop.f32.mrb[0].mxu0
    %v3266 = vadd.f32 0.0, %v3265
    %v3267 = vpop.f32.mrb[0].mxu0
    %3268 = vmatprep.mubr.f32.mxu0 0.0
    %3269 = vmatmul.mubr.f32.gmra.mrb[0].mxu0 %v3131
    %v3270 = vpop.f32.mrb[0].mxu0
    %v3271 = vadd.f32 0.0, %v3270
    %v3272 = vpop.f32.mrb[0].mxu0
    %3273 = vmatprep.mubr.f32.mxu0 0.0
    %3274 = vmatmul.mubr.f32.gmra.mrb[0].mxu0 %v3134
    %v3275 = vpop.f32.mrb[0].mxu0
    %v3276 = vadd.f32 0.0, %v3275
    %v3277 = vpop.f32.mrb[0].mxu0
    %3278 = vmatprep.mubr.f32.mxu0 0.0
    %3279 = vmatmul.mubr.f32.gmra.mrb[0].mxu0 %v3137
    %v3280 = vpop.f32.mrb[0].mxu0
    %v3281 = vadd.f32 0.0, %v3280
    %v3282 = vpop.f32.mrb[0].mxu0
    %3283 = vdwg.mxu0
    %v3284 = vadd.f32 %v3066, %v3206
    %v3285 = vadd.f32 %v3067, %v3211
    %v3286 = vadd.f32 %v3068, %v3216
    %v3287 = vadd.f32 %v3069, %v3221
    %v3288 = vadd.f32 %v3070, %v3226
    %v3289 = vadd.f32 %v3071, %v3231
    %v3290 = vadd.f32 %v3072, %v3236
    %v3291 = vadd.f32 %v3073, %v3241
    %v3292 = vadd.f32 %v3074, %v3246
    %v3293 = vadd.f32 %v3075, %v3251
    %v3294 = vadd.f32 %v3076, %v3256
    %v3295 = vadd.f32 %v3077, %v3261
    %v3296 = vadd.f32 %v3078, %v3266
    %v3297 = vadd.f32 %v3079, %v3271
    %v3298 = vadd.f32 %v3080, %v3276
    %v3299 = vadd.f32 %v3081, %v3281
    %s3300 = scalar_lea.vmem [#allocation7], 512
    %v3301 = vld [vmem:[%s3300] sm:$0xff]
    %v3302 = vld [vmem:[%s3300 + $0x8] sm:$0xff]
    %v3303 = vld [vmem:[%s3300 + $0x10] sm:$0xff]
    %v3304 = vld [vmem:[%s3300 + $0x18] sm:$0xff]
    %v3305 = vld [vmem:[%s3300 + $0x20] sm:$0xff]
    %v3306 = vld [vmem:[%s3300 + $0x28] sm:$0xff]
    %v3307 = vld [vmem:[%s3300 + $0x30] sm:$0xff]
    %v3308 = vld [vmem:[%s3300 + $0x38] sm:$0xff]
    %v3310 = vsel %vm372, %v1511, 0
    %v3313 = vsel %vm372, %v1516, 0
    %v3316 = vsel %vm372, %v1521, 0
    %v3319 = vsel %vm372, %v1526, 0
    %v3322 = vsel %vm372, %v1531, 0
    %v3325 = vsel %vm372, %v1536, 0
    %v3328 = vsel %vm372, %v1541, 0
    %v3331 = vsel %vm372, %v1546, 0
    %v3334 = vsel %vm372, %v1551, 0
    %v3337 = vsel %vm372, %v1556, 0
    %v3340 = vsel %vm372, %v1561, 0
    %v3343 = vsel %vm372, %v1566, 0
    %v3346 = vsel %vm372, %v1571, 0
    %v3349 = vsel %vm372, %v1576, 0
    %v3352 = vsel %vm372, %v1581, 0
    %v3355 = vsel %vm372, %v1586, 0
    %3357 = vmatprep.subr.mxu0 0.0
    %3358 = vmatpush1.msra.mxu0 %v3301
    %3359 = vmatprep.subr.mxu0 0.0
    %3360 = vmatpush1.msra.mxu0 %v3302
    %3361 = vmatprep.subr.mxu0 0.0
    %3362 = vmatpush1.msra.mxu0 %v3303
    %3363 = vmatprep.subr.mxu0 0.0
    %3364 = vmatpush1.msra.mxu0 %v3304
    %3365 = vmatprep.subr.mxu0 0.0
    %3366 = vmatpush1.msra.mxu0 %v3305
    %3367 = vmatprep.subr.mxu0 0.0
    %3368 = vmatpush1.msra.mxu0 %v3306
    %3369 = vmatprep.subr.mxu0 0.0
    %3370 = vmatpush1.msra.mxu0 %v3307
    %3371 = vmatprep.subr.mxu0 0.0
    %3372 = vmatpush1.msra.mxu0 %v3308
    %3373 = vmatprep.subr.mxu0 0.0
    %3374 = vmatpush1.msra.mxu0 0.0
    %3375 = vmatprep.subr.mxu0 0.0
    %3376 = vmatpush1.msra.mxu0 0.0
    %3377 = vmatprep.subr.mxu0 0.0
    %3378 = vmatpush1.msra.mxu0 0.0
    %3379 = vmatprep.subr.mxu0 0.0
    %3380 = vmatpush1.msra.mxu0 0.0
    %3381 = vmatprep.subr.mxu0 0.0
    %3382 = vmatpush1.msra.mxu0 0.0
    %3383 = vmatprep.subr.mxu0 0.0
    %3384 = vmatpush1.msra.mxu0 0.0
    %3385 = vmatprep.subr.mxu0 0.0
    %3386 = vmatpush1.msra.mxu0 0.0
    %3387 = vmatprep.subr.mxu0 0.0
    %3388 = vmatpush1.msra.mxu0 0.0
    %3389 = vmatprep.subr.mxu0 0.0
    %3390 = vmatpush1.msra.mxu0 0.0
    %3391 = vmatprep.subr.mxu0 0.0
    %3392 = vmatpush1.msra.mxu0 0.0
    %3393 = vmatprep.subr.mxu0 0.0
    %3394 = vmatpush1.msra.mxu0 0.0
    %3395 = vmatprep.subr.mxu0 0.0
    %3396 = vmatpush1.msra.mxu0 0.0
    %3397 = vmatprep.subr.mxu0 0.0
    %3398 = vmatpush1.msra.mxu0 0.0
    %3399 = vmatprep.subr.mxu0 0.0
    %3400 = vmatpush1.msra.mxu0 0.0
    %3401 = vmatprep.subr.mxu0 0.0
    %3402 = vmatpush1.msra.mxu0 0.0
    %3403 = vmatprep.subr.mxu0 0.0
    %3404 = vmatpush1.msra.mxu0 0.0
    %3405 = vmatprep.subr.mxu0 0.0
    %3406 = vmatpush1.msra.mxu0 0.0
    %3407 = vmatprep.subr.mxu0 0.0
    %3408 = vmatpush1.msra.mxu0 0.0
    %3409 = vmatprep.subr.mxu0 0.0
    %3410 = vmatpush1.msra.mxu0 0.0
    %3411 = vmatprep.subr.mxu0 0.0
    %3412 = vmatpush1.msra.mxu0 0.0
    %3413 = vmatprep.subr.mxu0 0.0
    %3414 = vmatpush1.msra.mxu0 0.0
    %3415 = vmatprep.subr.mxu0 0.0
    %3416 = vmatpush1.msra.mxu0 0.0
    %3417 = vmatprep.subr.mxu0 0.0
    %3418 = vmatpush1.msra.mxu0 0.0
    %3419 = vmatprep.subr.mxu0 0.0
    %3420 = vmatpush1.msra.mxu0 0.0
    %3421 = vmatprep.mubr.f32.mxu0 0.0
    %3422 = vmatmul.mubr.f32.gmra.mrb[0].mxu0 %v3310
    %v3423 = vpop.f32.mrb[0].mxu0
    %v3424 = vadd.f32 0.0, %v3423
    %v3425 = vpop.f32.mrb[0].mxu0
    %3426 = vmatprep.mubr.f32.mxu0 0.0
    %3427 = vmatmul.mubr.f32.gmra.mrb[0].mxu0 %v3313
    %v3428 = vpop.f32.mrb[0].mxu0
    %v3429 = vadd.f32 0.0, %v3428
    %v3430 = vpop.f32.mrb[0].mxu0
    %3431 = vmatprep.mubr.f32.mxu0 0.0
    %3432 = vmatmul.mubr.f32.gmra.mrb[0].mxu0 %v3316
    %v3433 = vpop.f32.mrb[0].mxu0
    %v3434 = vadd.f32 0.0, %v3433
    %v3435 = vpop.f32.mrb[0].mxu0
    %3436 = vmatprep.mubr.f32.mxu0 0.0
    %3437 = vmatmul.mubr.f32.gmra.mrb[0].mxu0 %v3319
    %v3438 = vpop.f32.mrb[0].mxu0
    %v3439 = vadd.f32 0.0, %v3438
    %v3440 = vpop.f32.mrb[0].mxu0
    %3441 = vmatprep.mubr.f32.mxu0 0.0
    %3442 = vmatmul.mubr.f32.gmra.mrb[0].mxu0 %v3322
    %v3443 = vpop.f32.mrb[0].mxu0
    %v3444 = vadd.f32 0.0, %v3443
    %v3445 = vpop.f32.mrb[0].mxu0
    %3446 = vmatprep.mubr.f32.mxu0 0.0
    %3447 = vmatmul.mubr.f32.gmra.mrb[0].mxu0 %v3325
    %v3448 = vpop.f32.mrb[0].mxu0
    %v3449 = vadd.f32 0.0, %v3448
    %v3450 = vpop.f32.mrb[0].mxu0
    %3451 = vmatprep.mubr.f32.mxu0 0.0
    %3452 = vmatmul.mubr.f32.gmra.mrb[0].mxu0 %v3328
    %v3453 = vpop.f32.mrb[0].mxu0
    %v3454 = vadd.f32 0.0, %v3453
    %v3455 = vpop.f32.mrb[0].mxu0
    %3456 = vmatprep.mubr.f32.mxu0 0.0
    %3457 = vmatmul.mubr.f32.gmra.mrb[0].mxu0 %v3331
    %v3458 = vpop.f32.mrb[0].mxu0
    %v3459 = vadd.f32 0.0, %v3458
    %v3460 = vpop.f32.mrb[0].mxu0
    %3461 = vmatprep.mubr.f32.mxu0 0.0
    %3462 = vmatmul.mubr.f32.gmra.mrb[0].mxu0 %v3334
    %v3463 = vpop.f32.mrb[0].mxu0
    %v3464 = vadd.f32 0.0, %v3463
    %v3465 = vpop.f32.mrb[0].mxu0
    %3466 = vmatprep.mubr.f32.mxu0 0.0
    %3467 = vmatmul.mubr.f32.gmra.mrb[0].mxu0 %v3337
    %v3468 = vpop.f32.mrb[0].mxu0
    %v3469 = vadd.f32 0.0, %v3468
    %v3470 = vpop.f32.mrb[0].mxu0
    %3471 = vmatprep.mubr.f32.mxu0 0.0
    %3472 = vmatmul.mubr.f32.gmra.mrb[0].mxu0 %v3340
    %v3473 = vpop.f32.mrb[0].mxu0
    %v3474 = vadd.f32 0.0, %v3473
    %v3475 = vpop.f32.mrb[0].mxu0
    %3476 = vmatprep.mubr.f32.mxu0 0.0
    %3477 = vmatmul.mubr.f32.gmra.mrb[0].mxu0 %v3343
    %v3478 = vpop.f32.mrb[0].mxu0
    %v3479 = vadd.f32 0.0, %v3478
    %v3480 = vpop.f32.mrb[0].mxu0
    %3481 = vmatprep.mubr.f32.mxu0 0.0
    %3482 = vmatmul.mubr.f32.gmra.mrb[0].mxu0 %v3346
    %v3483 = vpop.f32.mrb[0].mxu0
    %v3484 = vadd.f32 0.0, %v3483
    %v3485 = vpop.f32.mrb[0].mxu0
    %3486 = vmatprep.mubr.f32.mxu0 0.0
    %3487 = vmatmul.mubr.f32.gmra.mrb[0].mxu0 %v3349
    %v3488 = vpop.f32.mrb[0].mxu0
    %v3489 = vadd.f32 0.0, %v3488
    %v3490 = vpop.f32.mrb[0].mxu0
    %3491 = vmatprep.mubr.f32.mxu0 0.0
    %3492 = vmatmul.mubr.f32.gmra.mrb[0].mxu0 %v3352
    %v3493 = vpop.f32.mrb[0].mxu0
    %v3494 = vadd.f32 0.0, %v3493
    %v3495 = vpop.f32.mrb[0].mxu0
    %3496 = vmatprep.mubr.f32.mxu0 0.0
    %3497 = vmatmul.mubr.f32.gmra.mrb[0].mxu0 %v3355
    %v3498 = vpop.f32.mrb[0].mxu0
    %v3499 = vadd.f32 0.0, %v3498
    %v3500 = vpop.f32.mrb[0].mxu0
    %3501 = vdwg.mxu0
    %v3502 = vadd.f32 %v3284, %v3424
    %v3503 = vadd.f32 %v3285, %v3429
    %v3504 = vadd.f32 %v3286, %v3434
    %v3505 = vadd.f32 %v3287, %v3439
    %v3506 = vadd.f32 %v3288, %v3444
    %v3507 = vadd.f32 %v3289, %v3449
    %v3508 = vadd.f32 %v3290, %v3454
    %v3509 = vadd.f32 %v3291, %v3459
    %v3510 = vadd.f32 %v3292, %v3464
    %v3511 = vadd.f32 %v3293, %v3469
    %v3512 = vadd.f32 %v3294, %v3474
    %v3513 = vadd.f32 %v3295, %v3479
    %v3514 = vadd.f32 %v3296, %v3484
    %v3515 = vadd.f32 %v3297, %v3489
    %v3516 = vadd.f32 %v3298, %v3494
    %v3517 = vadd.f32 %v3299, %v3499
    %v3518 = vld [vmem:[%s1] sm:$0xff]
    %v3519 = vld [vmem:[%s1 + $0x8] sm:$0xff]
    %v3520 = vld [vmem:[%s1 + $0x10] sm:$0xff]
    %v3521 = vld [vmem:[%s1 + $0x18] sm:$0xff]
    %v3522 = vld [vmem:[%s1 + $0x20] sm:$0xff]
    %v3523 = vld [vmem:[%s1 + $0x28] sm:$0xff]
    %v3524 = vld [vmem:[%s1 + $0x30] sm:$0xff]
    %v3525 = vld [vmem:[%s1 + $0x38] sm:$0xff]
    %v3526 = vld [vmem:[%s1 + $0x40] sm:$0xff]
    %v3527 = vld [vmem:[%s1 + $0x48] sm:$0xff]
    %v3528 = vld [vmem:[%s1 + $0x50] sm:$0xff]
    %v3529 = vld [vmem:[%s1 + $0x58] sm:$0xff]
    %v3530 = vld [vmem:[%s1 + $0x60] sm:$0xff]
    %v3531 = vld [vmem:[%s1 + $0x68] sm:$0xff]
    %v3532 = vld [vmem:[%s1 + $0x70] sm:$0xff]
    %v3533 = vld [vmem:[%s1 + $0x78] sm:$0xff]
    %v3534 = vld [vmem:[#allocation2] sm:$0x1]
    %vm3535 = vcmask 7168
    %v3537 = vsel %vm3535, %v3518, 0
    %v3540 = vsel %vm3535, %v3519, 0
    %v3543 = vsel %vm3535, %v3520, 0
    %v3546 = vsel %vm3535, %v3521, 0
    %v3549 = vsel %vm3535, %v3522, 0
    %v3552 = vsel %vm3535, %v3523, 0
    %v3555 = vsel %vm3535, %v3524, 0
    %v3558 = vsel %vm3535, %v3525, 0
    %v3561 = vsel %vm3535, %v3526, 0
    %v3564 = vsel %vm3535, %v3527, 0
    %v3567 = vsel %vm3535, %v3528, 0
    %v3570 = vsel %vm3535, %v3529, 0
    %v3573 = vsel %vm3535, %v3530, 0
    %v3576 = vsel %vm3535, %v3531, 0
    %v3579 = vsel %vm3535, %v3532, 0
    %v3582 = vsel %vm3535, %v3533, 0
    %v3585 = vsel %vm207, %v3534, 0
    %3587 = vmatprep.subr.mxu0 0.0
    %3588 = vmatpush1.msra.mxu0 %v3585
    %3589 = vmatprep.subr.mxu0 0.0
    %3590 = vmatpush1.msra.mxu0 0.0
    %3591 = vmatprep.subr.mxu0 0.0
    %3592 = vmatpush1.msra.mxu0 0.0
    %3593 = vmatprep.subr.mxu0 0.0
    %3594 = vmatpush1.msra.mxu0 0.0
    %3595 = vmatprep.subr.mxu0 0.0
    %3596 = vmatpush1.msra.mxu0 0.0
    %3597 = vmatprep.subr.mxu0 0.0
    %3598 = vmatpush1.msra.mxu0 0.0
    %3599 = vmatprep.subr.mxu0 0.0
    %3600 = vmatpush1.msra.mxu0 0.0
    %3601 = vmatprep.subr.mxu0 0.0
    %3602 = vmatpush1.msra.mxu0 0.0
    %3603 = vmatprep.subr.mxu0 0.0
    %3604 = vmatpush1.msra.mxu0 0.0
    %3605 = vmatprep.subr.mxu0 0.0
    %3606 = vmatpush1.msra.mxu0 0.0
    %3607 = vmatprep.subr.mxu0 0.0
    %3608 = vmatpush1.msra.mxu0 0.0
    %3609 = vmatprep.subr.mxu0 0.0
    %3610 = vmatpush1.msra.mxu0 0.0
    %3611 = vmatprep.subr.mxu0 0.0
    %3612 = vmatpush1.msra.mxu0 0.0
    %3613 = vmatprep.subr.mxu0 0.0
    %3614 = vmatpush1.msra.mxu0 0.0
    %3615 = vmatprep.subr.mxu0 0.0
    %3616 = vmatpush1.msra.mxu0 0.0
    %3617 = vmatprep.subr.mxu0 0.0
    %3618 = vmatpush1.msra.mxu0 0.0
    %3619 = vmatprep.subr.mxu0 0.0
    %3620 = vmatpush1.msra.mxu0 0.0
    %3621 = vmatprep.subr.mxu0 0.0
    %3622 = vmatpush1.msra.mxu0 0.0
    %3623 = vmatprep.subr.mxu0 0.0
    %3624 = vmatpush1.msra.mxu0 0.0
    %3625 = vmatprep.subr.mxu0 0.0
    %3626 = vmatpush1.msra.mxu0 0.0
    %3627 = vmatprep.subr.mxu0 0.0
    %3628 = vmatpush1.msra.mxu0 0.0
    %3629 = vmatprep.subr.mxu0 0.0
    %3630 = vmatpush1.msra.mxu0 0.0
    %3631 = vmatprep.subr.mxu0 0.0
    %3632 = vmatpush1.msra.mxu0 0.0
    %3633 = vmatprep.subr.mxu0 0.0
    %3634 = vmatpush1.msra.mxu0 0.0
    %3635 = vmatprep.subr.mxu0 0.0
    %3636 = vmatpush1.msra.mxu0 0.0
    %3637 = vmatprep.subr.mxu0 0.0
    %3638 = vmatpush1.msra.mxu0 0.0
    %3639 = vmatprep.subr.mxu0 0.0
    %3640 = vmatpush1.msra.mxu0 0.0
    %3641 = vmatprep.subr.mxu0 0.0
    %3642 = vmatpush1.msra.mxu0 0.0
    %3643 = vmatprep.subr.mxu0 0.0
    %3644 = vmatpush1.msra.mxu0 0.0
    %3645 = vmatprep.subr.mxu0 0.0
    %3646 = vmatpush1.msra.mxu0 0.0
    %3647 = vmatprep.subr.mxu0 0.0
    %3648 = vmatpush1.msra.mxu0 0.0
    %3649 = vmatprep.subr.mxu0 0.0
    %3650 = vmatpush1.msra.mxu0 0.0
    %3651 = vmatprep.mubr.f32.mxu0 0.0
    %3652 = vmatmul.mubr.f32.gmra.mrb[0].mxu0 %v3537
    %v3653 = vpop.f32.mrb[0].mxu0
    %v3654 = vadd.f32 0.0, %v3653
    %v3655 = vpop.f32.mrb[0].mxu0
    %3656 = vmatprep.mubr.f32.mxu0 0.0
    %3657 = vmatmul.mubr.f32.gmra.mrb[0].mxu0 %v3540
    %v3658 = vpop.f32.mrb[0].mxu0
    %v3659 = vadd.f32 0.0, %v3658
    %v3660 = vpop.f32.mrb[0].mxu0
    %3661 = vmatprep.mubr.f32.mxu0 0.0
    %3662 = vmatmul.mubr.f32.gmra.mrb[0].mxu0 %v3543
    %v3663 = vpop.f32.mrb[0].mxu0
    %v3664 = vadd.f32 0.0, %v3663
    %v3665 = vpop.f32.mrb[0].mxu0
    %3666 = vmatprep.mubr.f32.mxu0 0.0
    %3667 = vmatmul.mubr.f32.gmra.mrb[0].mxu0 %v3546
    %v3668 = vpop.f32.mrb[0].mxu0
    %v3669 = vadd.f32 0.0, %v3668
    %v3670 = vpop.f32.mrb[0].mxu0
    %3671 = vmatprep.mubr.f32.mxu0 0.0
    %3672 = vmatmul.mubr.f32.gmra.mrb[0].mxu0 %v3549
    %v3673 = vpop.f32.mrb[0].mxu0
    %v3674 = vadd.f32 0.0, %v3673
    %v3675 = vpop.f32.mrb[0].mxu0
    %3676 = vmatprep.mubr.f32.mxu0 0.0
    %3677 = vmatmul.mubr.f32.gmra.mrb[0].mxu0 %v3552
    %v3678 = vpop.f32.mrb[0].mxu0
    %v3679 = vadd.f32 0.0, %v3678
    %v3680 = vpop.f32.mrb[0].mxu0
    %3681 = vmatprep.mubr.f32.mxu0 0.0
    %3682 = vmatmul.mubr.f32.gmra.mrb[0].mxu0 %v3555
    %v3683 = vpop.f32.mrb[0].mxu0
    %v3684 = vadd.f32 0.0, %v3683
    %v3685 = vpop.f32.mrb[0].mxu0
    %3686 = vmatprep.mubr.f32.mxu0 0.0
    %3687 = vmatmul.mubr.f32.gmra.mrb[0].mxu0 %v3558
    %v3688 = vpop.f32.mrb[0].mxu0
    %v3689 = vadd.f32 0.0, %v3688
    %v3690 = vpop.f32.mrb[0].mxu0
    %3691 = vmatprep.mubr.f32.mxu0 0.0
    %3692 = vmatmul.mubr.f32.gmra.mrb[0].mxu0 %v3561
    %v3693 = vpop.f32.mrb[0].mxu0
    %v3694 = vadd.f32 0.0, %v3693
    %v3695 = vpop.f32.mrb[0].mxu0
    %3696 = vmatprep.mubr.f32.mxu0 0.0
    %3697 = vmatmul.mubr.f32.gmra.mrb[0].mxu0 %v3564
    %v3698 = vpop.f32.mrb[0].mxu0
    %v3699 = vadd.f32 0.0, %v3698
    %v3700 = vpop.f32.mrb[0].mxu0
    %3701 = vmatprep.mubr.f32.mxu0 0.0
    %3702 = vmatmul.mubr.f32.gmra.mrb[0].mxu0 %v3567
    %v3703 = vpop.f32.mrb[0].mxu0
    %v3704 = vadd.f32 0.0, %v3703
    %v3705 = vpop.f32.mrb[0].mxu0
    %3706 = vmatprep.mubr.f32.mxu0 0.0
    %3707 = vmatmul.mubr.f32.gmra.mrb[0].mxu0 %v3570
    %v3708 = vpop.f32.mrb[0].mxu0
    %v3709 = vadd.f32 0.0, %v3708
    %v3710 = vpop.f32.mrb[0].mxu0
    %3711 = vmatprep.mubr.f32.mxu0 0.0
    %3712 = vmatmul.mubr.f32.gmra.mrb[0].mxu0 %v3573
    %v3713 = vpop.f32.mrb[0].mxu0
    %v3714 = vadd.f32 0.0, %v3713
    %v3715 = vpop.f32.mrb[0].mxu0
    %3716 = vmatprep.mubr.f32.mxu0 0.0
    %3717 = vmatmul.mubr.f32.gmra.mrb[0].mxu0 %v3576
    %v3718 = vpop.f32.mrb[0].mxu0
    %v3719 = vadd.f32 0.0, %v3718
    %v3720 = vpop.f32.mrb[0].mxu0
    %3721 = vmatprep.mubr.f32.mxu0 0.0
    %3722 = vmatmul.mubr.f32.gmra.mrb[0].mxu0 %v3579
    %v3723 = vpop.f32.mrb[0].mxu0
    %v3724 = vadd.f32 0.0, %v3723
    %v3725 = vpop.f32.mrb[0].mxu0
    %3726 = vmatprep.mubr.f32.mxu0 0.0
    %3727 = vmatmul.mubr.f32.gmra.mrb[0].mxu0 %v3582
    %v3728 = vpop.f32.mrb[0].mxu0
    %v3729 = vadd.f32 0.0, %v3728
    %v3730 = vpop.f32.mrb[0].mxu0
    %3731 = vdwg.mxu0
    %v3732 = vsel %vm372, %v3502, 0.0
    %v3733 = vsel %vm372, %v3503, 0.0
    %v3734 = vadd.f32 %v3732, %v3733
    %v3735 = vsel %vm372, %v3504, 0.0
    %v3736 = vadd.f32 %v3734, %v3735
    %v3737 = vsel %vm372, %v3505, 0.0
    %v3738 = vadd.f32 %v3736, %v3737
    %v3739 = vsel %vm372, %v3506, 0.0
    %v3740 = vadd.f32 %v3738, %v3739
    %v3741 = vsel %vm372, %v3507, 0.0
    %v3742 = vadd.f32 %v3740, %v3741
    %v3743 = vsel %vm372, %v3508, 0.0
    %v3744 = vadd.f32 %v3742, %v3743
    %v3745 = vsel %vm372, %v3509, 0.0
    %v3746 = vadd.f32 %v3744, %v3745
    %v3747 = vsel %vm372, %v3510, 0.0
    %v3748 = vadd.f32 %v3746, %v3747
    %v3749 = vsel %vm372, %v3511, 0.0
    %v3750 = vadd.f32 %v3748, %v3749
    %v3751 = vsel %vm372, %v3512, 0.0
    %v3752 = vadd.f32 %v3750, %v3751
    %v3753 = vsel %vm372, %v3513, 0.0
    %v3754 = vadd.f32 %v3752, %v3753
    %v3755 = vsel %vm372, %v3514, 0.0
    %v3756 = vadd.f32 %v3754, %v3755
    %v3757 = vsel %vm372, %v3515, 0.0
    %v3758 = vadd.f32 %v3756, %v3757
    %v3759 = vsel %vm372, %v3516, 0.0
    %v3760 = vadd.f32 %v3758, %v3759
    %v3761 = vsel %vm372, %v3517, 0.0
    %v3762 = vadd.f32 %v3760, %v3761
    %v3763 = vrot.slane %v3762, 4
    %v3764 = vadd.f32 %v3762, %v3763
    %v3765 = vrot.slane %v3764, 2
    %v3766 = vadd.f32 %v3764, %v3765
    %v3767 = vrot.slane %v3766, 1
    %v3768 = vadd.f32 %v3766, %v3767
    %v3769 = vmul.f32 %v3502, %v3502
    %v3770 = vmul.f32 %v3503, %v3503
    %v3771 = vmul.f32 %v3504, %v3504
    %v3772 = vmul.f32 %v3505, %v3505
    %v3773 = vmul.f32 %v3506, %v3506
    %v3774 = vmul.f32 %v3507, %v3507
    %v3775 = vmul.f32 %v3508, %v3508
    %v3776 = vmul.f32 %v3509, %v3509
    %v3777 = vmul.f32 %v3510, %v3510
    %v3778 = vmul.f32 %v3511, %v3511
    %v3779 = vmul.f32 %v3512, %v3512
    %v3780 = vmul.f32 %v3513, %v3513
    %v3781 = vmul.f32 %v3514, %v3514
    %v3782 = vmul.f32 %v3515, %v3515
    %v3783 = vmul.f32 %v3516, %v3516
    %v3784 = vmul.f32 %v3517, %v3517
    %v3785 = vsel %vm372, %v3769, 0.0
    %v3786 = vsel %vm372, %v3770, 0.0
    %v3787 = vadd.f32 %v3785, %v3786
    %v3788 = vsel %vm372, %v3771, 0.0
    %v3789 = vadd.f32 %v3787, %v3788
    %v3790 = vsel %vm372, %v3772, 0.0
    %v3791 = vadd.f32 %v3789, %v3790
    %v3792 = vsel %vm372, %v3773, 0.0
    %v3793 = vadd.f32 %v3791, %v3792
    %v3794 = vsel %vm372, %v3774, 0.0
    %v3795 = vadd.f32 %v3793, %v3794
    %v3796 = vsel %vm372, %v3775, 0.0
    %v3797 = vadd.f32 %v3795, %v3796
    %v3798 = vsel %vm372, %v3776, 0.0
    %v3799 = vadd.f32 %v3797, %v3798
    %v3800 = vsel %vm372, %v3777, 0.0
    %v3801 = vadd.f32 %v3799, %v3800
    %v3802 = vsel %vm372, %v3778, 0.0
    %v3803 = vadd.f32 %v3801, %v3802
    %v3804 = vsel %vm372, %v3779, 0.0
    %v3805 = vadd.f32 %v3803, %v3804
    %v3806 = vsel %vm372, %v3780, 0.0
    %v3807 = vadd.f32 %v3805, %v3806
    %v3808 = vsel %vm372, %v3781, 0.0
    %v3809 = vadd.f32 %v3807, %v3808
    %v3810 = vsel %vm372, %v3782, 0.0
    %v3811 = vadd.f32 %v3809, %v3810
    %v3812 = vsel %vm372, %v3783, 0.0
    %v3813 = vadd.f32 %v3811, %v3812
    %v3814 = vsel %vm372, %v3784, 0.0
    %v3815 = vadd.f32 %v3813, %v3814
    %v3816 = vrot.slane %v3815, 4
    %v3817 = vadd.f32 %v3815, %v3816
    %v3818 = vrot.slane %v3817, 2
    %v3819 = vadd.f32 %v3817, %v3818
    %v3820 = vrot.slane %v3819, 1
    %v3821 = vadd.f32 %v3819, %v3820
    %v3822 = vmul.f32 %v3768, 0.0078125
    %v3823 = vmul.f32 %v3821, 0.0078125
    %v3824 = vmul.f32 %v3822, %v3822
    %v3825 = vsub.f32 %v3823, %v3824
    %v3826 = vmax.f32 %v3825, 0.0
    %v3827 = vadd.f32 %v3826, 1e-05
    %v3828 = vrsqrt.pop %v3827
    %v3829 = vmul.f32 %v135, %v3828
    %v3830 = vsub.f32 0.0, %v3822
    %v3831 = vmul.f32 %v3830, %v3829
    %v3832 = vlaneseq
    %v3833 = vshrl.u32 %v3832, 7
    %v3834 = vsub.s32 3, %v3833
    %v3835 = vrot.slane %v3829, %v3834
    %v3836 = vmul.f32 %v3502, %v3835
    %v3837 = vmul.f32 %v3503, %v3835
    %v3838 = vmul.f32 %v3504, %v3835
    %v3839 = vmul.f32 %v3505, %v3835
    %v3840 = vmul.f32 %v3506, %v3835
    %v3841 = vmul.f32 %v3507, %v3835
    %v3842 = vmul.f32 %v3508, %v3835
    %v3843 = vmul.f32 %v3509, %v3835
    %v3844 = vmul.f32 %v3510, %v3835
    %v3845 = vmul.f32 %v3511, %v3835
    %v3846 = vmul.f32 %v3512, %v3835
    %v3847 = vmul.f32 %v3513, %v3835
    %v3848 = vmul.f32 %v3514, %v3835
    %v3849 = vmul.f32 %v3515, %v3835
    %v3850 = vmul.f32 %v3516, %v3835
    %v3851 = vmul.f32 %v3517, %v3835
    %v3852 = vlaneseq
    %v3853 = vshrl.u32 %v3852, 7
    %v3854 = vsub.s32 3, %v3853
    %v3855 = vrot.slane %v3831, %v3854
    %v3856 = vadd.f32 %v3836, %v3855
    %v3857 = vadd.f32 %v3837, %v3855
    %v3858 = vadd.f32 %v3838, %v3855
    %v3859 = vadd.f32 %v3839, %v3855
    %v3860 = vadd.f32 %v3840, %v3855
    %v3861 = vadd.f32 %v3841, %v3855
    %v3862 = vadd.f32 %v3842, %v3855
    %v3863 = vadd.f32 %v3843, %v3855
    %v3864 = vadd.f32 %v3844, %v3855
    %v3865 = vadd.f32 %v3845, %v3855
    %v3866 = vadd.f32 %v3846, %v3855
    %v3867 = vadd.f32 %v3847, %v3855
    %v3868 = vadd.f32 %v3848, %v3855
    %v3869 = vadd.f32 %v3849, %v3855
    %v3870 = vadd.f32 %v3850, %v3855
    %v3871 = vadd.f32 %v3851, %v3855
    %v3872 = vsel %vm372, %v3654, 0.0
    %v3873 = vsel %vm372, %v3659, 0.0
    %v3874 = vadd.f32 %v3872, %v3873
    %v3875 = vsel %vm372, %v3664, 0.0
    %v3876 = vadd.f32 %v3874, %v3875
    %v3877 = vsel %vm372, %v3669, 0.0
    %v3878 = vadd.f32 %v3876, %v3877
    %v3879 = vsel %vm372, %v3674, 0.0
    %v3880 = vadd.f32 %v3878, %v3879
    %v3881 = vsel %vm372, %v3679, 0.0
    %v3882 = vadd.f32 %v3880, %v3881
    %v3883 = vsel %vm372, %v3684, 0.0
    %v3884 = vadd.f32 %v3882, %v3883
    %v3885 = vsel %vm372, %v3689, 0.0
    %v3886 = vadd.f32 %v3884, %v3885
    %v3887 = vsel %vm372, %v3694, 0.0
    %v3888 = vadd.f32 %v3886, %v3887
    %v3889 = vsel %vm372, %v3699, 0.0
    %v3890 = vadd.f32 %v3888, %v3889
    %v3891 = vsel %vm372, %v3704, 0.0
    %v3892 = vadd.f32 %v3890, %v3891
    %v3893 = vsel %vm372, %v3709, 0.0
    %v3894 = vadd.f32 %v3892, %v3893
    %v3895 = vsel %vm372, %v3714, 0.0
    %v3896 = vadd.f32 %v3894, %v3895
    %v3897 = vsel %vm372, %v3719, 0.0
    %v3898 = vadd.f32 %v3896, %v3897
    %v3899 = vsel %vm372, %v3724, 0.0
    %v3900 = vadd.f32 %v3898, %v3899
    %v3901 = vsel %vm372, %v3729, 0.0
    %v3902 = vadd.f32 %v3900, %v3901
    %v3903 = vrot.slane %v3902, 4
    %v3904 = vadd.f32 %v3902, %v3903
    %v3905 = vrot.slane %v3904, 2
    %v3906 = vadd.f32 %v3904, %v3905
    %v3907 = vrot.slane %v3906, 1
    %v3908 = vadd.f32 %v3906, %v3907
    %v3909 = vmul.f32 %v3654, %v3654
    %v3910 = vmul.f32 %v3659, %v3659
    %v3911 = vmul.f32 %v3664, %v3664
    %v3912 = vmul.f32 %v3669, %v3669
    %v3913 = vmul.f32 %v3674, %v3674
    %v3914 = vmul.f32 %v3679, %v3679
    %v3915 = vmul.f32 %v3684, %v3684
    %v3916 = vmul.f32 %v3689, %v3689
    %v3917 = vmul.f32 %v3694, %v3694
    %v3918 = vmul.f32 %v3699, %v3699
    %v3919 = vmul.f32 %v3704, %v3704
    %v3920 = vmul.f32 %v3709, %v3709
    %v3921 = vmul.f32 %v3714, %v3714
    %v3922 = vmul.f32 %v3719, %v3719
    %v3923 = vmul.f32 %v3724, %v3724
    %v3924 = vmul.f32 %v3729, %v3729
    %v3925 = vsel %vm372, %v3909, 0.0
    %v3926 = vsel %vm372, %v3910, 0.0
    %v3927 = vadd.f32 %v3925, %v3926
    %v3928 = vsel %vm372, %v3911, 0.0
    %v3929 = vadd.f32 %v3927, %v3928
    %v3930 = vsel %vm372, %v3912, 0.0
    %v3931 = vadd.f32 %v3929, %v3930
    %v3932 = vsel %vm372, %v3913, 0.0
    %v3933 = vadd.f32 %v3931, %v3932
    %v3934 = vsel %vm372, %v3914, 0.0
    %v3935 = vadd.f32 %v3933, %v3934
    %v3936 = vsel %vm372, %v3915, 0.0
    %v3937 = vadd.f32 %v3935, %v3936
    %v3938 = vsel %vm372, %v3916, 0.0
    %v3939 = vadd.f32 %v3937, %v3938
    %v3940 = vsel %vm372, %v3917, 0.0
    %v3941 = vadd.f32 %v3939, %v3940
    %v3942 = vsel %vm372, %v3918, 0.0
    %v3943 = vadd.f32 %v3941, %v3942
    %v3944 = vsel %vm372, %v3919, 0.0
    %v3945 = vadd.f32 %v3943, %v3944
    %v3946 = vsel %vm372, %v3920, 0.0
    %v3947 = vadd.f32 %v3945, %v3946
    %v3948 = vsel %vm372, %v3921, 0.0
    %v3949 = vadd.f32 %v3947, %v3948
    %v3950 = vsel %vm372, %v3922, 0.0
    %v3951 = vadd.f32 %v3949, %v3950
    %v3952 = vsel %vm372, %v3923, 0.0
    %v3953 = vadd.f32 %v3951, %v3952
    %v3954 = vsel %vm372, %v3924, 0.0
    %v3955 = vadd.f32 %v3953, %v3954
    %v3956 = vrot.slane %v3955, 4
    %v3957 = vadd.f32 %v3955, %v3956
    %v3958 = vrot.slane %v3957, 2
    %v3959 = vadd.f32 %v3957, %v3958
    %v3960 = vrot.slane %v3959, 1
    %v3961 = vadd.f32 %v3959, %v3960
    %v3962 = vmul.f32 %v3908, 0.0078125
    %v3963 = vmul.f32 %v3961, 0.0078125
    %v3964 = vmul.f32 %v3962, %v3962
    %v3965 = vsub.f32 %v3963, %v3964
    %v3966 = vmax.f32 %v3965, 0.0
    %v3967 = vadd.f32 %v3966, 1e-05
    %v3968 = vrsqrt.pop %v3967
    %v3969 = vmul.f32 %v135, %v3968
    %v3970 = vsub.f32 0.0, %v3962
    %v3971 = vmul.f32 %v3970, %v3969
    %v3972 = vlaneseq
    %v3973 = vshrl.u32 %v3972, 7
    %v3974 = vsub.s32 4, %v3973
    %v3975 = vrot.slane %v3969, %v3974
    %v3976 = vmul.f32 %v3654, %v3975
    %v3977 = vmul.f32 %v3659, %v3975
    %v3978 = vmul.f32 %v3664, %v3975
    %v3979 = vmul.f32 %v3669, %v3975
    %v3980 = vmul.f32 %v3674, %v3975
    %v3981 = vmul.f32 %v3679, %v3975
    %v3982 = vmul.f32 %v3684, %v3975
    %v3983 = vmul.f32 %v3689, %v3975
    %v3984 = vmul.f32 %v3694, %v3975
    %v3985 = vmul.f32 %v3699, %v3975
    %v3986 = vmul.f32 %v3704, %v3975
    %v3987 = vmul.f32 %v3709, %v3975
    %v3988 = vmul.f32 %v3714, %v3975
    %v3989 = vmul.f32 %v3719, %v3975
    %v3990 = vmul.f32 %v3724, %v3975
    %v3991 = vmul.f32 %v3729, %v3975
    %v3992 = vlaneseq
    %v3993 = vshrl.u32 %v3992, 7
    %v3994 = vsub.s32 4, %v3993
    %v3995 = vrot.slane %v3971, %v3994
    %v3996 = vadd.f32 %v3976, %v3995
    %v3997 = vadd.f32 %v3977, %v3995
    %v3998 = vadd.f32 %v3978, %v3995
    %v3999 = vadd.f32 %v3979, %v3995
    %v4000 = vadd.f32 %v3980, %v3995
    %v4001 = vadd.f32 %v3981, %v3995
    %v4002 = vadd.f32 %v3982, %v3995
    %v4003 = vadd.f32 %v3983, %v3995
    %v4004 = vadd.f32 %v3984, %v3995
    %v4005 = vadd.f32 %v3985, %v3995
    %v4006 = vadd.f32 %v3986, %v3995
    %v4007 = vadd.f32 %v3987, %v3995
    %v4008 = vadd.f32 %v3988, %v3995
    %v4009 = vadd.f32 %v3989, %v3995
    %v4010 = vadd.f32 %v3990, %v3995
    %v4011 = vadd.f32 %v3991, %v3995
    %v4012 = vadd.f32 %v3856, %v3996
    %v4013 = vadd.f32 %v3857, %v3997
    %v4014 = vadd.f32 %v3858, %v3998
    %v4015 = vadd.f32 %v3859, %v3999
    %v4016 = vadd.f32 %v3860, %v4000
    %v4017 = vadd.f32 %v3861, %v4001
    %v4018 = vadd.f32 %v3862, %v4002
    %v4019 = vadd.f32 %v3863, %v4003
    %v4020 = vadd.f32 %v3864, %v4004
    %v4021 = vadd.f32 %v3865, %v4005
    %v4022 = vadd.f32 %v3866, %v4006
    %v4023 = vadd.f32 %v3867, %v4007
    %v4024 = vadd.f32 %v3868, %v4008
    %v4025 = vadd.f32 %v3869, %v4009
    %v4026 = vadd.f32 %v3870, %v4010
    %v4027 = vadd.f32 %v3871, %v4011
    %v4028 = vsel %vm372, %v4012, 0.0
    %v4029 = vsel %vm372, %v4013, 0.0
    %v4030 = vadd.f32 %v4028, %v4029
    %v4031 = vsel %vm372, %v4014, 0.0
    %v4032 = vadd.f32 %v4030, %v4031
    %v4033 = vsel %vm372, %v4015, 0.0
    %v4034 = vadd.f32 %v4032, %v4033
    %v4035 = vsel %vm372, %v4016, 0.0
    %v4036 = vadd.f32 %v4034, %v4035
    %v4037 = vsel %vm372, %v4017, 0.0
    %v4038 = vadd.f32 %v4036, %v4037
    %v4039 = vsel %vm372, %v4018, 0.0
    %v4040 = vadd.f32 %v4038, %v4039
    %v4041 = vsel %vm372, %v4019, 0.0
    %v4042 = vadd.f32 %v4040, %v4041
    %v4043 = vsel %vm372, %v4020, 0.0
    %v4044 = vadd.f32 %v4042, %v4043
    %v4045 = vsel %vm372, %v4021, 0.0
    %v4046 = vadd.f32 %v4044, %v4045
    %v4047 = vsel %vm372, %v4022, 0.0
    %v4048 = vadd.f32 %v4046, %v4047
    %v4049 = vsel %vm372, %v4023, 0.0
    %v4050 = vadd.f32 %v4048, %v4049
    %v4051 = vsel %vm372, %v4024, 0.0
    %v4052 = vadd.f32 %v4050, %v4051
    %v4053 = vsel %vm372, %v4025, 0.0
    %v4054 = vadd.f32 %v4052, %v4053
    %v4055 = vsel %vm372, %v4026, 0.0
    %v4056 = vadd.f32 %v4054, %v4055
    %v4057 = vsel %vm372, %v4027, 0.0
    %v4058 = vadd.f32 %v4056, %v4057
    %v4059 = vrot.slane %v4058, 4
    %v4060 = vadd.f32 %v4058, %v4059
    %v4061 = vrot.slane %v4060, 2
    %v4062 = vadd.f32 %v4060, %v4061
    %v4063 = vrot.slane %v4062, 1
    %v4064 = vadd.f32 %v4062, %v4063
    %v4065 = vmul.f32 %v4012, %v4012
    %v4066 = vmul.f32 %v4013, %v4013
    %v4067 = vmul.f32 %v4014, %v4014
    %v4068 = vmul.f32 %v4015, %v4015
    %v4069 = vmul.f32 %v4016, %v4016
    %v4070 = vmul.f32 %v4017, %v4017
    %v4071 = vmul.f32 %v4018, %v4018
    %v4072 = vmul.f32 %v4019, %v4019
    %v4073 = vmul.f32 %v4020, %v4020
    %v4074 = vmul.f32 %v4021, %v4021
    %v4075 = vmul.f32 %v4022, %v4022
    %v4076 = vmul.f32 %v4023, %v4023
    %v4077 = vmul.f32 %v4024, %v4024
    %v4078 = vmul.f32 %v4025, %v4025
    %v4079 = vmul.f32 %v4026, %v4026
    %v4080 = vmul.f32 %v4027, %v4027
    %v4081 = vsel %vm372, %v4065, 0.0
    %v4082 = vsel %vm372, %v4066, 0.0
    %v4083 = vadd.f32 %v4081, %v4082
    %v4084 = vsel %vm372, %v4067, 0.0
    %v4085 = vadd.f32 %v4083, %v4084
    %v4086 = vsel %vm372, %v4068, 0.0
    %v4087 = vadd.f32 %v4085, %v4086
    %v4088 = vsel %vm372, %v4069, 0.0
    %v4089 = vadd.f32 %v4087, %v4088
    %v4090 = vsel %vm372, %v4070, 0.0
    %v4091 = vadd.f32 %v4089, %v4090
    %v4092 = vsel %vm372, %v4071, 0.0
    %v4093 = vadd.f32 %v4091, %v4092
    %v4094 = vsel %vm372, %v4072, 0.0
    %v4095 = vadd.f32 %v4093, %v4094
    %v4096 = vsel %vm372, %v4073, 0.0
    %v4097 = vadd.f32 %v4095, %v4096
    %v4098 = vsel %vm372, %v4074, 0.0
    %v4099 = vadd.f32 %v4097, %v4098
    %v4100 = vsel %vm372, %v4075, 0.0
    %v4101 = vadd.f32 %v4099, %v4100
    %v4102 = vsel %vm372, %v4076, 0.0
    %v4103 = vadd.f32 %v4101, %v4102
    %v4104 = vsel %vm372, %v4077, 0.0
    %v4105 = vadd.f32 %v4103, %v4104
    %v4106 = vsel %vm372, %v4078, 0.0
    %v4107 = vadd.f32 %v4105, %v4106
    %v4108 = vsel %vm372, %v4079, 0.0
    %v4109 = vadd.f32 %v4107, %v4108
    %v4110 = vsel %vm372, %v4080, 0.0
    %v4111 = vadd.f32 %v4109, %v4110
    %v4112 = vrot.slane %v4111, 4
    %v4113 = vadd.f32 %v4111, %v4112
    %v4114 = vrot.slane %v4113, 2
    %v4115 = vadd.f32 %v4113, %v4114
    %v4116 = vrot.slane %v4115, 1
    %v4117 = vadd.f32 %v4115, %v4116
    %v4118 = vmul.f32 %v4064, 0.0078125
    %v4119 = vmul.f32 %v4117, 0.0078125
    %v4120 = vmul.f32 %v4118, %v4118
    %v4121 = vsub.f32 %v4119, %v4120
    %v4122 = vmax.f32 %v4121, 0.0
    %v4123 = vadd.f32 %v4122, 1e-05
    %v4124 = vrsqrt.pop %v4123
    %v4125 = vmul.f32 %v135, %v4124
    %v4126 = vmul.f32 %v4118, %v4125
    %v4128 = vrot.slane %v4126, 7
    %v4130 = vsub.f32 %v135, %v4128
    %v4131 = vlaneseq
    %v4132 = vshrl.u32 %v4131, 7
    %v4133 = vsub.s32 5, %v4132
    %v4134 = vrot.slane %v4125, %v4133
    %v4135 = vmul.f32 %v4012, %v4134
    %v4136 = vmul.f32 %v4013, %v4134
    %v4137 = vmul.f32 %v4014, %v4134
    %v4138 = vmul.f32 %v4015, %v4134
    %v4139 = vmul.f32 %v4016, %v4134
    %v4140 = vmul.f32 %v4017, %v4134
    %v4141 = vmul.f32 %v4018, %v4134
    %v4142 = vmul.f32 %v4019, %v4134
    %v4143 = vmul.f32 %v4020, %v4134
    %v4144 = vmul.f32 %v4021, %v4134
    %v4145 = vmul.f32 %v4022, %v4134
    %v4146 = vmul.f32 %v4023, %v4134
    %v4147 = vmul.f32 %v4024, %v4134
    %v4148 = vmul.f32 %v4025, %v4134
    %v4149 = vmul.f32 %v4026, %v4134
    %v4150 = vmul.f32 %v4027, %v4134
    %v4151 = vlaneseq
    %v4152 = vshrl.u32 %v4151, 7
    %v4153 = vsub.s32 6, %v4152
    %v4154 = vrot.slane %v4130, %v4153
    %v4155 = vadd.f32 %v4135, %v4154
    %v4156 = vadd.f32 %v4136, %v4154
    %v4157 = vadd.f32 %v4137, %v4154
    %v4158 = vadd.f32 %v4138, %v4154
    %v4159 = vadd.f32 %v4139, %v4154
    %v4160 = vadd.f32 %v4140, %v4154
    %v4161 = vadd.f32 %v4141, %v4154
    %v4162 = vadd.f32 %v4142, %v4154
    %v4163 = vadd.f32 %v4143, %v4154
    %v4164 = vadd.f32 %v4144, %v4154
    %v4165 = vadd.f32 %v4145, %v4154
    %v4166 = vadd.f32 %v4146, %v4154
    %v4167 = vadd.f32 %v4147, %v4154
    %v4168 = vadd.f32 %v4148, %v4154
    %v4169 = vadd.f32 %v4149, %v4154
    %v4170 = vadd.f32 %v4150, %v4154
    %v4171 = vld [vmem:[%s9] sm:$0xff]
    %v4172 = vld [vmem:[%s7] sm:$0xf]
    %v4173 = vld [vmem:[%s7 + $0x4] sm:$0xf]
    %v4174 = vld [vmem:[%s7 + $0x8] sm:$0xf]
    %v4175 = vld [vmem:[%s7 + $0xc] sm:$0xf]
    %v4176 = vld [vmem:[%s7 + $0x10] sm:$0xf]
    %v4177 = vld [vmem:[%s7 + $0x14] sm:$0xf]
    %v4178 = vld [vmem:[%s7 + $0x18] sm:$0xf]
    %v4179 = vld [vmem:[%s7 + $0x1c] sm:$0xf]
    %v4180 = vld [vmem:[%s7 + $0x20] sm:$0xf]
    %v4181 = vld [vmem:[%s7 + $0x24] sm:$0xf]
    %v4182 = vld [vmem:[%s7 + $0x28] sm:$0xf]
    %v4183 = vld [vmem:[%s7 + $0x2c] sm:$0xf]
    %v4184 = vld [vmem:[%s7 + $0x30] sm:$0xf]
    %v4185 = vld [vmem:[%s7 + $0x34] sm:$0xf]
    %v4186 = vld [vmem:[%s7 + $0x38] sm:$0xf]
    %v4187 = vld [vmem:[%s7 + $0x3c] sm:$0xf]
    %v4188 = vld [vmem:[%s7 + $0x40] sm:$0xf]
    %v4189 = vld [vmem:[%s7 + $0x44] sm:$0xf]
    %v4190 = vld [vmem:[%s7 + $0x48] sm:$0xf]
    %v4191 = vld [vmem:[%s7 + $0x4c] sm:$0xf]
    %v4192 = vld [vmem:[%s7 + $0x50] sm:$0xf]
    %v4193 = vld [vmem:[%s7 + $0x54] sm:$0xf]
    %v4194 = vld [vmem:[%s7 + $0x58] sm:$0xf]
    %v4195 = vld [vmem:[%s7 + $0x5c] sm:$0xf]
    %v4196 = vld [vmem:[%s7 + $0x60] sm:$0xf]
    %v4197 = vld [vmem:[%s7 + $0x64] sm:$0xf]
    %v4198 = vld [vmem:[%s7 + $0x68] sm:$0xf]
    %v4199 = vld [vmem:[%s7 + $0x6c] sm:$0xf]
    %v4200 = vld [vmem:[%s7 + $0x70] sm:$0xf]
    %v4201 = vld [vmem:[%s7 + $0x74] sm:$0xf]
    %v4202 = vld [vmem:[%s7 + $0x78] sm:$0xf]
    %v4203 = vld [vmem:[%s7 + $0x7c] sm:$0xf]
    %v4204 = vld [vmem:[%s7 + $0x80] sm:$0xf]
    %v4205 = vld [vmem:[%s7 + $0x84] sm:$0xf]
    %v4206 = vld [vmem:[%s7 + $0x88] sm:$0xf]
    %v4207 = vld [vmem:[%s7 + $0x8c] sm:$0xf]
    %v4208 = vunpack.c.l.bf16 %v4172
    %v4209 = vunpack.c.l.bf16 %v4173
    %v4210 = vunpack.c.l.bf16 %v4174
    %v4211 = vunpack.c.l.bf16 %v4175
    %v4212 = vunpack.c.l.bf16 %v4176
    %v4213 = vunpack.c.l.bf16 %v4177
    %v4214 = vunpack.c.l.bf16 %v4178
    %v4215 = vunpack.c.l.bf16 %v4179
    %v4216 = vunpack.c.l.bf16 %v4180
    %v4217 = vunpack.c.l.bf16 %v4181
    %v4218 = vunpack.c.l.bf16 %v4182
    %v4219 = vunpack.c.l.bf16 %v4183
    %v4220 = vunpack.c.l.bf16 %v4184
    %v4221 = vunpack.c.l.bf16 %v4185
    %v4222 = vunpack.c.l.bf16 %v4186
    %v4223 = vunpack.c.l.bf16 %v4187
    %v4224 = vunpack.c.l.bf16 %v4188
    %v4225 = vunpack.c.l.bf16 %v4189
    %v4226 = vunpack.c.l.bf16 %v4190
    %v4227 = vunpack.c.l.bf16 %v4191
    %v4228 = vunpack.c.l.bf16 %v4192
    %v4229 = vunpack.c.l.bf16 %v4193
    %v4230 = vunpack.c.l.bf16 %v4194
    %v4231 = vunpack.c.l.bf16 %v4195
    %v4232 = vunpack.c.l.bf16 %v4196
    %v4233 = vunpack.c.l.bf16 %v4197
    %v4234 = vunpack.c.l.bf16 %v4198
    %v4235 = vunpack.c.l.bf16 %v4199
    %v4236 = vunpack.c.l.bf16 %v4200
    %v4237 = vunpack.c.l.bf16 %v4201
    %v4238 = vunpack.c.l.bf16 %v4202
    %v4239 = vunpack.c.l.bf16 %v4203
    %v4240 = vunpack.c.l.bf16 %v4204
    %v4241 = vunpack.c.l.bf16 %v4205
    %v4242 = vunpack.c.l.bf16 %v4206
    %v4243 = vunpack.c.l.bf16 %v4207
    %4244 = vmatprep.subr.mxu0 0.0
    %4245 = vmatpush1.msra.mxu0 %v4155
    %4246 = vmatprep.subr.mxu0 0.0
    %4247 = vmatpush1.msra.mxu0 %v4156
    %4248 = vmatprep.subr.mxu0 0.0
    %4249 = vmatpush1.msra.mxu0 %v4157
    %4250 = vmatprep.subr.mxu0 0.0
    %4251 = vmatpush1.msra.mxu0 %v4158
    %4252 = vmatprep.subr.mxu0 0.0
    %4253 = vmatpush1.msra.mxu0 %v4159
    %4254 = vmatprep.subr.mxu0 0.0
    %4255 = vmatpush1.msra.mxu0 %v4160
    %4256 = vmatprep.subr.mxu0 0.0
    %4257 = vmatpush1.msra.mxu0 %v4161
    %4258 = vmatprep.subr.mxu0 0.0
    %4259 = vmatpush1.msra.mxu0 %v4162
    %4260 = vmatprep.subr.mxu0 0.0
    %4261 = vmatpush1.msra.mxu0 %v4163
    %4262 = vmatprep.subr.mxu0 0.0
    %4263 = vmatpush1.msra.mxu0 %v4164
    %4264 = vmatprep.subr.mxu0 0.0
    %4265 = vmatpush1.msra.mxu0 %v4165
    %4266 = vmatprep.subr.mxu0 0.0
    %4267 = vmatpush1.msra.mxu0 %v4166
    %4268 = vmatprep.subr.mxu0 0.0
    %4269 = vmatpush1.msra.mxu0 %v4167
    %4270 = vmatprep.subr.mxu0 0.0
    %4271 = vmatpush1.msra.mxu0 %v4168
    %4272 = vmatprep.subr.mxu0 0.0
    %4273 = vmatpush1.msra.mxu0 %v4169
    %4274 = vmatprep.subr.mxu0 0.0
    %4275 = vmatpush1.msra.mxu0 %v4170
    %4276 = vmatprep.subr.mxu0 0.0
    %4277 = vmatpush1.msra.mxu0 0.0
    %4278 = vmatprep.subr.mxu0 0.0
    %4279 = vmatpush1.msra.mxu0 0.0
    %4280 = vmatprep.subr.mxu0 0.0
    %4281 = vmatpush1.msra.mxu0 0.0
    %4282 = vmatprep.subr.mxu0 0.0
    %4283 = vmatpush1.msra.mxu0 0.0
    %4284 = vmatprep.subr.mxu0 0.0
    %4285 = vmatpush1.msra.mxu0 0.0
    %4286 = vmatprep.subr.mxu0 0.0
    %4287 = vmatpush1.msra.mxu0 0.0
    %4288 = vmatprep.subr.mxu0 0.0
    %4289 = vmatpush1.msra.mxu0 0.0
    %4290 = vmatprep.subr.mxu0 0.0
    %4291 = vmatpush1.msra.mxu0 0.0
    %4292 = vmatprep.subr.mxu0 0.0
    %4293 = vmatpush1.msra.mxu0 0.0
    %4294 = vmatprep.subr.mxu0 0.0
    %4295 = vmatpush1.msra.mxu0 0.0
    %4296 = vmatprep.subr.mxu0 0.0
    %4297 = vmatpush1.msra.mxu0 0.0
    %4298 = vmatprep.subr.mxu0 0.0
    %4299 = vmatpush1.msra.mxu0 0.0
    %4300 = vmatprep.subr.mxu0 0.0
    %4301 = vmatpush1.msra.mxu0 0.0
    %4302 = vmatprep.subr.mxu0 0.0
    %4303 = vmatpush1.msra.mxu0 0.0
    %4304 = vmatprep.subr.mxu0 0.0
    %4305 = vmatpush1.msra.mxu0 0.0
    %4306 = vmatprep.subr.mxu0 0.0
    %4307 = vmatpush1.msra.mxu0 0.0
    %4308 = vmatprep.mubr.f32.mxu0 0.0
    %4309 = vmatmul.mubr.f32.gmra.mrb[0].mxu0 %v4208
    %v4310 = vpop.f32.mrb[0].mxu0
    %v4311 = vadd.f32 0.0, %v4310
    %v4312 = vpop.f32.mrb[0].mxu0
    %4313 = vmatprep.mubr.f32.mxu0 0.0
    %4314 = vmatmul.mubr.f32.gmra.mrb[0].mxu0 %v4209
    %v4315 = vpop.f32.mrb[0].mxu0
    %v4316 = vadd.f32 0.0, %v4315
    %v4317 = vpop.f32.mrb[0].mxu0
    %4318 = vmatprep.mubr.f32.mxu0 0.0
    %4319 = vmatmul.mubr.f32.gmra.mrb[0].mxu0 %v4210
    %v4320 = vpop.f32.mrb[0].mxu0
    %v4321 = vadd.f32 0.0, %v4320
    %v4322 = vpop.f32.mrb[0].mxu0
    %4323 = vmatprep.mubr.f32.mxu0 0.0
    %4324 = vmatmul.mubr.f32.gmra.mrb[0].mxu0 %v4211
    %v4325 = vpop.f32.mrb[0].mxu0
    %v4326 = vadd.f32 0.0, %v4325
    %v4327 = vpop.f32.mrb[0].mxu0
    %4328 = vmatprep.mubr.f32.mxu0 0.0
    %4329 = vmatmul.mubr.f32.gmra.mrb[0].mxu0 %v4212
    %v4330 = vpop.f32.mrb[0].mxu0
    %v4331 = vadd.f32 0.0, %v4330
    %v4332 = vpop.f32.mrb[0].mxu0
    %4333 = vmatprep.mubr.f32.mxu0 0.0
    %4334 = vmatmul.mubr.f32.gmra.mrb[0].mxu0 %v4213
    %v4335 = vpop.f32.mrb[0].mxu0
    %v4336 = vadd.f32 0.0, %v4335
    %v4337 = vpop.f32.mrb[0].mxu0
    %4338 = vmatprep.mubr.f32.mxu0 0.0
    %4339 = vmatmul.mubr.f32.gmra.mrb[0].mxu0 %v4214
    %v4340 = vpop.f32.mrb[0].mxu0
    %v4341 = vadd.f32 0.0, %v4340
    %v4342 = vpop.f32.mrb[0].mxu0
    %4343 = vmatprep.mubr.f32.mxu0 0.0
    %4344 = vmatmul.mubr.f32.gmra.mrb[0].mxu0 %v4215
    %v4345 = vpop.f32.mrb[0].mxu0
    %v4346 = vadd.f32 0.0, %v4345
    %v4347 = vpop.f32.mrb[0].mxu0
    %4348 = vmatprep.mubr.f32.mxu0 0.0
    %4349 = vmatmul.mubr.f32.gmra.mrb[0].mxu0 %v4216
    %v4350 = vpop.f32.mrb[0].mxu0
    %v4351 = vadd.f32 0.0, %v4350
    %v4352 = vpop.f32.mrb[0].mxu0
    %4353 = vmatprep.mubr.f32.mxu0 0.0
    %4354 = vmatmul.mubr.f32.gmra.mrb[0].mxu0 %v4217
    %v4355 = vpop.f32.mrb[0].mxu0
    %v4356 = vadd.f32 0.0, %v4355
    %v4357 = vpop.f32.mrb[0].mxu0
    %4358 = vmatprep.mubr.f32.mxu0 0.0
    %4359 = vmatmul.mubr.f32.gmra.mrb[0].mxu0 %v4218
    %v4360 = vpop.f32.mrb[0].mxu0
    %v4361 = vadd.f32 0.0, %v4360
    %v4362 = vpop.f32.mrb[0].mxu0
    %4363 = vmatprep.mubr.f32.mxu0 0.0
    %4364 = vmatmul.mubr.f32.gmra.mrb[0].mxu0 %v4219
    %v4365 = vpop.f32.mrb[0].mxu0
    %v4366 = vadd.f32 0.0, %v4365
    %v4367 = vpop.f32.mrb[0].mxu0
    %4368 = vmatprep.mubr.f32.mxu0 0.0
    %4369 = vmatmul.mubr.f32.gmra.mrb[0].mxu0 %v4220
    %v4370 = vpop.f32.mrb[0].mxu0
    %v4371 = vadd.f32 0.0, %v4370
    %v4372 = vpop.f32.mrb[0].mxu0
    %4373 = vmatprep.mubr.f32.mxu0 0.0
    %4374 = vmatmul.mubr.f32.gmra.mrb[0].mxu0 %v4221
    %v4375 = vpop.f32.mrb[0].mxu0
    %v4376 = vadd.f32 0.0, %v4375
    %v4377 = vpop.f32.mrb[0].mxu0
    %4378 = vmatprep.mubr.f32.mxu0 0.0
    %4379 = vmatmul.mubr.f32.gmra.mrb[0].mxu0 %v4222
    %v4380 = vpop.f32.mrb[0].mxu0
    %v4381 = vadd.f32 0.0, %v4380
    %v4382 = vpop.f32.mrb[0].mxu0
    %4383 = vmatprep.mubr.f32.mxu0 0.0
    %4384 = vmatmul.mubr.f32.gmra.mrb[0].mxu0 %v4223
    %v4385 = vpop.f32.mrb[0].mxu0
    %v4386 = vadd.f32 0.0, %v4385
    %v4387 = vpop.f32.mrb[0].mxu0
    %4388 = vmatprep.mubr.f32.mxu0 0.0
    %4389 = vmatmul.mubr.f32.gmra.mrb[0].mxu0 %v4224
    %v4390 = vpop.f32.mrb[0].mxu0
    %v4391 = vadd.f32 0.0, %v4390
    %v4392 = vpop.f32.mrb[0].mxu0
    %4393 = vmatprep.mubr.f32.mxu0 0.0
    %4394 = vmatmul.mubr.f32.gmra.mrb[0].mxu0 %v4225
    %v4395 = vpop.f32.mrb[0].mxu0
    %v4396 = vadd.f32 0.0, %v4395
    %v4397 = vpop.f32.mrb[0].mxu0
    %4398 = vmatprep.mubr.f32.mxu0 0.0
    %4399 = vmatmul.mubr.f32.gmra.mrb[0].mxu0 %v4226
    %v4400 = vpop.f32.mrb[0].mxu0
    %v4401 = vadd.f32 0.0, %v4400
    %v4402 = vpop.f32.mrb[0].mxu0
    %4403 = vmatprep.mubr.f32.mxu0 0.0
    %4404 = vmatmul.mubr.f32.gmra.mrb[0].mxu0 %v4227
    %v4405 = vpop.f32.mrb[0].mxu0
    %v4406 = vadd.f32 0.0, %v4405
    %v4407 = vpop.f32.mrb[0].mxu0
    %4408 = vmatprep.mubr.f32.mxu0 0.0
    %4409 = vmatmul.mubr.f32.gmra.mrb[0].mxu0 %v4228
    %v4410 = vpop.f32.mrb[0].mxu0
    %v4411 = vadd.f32 0.0, %v4410
    %v4412 = vpop.f32.mrb[0].mxu0
    %4413 = vmatprep.mubr.f32.mxu0 0.0
    %4414 = vmatmul.mubr.f32.gmra.mrb[0].mxu0 %v4229
    %v4415 = vpop.f32.mrb[0].mxu0
    %v4416 = vadd.f32 0.0, %v4415
    %v4417 = vpop.f32.mrb[0].mxu0
    %4418 = vmatprep.mubr.f32.mxu0 0.0
    %4419 = vmatmul.mubr.f32.gmra.mrb[0].mxu0 %v4230
    %v4420 = vpop.f32.mrb[0].mxu0
    %v4421 = vadd.f32 0.0, %v4420
    %v4422 = vpop.f32.mrb[0].mxu0
    %4423 = vmatprep.mubr.f32.mxu0 0.0
    %4424 = vmatmul.mubr.f32.gmra.mrb[0].mxu0 %v4231
    %v4425 = vpop.f32.mrb[0].mxu0
    %v4426 = vadd.f32 0.0, %v4425
    %v4427 = vpop.f32.mrb[0].mxu0
    %4428 = vmatprep.mubr.f32.mxu0 0.0
    %4429 = vmatmul.mubr.f32.gmra.mrb[0].mxu0 %v4232
    %v4430 = vpop.f32.mrb[0].mxu0
    %v4431 = vadd.f32 0.0, %v4430
    %v4432 = vpop.f32.mrb[0].mxu0
    %4433 = vmatprep.mubr.f32.mxu0 0.0
    %4434 = vmatmul.mubr.f32.gmra.mrb[0].mxu0 %v4233
    %v4435 = vpop.f32.mrb[0].mxu0
    %v4436 = vadd.f32 0.0, %v4435
    %v4437 = vpop.f32.mrb[0].mxu0
    %4438 = vmatprep.mubr.f32.mxu0 0.0
    %4439 = vmatmul.mubr.f32.gmra.mrb[0].mxu0 %v4234
    %v4440 = vpop.f32.mrb[0].mxu0
    %v4441 = vadd.f32 0.0, %v4440
    %v4442 = vpop.f32.mrb[0].mxu0
    %4443 = vmatprep.mubr.f32.mxu0 0.0
    %4444 = vmatmul.mubr.f32.gmra.mrb[0].mxu0 %v4235
    %v4445 = vpop.f32.mrb[0].mxu0
    %v4446 = vadd.f32 0.0, %v4445
    %v4447 = vpop.f32.mrb[0].mxu0
    %4448 = vmatprep.mubr.f32.mxu0 0.0
    %4449 = vmatmul.mubr.f32.gmra.mrb[0].mxu0 %v4236
    %v4450 = vpop.f32.mrb[0].mxu0
    %v4451 = vadd.f32 0.0, %v4450
    %v4452 = vpop.f32.mrb[0].mxu0
    %4453 = vmatprep.mubr.f32.mxu0 0.0
    %4454 = vmatmul.mubr.f32.gmra.mrb[0].mxu0 %v4237
    %v4455 = vpop.f32.mrb[0].mxu0
    %v4456 = vadd.f32 0.0, %v4455
    %v4457 = vpop.f32.mrb[0].mxu0
    %4458 = vmatprep.mubr.f32.mxu0 0.0
    %4459 = vmatmul.mubr.f32.gmra.mrb[0].mxu0 %v4238
    %v4460 = vpop.f32.mrb[0].mxu0
    %v4461 = vadd.f32 0.0, %v4460
    %v4462 = vpop.f32.mrb[0].mxu0
    %4463 = vmatprep.mubr.f32.mxu0 0.0
    %4464 = vmatmul.mubr.f32.gmra.mrb[0].mxu0 %v4239
    %v4465 = vpop.f32.mrb[0].mxu0
    %v4466 = vadd.f32 0.0, %v4465
    %v4467 = vpop.f32.mrb[0].mxu0
    %4468 = vmatprep.mubr.f32.mxu0 0.0
    %4469 = vmatmul.mubr.f32.gmra.mrb[0].mxu0 %v4240
    %v4470 = vpop.f32.mrb[0].mxu0
    %v4471 = vadd.f32 0.0, %v4470
    %v4472 = vpop.f32.mrb[0].mxu0
    %4473 = vmatprep.mubr.f32.mxu0 0.0
    %4474 = vmatmul.mubr.f32.gmra.mrb[0].mxu0 %v4241
    %v4475 = vpop.f32.mrb[0].mxu0
    %v4476 = vadd.f32 0.0, %v4475
    %v4477 = vpop.f32.mrb[0].mxu0
    %4478 = vmatprep.mubr.f32.mxu0 0.0
    %4479 = vmatmul.mubr.f32.gmra.mrb[0].mxu0 %v4242
    %v4480 = vpop.f32.mrb[0].mxu0
    %v4481 = vadd.f32 0.0, %v4480
    %v4482 = vpop.f32.mrb[0].mxu0
    %4483 = vmatprep.mubr.f32.mxu0 0.0
    %4484 = vmatmul.mubr.f32.gmra.mrb[0].mxu0 %v4243
    %v4485 = vpop.f32.mrb[0].mxu0
    %v4486 = vadd.f32 0.0, %v4485
    %v4487 = vpop.f32.mrb[0].mxu0
    %4488 = vdwg.mxu0
    %v4489 = vld [vmem:[#allocation8] sm:$0xff]
    %v4490 = vld [vmem:[#allocation8 + $0x8] sm:$0xff]
    %v4491 = vld [vmem:[#allocation8 + $0x10] sm:$0xff]
    %v4492 = vld [vmem:[#allocation8 + $0x18] sm:$0xff]
    %v4493 = vld [vmem:[#allocation8 + $0x20] sm:$0xff]
    %v4494 = vld [vmem:[#allocation8 + $0x28] sm:$0xff]
    %v4495 = vld [vmem:[#allocation8 + $0x30] sm:$0xff]
    %v4496 = vld [vmem:[#allocation8 + $0x38] sm:$0xff]
    %s4497 = scalar_lea.vmem [#allocation8], 64
    %v4498 = vld [vmem:[%s4497] sm:$0xff]
    %v4499 = vld [vmem:[%s4497 + $0x8] sm:$0xff]
    %v4500 = vld [vmem:[%s4497 + $0x10] sm:$0xff]
    %v4501 = vld [vmem:[%s4497 + $0x18] sm:$0xff]
    %v4502 = vld [vmem:[%s4497 + $0x20] sm:$0xff]
    %v4503 = vld [vmem:[%s4497 + $0x28] sm:$0xff]
    %v4504 = vld [vmem:[%s4497 + $0x30] sm:$0xff]
    %v4505 = vld [vmem:[%s4497 + $0x38] sm:$0xff]
    %v4507 = vsel %vm372, %v4331, 0
    %v4510 = vsel %vm372, %v4336, 0
    %v4513 = vsel %vm372, %v4341, 0
    %v4516 = vsel %vm372, %v4346, 0
    %4518 = vmatprep.subr.mxu0 0.0
    %4519 = vmatpush1.msra.mxu0 %v4498
    %4520 = vmatprep.subr.mxu0 0.0
    %4521 = vmatpush1.msra.mxu0 %v4499
    %4522 = vmatprep.subr.mxu0 0.0
    %4523 = vmatpush1.msra.mxu0 %v4500
    %4524 = vmatprep.subr.mxu0 0.0
    %4525 = vmatpush1.msra.mxu0 %v4501
    %4526 = vmatprep.subr.mxu0 0.0
    %4527 = vmatpush1.msra.mxu0 %v4502
    %4528 = vmatprep.subr.mxu0 0.0
    %4529 = vmatpush1.msra.mxu0 %v4503
    %4530 = vmatprep.subr.mxu0 0.0
    %4531 = vmatpush1.msra.mxu0 %v4504
    %4532 = vmatprep.subr.mxu0 0.0
    %4533 = vmatpush1.msra.mxu0 %v4505
    %4534 = vmatprep.subr.mxu0 0.0
    %4535 = vmatpush1.msra.mxu0 0.0
    %4536 = vmatprep.subr.mxu0 0.0
    %4537 = vmatpush1.msra.mxu0 0.0
    %4538 = vmatprep.subr.mxu0 0.0
    %4539 = vmatpush1.msra.mxu0 0.0
    %4540 = vmatprep.subr.mxu0 0.0
    %4541 = vmatpush1.msra.mxu0 0.0
    %4542 = vmatprep.subr.mxu0 0.0
    %4543 = vmatpush1.msra.mxu0 0.0
    %4544 = vmatprep.subr.mxu0 0.0
    %4545 = vmatpush1.msra.mxu0 0.0
    %4546 = vmatprep.subr.mxu0 0.0
    %4547 = vmatpush1.msra.mxu0 0.0
    %4548 = vmatprep.subr.mxu0 0.0
    %4549 = vmatpush1.msra.mxu0 0.0
    %4550 = vmatprep.subr.mxu0 0.0
    %4551 = vmatpush1.msra.mxu0 0.0
    %4552 = vmatprep.subr.mxu0 0.0
    %4553 = vmatpush1.msra.mxu0 0.0
    %4554 = vmatprep.subr.mxu0 0.0
    %4555 = vmatpush1.msra.mxu0 0.0
    %4556 = vmatprep.subr.mxu0 0.0
    %4557 = vmatpush1.msra.mxu0 0.0
    %4558 = vmatprep.subr.mxu0 0.0
    %4559 = vmatpush1.msra.mxu0 0.0
    %4560 = vmatprep.subr.mxu0 0.0
    %4561 = vmatpush1.msra.mxu0 0.0
    %4562 = vmatprep.subr.mxu0 0.0
    %4563 = vmatpush1.msra.mxu0 0.0
    %4564 = vmatprep.subr.mxu0 0.0
    %4565 = vmatpush1.msra.mxu0 0.0
    %4566 = vmatprep.subr.mxu0 0.0
    %4567 = vmatpush1.msra.mxu0 0.0
    %4568 = vmatprep.subr.mxu0 0.0
    %4569 = vmatpush1.msra.mxu0 0.0
    %4570 = vmatprep.subr.mxu0 0.0
    %4571 = vmatpush1.msra.mxu0 0.0
    %4572 = vmatprep.subr.mxu0 0.0
    %4573 = vmatpush1.msra.mxu0 0.0
    %4574 = vmatprep.subr.mxu0 0.0
    %4575 = vmatpush1.msra.mxu0 0.0
    %4576 = vmatprep.subr.mxu0 0.0
    %4577 = vmatpush1.msra.mxu0 0.0
    %4578 = vmatprep.subr.mxu0 0.0
    %4579 = vmatpush1.msra.mxu0 0.0
    %4580 = vmatprep.subr.mxu0 0.0
    %4581 = vmatpush1.msra.mxu0 0.0
    %4582 = vmatprep.mubr.f32.mxu0 0.0
    %4583 = vmatmul.mubr.f32.gmra.mrb[0].mxu0 %v4507
    %v4584 = vpop.f32.mrb[0].mxu0
    %v4585 = vadd.f32 0.0, %v4584
    %v4586 = vpop.f32.mrb[0].mxu0
    %4587 = vmatprep.mubr.f32.mxu0 0.0
    %4588 = vmatmul.mubr.f32.gmra.mrb[0].mxu0 %v4510
    %v4589 = vpop.f32.mrb[0].mxu0
    %v4590 = vadd.f32 0.0, %v4589
    %v4591 = vpop.f32.mrb[0].mxu0
    %4592 = vmatprep.mubr.f32.mxu0 0.0
    %4593 = vmatmul.mubr.f32.gmra.mrb[0].mxu0 %v4513
    %v4594 = vpop.f32.mrb[0].mxu0
    %v4595 = vadd.f32 0.0, %v4594
    %v4596 = vpop.f32.mrb[0].mxu0
    %4597 = vmatprep.mubr.f32.mxu0 0.0
    %4598 = vmatmul.mubr.f32.gmra.mrb[0].mxu0 %v4516
    %v4599 = vpop.f32.mrb[0].mxu0
    %v4600 = vadd.f32 0.0, %v4599
    %v4601 = vpop.f32.mrb[0].mxu0
    %4602 = vdwg.mxu0
    %v4604 = vsel %vm372, %v4311, 0
    %v4607 = vsel %vm372, %v4316, 0
    %v4610 = vsel %vm372, %v4321, 0
    %v4613 = vsel %vm372, %v4326, 0
    %4615 = vmatprep.subr.mxu0 0.0
    %4616 = vmatpush1.msra.mxu0 %v4489
    %4617 = vmatprep.subr.mxu0 0.0
    %4618 = vmatpush1.msra.mxu0 %v4490
    %4619 = vmatprep.subr.mxu0 0.0
    %4620 = vmatpush1.msra.mxu0 %v4491
    %4621 = vmatprep.subr.mxu0 0.0
    %4622 = vmatpush1.msra.mxu0 %v4492
    %4623 = vmatprep.subr.mxu0 0.0
    %4624 = vmatpush1.msra.mxu0 %v4493
    %4625 = vmatprep.subr.mxu0 0.0
    %4626 = vmatpush1.msra.mxu0 %v4494
    %4627 = vmatprep.subr.mxu0 0.0
    %4628 = vmatpush1.msra.mxu0 %v4495
    %4629 = vmatprep.subr.mxu0 0.0
    %4630 = vmatpush1.msra.mxu0 %v4496
    %4631 = vmatprep.subr.mxu0 0.0
    %4632 = vmatpush1.msra.mxu0 0.0
    %4633 = vmatprep.subr.mxu0 0.0
    %4634 = vmatpush1.msra.mxu0 0.0
    %4635 = vmatprep.subr.mxu0 0.0
    %4636 = vmatpush1.msra.mxu0 0.0
    %4637 = vmatprep.subr.mxu0 0.0
    %4638 = vmatpush1.msra.mxu0 0.0
    %4639 = vmatprep.subr.mxu0 0.0
    %4640 = vmatpush1.msra.mxu0 0.0
    %4641 = vmatprep.subr.mxu0 0.0
    %4642 = vmatpush1.msra.mxu0 0.0
    %4643 = vmatprep.subr.mxu0 0.0
    %4644 = vmatpush1.msra.mxu0 0.0
    %4645 = vmatprep.subr.mxu0 0.0
    %4646 = vmatpush1.msra.mxu0 0.0
    %4647 = vmatprep.subr.mxu0 0.0
    %4648 = vmatpush1.msra.mxu0 0.0
    %4649 = vmatprep.subr.mxu0 0.0
    %4650 = vmatpush1.msra.mxu0 0.0
    %4651 = vmatprep.subr.mxu0 0.0
    %4652 = vmatpush1.msra.mxu0 0.0
    %4653 = vmatprep.subr.mxu0 0.0
    %4654 = vmatpush1.msra.mxu0 0.0
    %4655 = vmatprep.subr.mxu0 0.0
    %4656 = vmatpush1.msra.mxu0 0.0
    %4657 = vmatprep.subr.mxu0 0.0
    %4658 = vmatpush1.msra.mxu0 0.0
    %4659 = vmatprep.subr.mxu0 0.0
    %4660 = vmatpush1.msra.mxu0 0.0
    %4661 = vmatprep.subr.mxu0 0.0
    %4662 = vmatpush1.msra.mxu0 0.0
    %4663 = vmatprep.subr.mxu0 0.0
    %4664 = vmatpush1.msra.mxu0 0.0
    %4665 = vmatprep.subr.mxu0 0.0
    %4666 = vmatpush1.msra.mxu0 0.0
    %4667 = vmatprep.subr.mxu0 0.0
    %4668 = vmatpush1.msra.mxu0 0.0
    %4669 = vmatprep.subr.mxu0 0.0
    %4670 = vmatpush1.msra.mxu0 0.0
    %4671 = vmatprep.subr.mxu0 0.0
    %4672 = vmatpush1.msra.mxu0 0.0
    %4673 = vmatprep.subr.mxu0 0.0
    %4674 = vmatpush1.msra.mxu0 0.0
    %4675 = vmatprep.subr.mxu0 0.0
    %4676 = vmatpush1.msra.mxu0 0.0
    %4677 = vmatprep.subr.mxu0 0.0
    %4678 = vmatpush1.msra.mxu0 0.0
    %4679 = vmatprep.mubr.f32.mxu0 0.0
    %4680 = vmatmul.mubr.f32.gmra.mrb[0].mxu0 %v4604
    %v4681 = vpop.f32.mrb[0].mxu0
    %v4682 = vadd.f32 %v4585, %v4681
    %v4683 = vpop.f32.mrb[0].mxu0
    %4684 = vmatprep.mubr.f32.mxu0 0.0
    %4685 = vmatmul.mubr.f32.gmra.mrb[0].mxu0 %v4607
    %v4686 = vpop.f32.mrb[0].mxu0
    %v4687 = vadd.f32 %v4590, %v4686
    %v4688 = vpop.f32.mrb[0].mxu0
    %4689 = vmatprep.mubr.f32.mxu0 0.0
    %4690 = vmatmul.mubr.f32.gmra.mrb[0].mxu0 %v4610
    %v4691 = vpop.f32.mrb[0].mxu0
    %v4692 = vadd.f32 %v4595, %v4691
    %v4693 = vpop.f32.mrb[0].mxu0
    %4694 = vmatprep.mubr.f32.mxu0 0.0
    %4695 = vmatmul.mubr.f32.gmra.mrb[0].mxu0 %v4613
    %v4696 = vpop.f32.mrb[0].mxu0
    %v4697 = vadd.f32 %v4600, %v4696
    %v4698 = vpop.f32.mrb[0].mxu0
    %4699 = vdwg.mxu0
    %s4700 = scalar_lea.vmem [#allocation8], 128
    %v4701 = vld [vmem:[%s4700] sm:$0xff]
    %v4702 = vld [vmem:[%s4700 + $0x8] sm:$0xff]
    %v4703 = vld [vmem:[%s4700 + $0x10] sm:$0xff]
    %v4704 = vld [vmem:[%s4700 + $0x18] sm:$0xff]
    %v4705 = vld [vmem:[%s4700 + $0x20] sm:$0xff]
    %v4706 = vld [vmem:[%s4700 + $0x28] sm:$0xff]
    %v4707 = vld [vmem:[%s4700 + $0x30] sm:$0xff]
    %v4708 = vld [vmem:[%s4700 + $0x38] sm:$0xff]
    %v4710 = vsel %vm372, %v4351, 0
    %v4713 = vsel %vm372, %v4356, 0
    %v4716 = vsel %vm372, %v4361, 0
    %v4719 = vsel %vm372, %v4366, 0
    %4721 = vmatprep.subr.mxu0 0.0
    %4722 = vmatpush1.msra.mxu0 %v4701
    %4723 = vmatprep.subr.mxu0 0.0
    %4724 = vmatpush1.msra.mxu0 %v4702
    %4725 = vmatprep.subr.mxu0 0.0
    %4726 = vmatpush1.msra.mxu0 %v4703
    %4727 = vmatprep.subr.mxu0 0.0
    %4728 = vmatpush1.msra.mxu0 %v4704
    %4729 = vmatprep.subr.mxu0 0.0
    %4730 = vmatpush1.msra.mxu0 %v4705
    %4731 = vmatprep.subr.mxu0 0.0
    %4732 = vmatpush1.msra.mxu0 %v4706
    %4733 = vmatprep.subr.mxu0 0.0
    %4734 = vmatpush1.msra.mxu0 %v4707
    %4735 = vmatprep.subr.mxu0 0.0
    %4736 = vmatpush1.msra.mxu0 %v4708
    %4737 = vmatprep.subr.mxu0 0.0
    %4738 = vmatpush1.msra.mxu0 0.0
    %4739 = vmatprep.subr.mxu0 0.0
    %4740 = vmatpush1.msra.mxu0 0.0
    %4741 = vmatprep.subr.mxu0 0.0
    %4742 = vmatpush1.msra.mxu0 0.0
    %4743 = vmatprep.subr.mxu0 0.0
    %4744 = vmatpush1.msra.mxu0 0.0
    %4745 = vmatprep.subr.mxu0 0.0
    %4746 = vmatpush1.msra.mxu0 0.0
    %4747 = vmatprep.subr.mxu0 0.0
    %4748 = vmatpush1.msra.mxu0 0.0
    %4749 = vmatprep.subr.mxu0 0.0
    %4750 = vmatpush1.msra.mxu0 0.0
    %4751 = vmatprep.subr.mxu0 0.0
    %4752 = vmatpush1.msra.mxu0 0.0
    %4753 = vmatprep.subr.mxu0 0.0
    %4754 = vmatpush1.msra.mxu0 0.0
    %4755 = vmatprep.subr.mxu0 0.0
    %4756 = vmatpush1.msra.mxu0 0.0
    %4757 = vmatprep.subr.mxu0 0.0
    %4758 = vmatpush1.msra.mxu0 0.0
    %4759 = vmatprep.subr.mxu0 0.0
    %4760 = vmatpush1.msra.mxu0 0.0
    %4761 = vmatprep.subr.mxu0 0.0
    %4762 = vmatpush1.msra.mxu0 0.0
    %4763 = vmatprep.subr.mxu0 0.0
    %4764 = vmatpush1.msra.mxu0 0.0
    %4765 = vmatprep.subr.mxu0 0.0
    %4766 = vmatpush1.msra.mxu0 0.0
    %4767 = vmatprep.subr.mxu0 0.0
    %4768 = vmatpush1.msra.mxu0 0.0
    %4769 = vmatprep.subr.mxu0 0.0
    %4770 = vmatpush1.msra.mxu0 0.0
    %4771 = vmatprep.subr.mxu0 0.0
    %4772 = vmatpush1.msra.mxu0 0.0
    %4773 = vmatprep.subr.mxu0 0.0
    %4774 = vmatpush1.msra.mxu0 0.0
    %4775 = vmatprep.subr.mxu0 0.0
    %4776 = vmatpush1.msra.mxu0 0.0
    %4777 = vmatprep.subr.mxu0 0.0
    %4778 = vmatpush1.msra.mxu0 0.0
    %4779 = vmatprep.subr.mxu0 0.0
    %4780 = vmatpush1.msra.mxu0 0.0
    %4781 = vmatprep.subr.mxu0 0.0
    %4782 = vmatpush1.msra.mxu0 0.0
    %4783 = vmatprep.subr.mxu0 0.0
    %4784 = vmatpush1.msra.mxu0 0.0
    %4785 = vmatprep.mubr.f32.mxu0 0.0
    %4786 = vmatmul.mubr.f32.gmra.mrb[0].mxu0 %v4710
    %v4787 = vpop.f32.mrb[0].mxu0
    %v4788 = vadd.f32 0.0, %v4787
    %v4789 = vpop.f32.mrb[0].mxu0
    %4790 = vmatprep.mubr.f32.mxu0 0.0
    %4791 = vmatmul.mubr.f32.gmra.mrb[0].mxu0 %v4713
    %v4792 = vpop.f32.mrb[0].mxu0
    %v4793 = vadd.f32 0.0, %v4792
    %v4794 = vpop.f32.mrb[0].mxu0
    %4795 = vmatprep.mubr.f32.mxu0 0.0
    %4796 = vmatmul.mubr.f32.gmra.mrb[0].mxu0 %v4716
    %v4797 = vpop.f32.mrb[0].mxu0
    %v4798 = vadd.f32 0.0, %v4797
    %v4799 = vpop.f32.mrb[0].mxu0
    %4800 = vmatprep.mubr.f32.mxu0 0.0
    %4801 = vmatmul.mubr.f32.gmra.mrb[0].mxu0 %v4719
    %v4802 = vpop.f32.mrb[0].mxu0
    %v4803 = vadd.f32 0.0, %v4802
    %v4804 = vpop.f32.mrb[0].mxu0
    %4805 = vdwg.mxu0
    %v4806 = vadd.f32 %v4682, %v4788
    %v4807 = vadd.f32 %v4687, %v4793
    %v4808 = vadd.f32 %v4692, %v4798
    %v4809 = vadd.f32 %v4697, %v4803
    %s4810 = scalar_lea.vmem [#allocation8], 192
    %v4811 = vld [vmem:[%s4810] sm:$0xff]
    %v4812 = vld [vmem:[%s4810 + $0x8] sm:$0xff]
    %v4813 = vld [vmem:[%s4810 + $0x10] sm:$0xff]
    %v4814 = vld [vmem:[%s4810 + $0x18] sm:$0xff]
    %v4815 = vld [vmem:[%s4810 + $0x20] sm:$0xff]
    %v4816 = vld [vmem:[%s4810 + $0x28] sm:$0xff]
    %v4817 = vld [vmem:[%s4810 + $0x30] sm:$0xff]
    %v4818 = vld [vmem:[%s4810 + $0x38] sm:$0xff]
    %v4820 = vsel %vm372, %v4371, 0
    %v4823 = vsel %vm372, %v4376, 0
    %v4826 = vsel %vm372, %v4381, 0
    %v4829 = vsel %vm372, %v4386, 0
    %4831 = vmatprep.subr.mxu0 0.0
    %4832 = vmatpush1.msra.mxu0 %v4811
    %4833 = vmatprep.subr.mxu0 0.0
    %4834 = vmatpush1.msra.mxu0 %v4812
    %4835 = vmatprep.subr.mxu0 0.0
    %4836 = vmatpush1.msra.mxu0 %v4813
    %4837 = vmatprep.subr.mxu0 0.0
    %4838 = vmatpush1.msra.mxu0 %v4814
    %4839 = vmatprep.subr.mxu0 0.0
    %4840 = vmatpush1.msra.mxu0 %v4815
    %4841 = vmatprep.subr.mxu0 0.0
    %4842 = vmatpush1.msra.mxu0 %v4816
    %4843 = vmatprep.subr.mxu0 0.0
    %4844 = vmatpush1.msra.mxu0 %v4817
    %4845 = vmatprep.subr.mxu0 0.0
    %4846 = vmatpush1.msra.mxu0 %v4818
    %4847 = vmatprep.subr.mxu0 0.0
    %4848 = vmatpush1.msra.mxu0 0.0
    %4849 = vmatprep.subr.mxu0 0.0
    %4850 = vmatpush1.msra.mxu0 0.0
    %4851 = vmatprep.subr.mxu0 0.0
    %4852 = vmatpush1.msra.mxu0 0.0
    %4853 = vmatprep.subr.mxu0 0.0
    %4854 = vmatpush1.msra.mxu0 0.0
    %4855 = vmatprep.subr.mxu0 0.0
    %4856 = vmatpush1.msra.mxu0 0.0
    %4857 = vmatprep.subr.mxu0 0.0
    %4858 = vmatpush1.msra.mxu0 0.0
    %4859 = vmatprep.subr.mxu0 0.0
    %4860 = vmatpush1.msra.mxu0 0.0
    %4861 = vmatprep.subr.mxu0 0.0
    %4862 = vmatpush1.msra.mxu0 0.0
    %4863 = vmatprep.subr.mxu0 0.0
    %4864 = vmatpush1.msra.mxu0 0.0
    %4865 = vmatprep.subr.mxu0 0.0
    %4866 = vmatpush1.msra.mxu0 0.0
    %4867 = vmatprep.subr.mxu0 0.0
    %4868 = vmatpush1.msra.mxu0 0.0
    %4869 = vmatprep.subr.mxu0 0.0
    %4870 = vmatpush1.msra.mxu0 0.0
    %4871 = vmatprep.subr.mxu0 0.0
    %4872 = vmatpush1.msra.mxu0 0.0
    %4873 = vmatprep.subr.mxu0 0.0
    %4874 = vmatpush1.msra.mxu0 0.0
    %4875 = vmatprep.subr.mxu0 0.0
    %4876 = vmatpush1.msra.mxu0 0.0
    %4877 = vmatprep.subr.mxu0 0.0
    %4878 = vmatpush1.msra.mxu0 0.0
    %4879 = vmatprep.subr.mxu0 0.0
    %4880 = vmatpush1.msra.mxu0 0.0
    %4881 = vmatprep.subr.mxu0 0.0
    %4882 = vmatpush1.msra.mxu0 0.0
    %4883 = vmatprep.subr.mxu0 0.0
    %4884 = vmatpush1.msra.mxu0 0.0
    %4885 = vmatprep.subr.mxu0 0.0
    %4886 = vmatpush1.msra.mxu0 0.0
    %4887 = vmatprep.subr.mxu0 0.0
    %4888 = vmatpush1.msra.mxu0 0.0
    %4889 = vmatprep.subr.mxu0 0.0
    %4890 = vmatpush1.msra.mxu0 0.0
    %4891 = vmatprep.subr.mxu0 0.0
    %4892 = vmatpush1.msra.mxu0 0.0
    %4893 = vmatprep.subr.mxu0 0.0
    %4894 = vmatpush1.msra.mxu0 0.0
    %4895 = vmatprep.mubr.f32.mxu0 0.0
    %4896 = vmatmul.mubr.f32.gmra.mrb[0].mxu0 %v4820
    %v4897 = vpop.f32.mrb[0].mxu0
    %v4898 = vadd.f32 0.0, %v4897
    %v4899 = vpop.f32.mrb[0].mxu0
    %4900 = vmatprep.mubr.f32.mxu0 0.0
    %4901 = vmatmul.mubr.f32.gmra.mrb[0].mxu0 %v4823
    %v4902 = vpop.f32.mrb[0].mxu0
    %v4903 = vadd.f32 0.0, %v4902
    %v4904 = vpop.f32.mrb[0].mxu0
    %4905 = vmatprep.mubr.f32.mxu0 0.0
    %4906 = vmatmul.mubr.f32.gmra.mrb[0].mxu0 %v4826
    %v4907 = vpop.f32.mrb[0].mxu0
    %v4908 = vadd.f32 0.0, %v4907
    %v4909 = vpop.f32.mrb[0].mxu0
    %4910 = vmatprep.mubr.f32.mxu0 0.0
    %4911 = vmatmul.mubr.f32.gmra.mrb[0].mxu0 %v4829
    %v4912 = vpop.f32.mrb[0].mxu0
    %v4913 = vadd.f32 0.0, %v4912
    %v4914 = vpop.f32.mrb[0].mxu0
    %4915 = vdwg.mxu0
    %v4916 = vadd.f32 %v4806, %v4898
    %v4917 = vadd.f32 %v4807, %v4903
    %v4918 = vadd.f32 %v4808, %v4908
    %v4919 = vadd.f32 %v4809, %v4913
    %s4920 = scalar_lea.vmem [#allocation8], 256
    %v4921 = vld [vmem:[%s4920] sm:$0xff]
    %v4922 = vld [vmem:[%s4920 + $0x8] sm:$0xff]
    %v4923 = vld [vmem:[%s4920 + $0x10] sm:$0xff]
    %v4924 = vld [vmem:[%s4920 + $0x18] sm:$0xff]
    %v4925 = vld [vmem:[%s4920 + $0x20] sm:$0xff]
    %v4926 = vld [vmem:[%s4920 + $0x28] sm:$0xff]
    %v4927 = vld [vmem:[%s4920 + $0x30] sm:$0xff]
    %v4928 = vld [vmem:[%s4920 + $0x38] sm:$0xff]
    %v4930 = vsel %vm372, %v4391, 0
    %v4933 = vsel %vm372, %v4396, 0
    %v4936 = vsel %vm372, %v4401, 0
    %v4939 = vsel %vm372, %v4406, 0
    %4941 = vmatprep.subr.mxu0 0.0
    %4942 = vmatpush1.msra.mxu0 %v4921
    %4943 = vmatprep.subr.mxu0 0.0
    %4944 = vmatpush1.msra.mxu0 %v4922
    %4945 = vmatprep.subr.mxu0 0.0
    %4946 = vmatpush1.msra.mxu0 %v4923
    %4947 = vmatprep.subr.mxu0 0.0
    %4948 = vmatpush1.msra.mxu0 %v4924
    %4949 = vmatprep.subr.mxu0 0.0
    %4950 = vmatpush1.msra.mxu0 %v4925
    %4951 = vmatprep.subr.mxu0 0.0
    %4952 = vmatpush1.msra.mxu0 %v4926
    %4953 = vmatprep.subr.mxu0 0.0
    %4954 = vmatpush1.msra.mxu0 %v4927
    %4955 = vmatprep.subr.mxu0 0.0
    %4956 = vmatpush1.msra.mxu0 %v4928
    %4957 = vmatprep.subr.mxu0 0.0
    %4958 = vmatpush1.msra.mxu0 0.0
    %4959 = vmatprep.subr.mxu0 0.0
    %4960 = vmatpush1.msra.mxu0 0.0
    %4961 = vmatprep.subr.mxu0 0.0
    %4962 = vmatpush1.msra.mxu0 0.0
    %4963 = vmatprep.subr.mxu0 0.0
    %4964 = vmatpush1.msra.mxu0 0.0
    %4965 = vmatprep.subr.mxu0 0.0
    %4966 = vmatpush1.msra.mxu0 0.0
    %4967 = vmatprep.subr.mxu0 0.0
    %4968 = vmatpush1.msra.mxu0 0.0
    %4969 = vmatprep.subr.mxu0 0.0
    %4970 = vmatpush1.msra.mxu0 0.0
    %4971 = vmatprep.subr.mxu0 0.0
    %4972 = vmatpush1.msra.mxu0 0.0
    %4973 = vmatprep.subr.mxu0 0.0
    %4974 = vmatpush1.msra.mxu0 0.0
    %4975 = vmatprep.subr.mxu0 0.0
    %4976 = vmatpush1.msra.mxu0 0.0
    %4977 = vmatprep.subr.mxu0 0.0
    %4978 = vmatpush1.msra.mxu0 0.0
    %4979 = vmatprep.subr.mxu0 0.0
    %4980 = vmatpush1.msra.mxu0 0.0
    %4981 = vmatprep.subr.mxu0 0.0
    %4982 = vmatpush1.msra.mxu0 0.0
    %4983 = vmatprep.subr.mxu0 0.0
    %4984 = vmatpush1.msra.mxu0 0.0
    %4985 = vmatprep.subr.mxu0 0.0
    %4986 = vmatpush1.msra.mxu0 0.0
    %4987 = vmatprep.subr.mxu0 0.0
    %4988 = vmatpush1.msra.mxu0 0.0
    %4989 = vmatprep.subr.mxu0 0.0
    %4990 = vmatpush1.msra.mxu0 0.0
    %4991 = vmatprep.subr.mxu0 0.0
    %4992 = vmatpush1.msra.mxu0 0.0
    %4993 = vmatprep.subr.mxu0 0.0
    %4994 = vmatpush1.msra.mxu0 0.0
    %4995 = vmatprep.subr.mxu0 0.0
    %4996 = vmatpush1.msra.mxu0 0.0
    %4997 = vmatprep.subr.mxu0 0.0
    %4998 = vmatpush1.msra.mxu0 0.0
    %4999 = vmatprep.subr.mxu0 0.0
    %5000 = vmatpush1.msra.mxu0 0.0
    %5001 = vmatprep.subr.mxu0 0.0
    %5002 = vmatpush1.msra.mxu0 0.0
    %5003 = vmatprep.subr.mxu0 0.0
    %5004 = vmatpush1.msra.mxu0 0.0
    %5005 = vmatprep.mubr.f32.mxu0 0.0
    %5006 = vmatmul.mubr.f32.gmra.mrb[0].mxu0 %v4930
    %v5007 = vpop.f32.mrb[0].mxu0
    %v5008 = vadd.f32 0.0, %v5007
    %v5009 = vpop.f32.mrb[0].mxu0
    %5010 = vmatprep.mubr.f32.mxu0 0.0
    %5011 = vmatmul.mubr.f32.gmra.mrb[0].mxu0 %v4933
    %v5012 = vpop.f32.mrb[0].mxu0
    %v5013 = vadd.f32 0.0, %v5012
    %v5014 = vpop.f32.mrb[0].mxu0
    %5015 = vmatprep.mubr.f32.mxu0 0.0
    %5016 = vmatmul.mubr.f32.gmra.mrb[0].mxu0 %v4936
    %v5017 = vpop.f32.mrb[0].mxu0
    %v5018 = vadd.f32 0.0, %v5017
    %v5019 = vpop.f32.mrb[0].mxu0
    %5020 = vmatprep.mubr.f32.mxu0 0.0
    %5021 = vmatmul.mubr.f32.gmra.mrb[0].mxu0 %v4939
    %v5022 = vpop.f32.mrb[0].mxu0
    %v5023 = vadd.f32 0.0, %v5022
    %v5024 = vpop.f32.mrb[0].mxu0
    %5025 = vdwg.mxu0
    %v5026 = vadd.f32 %v4916, %v5008
    %v5027 = vadd.f32 %v4917, %v5013
    %v5028 = vadd.f32 %v4918, %v5018
    %v5029 = vadd.f32 %v4919, %v5023
    %s5030 = scalar_lea.vmem [#allocation8], 320
    %v5031 = vld [vmem:[%s5030] sm:$0xff]
    %v5032 = vld [vmem:[%s5030 + $0x8] sm:$0xff]
    %v5033 = vld [vmem:[%s5030 + $0x10] sm:$0xff]
    %v5034 = vld [vmem:[%s5030 + $0x18] sm:$0xff]
    %v5035 = vld [vmem:[%s5030 + $0x20] sm:$0xff]
    %v5036 = vld [vmem:[%s5030 + $0x28] sm:$0xff]
    %v5037 = vld [vmem:[%s5030 + $0x30] sm:$0xff]
    %v5038 = vld [vmem:[%s5030 + $0x38] sm:$0xff]
    %v5040 = vsel %vm372, %v4411, 0
    %v5043 = vsel %vm372, %v4416, 0
    %v5046 = vsel %vm372, %v4421, 0
    %v5049 = vsel %vm372, %v4426, 0
    %5051 = vmatprep.subr.mxu0 0.0
    %5052 = vmatpush1.msra.mxu0 %v5031
    %5053 = vmatprep.subr.mxu0 0.0
    %5054 = vmatpush1.msra.mxu0 %v5032
    %5055 = vmatprep.subr.mxu0 0.0
    %5056 = vmatpush1.msra.mxu0 %v5033
    %5057 = vmatprep.subr.mxu0 0.0
    %5058 = vmatpush1.msra.mxu0 %v5034
    %5059 = vmatprep.subr.mxu0 0.0
    %5060 = vmatpush1.msra.mxu0 %v5035
    %5061 = vmatprep.subr.mxu0 0.0
    %5062 = vmatpush1.msra.mxu0 %v5036
    %5063 = vmatprep.subr.mxu0 0.0
    %5064 = vmatpush1.msra.mxu0 %v5037
    %5065 = vmatprep.subr.mxu0 0.0
    %5066 = vmatpush1.msra.mxu0 %v5038
    %5067 = vmatprep.subr.mxu0 0.0
    %5068 = vmatpush1.msra.mxu0 0.0
    %5069 = vmatprep.subr.mxu0 0.0
    %5070 = vmatpush1.msra.mxu0 0.0
    %5071 = vmatprep.subr.mxu0 0.0
    %5072 = vmatpush1.msra.mxu0 0.0
    %5073 = vmatprep.subr.mxu0 0.0
    %5074 = vmatpush1.msra.mxu0 0.0
    %5075 = vmatprep.subr.mxu0 0.0
    %5076 = vmatpush1.msra.mxu0 0.0
    %5077 = vmatprep.subr.mxu0 0.0
    %5078 = vmatpush1.msra.mxu0 0.0
    %5079 = vmatprep.subr.mxu0 0.0
    %5080 = vmatpush1.msra.mxu0 0.0
    %5081 = vmatprep.subr.mxu0 0.0
    %5082 = vmatpush1.msra.mxu0 0.0
    %5083 = vmatprep.subr.mxu0 0.0
    %5084 = vmatpush1.msra.mxu0 0.0
    %5085 = vmatprep.subr.mxu0 0.0
    %5086 = vmatpush1.msra.mxu0 0.0
    %5087 = vmatprep.subr.mxu0 0.0
    %5088 = vmatpush1.msra.mxu0 0.0
    %5089 = vmatprep.subr.mxu0 0.0
    %5090 = vmatpush1.msra.mxu0 0.0
    %5091 = vmatprep.subr.mxu0 0.0
    %5092 = vmatpush1.msra.mxu0 0.0
    %5093 = vmatprep.subr.mxu0 0.0
    %5094 = vmatpush1.msra.mxu0 0.0
    %5095 = vmatprep.subr.mxu0 0.0
    %5096 = vmatpush1.msra.mxu0 0.0
    %5097 = vmatprep.subr.mxu0 0.0
    %5098 = vmatpush1.msra.mxu0 0.0
    %5099 = vmatprep.subr.mxu0 0.0
    %5100 = vmatpush1.msra.mxu0 0.0
    %5101 = vmatprep.subr.mxu0 0.0
    %5102 = vmatpush1.msra.mxu0 0.0
    %5103 = vmatprep.subr.mxu0 0.0
    %5104 = vmatpush1.msra.mxu0 0.0
    %5105 = vmatprep.subr.mxu0 0.0
    %5106 = vmatpush1.msra.mxu0 0.0
    %5107 = vmatprep.subr.mxu0 0.0
    %5108 = vmatpush1.msra.mxu0 0.0
    %5109 = vmatprep.subr.mxu0 0.0
    %5110 = vmatpush1.msra.mxu0 0.0
    %5111 = vmatprep.subr.mxu0 0.0
    %5112 = vmatpush1.msra.mxu0 0.0
    %5113 = vmatprep.subr.mxu0 0.0
    %5114 = vmatpush1.msra.mxu0 0.0
    %5115 = vmatprep.mubr.f32.mxu0 0.0
    %5116 = vmatmul.mubr.f32.gmra.mrb[0].mxu0 %v5040
    %v5117 = vpop.f32.mrb[0].mxu0
    %v5118 = vadd.f32 0.0, %v5117
    %v5119 = vpop.f32.mrb[0].mxu0
    %5120 = vmatprep.mubr.f32.mxu0 0.0
    %5121 = vmatmul.mubr.f32.gmra.mrb[0].mxu0 %v5043
    %v5122 = vpop.f32.mrb[0].mxu0
    %v5123 = vadd.f32 0.0, %v5122
    %v5124 = vpop.f32.mrb[0].mxu0
    %5125 = vmatprep.mubr.f32.mxu0 0.0
    %5126 = vmatmul.mubr.f32.gmra.mrb[0].mxu0 %v5046
    %v5127 = vpop.f32.mrb[0].mxu0
    %v5128 = vadd.f32 0.0, %v5127
    %v5129 = vpop.f32.mrb[0].mxu0
    %5130 = vmatprep.mubr.f32.mxu0 0.0
    %5131 = vmatmul.mubr.f32.gmra.mrb[0].mxu0 %v5049
    %v5132 = vpop.f32.mrb[0].mxu0
    %v5133 = vadd.f32 0.0, %v5132
    %v5134 = vpop.f32.mrb[0].mxu0
    %5135 = vdwg.mxu0
    %v5136 = vadd.f32 %v5026, %v5118
    %v5137 = vadd.f32 %v5027, %v5123
    %v5138 = vadd.f32 %v5028, %v5128
    %v5139 = vadd.f32 %v5029, %v5133
    %s5140 = scalar_lea.vmem [#allocation8], 384
    %v5141 = vld [vmem:[%s5140] sm:$0xff]
    %v5142 = vld [vmem:[%s5140 + $0x8] sm:$0xff]
    %v5143 = vld [vmem:[%s5140 + $0x10] sm:$0xff]
    %v5144 = vld [vmem:[%s5140 + $0x18] sm:$0xff]
    %v5145 = vld [vmem:[%s5140 + $0x20] sm:$0xff]
    %v5146 = vld [vmem:[%s5140 + $0x28] sm:$0xff]
    %v5147 = vld [vmem:[%s5140 + $0x30] sm:$0xff]
    %v5148 = vld [vmem:[%s5140 + $0x38] sm:$0xff]
    %v5150 = vsel %vm372, %v4431, 0
    %v5153 = vsel %vm372, %v4436, 0
    %v5156 = vsel %vm372, %v4441, 0
    %v5159 = vsel %vm372, %v4446, 0
    %5161 = vmatprep.subr.mxu0 0.0
    %5162 = vmatpush1.msra.mxu0 %v5141
    %5163 = vmatprep.subr.mxu0 0.0
    %5164 = vmatpush1.msra.mxu0 %v5142
    %5165 = vmatprep.subr.mxu0 0.0
    %5166 = vmatpush1.msra.mxu0 %v5143
    %5167 = vmatprep.subr.mxu0 0.0
    %5168 = vmatpush1.msra.mxu0 %v5144
    %5169 = vmatprep.subr.mxu0 0.0
    %5170 = vmatpush1.msra.mxu0 %v5145
    %5171 = vmatprep.subr.mxu0 0.0
    %5172 = vmatpush1.msra.mxu0 %v5146
    %5173 = vmatprep.subr.mxu0 0.0
    %5174 = vmatpush1.msra.mxu0 %v5147
    %5175 = vmatprep.subr.mxu0 0.0
    %5176 = vmatpush1.msra.mxu0 %v5148
    %5177 = vmatprep.subr.mxu0 0.0
    %5178 = vmatpush1.msra.mxu0 0.0
    %5179 = vmatprep.subr.mxu0 0.0
    %5180 = vmatpush1.msra.mxu0 0.0
    %5181 = vmatprep.subr.mxu0 0.0
    %5182 = vmatpush1.msra.mxu0 0.0
    %5183 = vmatprep.subr.mxu0 0.0
    %5184 = vmatpush1.msra.mxu0 0.0
    %5185 = vmatprep.subr.mxu0 0.0
    %5186 = vmatpush1.msra.mxu0 0.0
    %5187 = vmatprep.subr.mxu0 0.0
    %5188 = vmatpush1.msra.mxu0 0.0
    %5189 = vmatprep.subr.mxu0 0.0
    %5190 = vmatpush1.msra.mxu0 0.0
    %5191 = vmatprep.subr.mxu0 0.0
    %5192 = vmatpush1.msra.mxu0 0.0
    %5193 = vmatprep.subr.mxu0 0.0
    %5194 = vmatpush1.msra.mxu0 0.0
    %5195 = vmatprep.subr.mxu0 0.0
    %5196 = vmatpush1.msra.mxu0 0.0
    %5197 = vmatprep.subr.mxu0 0.0
    %5198 = vmatpush1.msra.mxu0 0.0
    %5199 = vmatprep.subr.mxu0 0.0
    %5200 = vmatpush1.msra.mxu0 0.0
    %5201 = vmatprep.subr.mxu0 0.0
    %5202 = vmatpush1.msra.mxu0 0.0
    %5203 = vmatprep.subr.mxu0 0.0
    %5204 = vmatpush1.msra.mxu0 0.0
    %5205 = vmatprep.subr.mxu0 0.0
    %5206 = vmatpush1.msra.mxu0 0.0
    %5207 = vmatprep.subr.mxu0 0.0
    %5208 = vmatpush1.msra.mxu0 0.0
    %5209 = vmatprep.subr.mxu0 0.0
    %5210 = vmatpush1.msra.mxu0 0.0
    %5211 = vmatprep.subr.mxu0 0.0
    %5212 = vmatpush1.msra.mxu0 0.0
    %5213 = vmatprep.subr.mxu0 0.0
    %5214 = vmatpush1.msra.mxu0 0.0
    %5215 = vmatprep.subr.mxu0 0.0
    %5216 = vmatpush1.msra.mxu0 0.0
    %5217 = vmatprep.subr.mxu0 0.0
    %5218 = vmatpush1.msra.mxu0 0.0
    %5219 = vmatprep.subr.mxu0 0.0
    %5220 = vmatpush1.msra.mxu0 0.0
    %5221 = vmatprep.subr.mxu0 0.0
    %5222 = vmatpush1.msra.mxu0 0.0
    %5223 = vmatprep.subr.mxu0 0.0
    %5224 = vmatpush1.msra.mxu0 0.0
    %5225 = vmatprep.mubr.f32.mxu0 0.0
    %5226 = vmatmul.mubr.f32.gmra.mrb[0].mxu0 %v5150
    %v5227 = vpop.f32.mrb[0].mxu0
    %v5228 = vadd.f32 0.0, %v5227
    %v5229 = vpop.f32.mrb[0].mxu0
    %5230 = vmatprep.mubr.f32.mxu0 0.0
    %5231 = vmatmul.mubr.f32.gmra.mrb[0].mxu0 %v5153
    %v5232 = vpop.f32.mrb[0].mxu0
    %v5233 = vadd.f32 0.0, %v5232
    %v5234 = vpop.f32.mrb[0].mxu0
    %5235 = vmatprep.mubr.f32.mxu0 0.0
    %5236 = vmatmul.mubr.f32.gmra.mrb[0].mxu0 %v5156
    %v5237 = vpop.f32.mrb[0].mxu0
    %v5238 = vadd.f32 0.0, %v5237
    %v5239 = vpop.f32.mrb[0].mxu0
    %5240 = vmatprep.mubr.f32.mxu0 0.0
    %5241 = vmatmul.mubr.f32.gmra.mrb[0].mxu0 %v5159
    %v5242 = vpop.f32.mrb[0].mxu0
    %v5243 = vadd.f32 0.0, %v5242
    %v5244 = vpop.f32.mrb[0].mxu0
    %5245 = vdwg.mxu0
    %v5246 = vadd.f32 %v5136, %v5228
    %v5247 = vadd.f32 %v5137, %v5233
    %v5248 = vadd.f32 %v5138, %v5238
    %v5249 = vadd.f32 %v5139, %v5243
    %s5250 = scalar_lea.vmem [#allocation8], 448
    %v5251 = vld [vmem:[%s5250] sm:$0xff]
    %v5252 = vld [vmem:[%s5250 + $0x8] sm:$0xff]
    %v5253 = vld [vmem:[%s5250 + $0x10] sm:$0xff]
    %v5254 = vld [vmem:[%s5250 + $0x18] sm:$0xff]
    %v5255 = vld [vmem:[%s5250 + $0x20] sm:$0xff]
    %v5256 = vld [vmem:[%s5250 + $0x28] sm:$0xff]
    %v5257 = vld [vmem:[%s5250 + $0x30] sm:$0xff]
    %v5258 = vld [vmem:[%s5250 + $0x38] sm:$0xff]
    %v5260 = vsel %vm372, %v4451, 0
    %v5263 = vsel %vm372, %v4456, 0
    %v5266 = vsel %vm372, %v4461, 0
    %v5269 = vsel %vm372, %v4466, 0
    %5271 = vmatprep.subr.mxu0 0.0
    %5272 = vmatpush1.msra.mxu0 %v5251
    %5273 = vmatprep.subr.mxu0 0.0
    %5274 = vmatpush1.msra.mxu0 %v5252
    %5275 = vmatprep.subr.mxu0 0.0
    %5276 = vmatpush1.msra.mxu0 %v5253
    %5277 = vmatprep.subr.mxu0 0.0
    %5278 = vmatpush1.msra.mxu0 %v5254
    %5279 = vmatprep.subr.mxu0 0.0
    %5280 = vmatpush1.msra.mxu0 %v5255
    %5281 = vmatprep.subr.mxu0 0.0
    %5282 = vmatpush1.msra.mxu0 %v5256
    %5283 = vmatprep.subr.mxu0 0.0
    %5284 = vmatpush1.msra.mxu0 %v5257
    %5285 = vmatprep.subr.mxu0 0.0
    %5286 = vmatpush1.msra.mxu0 %v5258
    %5287 = vmatprep.subr.mxu0 0.0
    %5288 = vmatpush1.msra.mxu0 0.0
    %5289 = vmatprep.subr.mxu0 0.0
    %5290 = vmatpush1.msra.mxu0 0.0
    %5291 = vmatprep.subr.mxu0 0.0
    %5292 = vmatpush1.msra.mxu0 0.0
    %5293 = vmatprep.subr.mxu0 0.0
    %5294 = vmatpush1.msra.mxu0 0.0
    %5295 = vmatprep.subr.mxu0 0.0
    %5296 = vmatpush1.msra.mxu0 0.0
    %5297 = vmatprep.subr.mxu0 0.0
    %5298 = vmatpush1.msra.mxu0 0.0
    %5299 = vmatprep.subr.mxu0 0.0
    %5300 = vmatpush1.msra.mxu0 0.0
    %5301 = vmatprep.subr.mxu0 0.0
    %5302 = vmatpush1.msra.mxu0 0.0
    %5303 = vmatprep.subr.mxu0 0.0
    %5304 = vmatpush1.msra.mxu0 0.0
    %5305 = vmatprep.subr.mxu0 0.0
    %5306 = vmatpush1.msra.mxu0 0.0
    %5307 = vmatprep.subr.mxu0 0.0
    %5308 = vmatpush1.msra.mxu0 0.0
    %5309 = vmatprep.subr.mxu0 0.0
    %5310 = vmatpush1.msra.mxu0 0.0
    %5311 = vmatprep.subr.mxu0 0.0
    %5312 = vmatpush1.msra.mxu0 0.0
    %5313 = vmatprep.subr.mxu0 0.0
    %5314 = vmatpush1.msra.mxu0 0.0
    %5315 = vmatprep.subr.mxu0 0.0
    %5316 = vmatpush1.msra.mxu0 0.0
    %5317 = vmatprep.subr.mxu0 0.0
    %5318 = vmatpush1.msra.mxu0 0.0
    %5319 = vmatprep.subr.mxu0 0.0
    %5320 = vmatpush1.msra.mxu0 0.0
    %5321 = vmatprep.subr.mxu0 0.0
    %5322 = vmatpush1.msra.mxu0 0.0
    %5323 = vmatprep.subr.mxu0 0.0
    %5324 = vmatpush1.msra.mxu0 0.0
    %5325 = vmatprep.subr.mxu0 0.0
    %5326 = vmatpush1.msra.mxu0 0.0
    %5327 = vmatprep.subr.mxu0 0.0
    %5328 = vmatpush1.msra.mxu0 0.0
    %5329 = vmatprep.subr.mxu0 0.0
    %5330 = vmatpush1.msra.mxu0 0.0
    %5331 = vmatprep.subr.mxu0 0.0
    %5332 = vmatpush1.msra.mxu0 0.0
    %5333 = vmatprep.subr.mxu0 0.0
    %5334 = vmatpush1.msra.mxu0 0.0
    %5335 = vmatprep.mubr.f32.mxu0 0.0
    %5336 = vmatmul.mubr.f32.gmra.mrb[0].mxu0 %v5260
    %v5337 = vpop.f32.mrb[0].mxu0
    %v5338 = vadd.f32 0.0, %v5337
    %v5339 = vpop.f32.mrb[0].mxu0
    %5340 = vmatprep.mubr.f32.mxu0 0.0
    %5341 = vmatmul.mubr.f32.gmra.mrb[0].mxu0 %v5263
    %v5342 = vpop.f32.mrb[0].mxu0
    %v5343 = vadd.f32 0.0, %v5342
    %v5344 = vpop.f32.mrb[0].mxu0
    %5345 = vmatprep.mubr.f32.mxu0 0.0
    %5346 = vmatmul.mubr.f32.gmra.mrb[0].mxu0 %v5266
    %v5347 = vpop.f32.mrb[0].mxu0
    %v5348 = vadd.f32 0.0, %v5347
    %v5349 = vpop.f32.mrb[0].mxu0
    %5350 = vmatprep.mubr.f32.mxu0 0.0
    %5351 = vmatmul.mubr.f32.gmra.mrb[0].mxu0 %v5269
    %v5352 = vpop.f32.mrb[0].mxu0
    %v5353 = vadd.f32 0.0, %v5352
    %v5354 = vpop.f32.mrb[0].mxu0
    %5355 = vdwg.mxu0
    %v5356 = vadd.f32 %v5246, %v5338
    %v5357 = vadd.f32 %v5247, %v5343
    %v5358 = vadd.f32 %v5248, %v5348
    %v5359 = vadd.f32 %v5249, %v5353
    %s5360 = scalar_lea.vmem [#allocation8], 512
    %v5361 = vld [vmem:[%s5360] sm:$0xff]
    %v5362 = vld [vmem:[%s5360 + $0x8] sm:$0xff]
    %v5363 = vld [vmem:[%s5360 + $0x10] sm:$0xff]
    %v5364 = vld [vmem:[%s5360 + $0x18] sm:$0xff]
    %v5365 = vld [vmem:[%s5360 + $0x20] sm:$0xff]
    %v5366 = vld [vmem:[%s5360 + $0x28] sm:$0xff]
    %v5367 = vld [vmem:[%s5360 + $0x30] sm:$0xff]
    %v5368 = vld [vmem:[%s5360 + $0x38] sm:$0xff]
    %v5370 = vsel %vm372, %v4471, 0
    %v5373 = vsel %vm372, %v4476, 0
    %v5376 = vsel %vm372, %v4481, 0
    %v5379 = vsel %vm372, %v4486, 0
    %5381 = vmatprep.subr.mxu0 0.0
    %5382 = vmatpush1.msra.mxu0 %v5361
    %5383 = vmatprep.subr.mxu0 0.0
    %5384 = vmatpush1.msra.mxu0 %v5362
    %5385 = vmatprep.subr.mxu0 0.0
    %5386 = vmatpush1.msra.mxu0 %v5363
    %5387 = vmatprep.subr.mxu0 0.0
    %5388 = vmatpush1.msra.mxu0 %v5364
    %5389 = vmatprep.subr.mxu0 0.0
    %5390 = vmatpush1.msra.mxu0 %v5365
    %5391 = vmatprep.subr.mxu0 0.0
    %5392 = vmatpush1.msra.mxu0 %v5366
    %5393 = vmatprep.subr.mxu0 0.0
    %5394 = vmatpush1.msra.mxu0 %v5367
    %5395 = vmatprep.subr.mxu0 0.0
    %5396 = vmatpush1.msra.mxu0 %v5368
    %5397 = vmatprep.subr.mxu0 0.0
    %5398 = vmatpush1.msra.mxu0 0.0
    %5399 = vmatprep.subr.mxu0 0.0
    %5400 = vmatpush1.msra.mxu0 0.0
    %5401 = vmatprep.subr.mxu0 0.0
    %5402 = vmatpush1.msra.mxu0 0.0
    %5403 = vmatprep.subr.mxu0 0.0
    %5404 = vmatpush1.msra.mxu0 0.0
    %5405 = vmatprep.subr.mxu0 0.0
    %5406 = vmatpush1.msra.mxu0 0.0
    %5407 = vmatprep.subr.mxu0 0.0
    %5408 = vmatpush1.msra.mxu0 0.0
    %5409 = vmatprep.subr.mxu0 0.0
    %5410 = vmatpush1.msra.mxu0 0.0
    %5411 = vmatprep.subr.mxu0 0.0
    %5412 = vmatpush1.msra.mxu0 0.0
    %5413 = vmatprep.subr.mxu0 0.0
    %5414 = vmatpush1.msra.mxu0 0.0
    %5415 = vmatprep.subr.mxu0 0.0
    %5416 = vmatpush1.msra.mxu0 0.0
    %5417 = vmatprep.subr.mxu0 0.0
    %5418 = vmatpush1.msra.mxu0 0.0
    %5419 = vmatprep.subr.mxu0 0.0
    %5420 = vmatpush1.msra.mxu0 0.0
    %5421 = vmatprep.subr.mxu0 0.0
    %5422 = vmatpush1.msra.mxu0 0.0
    %5423 = vmatprep.subr.mxu0 0.0
    %5424 = vmatpush1.msra.mxu0 0.0
    %5425 = vmatprep.subr.mxu0 0.0
    %5426 = vmatpush1.msra.mxu0 0.0
    %5427 = vmatprep.subr.mxu0 0.0
    %5428 = vmatpush1.msra.mxu0 0.0
    %5429 = vmatprep.subr.mxu0 0.0
    %5430 = vmatpush1.msra.mxu0 0.0
    %5431 = vmatprep.subr.mxu0 0.0
    %5432 = vmatpush1.msra.mxu0 0.0
    %5433 = vmatprep.subr.mxu0 0.0
    %5434 = vmatpush1.msra.mxu0 0.0
    %5435 = vmatprep.subr.mxu0 0.0
    %5436 = vmatpush1.msra.mxu0 0.0
    %5437 = vmatprep.subr.mxu0 0.0
    %5438 = vmatpush1.msra.mxu0 0.0
    %5439 = vmatprep.subr.mxu0 0.0
    %5440 = vmatpush1.msra.mxu0 0.0
    %5441 = vmatprep.subr.mxu0 0.0
    %5442 = vmatpush1.msra.mxu0 0.0
    %5443 = vmatprep.subr.mxu0 0.0
    %5444 = vmatpush1.msra.mxu0 0.0
    %5445 = vmatprep.mubr.f32.mxu0 0.0
    %5446 = vmatmul.mubr.f32.gmra.mrb[0].mxu0 %v5370
    %v5447 = vpop.f32.mrb[0].mxu0
    %v5448 = vadd.f32 0.0, %v5447
    %v5449 = vpop.f32.mrb[0].mxu0
    %5450 = vmatprep.mubr.f32.mxu0 0.0
    %5451 = vmatmul.mubr.f32.gmra.mrb[0].mxu0 %v5373
    %v5452 = vpop.f32.mrb[0].mxu0
    %v5453 = vadd.f32 0.0, %v5452
    %v5454 = vpop.f32.mrb[0].mxu0
    %5455 = vmatprep.mubr.f32.mxu0 0.0
    %5456 = vmatmul.mubr.f32.gmra.mrb[0].mxu0 %v5376
    %v5457 = vpop.f32.mrb[0].mxu0
    %v5458 = vadd.f32 0.0, %v5457
    %v5459 = vpop.f32.mrb[0].mxu0
    %5460 = vmatprep.mubr.f32.mxu0 0.0
    %5461 = vmatmul.mubr.f32.gmra.mrb[0].mxu0 %v5379
    %v5462 = vpop.f32.mrb[0].mxu0
    %v5463 = vadd.f32 0.0, %v5462
    %v5464 = vpop.f32.mrb[0].mxu0
    %5465 = vdwg.mxu0
    %v5466 = vadd.f32 %v5356, %v5448
    %v5467 = vadd.f32 %v5357, %v5453
    %v5468 = vadd.f32 %v5358, %v5458
    %v5469 = vadd.f32 %v5359, %v5463
    %v5470 = vlaneseq
    %v5471 = vshrl.u32 %v5470, 7
    %v5472 = vsub.s32 0, %v5471
    %v5473 = vrot.slane %v4171, %v5472
    %v5474 = vadd.f32 %v5466, %v5473
    %v5475 = vadd.f32 %v5467, %v5473
    %v5476 = vadd.f32 %v5468, %v5473
    %v5477 = vadd.f32 %v5469, %v5473
    %v5478 = vmax.f32 %v5474, 0.0
    %v5479 = vmax.f32 %v5475, 0.0
    %v5480 = vmax.f32 %v5476, 0.0
    %v5481 = vmax.f32 %v5477, 0.0
    %v5482 = vadd.f32 %v5478, %v5479
    %v5483 = vadd.f32 %v5482, %v5480
    %v5484 = vadd.f32 %v5483, %v5481
    %v5485 = vrot.slane %v5484, 4
    %v5486 = vadd.f32 %v5484, %v5485
    %v5487 = vrot.slane %v5486, 2
    %v5488 = vadd.f32 %v5486, %v5487
    %v5489 = vrot.slane %v5488, 1
    %v5490 = vadd.f32 %v5488, %v5489
    %v5491 = vmul.f32 %v5478, %v5478
    %v5492 = vmul.f32 %v5479, %v5479
    %v5493 = vmul.f32 %v5480, %v5480
    %v5494 = vmul.f32 %v5481, %v5481
    %v5495 = vadd.f32 %v5491, %v5492
    %v5496 = vadd.f32 %v5495, %v5493
    %v5497 = vadd.f32 %v5496, %v5494
    %v5498 = vrot.slane %v5497, 4
    %v5499 = vadd.f32 %v5497, %v5498
    %v5500 = vrot.slane %v5499, 2
    %v5501 = vadd.f32 %v5499, %v5500
    %v5502 = vrot.slane %v5501, 1
    %v5503 = vadd.f32 %v5501, %v5502
    %v5504 = vmul.f32 %v5490, 0.03125
    %v5505 = vmul.f32 %v5503, 0.03125
    %v5506 = vmul.f32 %v5504, %v5504
    %v5507 = vsub.f32 %v5505, %v5506
    %v5508 = vmax.f32 %v5507, 0.0
    %v5509 = vadd.f32 %v5508, 1e-05
    %v5510 = vrsqrt.pop %v5509
    %v5511 = vmul.f32 %v4171, %v5510
    %v5512 = vmul.f32 %v5504, %v5511
    %v5514 = vrot.slane %v5512, 7
    %v5516 = vsub.f32 %v4171, %v5514
    %v5517 = vlaneseq
    %v5518 = vshrl.u32 %v5517, 7
    %v5519 = vsub.s32 1, %v5518
    %v5520 = vrot.slane %v5511, %v5519
    %v5521 = vmul.f32 %v5478, %v5520
    %v5522 = vmul.f32 %v5479, %v5520
    %v5523 = vmul.f32 %v5480, %v5520
    %v5524 = vmul.f32 %v5481, %v5520
    %v5525 = vlaneseq
    %v5526 = vshrl.u32 %v5525, 7
    %v5527 = vsub.s32 2, %v5526
    %v5528 = vrot.slane %v5516, %v5527
    %v5529 = vadd.f32 %v5521, %v5528
    %v5530 = vadd.f32 %v5522, %v5528
    %v5531 = vadd.f32 %v5523, %v5528
    %v5532 = vadd.f32 %v5524, %v5528
    %v5533 = vld [vmem:[%s12] sm:$0xf]
    %v5534 = vld [vmem:[%s12 + $0x4] sm:$0xf]
    %v5535 = vld [vmem:[%s12 + $0x8] sm:$0xf]
    %v5536 = vld [vmem:[%s12 + $0xc] sm:$0xf]
    %v5537 = vld [vmem:[%s12 + $0x10] sm:$0xf]
    %v5538 = vld [vmem:[%s12 + $0x14] sm:$0xf]
    %v5539 = vld [vmem:[%s12 + $0x18] sm:$0xf]
    %v5540 = vld [vmem:[%s12 + $0x1c] sm:$0xf]
    %v5541 = vld [vmem:[%s12 + $0x20] sm:$0xf]
    %v5542 = vld [vmem:[%s12 + $0x24] sm:$0xf]
    %v5543 = vld [vmem:[%s12 + $0x28] sm:$0xf]
    %v5544 = vld [vmem:[%s12 + $0x2c] sm:$0xf]
    %v5545 = vld [vmem:[%s12 + $0x30] sm:$0xf]
    %v5546 = vld [vmem:[%s12 + $0x34] sm:$0xf]
    %v5547 = vld [vmem:[%s12 + $0x38] sm:$0xf]
    %v5548 = vld [vmem:[%s12 + $0x3c] sm:$0xf]
    %v5549 = vld [vmem:[%s12 + $0x40] sm:$0xf]
    %v5550 = vld [vmem:[%s12 + $0x44] sm:$0xf]
    %v5551 = vld [vmem:[%s12 + $0x48] sm:$0xf]
    %v5552 = vld [vmem:[%s12 + $0x4c] sm:$0xf]
    %v5553 = vld [vmem:[%s12 + $0x50] sm:$0xf]
    %v5554 = vld [vmem:[%s12 + $0x54] sm:$0xf]
    %v5555 = vld [vmem:[%s12 + $0x58] sm:$0xf]
    %v5556 = vld [vmem:[%s12 + $0x5c] sm:$0xf]
    %v5557 = vld [vmem:[%s12 + $0x60] sm:$0xf]
    %v5558 = vld [vmem:[%s12 + $0x64] sm:$0xf]
    %v5559 = vld [vmem:[%s12 + $0x68] sm:$0xf]
    %v5560 = vld [vmem:[%s12 + $0x6c] sm:$0xf]
    %v5561 = vld [vmem:[%s12 + $0x70] sm:$0xf]
    %v5562 = vld [vmem:[%s12 + $0x74] sm:$0xf]
    %v5563 = vld [vmem:[%s12 + $0x78] sm:$0xf]
    %v5564 = vld [vmem:[%s12 + $0x7c] sm:$0xf]
    %v5565 = vld [vmem:[%s12 + $0x80] sm:$0xf]
    %v5566 = vld [vmem:[%s12 + $0x84] sm:$0xf]
    %v5567 = vld [vmem:[%s12 + $0x88] sm:$0xf]
    %v5568 = vld [vmem:[%s12 + $0x8c] sm:$0xf]
    %v5569 = vunpack.c.l.bf16 %v5533
    %v5570 = vunpack.c.l.bf16 %v5534
    %v5571 = vunpack.c.l.bf16 %v5535
    %v5572 = vunpack.c.l.bf16 %v5536
    %v5573 = vunpack.c.l.bf16 %v5537
    %v5574 = vunpack.c.l.bf16 %v5538
    %v5575 = vunpack.c.l.bf16 %v5539
    %v5576 = vunpack.c.l.bf16 %v5540
    %v5577 = vunpack.c.l.bf16 %v5541
    %v5578 = vunpack.c.l.bf16 %v5542
    %v5579 = vunpack.c.l.bf16 %v5543
    %v5580 = vunpack.c.l.bf16 %v5544
    %v5581 = vunpack.c.l.bf16 %v5545
    %v5582 = vunpack.c.l.bf16 %v5546
    %v5583 = vunpack.c.l.bf16 %v5547
    %v5584 = vunpack.c.l.bf16 %v5548
    %v5585 = vunpack.c.l.bf16 %v5549
    %v5586 = vunpack.c.l.bf16 %v5550
    %v5587 = vunpack.c.l.bf16 %v5551
    %v5588 = vunpack.c.l.bf16 %v5552
    %v5589 = vunpack.c.l.bf16 %v5553
    %v5590 = vunpack.c.l.bf16 %v5554
    %v5591 = vunpack.c.l.bf16 %v5555
    %v5592 = vunpack.c.l.bf16 %v5556
    %v5593 = vunpack.c.l.bf16 %v5557
    %v5594 = vunpack.c.l.bf16 %v5558
    %v5595 = vunpack.c.l.bf16 %v5559
    %v5596 = vunpack.c.l.bf16 %v5560
    %v5597 = vunpack.c.l.bf16 %v5561
    %v5598 = vunpack.c.l.bf16 %v5562
    %v5599 = vunpack.c.l.bf16 %v5563
    %v5600 = vunpack.c.l.bf16 %v5564
    %v5601 = vunpack.c.l.bf16 %v5565
    %v5602 = vunpack.c.l.bf16 %v5566
    %v5603 = vunpack.c.l.bf16 %v5567
    %v5604 = vunpack.c.l.bf16 %v5568
    %vm5605 = vcmask 261120
    %v5607 = vsel %vm5605, %v5569, 0
    %v5610 = vsel %vm5605, %v5570, 0
    %v5613 = vsel %vm5605, %v5571, 0
    %v5616 = vsel %vm5605, %v5572, 0
    %v5619 = vsel %vm5605, %v5573, 0
    %v5622 = vsel %vm5605, %v5574, 0
    %v5625 = vsel %vm5605, %v5575, 0
    %v5628 = vsel %vm5605, %v5576, 0
    %v5631 = vsel %vm5605, %v5577, 0
    %v5634 = vsel %vm5605, %v5578, 0
    %v5637 = vsel %vm5605, %v5579, 0
    %v5640 = vsel %vm5605, %v5580, 0
    %v5643 = vsel %vm5605, %v5581, 0
    %v5646 = vsel %vm5605, %v5582, 0
    %v5649 = vsel %vm5605, %v5583, 0
    %v5652 = vsel %vm5605, %v5584, 0
    %v5655 = vsel %vm5605, %v5585, 0
    %v5658 = vsel %vm5605, %v5586, 0
    %v5661 = vsel %vm5605, %v5587, 0
    %v5664 = vsel %vm5605, %v5588, 0
    %v5667 = vsel %vm5605, %v5589, 0
    %v5670 = vsel %vm5605, %v5590, 0
    %v5673 = vsel %vm5605, %v5591, 0
    %v5676 = vsel %vm5605, %v5592, 0
    %v5679 = vsel %vm5605, %v5593, 0
    %v5682 = vsel %vm5605, %v5594, 0
    %v5685 = vsel %vm5605, %v5595, 0
    %v5688 = vsel %vm5605, %v5596, 0
    %v5691 = vsel %vm5605, %v5597, 0
    %v5694 = vsel %vm5605, %v5598, 0
    %v5697 = vsel %vm5605, %v5599, 0
    %v5700 = vsel %vm5605, %v5600, 0
    %v5703 = vsel %vm5605, %v5601, 0
    %v5706 = vsel %vm5605, %v5602, 0
    %v5709 = vsel %vm5605, %v5603, 0
    %v5712 = vsel %vm5605, %v5604, 0
    %5714 = vmatprep.subr.mxu0 0.0
    %5715 = vmatpush1.msra.mxu0 %v5529
    %5716 = vmatprep.subr.mxu0 0.0
    %5717 = vmatpush1.msra.mxu0 %v5530
    %5718 = vmatprep.subr.mxu0 0.0
    %5719 = vmatpush1.msra.mxu0 %v5531
    %5720 = vmatprep.subr.mxu0 0.0
    %5721 = vmatpush1.msra.mxu0 %v5532
    %5722 = vmatprep.subr.mxu0 0.0
    %5723 = vmatpush1.msra.mxu0 0.0
    %5724 = vmatprep.subr.mxu0 0.0
    %5725 = vmatpush1.msra.mxu0 0.0
    %5726 = vmatprep.subr.mxu0 0.0
    %5727 = vmatpush1.msra.mxu0 0.0
    %5728 = vmatprep.subr.mxu0 0.0
    %5729 = vmatpush1.msra.mxu0 0.0
    %5730 = vmatprep.subr.mxu0 0.0
    %5731 = vmatpush1.msra.mxu0 0.0
    %5732 = vmatprep.subr.mxu0 0.0
    %5733 = vmatpush1.msra.mxu0 0.0
    %5734 = vmatprep.subr.mxu0 0.0
    %5735 = vmatpush1.msra.mxu0 0.0
    %5736 = vmatprep.subr.mxu0 0.0
    %5737 = vmatpush1.msra.mxu0 0.0
    %5738 = vmatprep.subr.mxu0 0.0
    %5739 = vmatpush1.msra.mxu0 0.0
    %5740 = vmatprep.subr.mxu0 0.0
    %5741 = vmatpush1.msra.mxu0 0.0
    %5742 = vmatprep.subr.mxu0 0.0
    %5743 = vmatpush1.msra.mxu0 0.0
    %5744 = vmatprep.subr.mxu0 0.0
    %5745 = vmatpush1.msra.mxu0 0.0
    %5746 = vmatprep.subr.mxu0 0.0
    %5747 = vmatpush1.msra.mxu0 0.0
    %5748 = vmatprep.subr.mxu0 0.0
    %5749 = vmatpush1.msra.mxu0 0.0
    %5750 = vmatprep.subr.mxu0 0.0
    %5751 = vmatpush1.msra.mxu0 0.0
    %5752 = vmatprep.subr.mxu0 0.0
    %5753 = vmatpush1.msra.mxu0 0.0
    %5754 = vmatprep.subr.mxu0 0.0
    %5755 = vmatpush1.msra.mxu0 0.0
    %5756 = vmatprep.subr.mxu0 0.0
    %5757 = vmatpush1.msra.mxu0 0.0
    %5758 = vmatprep.subr.mxu0 0.0
    %5759 = vmatpush1.msra.mxu0 0.0
    %5760 = vmatprep.subr.mxu0 0.0
    %5761 = vmatpush1.msra.mxu0 0.0
    %5762 = vmatprep.subr.mxu0 0.0
    %5763 = vmatpush1.msra.mxu0 0.0
    %5764 = vmatprep.subr.mxu0 0.0
    %5765 = vmatpush1.msra.mxu0 0.0
    %5766 = vmatprep.subr.mxu0 0.0
    %5767 = vmatpush1.msra.mxu0 0.0
    %5768 = vmatprep.subr.mxu0 0.0
    %5769 = vmatpush1.msra.mxu0 0.0
    %5770 = vmatprep.subr.mxu0 0.0
    %5771 = vmatpush1.msra.mxu0 0.0
    %5772 = vmatprep.subr.mxu0 0.0
    %5773 = vmatpush1.msra.mxu0 0.0
    %5774 = vmatprep.subr.mxu0 0.0
    %5775 = vmatpush1.msra.mxu0 0.0
    %5776 = vmatprep.subr.mxu0 0.0
    %5777 = vmatpush1.msra.mxu0 0.0
    %5778 = vmatprep.mubr.f32.mxu0 0.0
    %5779 = vmatmul.mubr.f32.gmra.mrb[0].mxu0 %v5607
    %v5780 = vpop.f32.mrb[0].mxu0
    %v5781 = vadd.f32 0.0, %v5780
    %v5782 = vpop.f32.mrb[0].mxu0
    %5783 = vmatprep.mubr.f32.mxu0 0.0
    %5784 = vmatmul.mubr.f32.gmra.mrb[0].mxu0 %v5610
    %v5785 = vpop.f32.mrb[0].mxu0
    %v5786 = vadd.f32 0.0, %v5785
    %v5787 = vpop.f32.mrb[0].mxu0
    %5788 = vmatprep.mubr.f32.mxu0 0.0
    %5789 = vmatmul.mubr.f32.gmra.mrb[0].mxu0 %v5613
    %v5790 = vpop.f32.mrb[0].mxu0
    %v5791 = vadd.f32 0.0, %v5790
    %v5792 = vpop.f32.mrb[0].mxu0
    %5793 = vmatprep.mubr.f32.mxu0 0.0
    %5794 = vmatmul.mubr.f32.gmra.mrb[0].mxu0 %v5616
    %v5795 = vpop.f32.mrb[0].mxu0
    %v5796 = vadd.f32 0.0, %v5795
    %v5797 = vpop.f32.mrb[0].mxu0
    %5798 = vmatprep.mubr.f32.mxu0 0.0
    %5799 = vmatmul.mubr.f32.gmra.mrb[0].mxu0 %v5619
    %v5800 = vpop.f32.mrb[0].mxu0
    %v5801 = vadd.f32 0.0, %v5800
    %v5802 = vpop.f32.mrb[0].mxu0
    %5803 = vmatprep.mubr.f32.mxu0 0.0
    %5804 = vmatmul.mubr.f32.gmra.mrb[0].mxu0 %v5622
    %v5805 = vpop.f32.mrb[0].mxu0
    %v5806 = vadd.f32 0.0, %v5805
    %v5807 = vpop.f32.mrb[0].mxu0
    %5808 = vmatprep.mubr.f32.mxu0 0.0
    %5809 = vmatmul.mubr.f32.gmra.mrb[0].mxu0 %v5625
    %v5810 = vpop.f32.mrb[0].mxu0
    %v5811 = vadd.f32 0.0, %v5810
    %v5812 = vpop.f32.mrb[0].mxu0
    %5813 = vmatprep.mubr.f32.mxu0 0.0
    %5814 = vmatmul.mubr.f32.gmra.mrb[0].mxu0 %v5628
    %v5815 = vpop.f32.mrb[0].mxu0
    %v5816 = vadd.f32 0.0, %v5815
    %v5817 = vpop.f32.mrb[0].mxu0
    %5818 = vmatprep.mubr.f32.mxu0 0.0
    %5819 = vmatmul.mubr.f32.gmra.mrb[0].mxu0 %v5631
    %v5820 = vpop.f32.mrb[0].mxu0
    %v5821 = vadd.f32 0.0, %v5820
    %v5822 = vpop.f32.mrb[0].mxu0
    %5823 = vmatprep.mubr.f32.mxu0 0.0
    %5824 = vmatmul.mubr.f32.gmra.mrb[0].mxu0 %v5634
    %v5825 = vpop.f32.mrb[0].mxu0
    %v5826 = vadd.f32 0.0, %v5825
    %v5827 = vpop.f32.mrb[0].mxu0
    %5828 = vmatprep.mubr.f32.mxu0 0.0
    %5829 = vmatmul.mubr.f32.gmra.mrb[0].mxu0 %v5637
    %v5830 = vpop.f32.mrb[0].mxu0
    %v5831 = vadd.f32 0.0, %v5830
    %v5832 = vpop.f32.mrb[0].mxu0
    %5833 = vmatprep.mubr.f32.mxu0 0.0
    %5834 = vmatmul.mubr.f32.gmra.mrb[0].mxu0 %v5640
    %v5835 = vpop.f32.mrb[0].mxu0
    %v5836 = vadd.f32 0.0, %v5835
    %v5837 = vpop.f32.mrb[0].mxu0
    %5838 = vmatprep.mubr.f32.mxu0 0.0
    %5839 = vmatmul.mubr.f32.gmra.mrb[0].mxu0 %v5643
    %v5840 = vpop.f32.mrb[0].mxu0
    %v5841 = vadd.f32 0.0, %v5840
    %v5842 = vpop.f32.mrb[0].mxu0
    %5843 = vmatprep.mubr.f32.mxu0 0.0
    %5844 = vmatmul.mubr.f32.gmra.mrb[0].mxu0 %v5646
    %v5845 = vpop.f32.mrb[0].mxu0
    %v5846 = vadd.f32 0.0, %v5845
    %v5847 = vpop.f32.mrb[0].mxu0
    %5848 = vmatprep.mubr.f32.mxu0 0.0
    %5849 = vmatmul.mubr.f32.gmra.mrb[0].mxu0 %v5649
    %v5850 = vpop.f32.mrb[0].mxu0
    %v5851 = vadd.f32 0.0, %v5850
    %v5852 = vpop.f32.mrb[0].mxu0
    %5853 = vmatprep.mubr.f32.mxu0 0.0
    %5854 = vmatmul.mubr.f32.gmra.mrb[0].mxu0 %v5652
    %v5855 = vpop.f32.mrb[0].mxu0
    %v5856 = vadd.f32 0.0, %v5855
    %v5857 = vpop.f32.mrb[0].mxu0
    %5858 = vmatprep.mubr.f32.mxu0 0.0
    %5859 = vmatmul.mubr.f32.gmra.mrb[0].mxu0 %v5655
    %v5860 = vpop.f32.mrb[0].mxu0
    %v5861 = vadd.f32 0.0, %v5860
    %v5862 = vpop.f32.mrb[0].mxu0
    %5863 = vmatprep.mubr.f32.mxu0 0.0
    %5864 = vmatmul.mubr.f32.gmra.mrb[0].mxu0 %v5658
    %v5865 = vpop.f32.mrb[0].mxu0
    %v5866 = vadd.f32 0.0, %v5865
    %v5867 = vpop.f32.mrb[0].mxu0
    %5868 = vmatprep.mubr.f32.mxu0 0.0
    %5869 = vmatmul.mubr.f32.gmra.mrb[0].mxu0 %v5661
    %v5870 = vpop.f32.mrb[0].mxu0
    %v5871 = vadd.f32 0.0, %v5870
    %v5872 = vpop.f32.mrb[0].mxu0
    %5873 = vmatprep.mubr.f32.mxu0 0.0
    %5874 = vmatmul.mubr.f32.gmra.mrb[0].mxu0 %v5664
    %v5875 = vpop.f32.mrb[0].mxu0
    %v5876 = vadd.f32 0.0, %v5875
    %v5877 = vpop.f32.mrb[0].mxu0
    %5878 = vmatprep.mubr.f32.mxu0 0.0
    %5879 = vmatmul.mubr.f32.gmra.mrb[0].mxu0 %v5667
    %v5880 = vpop.f32.mrb[0].mxu0
    %v5881 = vadd.f32 0.0, %v5880
    %v5882 = vpop.f32.mrb[0].mxu0
    %5883 = vmatprep.mubr.f32.mxu0 0.0
    %5884 = vmatmul.mubr.f32.gmra.mrb[0].mxu0 %v5670
    %v5885 = vpop.f32.mrb[0].mxu0
    %v5886 = vadd.f32 0.0, %v5885
    %v5887 = vpop.f32.mrb[0].mxu0
    %5888 = vmatprep.mubr.f32.mxu0 0.0
    %5889 = vmatmul.mubr.f32.gmra.mrb[0].mxu0 %v5673
    %v5890 = vpop.f32.mrb[0].mxu0
    %v5891 = vadd.f32 0.0, %v5890
    %v5892 = vpop.f32.mrb[0].mxu0
    %5893 = vmatprep.mubr.f32.mxu0 0.0
    %5894 = vmatmul.mubr.f32.gmra.mrb[0].mxu0 %v5676
    %v5895 = vpop.f32.mrb[0].mxu0
    %v5896 = vadd.f32 0.0, %v5895
    %v5897 = vpop.f32.mrb[0].mxu0
    %5898 = vmatprep.mubr.f32.mxu0 0.0
    %5899 = vmatmul.mubr.f32.gmra.mrb[0].mxu0 %v5679
    %v5900 = vpop.f32.mrb[0].mxu0
    %v5901 = vadd.f32 0.0, %v5900
    %v5902 = vpop.f32.mrb[0].mxu0
    %5903 = vmatprep.mubr.f32.mxu0 0.0
    %5904 = vmatmul.mubr.f32.gmra.mrb[0].mxu0 %v5682
    %v5905 = vpop.f32.mrb[0].mxu0
    %v5906 = vadd.f32 0.0, %v5905
    %v5907 = vpop.f32.mrb[0].mxu0
    %5908 = vmatprep.mubr.f32.mxu0 0.0
    %5909 = vmatmul.mubr.f32.gmra.mrb[0].mxu0 %v5685
    %v5910 = vpop.f32.mrb[0].mxu0
    %v5911 = vadd.f32 0.0, %v5910
    %v5912 = vpop.f32.mrb[0].mxu0
    %5913 = vmatprep.mubr.f32.mxu0 0.0
    %5914 = vmatmul.mubr.f32.gmra.mrb[0].mxu0 %v5688
    %v5915 = vpop.f32.mrb[0].mxu0
    %v5916 = vadd.f32 0.0, %v5915
    %v5917 = vpop.f32.mrb[0].mxu0
    %5918 = vmatprep.mubr.f32.mxu0 0.0
    %5919 = vmatmul.mubr.f32.gmra.mrb[0].mxu0 %v5691
    %v5920 = vpop.f32.mrb[0].mxu0
    %v5921 = vadd.f32 0.0, %v5920
    %v5922 = vpop.f32.mrb[0].mxu0
    %5923 = vmatprep.mubr.f32.mxu0 0.0
    %5924 = vmatmul.mubr.f32.gmra.mrb[0].mxu0 %v5694
    %v5925 = vpop.f32.mrb[0].mxu0
    %v5926 = vadd.f32 0.0, %v5925
    %v5927 = vpop.f32.mrb[0].mxu0
    %5928 = vmatprep.mubr.f32.mxu0 0.0
    %5929 = vmatmul.mubr.f32.gmra.mrb[0].mxu0 %v5697
    %v5930 = vpop.f32.mrb[0].mxu0
    %v5931 = vadd.f32 0.0, %v5930
    %v5932 = vpop.f32.mrb[0].mxu0
    %5933 = vmatprep.mubr.f32.mxu0 0.0
    %5934 = vmatmul.mubr.f32.gmra.mrb[0].mxu0 %v5700
    %v5935 = vpop.f32.mrb[0].mxu0
    %v5936 = vadd.f32 0.0, %v5935
    %v5937 = vpop.f32.mrb[0].mxu0
    %5938 = vmatprep.mubr.f32.mxu0 0.0
    %5939 = vmatmul.mubr.f32.gmra.mrb[0].mxu0 %v5703
    %v5940 = vpop.f32.mrb[0].mxu0
    %v5941 = vadd.f32 0.0, %v5940
    %v5942 = vpop.f32.mrb[0].mxu0
    %5943 = vmatprep.mubr.f32.mxu0 0.0
    %5944 = vmatmul.mubr.f32.gmra.mrb[0].mxu0 %v5706
    %v5945 = vpop.f32.mrb[0].mxu0
    %v5946 = vadd.f32 0.0, %v5945
    %v5947 = vpop.f32.mrb[0].mxu0
    %5948 = vmatprep.mubr.f32.mxu0 0.0
    %5949 = vmatmul.mubr.f32.gmra.mrb[0].mxu0 %v5709
    %v5950 = vpop.f32.mrb[0].mxu0
    %v5951 = vadd.f32 0.0, %v5950
    %v5952 = vpop.f32.mrb[0].mxu0
    %5953 = vmatprep.mubr.f32.mxu0 0.0
    %5954 = vmatmul.mubr.f32.gmra.mrb[0].mxu0 %v5712
    %v5955 = vpop.f32.mrb[0].mxu0
    %v5956 = vadd.f32 0.0, %v5955
    %v5957 = vpop.f32.mrb[0].mxu0
    %5958 = vdwg.mxu0
    %v5959 = vld [vmem:[%s13] sm:$0xff]
    %v5960 = vld [vmem:[%s13 + $0x8] sm:$0xff]
    %v5961 = vld [vmem:[%s13 + $0x10] sm:$0xff]
    %v5962 = vld [vmem:[%s13 + $0x18] sm:$0xff]
    %v5963 = vld [vmem:[%s13 + $0x20] sm:$0xff]
    %v5964 = vld [vmem:[%s13 + $0x28] sm:$0xff]
    %v5965 = vld [vmem:[%s13 + $0x30] sm:$0xff]
    %v5966 = vld [vmem:[%s13 + $0x38] sm:$0xff]
    %v5967 = vld [vmem:[%s13 + $0x40] sm:$0xff]
    %v5968 = vld [vmem:[%s13 + $0x48] sm:$0xff]
    %v5969 = vld [vmem:[%s13 + $0x50] sm:$0xff]
    %v5970 = vld [vmem:[%s13 + $0x58] sm:$0xff]
    %v5971 = vld [vmem:[%s13 + $0x60] sm:$0xff]
    %v5972 = vld [vmem:[%s13 + $0x68] sm:$0xff]
    %v5973 = vld [vmem:[%s13 + $0x70] sm:$0xff]
    %v5974 = vld [vmem:[%s13 + $0x78] sm:$0xff]
    %s5975 = scalar_lea.vmem %s13, 128
    %v5976 = vld [vmem:[%s5975] sm:$0xff]
    %v5977 = vld [vmem:[%s5975 + $0x8] sm:$0xff]
    %v5978 = vld [vmem:[%s5975 + $0x10] sm:$0xff]
    %v5979 = vld [vmem:[%s5975 + $0x18] sm:$0xff]
    %v5980 = vld [vmem:[%s5975 + $0x20] sm:$0xff]
    %v5981 = vld [vmem:[%s5975 + $0x28] sm:$0xff]
    %v5982 = vld [vmem:[%s5975 + $0x30] sm:$0xff]
    %v5983 = vld [vmem:[%s5975 + $0x38] sm:$0xff]
    %v5984 = vld [vmem:[%s5975 + $0x40] sm:$0xff]
    %v5985 = vld [vmem:[%s5975 + $0x48] sm:$0xff]
    %v5986 = vld [vmem:[%s5975 + $0x50] sm:$0xff]
    %v5987 = vld [vmem:[%s5975 + $0x58] sm:$0xff]
    %v5988 = vld [vmem:[%s5975 + $0x60] sm:$0xff]
    %v5989 = vld [vmem:[%s5975 + $0x68] sm:$0xff]
    %v5990 = vld [vmem:[%s5975 + $0x70] sm:$0xff]
    %v5991 = vld [vmem:[%s5975 + $0x78] sm:$0xff]
    %5992 = vmatprep.subr.mxu0 0.0
    %5993 = vmatpush1.msra.mxu0 %v5976
    %5994 = vmatprep.subr.mxu0 0.0
    %5995 = vmatpush1.msra.mxu0 %v5977
    %5996 = vmatprep.subr.mxu0 0.0
    %5997 = vmatpush1.msra.mxu0 %v5978
    %5998 = vmatprep.subr.mxu0 0.0
    %5999 = vmatpush1.msra.mxu0 %v5979
    %6000 = vmatprep.subr.mxu0 0.0
    %6001 = vmatpush1.msra.mxu0 %v5980
    %6002 = vmatprep.subr.mxu0 0.0
    %6003 = vmatpush1.msra.mxu0 %v5981
    %6004 = vmatprep.subr.mxu0 0.0
    %6005 = vmatpush1.msra.mxu0 %v5982
    %6006 = vmatprep.subr.mxu0 0.0
    %6007 = vmatpush1.msra.mxu0 %v5983
    %6008 = vmatprep.subr.mxu0 0.0
    %6009 = vmatpush1.msra.mxu0 %v5984
    %6010 = vmatprep.subr.mxu0 0.0
    %6011 = vmatpush1.msra.mxu0 %v5985
    %6012 = vmatprep.subr.mxu0 0.0
    %6013 = vmatpush1.msra.mxu0 %v5986
    %6014 = vmatprep.subr.mxu0 0.0
    %6015 = vmatpush1.msra.mxu0 %v5987
    %6016 = vmatprep.subr.mxu0 0.0
    %6017 = vmatpush1.msra.mxu0 %v5988
    %6018 = vmatprep.subr.mxu0 0.0
    %6019 = vmatpush1.msra.mxu0 %v5989
    %6020 = vmatprep.subr.mxu0 0.0
    %6021 = vmatpush1.msra.mxu0 %v5990
    %6022 = vmatprep.subr.mxu0 0.0
    %6023 = vmatpush1.msra.mxu0 %v5991
    %6024 = vmatprep.subr.mxu0 0.0
    %6025 = vmatpush1.msra.mxu0 0.0
    %6026 = vmatprep.subr.mxu0 0.0
    %6027 = vmatpush1.msra.mxu0 0.0
    %6028 = vmatprep.subr.mxu0 0.0
    %6029 = vmatpush1.msra.mxu0 0.0
    %6030 = vmatprep.subr.mxu0 0.0
    %6031 = vmatpush1.msra.mxu0 0.0
    %6032 = vmatprep.subr.mxu0 0.0
    %6033 = vmatpush1.msra.mxu0 0.0
    %6034 = vmatprep.subr.mxu0 0.0
    %6035 = vmatpush1.msra.mxu0 0.0
    %6036 = vmatprep.subr.mxu0 0.0
    %6037 = vmatpush1.msra.mxu0 0.0
    %6038 = vmatprep.subr.mxu0 0.0
    %6039 = vmatpush1.msra.mxu0 0.0
    %6040 = vmatprep.subr.mxu0 0.0
    %6041 = vmatpush1.msra.mxu0 0.0
    %6042 = vmatprep.subr.mxu0 0.0
    %6043 = vmatpush1.msra.mxu0 0.0
    %6044 = vmatprep.subr.mxu0 0.0
    %6045 = vmatpush1.msra.mxu0 0.0
    %6046 = vmatprep.subr.mxu0 0.0
    %6047 = vmatpush1.msra.mxu0 0.0
    %6048 = vmatprep.subr.mxu0 0.0
    %6049 = vmatpush1.msra.mxu0 0.0
    %6050 = vmatprep.subr.mxu0 0.0
    %6051 = vmatpush1.msra.mxu0 0.0
    %6052 = vmatprep.subr.mxu0 0.0
    %6053 = vmatpush1.msra.mxu0 0.0
    %6054 = vmatprep.subr.mxu0 0.0
    %6055 = vmatpush1.msra.mxu0 0.0
    %6056 = vmatprep.mubr.f32.mxu0 0.0
    %6057 = vmatmul.mubr.f32.gmra.mrb[0].mxu0 %v5801
    %v6058 = vpop.f32.mrb[0].mxu0
    %v6059 = vadd.f32 0.0, %v6058
    %v6060 = vpop.f32.mrb[0].mxu0
    %6061 = vmatprep.mubr.f32.mxu0 0.0
    %6062 = vmatmul.mubr.f32.gmra.mrb[0].mxu0 %v5806
    %v6063 = vpop.f32.mrb[0].mxu0
    %v6064 = vadd.f32 0.0, %v6063
    %v6065 = vpop.f32.mrb[0].mxu0
    %6066 = vmatprep.mubr.f32.mxu0 0.0
    %6067 = vmatmul.mubr.f32.gmra.mrb[0].mxu0 %v5811
    %v6068 = vpop.f32.mrb[0].mxu0
    %v6069 = vadd.f32 0.0, %v6068
    %v6070 = vpop.f32.mrb[0].mxu0
    %6071 = vmatprep.mubr.f32.mxu0 0.0
    %6072 = vmatmul.mubr.f32.gmra.mrb[0].mxu0 %v5816
    %v6073 = vpop.f32.mrb[0].mxu0
    %v6074 = vadd.f32 0.0, %v6073
    %v6075 = vpop.f32.mrb[0].mxu0
    %6076 = vdwg.mxu0
    %6077 = vmatprep.subr.mxu0 0.0
    %6078 = vmatpush1.msra.mxu0 %v5959
    %6079 = vmatprep.subr.mxu0 0.0
    %6080 = vmatpush1.msra.mxu0 %v5960
    %6081 = vmatprep.subr.mxu0 0.0
    %6082 = vmatpush1.msra.mxu0 %v5961
    %6083 = vmatprep.subr.mxu0 0.0
    %6084 = vmatpush1.msra.mxu0 %v5962
    %6085 = vmatprep.subr.mxu0 0.0
    %6086 = vmatpush1.msra.mxu0 %v5963
    %6087 = vmatprep.subr.mxu0 0.0
    %6088 = vmatpush1.msra.mxu0 %v5964
    %6089 = vmatprep.subr.mxu0 0.0
    %6090 = vmatpush1.msra.mxu0 %v5965
    %6091 = vmatprep.subr.mxu0 0.0
    %6092 = vmatpush1.msra.mxu0 %v5966
    %6093 = vmatprep.subr.mxu0 0.0
    %6094 = vmatpush1.msra.mxu0 %v5967
    %6095 = vmatprep.subr.mxu0 0.0
    %6096 = vmatpush1.msra.mxu0 %v5968
    %6097 = vmatprep.subr.mxu0 0.0
    %6098 = vmatpush1.msra.mxu0 %v5969
    %6099 = vmatprep.subr.mxu0 0.0
    %6100 = vmatpush1.msra.mxu0 %v5970
    %6101 = vmatprep.subr.mxu0 0.0
    %6102 = vmatpush1.msra.mxu0 %v5971
    %6103 = vmatprep.subr.mxu0 0.0
    %6104 = vmatpush1.msra.mxu0 %v5972
    %6105 = vmatprep.subr.mxu0 0.0
    %6106 = vmatpush1.msra.mxu0 %v5973
    %6107 = vmatprep.subr.mxu0 0.0
    %6108 = vmatpush1.msra.mxu0 %v5974
    %6109 = vmatprep.subr.mxu0 0.0
    %6110 = vmatpush1.msra.mxu0 0.0
    %6111 = vmatprep.subr.mxu0 0.0
    %6112 = vmatpush1.msra.mxu0 0.0
    %6113 = vmatprep.subr.mxu0 0.0
    %6114 = vmatpush1.msra.mxu0 0.0
    %6115 = vmatprep.subr.mxu0 0.0
    %6116 = vmatpush1.msra.mxu0 0.0
    %6117 = vmatprep.subr.mxu0 0.0
    %6118 = vmatpush1.msra.mxu0 0.0
    %6119 = vmatprep.subr.mxu0 0.0
    %6120 = vmatpush1.msra.mxu0 0.0
    %6121 = vmatprep.subr.mxu0 0.0
    %6122 = vmatpush1.msra.mxu0 0.0
    %6123 = vmatprep.subr.mxu0 0.0
    %6124 = vmatpush1.msra.mxu0 0.0
    %6125 = vmatprep.subr.mxu0 0.0
    %6126 = vmatpush1.msra.mxu0 0.0
    %6127 = vmatprep.subr.mxu0 0.0
    %6128 = vmatpush1.msra.mxu0 0.0
    %6129 = vmatprep.subr.mxu0 0.0
    %6130 = vmatpush1.msra.mxu0 0.0
    %6131 = vmatprep.subr.mxu0 0.0
    %6132 = vmatpush1.msra.mxu0 0.0
    %6133 = vmatprep.subr.mxu0 0.0
    %6134 = vmatpush1.msra.mxu0 0.0
    %6135 = vmatprep.subr.mxu0 0.0
    %6136 = vmatpush1.msra.mxu0 0.0
    %6137 = vmatprep.subr.mxu0 0.0
    %6138 = vmatpush1.msra.mxu0 0.0
    %6139 = vmatprep.subr.mxu0 0.0
    %6140 = vmatpush1.msra.mxu0 0.0
    %6141 = vmatprep.mubr.f32.mxu0 0.0
    %6142 = vmatmul.mubr.f32.gmra.mrb[0].mxu0 %v5781
    %v6143 = vpop.f32.mrb[0].mxu0
    %v6144 = vadd.f32 %v6059, %v6143
    %v6145 = vpop.f32.mrb[0].mxu0
    %6146 = vmatprep.mubr.f32.mxu0 0.0
    %6147 = vmatmul.mubr.f32.gmra.mrb[0].mxu0 %v5786
    %v6148 = vpop.f32.mrb[0].mxu0
    %v6149 = vadd.f32 %v6064, %v6148
    %v6150 = vpop.f32.mrb[0].mxu0
    %6151 = vmatprep.mubr.f32.mxu0 0.0
    %6152 = vmatmul.mubr.f32.gmra.mrb[0].mxu0 %v5791
    %v6153 = vpop.f32.mrb[0].mxu0
    %v6154 = vadd.f32 %v6069, %v6153
    %v6155 = vpop.f32.mrb[0].mxu0
    %6156 = vmatprep.mubr.f32.mxu0 0.0
    %6157 = vmatmul.mubr.f32.gmra.mrb[0].mxu0 %v5796
    %v6158 = vpop.f32.mrb[0].mxu0
    %v6159 = vadd.f32 %v6074, %v6158
    %v6160 = vpop.f32.mrb[0].mxu0
    %6161 = vdwg.mxu0
    %s6162 = scalar_lea.vmem %s13, 256
    %v6163 = vld [vmem:[%s6162] sm:$0xff]
    %v6164 = vld [vmem:[%s6162 + $0x8] sm:$0xff]
    %v6165 = vld [vmem:[%s6162 + $0x10] sm:$0xff]
    %v6166 = vld [vmem:[%s6162 + $0x18] sm:$0xff]
    %v6167 = vld [vmem:[%s6162 + $0x20] sm:$0xff]
    %v6168 = vld [vmem:[%s6162 + $0x28] sm:$0xff]
    %v6169 = vld [vmem:[%s6162 + $0x30] sm:$0xff]
    %v6170 = vld [vmem:[%s6162 + $0x38] sm:$0xff]
    %v6171 = vld [vmem:[%s6162 + $0x40] sm:$0xff]
    %v6172 = vld [vmem:[%s6162 + $0x48] sm:$0xff]
    %v6173 = vld [vmem:[%s6162 + $0x50] sm:$0xff]
    %v6174 = vld [vmem:[%s6162 + $0x58] sm:$0xff]
    %v6175 = vld [vmem:[%s6162 + $0x60] sm:$0xff]
    %v6176 = vld [vmem:[%s6162 + $0x68] sm:$0xff]
    %v6177 = vld [vmem:[%s6162 + $0x70] sm:$0xff]
    %v6178 = vld [vmem:[%s6162 + $0x78] sm:$0xff]
    %6179 = vmatprep.subr.mxu0 0.0
    %6180 = vmatpush1.msra.mxu0 %v6163
    %6181 = vmatprep.subr.mxu0 0.0
    %6182 = vmatpush1.msra.mxu0 %v6164
    %6183 = vmatprep.subr.mxu0 0.0
    %6184 = vmatpush1.msra.mxu0 %v6165
    %6185 = vmatprep.subr.mxu0 0.0
    %6186 = vmatpush1.msra.mxu0 %v6166
    %6187 = vmatprep.subr.mxu0 0.0
    %6188 = vmatpush1.msra.mxu0 %v6167
    %6189 = vmatprep.subr.mxu0 0.0
    %6190 = vmatpush1.msra.mxu0 %v6168
    %6191 = vmatprep.subr.mxu0 0.0
    %6192 = vmatpush1.msra.mxu0 %v6169
    %6193 = vmatprep.subr.mxu0 0.0
    %6194 = vmatpush1.msra.mxu0 %v6170
    %6195 = vmatprep.subr.mxu0 0.0
    %6196 = vmatpush1.msra.mxu0 %v6171
    %6197 = vmatprep.subr.mxu0 0.0
    %6198 = vmatpush1.msra.mxu0 %v6172
    %6199 = vmatprep.subr.mxu0 0.0
    %6200 = vmatpush1.msra.mxu0 %v6173
    %6201 = vmatprep.subr.mxu0 0.0
    %6202 = vmatpush1.msra.mxu0 %v6174
    %6203 = vmatprep.subr.mxu0 0.0
    %6204 = vmatpush1.msra.mxu0 %v6175
    %6205 = vmatprep.subr.mxu0 0.0
    %6206 = vmatpush1.msra.mxu0 %v6176
    %6207 = vmatprep.subr.mxu0 0.0
    %6208 = vmatpush1.msra.mxu0 %v6177
    %6209 = vmatprep.subr.mxu0 0.0
    %6210 = vmatpush1.msra.mxu0 %v6178
    %6211 = vmatprep.subr.mxu0 0.0
    %6212 = vmatpush1.msra.mxu0 0.0
    %6213 = vmatprep.subr.mxu0 0.0
    %6214 = vmatpush1.msra.mxu0 0.0
    %6215 = vmatprep.subr.mxu0 0.0
    %6216 = vmatpush1.msra.mxu0 0.0
    %6217 = vmatprep.subr.mxu0 0.0
    %6218 = vmatpush1.msra.mxu0 0.0
    %6219 = vmatprep.subr.mxu0 0.0
    %6220 = vmatpush1.msra.mxu0 0.0
    %6221 = vmatprep.subr.mxu0 0.0
    %6222 = vmatpush1.msra.mxu0 0.0
    %6223 = vmatprep.subr.mxu0 0.0
    %6224 = vmatpush1.msra.mxu0 0.0
    %6225 = vmatprep.subr.mxu0 0.0
    %6226 = vmatpush1.msra.mxu0 0.0
    %6227 = vmatprep.subr.mxu0 0.0
    %6228 = vmatpush1.msra.mxu0 0.0
    %6229 = vmatprep.subr.mxu0 0.0
    %6230 = vmatpush1.msra.mxu0 0.0
    %6231 = vmatprep.subr.mxu0 0.0
    %6232 = vmatpush1.msra.mxu0 0.0
    %6233 = vmatprep.subr.mxu0 0.0
    %6234 = vmatpush1.msra.mxu0 0.0
    %6235 = vmatprep.subr.mxu0 0.0
    %6236 = vmatpush1.msra.mxu0 0.0
    %6237 = vmatprep.subr.mxu0 0.0
    %6238 = vmatpush1.msra.mxu0 0.0
    %6239 = vmatprep.subr.mxu0 0.0
    %6240 = vmatpush1.msra.mxu0 0.0
    %6241 = vmatprep.subr.mxu0 0.0
    %6242 = vmatpush1.msra.mxu0 0.0
    %6243 = vmatprep.mubr.f32.mxu0 0.0
    %6244 = vmatmul.mubr.f32.gmra.mrb[0].mxu0 %v5821
    %v6245 = vpop.f32.mrb[0].mxu0
    %v6246 = vadd.f32 0.0, %v6245
    %v6247 = vpop.f32.mrb[0].mxu0
    %6248 = vmatprep.mubr.f32.mxu0 0.0
    %6249 = vmatmul.mubr.f32.gmra.mrb[0].mxu0 %v5826
    %v6250 = vpop.f32.mrb[0].mxu0
    %v6251 = vadd.f32 0.0, %v6250
    %v6252 = vpop.f32.mrb[0].mxu0
    %6253 = vmatprep.mubr.f32.mxu0 0.0
    %6254 = vmatmul.mubr.f32.gmra.mrb[0].mxu0 %v5831
    %v6255 = vpop.f32.mrb[0].mxu0
    %v6256 = vadd.f32 0.0, %v6255
    %v6257 = vpop.f32.mrb[0].mxu0
    %6258 = vmatprep.mubr.f32.mxu0 0.0
    %6259 = vmatmul.mubr.f32.gmra.mrb[0].mxu0 %v5836
    %v6260 = vpop.f32.mrb[0].mxu0
    %v6261 = vadd.f32 0.0, %v6260
    %v6262 = vpop.f32.mrb[0].mxu0
    %6263 = vdwg.mxu0
    %v6264 = vadd.f32 %v6144, %v6246
    %v6265 = vadd.f32 %v6149, %v6251
    %v6266 = vadd.f32 %v6154, %v6256
    %v6267 = vadd.f32 %v6159, %v6261
    %s6268 = scalar_lea.vmem %s13, 384
    %v6269 = vld [vmem:[%s6268] sm:$0xff]
    %v6270 = vld [vmem:[%s6268 + $0x8] sm:$0xff]
    %v6271 = vld [vmem:[%s6268 + $0x10] sm:$0xff]
    %v6272 = vld [vmem:[%s6268 + $0x18] sm:$0xff]
    %v6273 = vld [vmem:[%s6268 + $0x20] sm:$0xff]
    %v6274 = vld [vmem:[%s6268 + $0x28] sm:$0xff]
    %v6275 = vld [vmem:[%s6268 + $0x30] sm:$0xff]
    %v6276 = vld [vmem:[%s6268 + $0x38] sm:$0xff]
    %v6277 = vld [vmem:[%s6268 + $0x40] sm:$0xff]
    %v6278 = vld [vmem:[%s6268 + $0x48] sm:$0xff]
    %v6279 = vld [vmem:[%s6268 + $0x50] sm:$0xff]
    %v6280 = vld [vmem:[%s6268 + $0x58] sm:$0xff]
    %v6281 = vld [vmem:[%s6268 + $0x60] sm:$0xff]
    %v6282 = vld [vmem:[%s6268 + $0x68] sm:$0xff]
    %v6283 = vld [vmem:[%s6268 + $0x70] sm:$0xff]
    %v6284 = vld [vmem:[%s6268 + $0x78] sm:$0xff]
    %6285 = vmatprep.subr.mxu0 0.0
    %6286 = vmatpush1.msra.mxu0 %v6269
    %6287 = vmatprep.subr.mxu0 0.0
    %6288 = vmatpush1.msra.mxu0 %v6270
    %6289 = vmatprep.subr.mxu0 0.0
    %6290 = vmatpush1.msra.mxu0 %v6271
    %6291 = vmatprep.subr.mxu0 0.0
    %6292 = vmatpush1.msra.mxu0 %v6272
    %6293 = vmatprep.subr.mxu0 0.0
    %6294 = vmatpush1.msra.mxu0 %v6273
    %6295 = vmatprep.subr.mxu0 0.0
    %6296 = vmatpush1.msra.mxu0 %v6274
    %6297 = vmatprep.subr.mxu0 0.0
    %6298 = vmatpush1.msra.mxu0 %v6275
    %6299 = vmatprep.subr.mxu0 0.0
    %6300 = vmatpush1.msra.mxu0 %v6276
    %6301 = vmatprep.subr.mxu0 0.0
    %6302 = vmatpush1.msra.mxu0 %v6277
    %6303 = vmatprep.subr.mxu0 0.0
    %6304 = vmatpush1.msra.mxu0 %v6278
    %6305 = vmatprep.subr.mxu0 0.0
    %6306 = vmatpush1.msra.mxu0 %v6279
    %6307 = vmatprep.subr.mxu0 0.0
    %6308 = vmatpush1.msra.mxu0 %v6280
    %6309 = vmatprep.subr.mxu0 0.0
    %6310 = vmatpush1.msra.mxu0 %v6281
    %6311 = vmatprep.subr.mxu0 0.0
    %6312 = vmatpush1.msra.mxu0 %v6282
    %6313 = vmatprep.subr.mxu0 0.0
    %6314 = vmatpush1.msra.mxu0 %v6283
    %6315 = vmatprep.subr.mxu0 0.0
    %6316 = vmatpush1.msra.mxu0 %v6284
    %6317 = vmatprep.subr.mxu0 0.0
    %6318 = vmatpush1.msra.mxu0 0.0
    %6319 = vmatprep.subr.mxu0 0.0
    %6320 = vmatpush1.msra.mxu0 0.0
    %6321 = vmatprep.subr.mxu0 0.0
    %6322 = vmatpush1.msra.mxu0 0.0
    %6323 = vmatprep.subr.mxu0 0.0
    %6324 = vmatpush1.msra.mxu0 0.0
    %6325 = vmatprep.subr.mxu0 0.0
    %6326 = vmatpush1.msra.mxu0 0.0
    %6327 = vmatprep.subr.mxu0 0.0
    %6328 = vmatpush1.msra.mxu0 0.0
    %6329 = vmatprep.subr.mxu0 0.0
    %6330 = vmatpush1.msra.mxu0 0.0
    %6331 = vmatprep.subr.mxu0 0.0
    %6332 = vmatpush1.msra.mxu0 0.0
    %6333 = vmatprep.subr.mxu0 0.0
    %6334 = vmatpush1.msra.mxu0 0.0
    %6335 = vmatprep.subr.mxu0 0.0
    %6336 = vmatpush1.msra.mxu0 0.0
    %6337 = vmatprep.subr.mxu0 0.0
    %6338 = vmatpush1.msra.mxu0 0.0
    %6339 = vmatprep.subr.mxu0 0.0
    %6340 = vmatpush1.msra.mxu0 0.0
    %6341 = vmatprep.subr.mxu0 0.0
    %6342 = vmatpush1.msra.mxu0 0.0
    %6343 = vmatprep.subr.mxu0 0.0
    %6344 = vmatpush1.msra.mxu0 0.0
    %6345 = vmatprep.subr.mxu0 0.0
    %6346 = vmatpush1.msra.mxu0 0.0
    %6347 = vmatprep.subr.mxu0 0.0
    %6348 = vmatpush1.msra.mxu0 0.0
    %6349 = vmatprep.mubr.f32.mxu0 0.0
    %6350 = vmatmul.mubr.f32.gmra.mrb[0].mxu0 %v5841
    %v6351 = vpop.f32.mrb[0].mxu0
    %v6352 = vadd.f32 0.0, %v6351
    %v6353 = vpop.f32.mrb[0].mxu0
    %6354 = vmatprep.mubr.f32.mxu0 0.0
    %6355 = vmatmul.mubr.f32.gmra.mrb[0].mxu0 %v5846
    %v6356 = vpop.f32.mrb[0].mxu0
    %v6357 = vadd.f32 0.0, %v6356
    %v6358 = vpop.f32.mrb[0].mxu0
    %6359 = vmatprep.mubr.f32.mxu0 0.0
    %6360 = vmatmul.mubr.f32.gmra.mrb[0].mxu0 %v5851
    %v6361 = vpop.f32.mrb[0].mxu0
    %v6362 = vadd.f32 0.0, %v6361
    %v6363 = vpop.f32.mrb[0].mxu0
    %6364 = vmatprep.mubr.f32.mxu0 0.0
    %6365 = vmatmul.mubr.f32.gmra.mrb[0].mxu0 %v5856
    %v6366 = vpop.f32.mrb[0].mxu0
    %v6367 = vadd.f32 0.0, %v6366
    %v6368 = vpop.f32.mrb[0].mxu0
    %6369 = vdwg.mxu0
    %v6370 = vadd.f32 %v6264, %v6352
    %v6371 = vadd.f32 %v6265, %v6357
    %v6372 = vadd.f32 %v6266, %v6362
    %v6373 = vadd.f32 %v6267, %v6367
    %s6374 = scalar_lea.vmem %s13, 512
    %v6375 = vld [vmem:[%s6374] sm:$0xff]
    %v6376 = vld [vmem:[%s6374 + $0x8] sm:$0xff]
    %v6377 = vld [vmem:[%s6374 + $0x10] sm:$0xff]
    %v6378 = vld [vmem:[%s6374 + $0x18] sm:$0xff]
    %v6379 = vld [vmem:[%s6374 + $0x20] sm:$0xff]
    %v6380 = vld [vmem:[%s6374 + $0x28] sm:$0xff]
    %v6381 = vld [vmem:[%s6374 + $0x30] sm:$0xff]
    %v6382 = vld [vmem:[%s6374 + $0x38] sm:$0xff]
    %v6383 = vld [vmem:[%s6374 + $0x40] sm:$0xff]
    %v6384 = vld [vmem:[%s6374 + $0x48] sm:$0xff]
    %v6385 = vld [vmem:[%s6374 + $0x50] sm:$0xff]
    %v6386 = vld [vmem:[%s6374 + $0x58] sm:$0xff]
    %v6387 = vld [vmem:[%s6374 + $0x60] sm:$0xff]
    %v6388 = vld [vmem:[%s6374 + $0x68] sm:$0xff]
    %v6389 = vld [vmem:[%s6374 + $0x70] sm:$0xff]
    %v6390 = vld [vmem:[%s6374 + $0x78] sm:$0xff]
    %6391 = vmatprep.subr.mxu0 0.0
    %6392 = vmatpush1.msra.mxu0 %v6375
    %6393 = vmatprep.subr.mxu0 0.0
    %6394 = vmatpush1.msra.mxu0 %v6376
    %6395 = vmatprep.subr.mxu0 0.0
    %6396 = vmatpush1.msra.mxu0 %v6377
    %6397 = vmatprep.subr.mxu0 0.0
    %6398 = vmatpush1.msra.mxu0 %v6378
    %6399 = vmatprep.subr.mxu0 0.0
    %6400 = vmatpush1.msra.mxu0 %v6379
    %6401 = vmatprep.subr.mxu0 0.0
    %6402 = vmatpush1.msra.mxu0 %v6380
    %6403 = vmatprep.subr.mxu0 0.0
    %6404 = vmatpush1.msra.mxu0 %v6381
    %6405 = vmatprep.subr.mxu0 0.0
    %6406 = vmatpush1.msra.mxu0 %v6382
    %6407 = vmatprep.subr.mxu0 0.0
    %6408 = vmatpush1.msra.mxu0 %v6383
    %6409 = vmatprep.subr.mxu0 0.0
    %6410 = vmatpush1.msra.mxu0 %v6384
    %6411 = vmatprep.subr.mxu0 0.0
    %6412 = vmatpush1.msra.mxu0 %v6385
    %6413 = vmatprep.subr.mxu0 0.0
    %6414 = vmatpush1.msra.mxu0 %v6386
    %6415 = vmatprep.subr.mxu0 0.0
    %6416 = vmatpush1.msra.mxu0 %v6387
    %6417 = vmatprep.subr.mxu0 0.0
    %6418 = vmatpush1.msra.mxu0 %v6388
    %6419 = vmatprep.subr.mxu0 0.0
    %6420 = vmatpush1.msra.mxu0 %v6389
    %6421 = vmatprep.subr.mxu0 0.0
    %6422 = vmatpush1.msra.mxu0 %v6390
    %6423 = vmatprep.subr.mxu0 0.0
    %6424 = vmatpush1.msra.mxu0 0.0
    %6425 = vmatprep.subr.mxu0 0.0
    %6426 = vmatpush1.msra.mxu0 0.0
    %6427 = vmatprep.subr.mxu0 0.0
    %6428 = vmatpush1.msra.mxu0 0.0
    %6429 = vmatprep.subr.mxu0 0.0
    %6430 = vmatpush1.msra.mxu0 0.0
    %6431 = vmatprep.subr.mxu0 0.0
    %6432 = vmatpush1.msra.mxu0 0.0
    %6433 = vmatprep.subr.mxu0 0.0
    %6434 = vmatpush1.msra.mxu0 0.0
    %6435 = vmatprep.subr.mxu0 0.0
    %6436 = vmatpush1.msra.mxu0 0.0
    %6437 = vmatprep.subr.mxu0 0.0
    %6438 = vmatpush1.msra.mxu0 0.0
    %6439 = vmatprep.subr.mxu0 0.0
    %6440 = vmatpush1.msra.mxu0 0.0
    %6441 = vmatprep.subr.mxu0 0.0
    %6442 = vmatpush1.msra.mxu0 0.0
    %6443 = vmatprep.subr.mxu0 0.0
    %6444 = vmatpush1.msra.mxu0 0.0
    %6445 = vmatprep.subr.mxu0 0.0
    %6446 = vmatpush1.msra.mxu0 0.0
    %6447 = vmatprep.subr.mxu0 0.0
    %6448 = vmatpush1.msra.mxu0 0.0
    %6449 = vmatprep.subr.mxu0 0.0
    %6450 = vmatpush1.msra.mxu0 0.0
    %6451 = vmatprep.subr.mxu0 0.0
    %6452 = vmatpush1.msra.mxu0 0.0
    %6453 = vmatprep.subr.mxu0 0.0
    %6454 = vmatpush1.msra.mxu0 0.0
    %6455 = vmatprep.mubr.f32.mxu0 0.0
    %6456 = vmatmul.mubr.f32.gmra.mrb[0].mxu0 %v5861
    %v6457 = vpop.f32.mrb[0].mxu0
    %v6458 = vadd.f32 0.0, %v6457
    %v6459 = vpop.f32.mrb[0].mxu0
    %6460 = vmatprep.mubr.f32.mxu0 0.0
    %6461 = vmatmul.mubr.f32.gmra.mrb[0].mxu0 %v5866
    %v6462 = vpop.f32.mrb[0].mxu0
    %v6463 = vadd.f32 0.0, %v6462
    %v6464 = vpop.f32.mrb[0].mxu0
    %6465 = vmatprep.mubr.f32.mxu0 0.0
    %6466 = vmatmul.mubr.f32.gmra.mrb[0].mxu0 %v5871
    %v6467 = vpop.f32.mrb[0].mxu0
    %v6468 = vadd.f32 0.0, %v6467
    %v6469 = vpop.f32.mrb[0].mxu0
    %6470 = vmatprep.mubr.f32.mxu0 0.0
    %6471 = vmatmul.mubr.f32.gmra.mrb[0].mxu0 %v5876
    %v6472 = vpop.f32.mrb[0].mxu0
    %v6473 = vadd.f32 0.0, %v6472
    %v6474 = vpop.f32.mrb[0].mxu0
    %6475 = vdwg.mxu0
    %v6476 = vadd.f32 %v6370, %v6458
    %v6477 = vadd.f32 %v6371, %v6463
    %v6478 = vadd.f32 %v6372, %v6468
    %v6479 = vadd.f32 %v6373, %v6473
    %s6480 = scalar_lea.vmem %s13, 640
    %v6481 = vld [vmem:[%s6480] sm:$0xff]
    %v6482 = vld [vmem:[%s6480 + $0x8] sm:$0xff]
    %v6483 = vld [vmem:[%s6480 + $0x10] sm:$0xff]
    %v6484 = vld [vmem:[%s6480 + $0x18] sm:$0xff]
    %v6485 = vld [vmem:[%s6480 + $0x20] sm:$0xff]
    %v6486 = vld [vmem:[%s6480 + $0x28] sm:$0xff]
    %v6487 = vld [vmem:[%s6480 + $0x30] sm:$0xff]
    %v6488 = vld [vmem:[%s6480 + $0x38] sm:$0xff]
    %v6489 = vld [vmem:[%s6480 + $0x40] sm:$0xff]
    %v6490 = vld [vmem:[%s6480 + $0x48] sm:$0xff]
    %v6491 = vld [vmem:[%s6480 + $0x50] sm:$0xff]
    %v6492 = vld [vmem:[%s6480 + $0x58] sm:$0xff]
    %v6493 = vld [vmem:[%s6480 + $0x60] sm:$0xff]
    %v6494 = vld [vmem:[%s6480 + $0x68] sm:$0xff]
    %v6495 = vld [vmem:[%s6480 + $0x70] sm:$0xff]
    %v6496 = vld [vmem:[%s6480 + $0x78] sm:$0xff]
    %6497 = vmatprep.subr.mxu0 0.0
    %6498 = vmatpush1.msra.mxu0 %v6481
    %6499 = vmatprep.subr.mxu0 0.0
    %6500 = vmatpush1.msra.mxu0 %v6482
    %6501 = vmatprep.subr.mxu0 0.0
    %6502 = vmatpush1.msra.mxu0 %v6483
    %6503 = vmatprep.subr.mxu0 0.0
    %6504 = vmatpush1.msra.mxu0 %v6484
    %6505 = vmatprep.subr.mxu0 0.0
    %6506 = vmatpush1.msra.mxu0 %v6485
    %6507 = vmatprep.subr.mxu0 0.0
    %6508 = vmatpush1.msra.mxu0 %v6486
    %6509 = vmatprep.subr.mxu0 0.0
    %6510 = vmatpush1.msra.mxu0 %v6487
    %6511 = vmatprep.subr.mxu0 0.0
    %6512 = vmatpush1.msra.mxu0 %v6488
    %6513 = vmatprep.subr.mxu0 0.0
    %6514 = vmatpush1.msra.mxu0 %v6489
    %6515 = vmatprep.subr.mxu0 0.0
    %6516 = vmatpush1.msra.mxu0 %v6490
    %6517 = vmatprep.subr.mxu0 0.0
    %6518 = vmatpush1.msra.mxu0 %v6491
    %6519 = vmatprep.subr.mxu0 0.0
    %6520 = vmatpush1.msra.mxu0 %v6492
    %6521 = vmatprep.subr.mxu0 0.0
    %6522 = vmatpush1.msra.mxu0 %v6493
    %6523 = vmatprep.subr.mxu0 0.0
    %6524 = vmatpush1.msra.mxu0 %v6494
    %6525 = vmatprep.subr.mxu0 0.0
    %6526 = vmatpush1.msra.mxu0 %v6495
    %6527 = vmatprep.subr.mxu0 0.0
    %6528 = vmatpush1.msra.mxu0 %v6496
    %6529 = vmatprep.subr.mxu0 0.0
    %6530 = vmatpush1.msra.mxu0 0.0
    %6531 = vmatprep.subr.mxu0 0.0
    %6532 = vmatpush1.msra.mxu0 0.0
    %6533 = vmatprep.subr.mxu0 0.0
    %6534 = vmatpush1.msra.mxu0 0.0
    %6535 = vmatprep.subr.mxu0 0.0
    %6536 = vmatpush1.msra.mxu0 0.0
    %6537 = vmatprep.subr.mxu0 0.0
    %6538 = vmatpush1.msra.mxu0 0.0
    %6539 = vmatprep.subr.mxu0 0.0
    %6540 = vmatpush1.msra.mxu0 0.0
    %6541 = vmatprep.subr.mxu0 0.0
    %6542 = vmatpush1.msra.mxu0 0.0
    %6543 = vmatprep.subr.mxu0 0.0
    %6544 = vmatpush1.msra.mxu0 0.0
    %6545 = vmatprep.subr.mxu0 0.0
    %6546 = vmatpush1.msra.mxu0 0.0
    %6547 = vmatprep.subr.mxu0 0.0
    %6548 = vmatpush1.msra.mxu0 0.0
    %6549 = vmatprep.subr.mxu0 0.0
    %6550 = vmatpush1.msra.mxu0 0.0
    %6551 = vmatprep.subr.mxu0 0.0
    %6552 = vmatpush1.msra.mxu0 0.0
    %6553 = vmatprep.subr.mxu0 0.0
    %6554 = vmatpush1.msra.mxu0 0.0
    %6555 = vmatprep.subr.mxu0 0.0
    %6556 = vmatpush1.msra.mxu0 0.0
    %6557 = vmatprep.subr.mxu0 0.0
    %6558 = vmatpush1.msra.mxu0 0.0
    %6559 = vmatprep.subr.mxu0 0.0
    %6560 = vmatpush1.msra.mxu0 0.0
    %6561 = vmatprep.mubr.f32.mxu0 0.0
    %6562 = vmatmul.mubr.f32.gmra.mrb[0].mxu0 %v5881
    %v6563 = vpop.f32.mrb[0].mxu0
    %v6564 = vadd.f32 0.0, %v6563
    %v6565 = vpop.f32.mrb[0].mxu0
    %6566 = vmatprep.mubr.f32.mxu0 0.0
    %6567 = vmatmul.mubr.f32.gmra.mrb[0].mxu0 %v5886
    %v6568 = vpop.f32.mrb[0].mxu0
    %v6569 = vadd.f32 0.0, %v6568
    %v6570 = vpop.f32.mrb[0].mxu0
    %6571 = vmatprep.mubr.f32.mxu0 0.0
    %6572 = vmatmul.mubr.f32.gmra.mrb[0].mxu0 %v5891
    %v6573 = vpop.f32.mrb[0].mxu0
    %v6574 = vadd.f32 0.0, %v6573
    %v6575 = vpop.f32.mrb[0].mxu0
    %6576 = vmatprep.mubr.f32.mxu0 0.0
    %6577 = vmatmul.mubr.f32.gmra.mrb[0].mxu0 %v5896
    %v6578 = vpop.f32.mrb[0].mxu0
    %v6579 = vadd.f32 0.0, %v6578
    %v6580 = vpop.f32.mrb[0].mxu0
    %6581 = vdwg.mxu0
    %v6582 = vadd.f32 %v6476, %v6564
    %v6583 = vadd.f32 %v6477, %v6569
    %v6584 = vadd.f32 %v6478, %v6574
    %v6585 = vadd.f32 %v6479, %v6579
    %s6586 = scalar_lea.vmem %s13, 768
    %v6587 = vld [vmem:[%s6586] sm:$0xff]
    %v6588 = vld [vmem:[%s6586 + $0x8] sm:$0xff]
    %v6589 = vld [vmem:[%s6586 + $0x10] sm:$0xff]
    %v6590 = vld [vmem:[%s6586 + $0x18] sm:$0xff]
    %v6591 = vld [vmem:[%s6586 + $0x20] sm:$0xff]
    %v6592 = vld [vmem:[%s6586 + $0x28] sm:$0xff]
    %v6593 = vld [vmem:[%s6586 + $0x30] sm:$0xff]
    %v6594 = vld [vmem:[%s6586 + $0x38] sm:$0xff]
    %v6595 = vld [vmem:[%s6586 + $0x40] sm:$0xff]
    %v6596 = vld [vmem:[%s6586 + $0x48] sm:$0xff]
    %v6597 = vld [vmem:[%s6586 + $0x50] sm:$0xff]
    %v6598 = vld [vmem:[%s6586 + $0x58] sm:$0xff]
    %v6599 = vld [vmem:[%s6586 + $0x60] sm:$0xff]
    %v6600 = vld [vmem:[%s6586 + $0x68] sm:$0xff]
    %v6601 = vld [vmem:[%s6586 + $0x70] sm:$0xff]
    %v6602 = vld [vmem:[%s6586 + $0x78] sm:$0xff]
    %6603 = vmatprep.subr.mxu0 0.0
    %6604 = vmatpush1.msra.mxu0 %v6587
    %6605 = vmatprep.subr.mxu0 0.0
    %6606 = vmatpush1.msra.mxu0 %v6588
    %6607 = vmatprep.subr.mxu0 0.0
    %6608 = vmatpush1.msra.mxu0 %v6589
    %6609 = vmatprep.subr.mxu0 0.0
    %6610 = vmatpush1.msra.mxu0 %v6590
    %6611 = vmatprep.subr.mxu0 0.0
    %6612 = vmatpush1.msra.mxu0 %v6591
    %6613 = vmatprep.subr.mxu0 0.0
    %6614 = vmatpush1.msra.mxu0 %v6592
    %6615 = vmatprep.subr.mxu0 0.0
    %6616 = vmatpush1.msra.mxu0 %v6593
    %6617 = vmatprep.subr.mxu0 0.0
    %6618 = vmatpush1.msra.mxu0 %v6594
    %6619 = vmatprep.subr.mxu0 0.0
    %6620 = vmatpush1.msra.mxu0 %v6595
    %6621 = vmatprep.subr.mxu0 0.0
    %6622 = vmatpush1.msra.mxu0 %v6596
    %6623 = vmatprep.subr.mxu0 0.0
    %6624 = vmatpush1.msra.mxu0 %v6597
    %6625 = vmatprep.subr.mxu0 0.0
    %6626 = vmatpush1.msra.mxu0 %v6598
    %6627 = vmatprep.subr.mxu0 0.0
    %6628 = vmatpush1.msra.mxu0 %v6599
    %6629 = vmatprep.subr.mxu0 0.0
    %6630 = vmatpush1.msra.mxu0 %v6600
    %6631 = vmatprep.subr.mxu0 0.0
    %6632 = vmatpush1.msra.mxu0 %v6601
    %6633 = vmatprep.subr.mxu0 0.0
    %6634 = vmatpush1.msra.mxu0 %v6602
    %6635 = vmatprep.subr.mxu0 0.0
    %6636 = vmatpush1.msra.mxu0 0.0
    %6637 = vmatprep.subr.mxu0 0.0
    %6638 = vmatpush1.msra.mxu0 0.0
    %6639 = vmatprep.subr.mxu0 0.0
    %6640 = vmatpush1.msra.mxu0 0.0
    %6641 = vmatprep.subr.mxu0 0.0
    %6642 = vmatpush1.msra.mxu0 0.0
    %6643 = vmatprep.subr.mxu0 0.0
    %6644 = vmatpush1.msra.mxu0 0.0
    %6645 = vmatprep.subr.mxu0 0.0
    %6646 = vmatpush1.msra.mxu0 0.0
    %6647 = vmatprep.subr.mxu0 0.0
    %6648 = vmatpush1.msra.mxu0 0.0
    %6649 = vmatprep.subr.mxu0 0.0
    %6650 = vmatpush1.msra.mxu0 0.0
    %6651 = vmatprep.subr.mxu0 0.0
    %6652 = vmatpush1.msra.mxu0 0.0
    %6653 = vmatprep.subr.mxu0 0.0
    %6654 = vmatpush1.msra.mxu0 0.0
    %6655 = vmatprep.subr.mxu0 0.0
    %6656 = vmatpush1.msra.mxu0 0.0
    %6657 = vmatprep.subr.mxu0 0.0
    %6658 = vmatpush1.msra.mxu0 0.0
    %6659 = vmatprep.subr.mxu0 0.0
    %6660 = vmatpush1.msra.mxu0 0.0
    %6661 = vmatprep.subr.mxu0 0.0
    %6662 = vmatpush1.msra.mxu0 0.0
    %6663 = vmatprep.subr.mxu0 0.0
    %6664 = vmatpush1.msra.mxu0 0.0
    %6665 = vmatprep.subr.mxu0 0.0
    %6666 = vmatpush1.msra.mxu0 0.0
    %6667 = vmatprep.mubr.f32.mxu0 0.0
    %6668 = vmatmul.mubr.f32.gmra.mrb[0].mxu0 %v5901
    %v6669 = vpop.f32.mrb[0].mxu0
    %v6670 = vadd.f32 0.0, %v6669
    %v6671 = vpop.f32.mrb[0].mxu0
    %6672 = vmatprep.mubr.f32.mxu0 0.0
    %6673 = vmatmul.mubr.f32.gmra.mrb[0].mxu0 %v5906
    %v6674 = vpop.f32.mrb[0].mxu0
    %v6675 = vadd.f32 0.0, %v6674
    %v6676 = vpop.f32.mrb[0].mxu0
    %6677 = vmatprep.mubr.f32.mxu0 0.0
    %6678 = vmatmul.mubr.f32.gmra.mrb[0].mxu0 %v5911
    %v6679 = vpop.f32.mrb[0].mxu0
    %v6680 = vadd.f32 0.0, %v6679
    %v6681 = vpop.f32.mrb[0].mxu0
    %6682 = vmatprep.mubr.f32.mxu0 0.0
    %6683 = vmatmul.mubr.f32.gmra.mrb[0].mxu0 %v5916
    %v6684 = vpop.f32.mrb[0].mxu0
    %v6685 = vadd.f32 0.0, %v6684
    %v6686 = vpop.f32.mrb[0].mxu0
    %6687 = vdwg.mxu0
    %v6688 = vadd.f32 %v6582, %v6670
    %v6689 = vadd.f32 %v6583, %v6675
    %v6690 = vadd.f32 %v6584, %v6680
    %v6691 = vadd.f32 %v6585, %v6685
    %s6692 = scalar_lea.vmem %s13, 896
    %v6693 = vld [vmem:[%s6692] sm:$0xff]
    %v6694 = vld [vmem:[%s6692 + $0x8] sm:$0xff]
    %v6695 = vld [vmem:[%s6692 + $0x10] sm:$0xff]
    %v6696 = vld [vmem:[%s6692 + $0x18] sm:$0xff]
    %v6697 = vld [vmem:[%s6692 + $0x20] sm:$0xff]
    %v6698 = vld [vmem:[%s6692 + $0x28] sm:$0xff]
    %v6699 = vld [vmem:[%s6692 + $0x30] sm:$0xff]
    %v6700 = vld [vmem:[%s6692 + $0x38] sm:$0xff]
    %v6701 = vld [vmem:[%s6692 + $0x40] sm:$0xff]
    %v6702 = vld [vmem:[%s6692 + $0x48] sm:$0xff]
    %v6703 = vld [vmem:[%s6692 + $0x50] sm:$0xff]
    %v6704 = vld [vmem:[%s6692 + $0x58] sm:$0xff]
    %v6705 = vld [vmem:[%s6692 + $0x60] sm:$0xff]
    %v6706 = vld [vmem:[%s6692 + $0x68] sm:$0xff]
    %v6707 = vld [vmem:[%s6692 + $0x70] sm:$0xff]
    %v6708 = vld [vmem:[%s6692 + $0x78] sm:$0xff]
    %6709 = vmatprep.subr.mxu0 0.0
    %6710 = vmatpush1.msra.mxu0 %v6693
    %6711 = vmatprep.subr.mxu0 0.0
    %6712 = vmatpush1.msra.mxu0 %v6694
    %6713 = vmatprep.subr.mxu0 0.0
    %6714 = vmatpush1.msra.mxu0 %v6695
    %6715 = vmatprep.subr.mxu0 0.0
    %6716 = vmatpush1.msra.mxu0 %v6696
    %6717 = vmatprep.subr.mxu0 0.0
    %6718 = vmatpush1.msra.mxu0 %v6697
    %6719 = vmatprep.subr.mxu0 0.0
    %6720 = vmatpush1.msra.mxu0 %v6698
    %6721 = vmatprep.subr.mxu0 0.0
    %6722 = vmatpush1.msra.mxu0 %v6699
    %6723 = vmatprep.subr.mxu0 0.0
    %6724 = vmatpush1.msra.mxu0 %v6700
    %6725 = vmatprep.subr.mxu0 0.0
    %6726 = vmatpush1.msra.mxu0 %v6701
    %6727 = vmatprep.subr.mxu0 0.0
    %6728 = vmatpush1.msra.mxu0 %v6702
    %6729 = vmatprep.subr.mxu0 0.0
    %6730 = vmatpush1.msra.mxu0 %v6703
    %6731 = vmatprep.subr.mxu0 0.0
    %6732 = vmatpush1.msra.mxu0 %v6704
    %6733 = vmatprep.subr.mxu0 0.0
    %6734 = vmatpush1.msra.mxu0 %v6705
    %6735 = vmatprep.subr.mxu0 0.0
    %6736 = vmatpush1.msra.mxu0 %v6706
    %6737 = vmatprep.subr.mxu0 0.0
    %6738 = vmatpush1.msra.mxu0 %v6707
    %6739 = vmatprep.subr.mxu0 0.0
    %6740 = vmatpush1.msra.mxu0 %v6708
    %6741 = vmatprep.subr.mxu0 0.0
    %6742 = vmatpush1.msra.mxu0 0.0
    %6743 = vmatprep.subr.mxu0 0.0
    %6744 = vmatpush1.msra.mxu0 0.0
    %6745 = vmatprep.subr.mxu0 0.0
    %6746 = vmatpush1.msra.mxu0 0.0
    %6747 = vmatprep.subr.mxu0 0.0
    %6748 = vmatpush1.msra.mxu0 0.0
    %6749 = vmatprep.subr.mxu0 0.0
    %6750 = vmatpush1.msra.mxu0 0.0
    %6751 = vmatprep.subr.mxu0 0.0
    %6752 = vmatpush1.msra.mxu0 0.0
    %6753 = vmatprep.subr.mxu0 0.0
    %6754 = vmatpush1.msra.mxu0 0.0
    %6755 = vmatprep.subr.mxu0 0.0
    %6756 = vmatpush1.msra.mxu0 0.0
    %6757 = vmatprep.subr.mxu0 0.0
    %6758 = vmatpush1.msra.mxu0 0.0
    %6759 = vmatprep.subr.mxu0 0.0
    %6760 = vmatpush1.msra.mxu0 0.0
    %6761 = vmatprep.subr.mxu0 0.0
    %6762 = vmatpush1.msra.mxu0 0.0
    %6763 = vmatprep.subr.mxu0 0.0
    %6764 = vmatpush1.msra.mxu0 0.0
    %6765 = vmatprep.subr.mxu0 0.0
    %6766 = vmatpush1.msra.mxu0 0.0
    %6767 = vmatprep.subr.mxu0 0.0
    %6768 = vmatpush1.msra.mxu0 0.0
    %6769 = vmatprep.subr.mxu0 0.0
    %6770 = vmatpush1.msra.mxu0 0.0
    %6771 = vmatprep.subr.mxu0 0.0
    %6772 = vmatpush1.msra.mxu0 0.0
    %6773 = vmatprep.mubr.f32.mxu0 0.0
    %6774 = vmatmul.mubr.f32.gmra.mrb[0].mxu0 %v5921
    %v6775 = vpop.f32.mrb[0].mxu0
    %v6776 = vadd.f32 0.0, %v6775
    %v6777 = vpop.f32.mrb[0].mxu0
    %6778 = vmatprep.mubr.f32.mxu0 0.0
    %6779 = vmatmul.mubr.f32.gmra.mrb[0].mxu0 %v5926
    %v6780 = vpop.f32.mrb[0].mxu0
    %v6781 = vadd.f32 0.0, %v6780
    %v6782 = vpop.f32.mrb[0].mxu0
    %6783 = vmatprep.mubr.f32.mxu0 0.0
    %6784 = vmatmul.mubr.f32.gmra.mrb[0].mxu0 %v5931
    %v6785 = vpop.f32.mrb[0].mxu0
    %v6786 = vadd.f32 0.0, %v6785
    %v6787 = vpop.f32.mrb[0].mxu0
    %6788 = vmatprep.mubr.f32.mxu0 0.0
    %6789 = vmatmul.mubr.f32.gmra.mrb[0].mxu0 %v5936
    %v6790 = vpop.f32.mrb[0].mxu0
    %v6791 = vadd.f32 0.0, %v6790
    %v6792 = vpop.f32.mrb[0].mxu0
    %6793 = vdwg.mxu0
    %v6794 = vadd.f32 %v6688, %v6776
    %v6795 = vadd.f32 %v6689, %v6781
    %v6796 = vadd.f32 %v6690, %v6786
    %v6797 = vadd.f32 %v6691, %v6791
    %s6798 = scalar_lea.vmem %s13, 1024
    %v6799 = vld [vmem:[%s6798] sm:$0xff]
    %v6800 = vld [vmem:[%s6798 + $0x8] sm:$0xff]
    %v6801 = vld [vmem:[%s6798 + $0x10] sm:$0xff]
    %v6802 = vld [vmem:[%s6798 + $0x18] sm:$0xff]
    %v6803 = vld [vmem:[%s6798 + $0x20] sm:$0xff]
    %v6804 = vld [vmem:[%s6798 + $0x28] sm:$0xff]
    %v6805 = vld [vmem:[%s6798 + $0x30] sm:$0xff]
    %v6806 = vld [vmem:[%s6798 + $0x38] sm:$0xff]
    %v6807 = vld [vmem:[%s6798 + $0x40] sm:$0xff]
    %v6808 = vld [vmem:[%s6798 + $0x48] sm:$0xff]
    %v6809 = vld [vmem:[%s6798 + $0x50] sm:$0xff]
    %v6810 = vld [vmem:[%s6798 + $0x58] sm:$0xff]
    %v6811 = vld [vmem:[%s6798 + $0x60] sm:$0xff]
    %v6812 = vld [vmem:[%s6798 + $0x68] sm:$0xff]
    %v6813 = vld [vmem:[%s6798 + $0x70] sm:$0xff]
    %v6814 = vld [vmem:[%s6798 + $0x78] sm:$0xff]
    %6815 = vmatprep.subr.mxu0 0.0
    %6816 = vmatpush1.msra.mxu0 %v6799
    %6817 = vmatprep.subr.mxu0 0.0
    %6818 = vmatpush1.msra.mxu0 %v6800
    %6819 = vmatprep.subr.mxu0 0.0
    %6820 = vmatpush1.msra.mxu0 %v6801
    %6821 = vmatprep.subr.mxu0 0.0
    %6822 = vmatpush1.msra.mxu0 %v6802
    %6823 = vmatprep.subr.mxu0 0.0
    %6824 = vmatpush1.msra.mxu0 %v6803
    %6825 = vmatprep.subr.mxu0 0.0
    %6826 = vmatpush1.msra.mxu0 %v6804
    %6827 = vmatprep.subr.mxu0 0.0
    %6828 = vmatpush1.msra.mxu0 %v6805
    %6829 = vmatprep.subr.mxu0 0.0
    %6830 = vmatpush1.msra.mxu0 %v6806
    %6831 = vmatprep.subr.mxu0 0.0
    %6832 = vmatpush1.msra.mxu0 %v6807
    %6833 = vmatprep.subr.mxu0 0.0
    %6834 = vmatpush1.msra.mxu0 %v6808
    %6835 = vmatprep.subr.mxu0 0.0
    %6836 = vmatpush1.msra.mxu0 %v6809
    %6837 = vmatprep.subr.mxu0 0.0
    %6838 = vmatpush1.msra.mxu0 %v6810
    %6839 = vmatprep.subr.mxu0 0.0
    %6840 = vmatpush1.msra.mxu0 %v6811
    %6841 = vmatprep.subr.mxu0 0.0
    %6842 = vmatpush1.msra.mxu0 %v6812
    %6843 = vmatprep.subr.mxu0 0.0
    %6844 = vmatpush1.msra.mxu0 %v6813
    %6845 = vmatprep.subr.mxu0 0.0
    %6846 = vmatpush1.msra.mxu0 %v6814
    %6847 = vmatprep.subr.mxu0 0.0
    %6848 = vmatpush1.msra.mxu0 0.0
    %6849 = vmatprep.subr.mxu0 0.0
    %6850 = vmatpush1.msra.mxu0 0.0
    %6851 = vmatprep.subr.mxu0 0.0
    %6852 = vmatpush1.msra.mxu0 0.0
    %6853 = vmatprep.subr.mxu0 0.0
    %6854 = vmatpush1.msra.mxu0 0.0
    %6855 = vmatprep.subr.mxu0 0.0
    %6856 = vmatpush1.msra.mxu0 0.0
    %6857 = vmatprep.subr.mxu0 0.0
    %6858 = vmatpush1.msra.mxu0 0.0
    %6859 = vmatprep.subr.mxu0 0.0
    %6860 = vmatpush1.msra.mxu0 0.0
    %6861 = vmatprep.subr.mxu0 0.0
    %6862 = vmatpush1.msra.mxu0 0.0
    %6863 = vmatprep.subr.mxu0 0.0
    %6864 = vmatpush1.msra.mxu0 0.0
    %6865 = vmatprep.subr.mxu0 0.0
    %6866 = vmatpush1.msra.mxu0 0.0
    %6867 = vmatprep.subr.mxu0 0.0
    %6868 = vmatpush1.msra.mxu0 0.0
    %6869 = vmatprep.subr.mxu0 0.0
    %6870 = vmatpush1.msra.mxu0 0.0
    %6871 = vmatprep.subr.mxu0 0.0
    %6872 = vmatpush1.msra.mxu0 0.0
    %6873 = vmatprep.subr.mxu0 0.0
    %6874 = vmatpush1.msra.mxu0 0.0
    %6875 = vmatprep.subr.mxu0 0.0
    %6876 = vmatpush1.msra.mxu0 0.0
    %6877 = vmatprep.subr.mxu0 0.0
    %6878 = vmatpush1.msra.mxu0 0.0
    %6879 = vmatprep.mubr.f32.mxu0 0.0
    %6880 = vmatmul.mubr.f32.gmra.mrb[0].mxu0 %v5941
    %v6881 = vpop.f32.mrb[0].mxu0
    %v6882 = vadd.f32 0.0, %v6881
    %v6883 = vpop.f32.mrb[0].mxu0
    %6884 = vmatprep.mubr.f32.mxu0 0.0
    %6885 = vmatmul.mubr.f32.gmra.mrb[0].mxu0 %v5946
    %v6886 = vpop.f32.mrb[0].mxu0
    %v6887 = vadd.f32 0.0, %v6886
    %v6888 = vpop.f32.mrb[0].mxu0
    %6889 = vmatprep.mubr.f32.mxu0 0.0
    %6890 = vmatmul.mubr.f32.gmra.mrb[0].mxu0 %v5951
    %v6891 = vpop.f32.mrb[0].mxu0
    %v6892 = vadd.f32 0.0, %v6891
    %v6893 = vpop.f32.mrb[0].mxu0
    %6894 = vmatprep.mubr.f32.mxu0 0.0
    %6895 = vmatmul.mubr.f32.gmra.mrb[0].mxu0 %v5956
    %v6896 = vpop.f32.mrb[0].mxu0
    %v6897 = vadd.f32 0.0, %v6896
    %v6898 = vpop.f32.mrb[0].mxu0
    %6899 = vdwg.mxu0
    %v6900 = vadd.f32 %v6794, %v6882
    %v6901 = vadd.f32 %v6795, %v6887
    %v6902 = vadd.f32 %v6796, %v6892
    %v6903 = vadd.f32 %v6797, %v6897
    %v6904 = vld [vmem:[%s10] sm:$0xf]
    %v6905 = vld [vmem:[%s10 + $0x4] sm:$0xf]
    %v6906 = vld [vmem:[%s10 + $0x8] sm:$0xf]
    %v6907 = vld [vmem:[%s10 + $0xc] sm:$0xf]
    %v6908 = vunpack.c.l.bf16 %v6904
    %v6909 = vunpack.c.l.bf16 %v6905
    %v6910 = vunpack.c.l.bf16 %v6906
    %v6911 = vunpack.c.l.bf16 %v6907
    %6912 = vmatprep.subr.mxu0 0.0
    %6913 = vmatpush1.msra.mxu0 %v4155
    %6914 = vmatprep.subr.mxu0 0.0
    %6915 = vmatpush1.msra.mxu0 %v4156
    %6916 = vmatprep.subr.mxu0 0.0
    %6917 = vmatpush1.msra.mxu0 %v4157
    %6918 = vmatprep.subr.mxu0 0.0
    %6919 = vmatpush1.msra.mxu0 %v4158
    %6920 = vmatprep.subr.mxu0 0.0
    %6921 = vmatpush1.msra.mxu0 %v4159
    %6922 = vmatprep.subr.mxu0 0.0
    %6923 = vmatpush1.msra.mxu0 %v4160
    %6924 = vmatprep.subr.mxu0 0.0
    %6925 = vmatpush1.msra.mxu0 %v4161
    %6926 = vmatprep.subr.mxu0 0.0
    %6927 = vmatpush1.msra.mxu0 %v4162
    %6928 = vmatprep.subr.mxu0 0.0
    %6929 = vmatpush1.msra.mxu0 %v4163
    %6930 = vmatprep.subr.mxu0 0.0
    %6931 = vmatpush1.msra.mxu0 %v4164
    %6932 = vmatprep.subr.mxu0 0.0
    %6933 = vmatpush1.msra.mxu0 %v4165
    %6934 = vmatprep.subr.mxu0 0.0
    %6935 = vmatpush1.msra.mxu0 %v4166
    %6936 = vmatprep.subr.mxu0 0.0
    %6937 = vmatpush1.msra.mxu0 %v4167
    %6938 = vmatprep.subr.mxu0 0.0
    %6939 = vmatpush1.msra.mxu0 %v4168
    %6940 = vmatprep.subr.mxu0 0.0
    %6941 = vmatpush1.msra.mxu0 %v4169
    %6942 = vmatprep.subr.mxu0 0.0
    %6943 = vmatpush1.msra.mxu0 %v4170
    %6944 = vmatprep.subr.mxu0 0.0
    %6945 = vmatpush1.msra.mxu0 0.0
    %6946 = vmatprep.subr.mxu0 0.0
    %6947 = vmatpush1.msra.mxu0 0.0
    %6948 = vmatprep.subr.mxu0 0.0
    %6949 = vmatpush1.msra.mxu0 0.0
    %6950 = vmatprep.subr.mxu0 0.0
    %6951 = vmatpush1.msra.mxu0 0.0
    %6952 = vmatprep.subr.mxu0 0.0
    %6953 = vmatpush1.msra.mxu0 0.0
    %6954 = vmatprep.subr.mxu0 0.0
    %6955 = vmatpush1.msra.mxu0 0.0
    %6956 = vmatprep.subr.mxu0 0.0
    %6957 = vmatpush1.msra.mxu0 0.0
    %6958 = vmatprep.subr.mxu0 0.0
    %6959 = vmatpush1.msra.mxu0 0.0
    %6960 = vmatprep.subr.mxu0 0.0
    %6961 = vmatpush1.msra.mxu0 0.0
    %6962 = vmatprep.subr.mxu0 0.0
    %6963 = vmatpush1.msra.mxu0 0.0
    %6964 = vmatprep.subr.mxu0 0.0
    %6965 = vmatpush1.msra.mxu0 0.0
    %6966 = vmatprep.subr.mxu0 0.0
    %6967 = vmatpush1.msra.mxu0 0.0
    %6968 = vmatprep.subr.mxu0 0.0
    %6969 = vmatpush1.msra.mxu0 0.0
    %6970 = vmatprep.subr.mxu0 0.0
    %6971 = vmatpush1.msra.mxu0 0.0
    %6972 = vmatprep.subr.mxu0 0.0
    %6973 = vmatpush1.msra.mxu0 0.0
    %6974 = vmatprep.subr.mxu0 0.0
    %6975 = vmatpush1.msra.mxu0 0.0
    %6976 = vmatprep.mubr.f32.mxu0 0.0
    %6977 = vmatmul.mubr.f32.gmra.mrb[0].mxu0 %v6908
    %v6978 = vpop.f32.mrb[0].mxu0
    %v6979 = vadd.f32 0.0, %v6978
    %v6980 = vpop.f32.mrb[0].mxu0
    %6981 = vmatprep.mubr.f32.mxu0 0.0
    %6982 = vmatmul.mubr.f32.gmra.mrb[0].mxu0 %v6909
    %v6983 = vpop.f32.mrb[0].mxu0
    %v6984 = vadd.f32 0.0, %v6983
    %v6985 = vpop.f32.mrb[0].mxu0
    %6986 = vmatprep.mubr.f32.mxu0 0.0
    %6987 = vmatmul.mubr.f32.gmra.mrb[0].mxu0 %v6910
    %v6988 = vpop.f32.mrb[0].mxu0
    %v6989 = vadd.f32 0.0, %v6988
    %v6990 = vpop.f32.mrb[0].mxu0
    %6991 = vmatprep.mubr.f32.mxu0 0.0
    %6992 = vmatmul.mubr.f32.gmra.mrb[0].mxu0 %v6911
    %v6993 = vpop.f32.mrb[0].mxu0
    %v6994 = vadd.f32 0.0, %v6993
    %v6995 = vpop.f32.mrb[0].mxu0
    %6996 = vdwg.mxu0
    %v6997 = vld [vmem:[#allocation10] sm:$0xff]
    %v6998 = vld [vmem:[#allocation10 + $0x8] sm:$0xff]
    %v6999 = vld [vmem:[#allocation10 + $0x10] sm:$0xff]
    %v7000 = vld [vmem:[#allocation10 + $0x18] sm:$0xff]
    %v7001 = vld [vmem:[#allocation10 + $0x20] sm:$0xff]
    %v7002 = vld [vmem:[#allocation10 + $0x28] sm:$0xff]
    %v7003 = vld [vmem:[#allocation10 + $0x30] sm:$0xff]
    %v7004 = vld [vmem:[#allocation10 + $0x38] sm:$0xff]
    %v7006 = vsel %vm372, %v6979, 0
    %v7009 = vsel %vm372, %v6984, 0
    %v7012 = vsel %vm372, %v6989, 0
    %v7015 = vsel %vm372, %v6994, 0
    %7017 = vmatprep.subr.mxu0 0.0
    %7018 = vmatpush1.msra.mxu0 %v6997
    %7019 = vmatprep.subr.mxu0 0.0
    %7020 = vmatpush1.msra.mxu0 %v6998
    %7021 = vmatprep.subr.mxu0 0.0
    %7022 = vmatpush1.msra.mxu0 %v6999
    %7023 = vmatprep.subr.mxu0 0.0
    %7024 = vmatpush1.msra.mxu0 %v7000
    %7025 = vmatprep.subr.mxu0 0.0
    %7026 = vmatpush1.msra.mxu0 %v7001
    %7027 = vmatprep.subr.mxu0 0.0
    %7028 = vmatpush1.msra.mxu0 %v7002
    %7029 = vmatprep.subr.mxu0 0.0
    %7030 = vmatpush1.msra.mxu0 %v7003
    %7031 = vmatprep.subr.mxu0 0.0
    %7032 = vmatpush1.msra.mxu0 %v7004
    %7033 = vmatprep.subr.mxu0 0.0
    %7034 = vmatpush1.msra.mxu0 0.0
    %7035 = vmatprep.subr.mxu0 0.0
    %7036 = vmatpush1.msra.mxu0 0.0
    %7037 = vmatprep.subr.mxu0 0.0
    %7038 = vmatpush1.msra.mxu0 0.0
    %7039 = vmatprep.subr.mxu0 0.0
    %7040 = vmatpush1.msra.mxu0 0.0
    %7041 = vmatprep.subr.mxu0 0.0
    %7042 = vmatpush1.msra.mxu0 0.0
    %7043 = vmatprep.subr.mxu0 0.0
    %7044 = vmatpush1.msra.mxu0 0.0
    %7045 = vmatprep.subr.mxu0 0.0
    %7046 = vmatpush1.msra.mxu0 0.0
    %7047 = vmatprep.subr.mxu0 0.0
    %7048 = vmatpush1.msra.mxu0 0.0
    %7049 = vmatprep.subr.mxu0 0.0
    %7050 = vmatpush1.msra.mxu0 0.0
    %7051 = vmatprep.subr.mxu0 0.0
    %7052 = vmatpush1.msra.mxu0 0.0
    %7053 = vmatprep.subr.mxu0 0.0
    %7054 = vmatpush1.msra.mxu0 0.0
    %7055 = vmatprep.subr.mxu0 0.0
    %7056 = vmatpush1.msra.mxu0 0.0
    %7057 = vmatprep.subr.mxu0 0.0
    %7058 = vmatpush1.msra.mxu0 0.0
    %7059 = vmatprep.subr.mxu0 0.0
    %7060 = vmatpush1.msra.mxu0 0.0
    %7061 = vmatprep.subr.mxu0 0.0
    %7062 = vmatpush1.msra.mxu0 0.0
    %7063 = vmatprep.subr.mxu0 0.0
    %7064 = vmatpush1.msra.mxu0 0.0
    %7065 = vmatprep.subr.mxu0 0.0
    %7066 = vmatpush1.msra.mxu0 0.0
    %7067 = vmatprep.subr.mxu0 0.0
    %7068 = vmatpush1.msra.mxu0 0.0
    %7069 = vmatprep.subr.mxu0 0.0
    %7070 = vmatpush1.msra.mxu0 0.0
    %7071 = vmatprep.subr.mxu0 0.0
    %7072 = vmatpush1.msra.mxu0 0.0
    %7073 = vmatprep.subr.mxu0 0.0
    %7074 = vmatpush1.msra.mxu0 0.0
    %7075 = vmatprep.subr.mxu0 0.0
    %7076 = vmatpush1.msra.mxu0 0.0
    %7077 = vmatprep.subr.mxu0 0.0
    %7078 = vmatpush1.msra.mxu0 0.0
    %7079 = vmatprep.subr.mxu0 0.0
    %7080 = vmatpush1.msra.mxu0 0.0
    %7081 = vmatprep.mubr.f32.mxu0 0.0
    %7082 = vmatmul.mubr.f32.gmra.mrb[0].mxu0 %v7006
    %v7083 = vpop.f32.mrb[0].mxu0
    %v7084 = vadd.f32 0.0, %v7083
    %v7085 = vpop.f32.mrb[0].mxu0
    %7086 = vmatprep.mubr.f32.mxu0 0.0
    %7087 = vmatmul.mubr.f32.gmra.mrb[0].mxu0 %v7009
    %v7088 = vpop.f32.mrb[0].mxu0
    %v7089 = vadd.f32 0.0, %v7088
    %v7090 = vpop.f32.mrb[0].mxu0
    %7091 = vmatprep.mubr.f32.mxu0 0.0
    %7092 = vmatmul.mubr.f32.gmra.mrb[0].mxu0 %v7012
    %v7093 = vpop.f32.mrb[0].mxu0
    %v7094 = vadd.f32 0.0, %v7093
    %v7095 = vpop.f32.mrb[0].mxu0
    %7096 = vmatprep.mubr.f32.mxu0 0.0
    %7097 = vmatmul.mubr.f32.gmra.mrb[0].mxu0 %v7015
    %v7098 = vpop.f32.mrb[0].mxu0
    %v7099 = vadd.f32 0.0, %v7098
    %v7100 = vpop.f32.mrb[0].mxu0
    %7101 = vdwg.mxu0
    %v7102 = vadd.f32 %v6900, %v6901
    %v7103 = vadd.f32 %v7102, %v6902
    %v7104 = vadd.f32 %v7103, %v6903
    %v7105 = vrot.slane %v7104, 4
    %v7106 = vadd.f32 %v7104, %v7105
    %v7107 = vrot.slane %v7106, 2
    %v7108 = vadd.f32 %v7106, %v7107
    %v7109 = vrot.slane %v7108, 1
    %v7110 = vadd.f32 %v7108, %v7109
    %v7111 = vmul.f32 %v6900, %v6900
    %v7112 = vmul.f32 %v6901, %v6901
    %v7113 = vmul.f32 %v6902, %v6902
    %v7114 = vmul.f32 %v6903, %v6903
    %v7115 = vadd.f32 %v7111, %v7112
    %v7116 = vadd.f32 %v7115, %v7113
    %v7117 = vadd.f32 %v7116, %v7114
    %v7118 = vrot.slane %v7117, 4
    %v7119 = vadd.f32 %v7117, %v7118
    %v7120 = vrot.slane %v7119, 2
    %v7121 = vadd.f32 %v7119, %v7120
    %v7122 = vrot.slane %v7121, 1
    %v7123 = vadd.f32 %v7121, %v7122
    %v7124 = vmul.f32 %v7110, 0.03125
    %v7125 = vmul.f32 %v7123, 0.03125
    %v7126 = vmul.f32 %v7124, %v7124
    %v7127 = vsub.f32 %v7125, %v7126
    %v7128 = vmax.f32 %v7127, 0.0
    %v7129 = vadd.f32 %v7128, 1e-05
    %v7130 = vrsqrt.pop %v7129
    %v7131 = vmul.f32 %v4171, %v7130
    %v7132 = vsub.f32 0.0, %v7124
    %v7133 = vmul.f32 %v7132, %v7131
    %v7134 = vlaneseq
    %v7135 = vshrl.u32 %v7134, 7
    %v7136 = vsub.s32 3, %v7135
    %v7137 = vrot.slane %v7131, %v7136
    %v7138 = vmul.f32 %v6900, %v7137
    %v7139 = vmul.f32 %v6901, %v7137
    %v7140 = vmul.f32 %v6902, %v7137
    %v7141 = vmul.f32 %v6903, %v7137
    %v7142 = vlaneseq
    %v7143 = vshrl.u32 %v7142, 7
    %v7144 = vsub.s32 3, %v7143
    %v7145 = vrot.slane %v7133, %v7144
    %v7146 = vadd.f32 %v7138, %v7145
    %v7147 = vadd.f32 %v7139, %v7145
    %v7148 = vadd.f32 %v7140, %v7145
    %v7149 = vadd.f32 %v7141, %v7145
    %v7150 = vadd.f32 %v7084, %v7089
    %v7151 = vadd.f32 %v7150, %v7094
    %v7152 = vadd.f32 %v7151, %v7099
    %v7153 = vrot.slane %v7152, 4
    %v7154 = vadd.f32 %v7152, %v7153
    %v7155 = vrot.slane %v7154, 2
    %v7156 = vadd.f32 %v7154, %v7155
    %v7157 = vrot.slane %v7156, 1
    %v7158 = vadd.f32 %v7156, %v7157
    %v7159 = vmul.f32 %v7084, %v7084
    %v7160 = vmul.f32 %v7089, %v7089
    %v7161 = vmul.f32 %v7094, %v7094
    %v7162 = vmul.f32 %v7099, %v7099
    %v7163 = vadd.f32 %v7159, %v7160
    %v7164 = vadd.f32 %v7163, %v7161
    %v7165 = vadd.f32 %v7164, %v7162
    %v7166 = vrot.slane %v7165, 4
    %v7167 = vadd.f32 %v7165, %v7166
    %v7168 = vrot.slane %v7167, 2
    %v7169 = vadd.f32 %v7167, %v7168
    %v7170 = vrot.slane %v7169, 1
    %v7171 = vadd.f32 %v7169, %v7170
    %v7172 = vmul.f32 %v7158, 0.03125
    %v7173 = vmul.f32 %v7171, 0.03125
    %v7174 = vmul.f32 %v7172, %v7172
    %v7175 = vsub.f32 %v7173, %v7174
    %v7176 = vmax.f32 %v7175, 0.0
    %v7177 = vadd.f32 %v7176, 1e-05
    %v7178 = vrsqrt.pop %v7177
    %v7179 = vmul.f32 %v4171, %v7178
    %v7180 = vsub.f32 0.0, %v7172
    %v7181 = vmul.f32 %v7180, %v7179
    %v7182 = vlaneseq
    %v7183 = vshrl.u32 %v7182, 7
    %v7184 = vsub.s32 4, %v7183
    %v7185 = vrot.slane %v7179, %v7184
    %v7186 = vmul.f32 %v7084, %v7185
    %v7187 = vmul.f32 %v7089, %v7185
    %v7188 = vmul.f32 %v7094, %v7185
    %v7189 = vmul.f32 %v7099, %v7185
    %v7190 = vlaneseq
    %v7191 = vshrl.u32 %v7190, 7
    %v7192 = vsub.s32 4, %v7191
    %v7193 = vrot.slane %v7181, %v7192
    %v7194 = vadd.f32 %v7186, %v7193
    %v7195 = vadd.f32 %v7187, %v7193
    %v7196 = vadd.f32 %v7188, %v7193
    %v7197 = vadd.f32 %v7189, %v7193
    %v7198 = vadd.f32 %v7146, %v7194
    %v7199 = vadd.f32 %v7147, %v7195
    %v7200 = vadd.f32 %v7148, %v7196
    %v7201 = vadd.f32 %v7149, %v7197
    %v7202 = vadd.f32 %v7198, %v7199
    %v7203 = vadd.f32 %v7202, %v7200
    %v7204 = vadd.f32 %v7203, %v7201
    %v7205 = vrot.slane %v7204, 4
    %v7206 = vadd.f32 %v7204, %v7205
    %v7207 = vrot.slane %v7206, 2
    %v7208 = vadd.f32 %v7206, %v7207
    %v7209 = vrot.slane %v7208, 1
    %v7210 = vadd.f32 %v7208, %v7209
    %v7211 = vmul.f32 %v7198, %v7198
    %v7212 = vmul.f32 %v7199, %v7199
    %v7213 = vmul.f32 %v7200, %v7200
    %v7214 = vmul.f32 %v7201, %v7201
    %v7215 = vadd.f32 %v7211, %v7212
    %v7216 = vadd.f32 %v7215, %v7213
    %v7217 = vadd.f32 %v7216, %v7214
    %v7218 = vrot.slane %v7217, 4
    %v7219 = vadd.f32 %v7217, %v7218
    %v7220 = vrot.slane %v7219, 2
    %v7221 = vadd.f32 %v7219, %v7220
    %v7222 = vrot.slane %v7221, 1
    %v7223 = vadd.f32 %v7221, %v7222
    %v7224 = vmul.f32 %v7210, 0.03125
    %v7225 = vmul.f32 %v7223, 0.03125
    %v7226 = vmul.f32 %v7224, %v7224
    %v7227 = vsub.f32 %v7225, %v7226
    %v7228 = vmax.f32 %v7227, 0.0
    %v7229 = vadd.f32 %v7228, 1e-05
    %v7230 = vrsqrt.pop %v7229
    %v7231 = vmul.f32 %v4171, %v7230
    %v7232 = vmul.f32 %v7224, %v7231
    %v7234 = vrot.slane %v7232, 7
    %v7236 = vsub.f32 %v4171, %v7234
    %v7237 = vlaneseq
    %v7238 = vshrl.u32 %v7237, 7
    %v7239 = vsub.s32 5, %v7238
    %v7240 = vrot.slane %v7231, %v7239
    %v7241 = vmul.f32 %v7198, %v7240
    %v7242 = vmul.f32 %v7199, %v7240
    %v7243 = vmul.f32 %v7200, %v7240
    %v7244 = vmul.f32 %v7201, %v7240
    %v7245 = vlaneseq
    %v7246 = vshrl.u32 %v7245, 7
    %v7247 = vsub.s32 6, %v7246
    %v7248 = vrot.slane %v7236, %v7247
    %v7249 = vadd.f32 %v7241, %v7248
    %v7250 = vadd.f32 %v7242, %v7248
    %v7251 = vadd.f32 %v7243, %v7248
    %v7252 = vadd.f32 %v7244, %v7248
    %v7253 = vld [vmem:[%s14] sm:$0x3]
    %v7255 = vsel %vm5605, %v7253, 0
    %7257 = vmatprep.subr.mxu0 0.0
    %7258 = vmatpush1.msra.mxu0 %v7249
    %7259 = vmatprep.subr.mxu0 0.0
    %7260 = vmatpush1.msra.mxu0 %v7250
    %7261 = vmatprep.subr.mxu0 0.0
    %7262 = vmatpush1.msra.mxu0 %v7251
    %7263 = vmatprep.subr.mxu0 0.0
    %7264 = vmatpush1.msra.mxu0 %v7252
    %7265 = vmatprep.subr.mxu0 0.0
    %7266 = vmatpush1.msra.mxu0 0.0
    %7267 = vmatprep.subr.mxu0 0.0
    %7268 = vmatpush1.msra.mxu0 0.0
    %7269 = vmatprep.subr.mxu0 0.0
    %7270 = vmatpush1.msra.mxu0 0.0
    %7271 = vmatprep.subr.mxu0 0.0
    %7272 = vmatpush1.msra.mxu0 0.0
    %7273 = vmatprep.subr.mxu0 0.0
    %7274 = vmatpush1.msra.mxu0 0.0
    %7275 = vmatprep.subr.mxu0 0.0
    %7276 = vmatpush1.msra.mxu0 0.0
    %7277 = vmatprep.subr.mxu0 0.0
    %7278 = vmatpush1.msra.mxu0 0.0
    %7279 = vmatprep.subr.mxu0 0.0
    %7280 = vmatpush1.msra.mxu0 0.0
    %7281 = vmatprep.subr.mxu0 0.0
    %7282 = vmatpush1.msra.mxu0 0.0
    %7283 = vmatprep.subr.mxu0 0.0
    %7284 = vmatpush1.msra.mxu0 0.0
    %7285 = vmatprep.subr.mxu0 0.0
    %7286 = vmatpush1.msra.mxu0 0.0
    %7287 = vmatprep.subr.mxu0 0.0
    %7288 = vmatpush1.msra.mxu0 0.0
    %7289 = vmatprep.subr.mxu0 0.0
    %7290 = vmatpush1.msra.mxu0 0.0
    %7291 = vmatprep.subr.mxu0 0.0
    %7292 = vmatpush1.msra.mxu0 0.0
    %7293 = vmatprep.subr.mxu0 0.0
    %7294 = vmatpush1.msra.mxu0 0.0
    %7295 = vmatprep.subr.mxu0 0.0
    %7296 = vmatpush1.msra.mxu0 0.0
    %7297 = vmatprep.subr.mxu0 0.0
    %7298 = vmatpush1.msra.mxu0 0.0
    %7299 = vmatprep.subr.mxu0 0.0
    %7300 = vmatpush1.msra.mxu0 0.0
    %7301 = vmatprep.subr.mxu0 0.0
    %7302 = vmatpush1.msra.mxu0 0.0
    %7303 = vmatprep.subr.mxu0 0.0
    %7304 = vmatpush1.msra.mxu0 0.0
    %7305 = vmatprep.subr.mxu0 0.0
    %7306 = vmatpush1.msra.mxu0 0.0
    %7307 = vmatprep.subr.mxu0 0.0
    %7308 = vmatpush1.msra.mxu0 0.0
    %7309 = vmatprep.subr.mxu0 0.0
    %7310 = vmatpush1.msra.mxu0 0.0
    %7311 = vmatprep.subr.mxu0 0.0
    %7312 = vmatpush1.msra.mxu0 0.0
    %7313 = vmatprep.subr.mxu0 0.0
    %7314 = vmatpush1.msra.mxu0 0.0
    %7315 = vmatprep.subr.mxu0 0.0
    %7316 = vmatpush1.msra.mxu0 0.0
    %7317 = vmatprep.subr.mxu0 0.0
    %7318 = vmatpush1.msra.mxu0 0.0
    %7319 = vmatprep.subr.mxu0 0.0
    %7320 = vmatpush1.msra.mxu0 0.0
    %7321 = vmatprep.mubr.f32.mxu0 0.0
    %7322 = vmatmul.mubr.f32.gmra.mrb[0].mxu0 %v7255
    %v7323 = vpop.f32.mrb[0].mxu0
    %v7324 = vadd.f32 0.0, %v7323
    %v7325 = vpop.f32.mrb[0].mxu0
    %7326 = vdwg.mxu0
    %v7327 = vld [vmem:[%s15] sm:$0xff]
    %v7328 = vld [vmem:[%s15 + $0x8] sm:$0xff]
    %v7329 = vld [vmem:[%s15 + $0x10] sm:$0xff]
    %v7330 = vld [vmem:[%s15 + $0x18] sm:$0xff]
    %v7331 = vld [vmem:[%s15 + $0x20] sm:$0xff]
    %v7332 = vld [vmem:[%s15 + $0x28] sm:$0xff]
    %v7333 = vld [vmem:[%s15 + $0x30] sm:$0xff]
    %v7334 = vld [vmem:[%s15 + $0x38] sm:$0xff]
    %v7335 = vld [vmem:[%s15 + $0x40] sm:$0xff]
    %v7336 = vld [vmem:[%s15 + $0x48] sm:$0xff]
    %v7337 = vld [vmem:[%s15 + $0x50] sm:$0xff]
    %v7338 = vld [vmem:[%s15 + $0x58] sm:$0xff]
    %v7339 = vld [vmem:[%s15 + $0x60] sm:$0xff]
    %v7340 = vld [vmem:[%s15 + $0x68] sm:$0xff]
    %v7341 = vld [vmem:[%s15 + $0x70] sm:$0xff]
    %v7342 = vld [vmem:[%s15 + $0x78] sm:$0xff]
    %v7343 = vld [vmem:[#allocation11] sm:$0x1]
    %v7345 = vlaneseq
    %v7346 = vshrl.u32 %v7345, 7
    %v7347 = vsub.s32 0, %v7346
    %v7348 = vrot.slane %v7343, %v7347
    %7350 = vmatprep.subr.mxu0 0.0
    %7351 = vmatpush1.msra.mxu0 %v7327
    %7352 = vmatprep.subr.mxu0 0.0
    %7353 = vmatpush1.msra.mxu0 %v7328
    %7354 = vmatprep.subr.mxu0 0.0
    %7355 = vmatpush1.msra.mxu0 %v7329
    %7356 = vmatprep.subr.mxu0 0.0
    %7357 = vmatpush1.msra.mxu0 %v7330
    %7358 = vmatprep.subr.mxu0 0.0
    %7359 = vmatpush1.msra.mxu0 %v7331
    %7360 = vmatprep.subr.mxu0 0.0
    %7361 = vmatpush1.msra.mxu0 %v7332
    %7362 = vmatprep.subr.mxu0 0.0
    %7363 = vmatpush1.msra.mxu0 %v7333
    %7364 = vmatprep.subr.mxu0 0.0
    %7365 = vmatpush1.msra.mxu0 %v7334
    %7366 = vmatprep.subr.mxu0 0.0
    %7367 = vmatpush1.msra.mxu0 %v7335
    %7368 = vmatprep.subr.mxu0 0.0
    %7369 = vmatpush1.msra.mxu0 %v7336
    %7370 = vmatprep.subr.mxu0 0.0
    %7371 = vmatpush1.msra.mxu0 %v7337
    %7372 = vmatprep.subr.mxu0 0.0
    %7373 = vmatpush1.msra.mxu0 %v7338
    %7374 = vmatprep.subr.mxu0 0.0
    %7375 = vmatpush1.msra.mxu0 %v7339
    %7376 = vmatprep.subr.mxu0 0.0
    %7377 = vmatpush1.msra.mxu0 %v7340
    %7378 = vmatprep.subr.mxu0 0.0
    %7379 = vmatpush1.msra.mxu0 %v7341
    %7380 = vmatprep.subr.mxu0 0.0
    %7381 = vmatpush1.msra.mxu0 %v7342
    %7382 = vmatprep.subr.mxu0 0.0
    %7383 = vmatpush1.msra.mxu0 0.0
    %7384 = vmatprep.subr.mxu0 0.0
    %7385 = vmatpush1.msra.mxu0 0.0
    %7386 = vmatprep.subr.mxu0 0.0
    %7387 = vmatpush1.msra.mxu0 0.0
    %7388 = vmatprep.subr.mxu0 0.0
    %7389 = vmatpush1.msra.mxu0 0.0
    %7390 = vmatprep.subr.mxu0 0.0
    %7391 = vmatpush1.msra.mxu0 0.0
    %7392 = vmatprep.subr.mxu0 0.0
    %7393 = vmatpush1.msra.mxu0 0.0
    %7394 = vmatprep.subr.mxu0 0.0
    %7395 = vmatpush1.msra.mxu0 0.0
    %7396 = vmatprep.subr.mxu0 0.0
    %7397 = vmatpush1.msra.mxu0 0.0
    %7398 = vmatprep.subr.mxu0 0.0
    %7399 = vmatpush1.msra.mxu0 0.0
    %7400 = vmatprep.subr.mxu0 0.0
    %7401 = vmatpush1.msra.mxu0 0.0
    %7402 = vmatprep.subr.mxu0 0.0
    %7403 = vmatpush1.msra.mxu0 0.0
    %7404 = vmatprep.subr.mxu0 0.0
    %7405 = vmatpush1.msra.mxu0 0.0
    %7406 = vmatprep.subr.mxu0 0.0
    %7407 = vmatpush1.msra.mxu0 0.0
    %7408 = vmatprep.subr.mxu0 0.0
    %7409 = vmatpush1.msra.mxu0 0.0
    %7410 = vmatprep.subr.mxu0 0.0
    %7411 = vmatpush1.msra.mxu0 0.0
    %7412 = vmatprep.subr.mxu0 0.0
    %7413 = vmatpush1.msra.mxu0 0.0
    %7414 = vmatprep.mubr.f32.mxu0 0.0
    %7415 = vmatmul.mubr.f32.gmra.mrb[0].mxu0 %v7324
    %v7416 = vpop.f32.mrb[0].mxu0
    %v7417 = vadd.f32 %v7348, %v7416
    %v7418 = vpop.f32.mrb[0].mxu0
    %7419 = vdwg.mxu0
    %vm7420 = vcmask 74752
    %7421 = vst.msk [vmem:[#allocation13] sm:$0x3] %vm7420, %v7417
    // Predicated region
    $region94: #{tiny_resnet_forward.1} parent=1 // pred_check
      _
    $region95: #{tiny_resnet_forward.1} parent=1 // pred_check_branch
      %7423 = sbr.rel (0) target = $region97
    $region96: #{tiny_resnet_forward.1} parent=1 // pred_region
      %s7425 = ssub.s32 32, 32
      %7426 = vsyncadd [#allocation4], %s7425
      %s7428 = sshll.u32 [#allocation13], 4
      %s7429 = int_to_ptr.vmem [resolvable:$true] %s7428
      %7431 = dma.vmem_to_hbm [thread:$0]  %s7429, 32, %s17, [#allocation4]
    $region97: #{tiny_resnet_forward.1} parent=1 // pred_fallthru
      _
    // Predicated region
    $region98: #{tiny_resnet_forward.1} parent=1 // pred_check
      _
    $region99: #{tiny_resnet_forward.1} parent=1 // pred_check_branch
      %7433 = sbr.rel (0) target = $region101
    $region100: #{tiny_resnet_forward.1} parent=1 // pred_region
      %7434 = dma.done [#allocation4], 32
    $region101: #{tiny_resnet_forward.1} parent=1 // pred_fallthru
      _
    %7435 = vsyncpa [#allocation3], 1
    %7436 = vsyncpa [#allocation6], 1
    %7437 = vsyncpa [#allocation9], 1
    %7438 = vsyncpa [#allocation12], 1
    %7439 = vsyncpa [#allocation4], 1

</llo_original>
